<compile_context>
chip_gen: v7x
topology: tpu7x:2x2x1
jax: 0.10.0
libtpu: 0.0.40
codegen_flags: <defaults>
</compile_context>

<pallas_src>
import functools

import jax
import jax.numpy as jnp
from jax.experimental import pallas as pl
from jax.experimental.pallas import tpu as pltpu


def _attention_kernel(xq_ref, xkv_ref, wq_ref, wk_ref, wv_ref, wp_ref, bp_ref,
                      o_ref, q_sc, k_sc, v_sc, m_sc, l_sc, acc_sc, *, num_heads):
    """One (batch, q-tile, kv-tile) program; kv tiles stream on grid axis 2.

    xq_ref : (1, tq, C)  bf16   activations for this q tile
    xkv_ref: (1, tkv, C) bf16   activations for this kv tile
    wq_ref : (H, C, hd)  bf16   per-head q projection (softmax scale folded in)
    wk_ref : (H, C, hd)  bf16   per-head k projection
    wv_ref : (H, C, hd)  bf16   per-head v projection
    wp_ref : (H, hd, C)  bf16   per-head slice of the output projection
    bp_ref : (1, C)      f32    output-projection bias
    o_ref  : (1, tq, C)  f32    output tile
    scratch: q_sc (H,tq,hd) bf16; k_sc/v_sc (n_kv,H,tkv,hd) bf16 (per-batch
             K/V cache); m_sc/l_sc (H,tq,1) f32; acc_sc (H,tq,hd) f32
    """
    i = pl.program_id(1)   # q-tile index
    j = pl.program_id(2)   # kv-tile index (reduction axis)

    @pl.when(j == 0)
    def _init_q_tile():
        # Project q for all heads once per q tile (batched over the head dim).
        xq = jnp.broadcast_to(xq_ref[0], (num_heads,) + xq_ref.shape[1:])
        q = jnp.einsum("htc,hcd->htd", xq, wq_ref[...],
                       preferred_element_type=jnp.float32)
        q_sc[...] = q.astype(q_sc.dtype)
        m_sc[...] = jnp.full_like(m_sc, -jnp.inf)
        l_sc[...] = jnp.zeros_like(l_sc)
        acc_sc[...] = jnp.zeros_like(acc_sc)

    @pl.when(i == 0)
    def _project_kv_tile():
        # K/V projection happens exactly once per (batch, kv-tile); the result
        # is cached in VMEM and reused by every later q tile of this batch.
        xkv = jnp.broadcast_to(xkv_ref[0], (num_heads,) + xkv_ref.shape[1:])
        k = jnp.einsum("htc,hcd->htd", xkv, wk_ref[...],
                       preferred_element_type=jnp.float32)
        v = jnp.einsum("htc,hcd->htd", xkv, wv_ref[...],
                       preferred_element_type=jnp.float32)
        k_sc[j] = k.astype(k_sc.dtype)
        v_sc[j] = v.astype(v_sc.dtype)

    k = k_sc[j]                                                  # (H, tkv, hd)
    v = v_sc[j]                                                  # (H, tkv, hd)

    # Scores (scale already folded into Wq); contraction over head_dim, no k.T.
    s = jnp.einsum("hqd,hkd->hqk", q_sc[...], k,
                   preferred_element_type=jnp.float32)           # (H, tq, tkv)

    # Online softmax update (f32).
    m_prev = m_sc[...]
    m_new = jnp.maximum(m_prev, jnp.max(s, axis=-1, keepdims=True))
    alpha = jnp.exp(m_prev - m_new)
    p = jnp.exp(s - m_new)
    l_sc[...] = alpha * l_sc[...] + jnp.sum(p, axis=-1, keepdims=True)
    acc_sc[...] = alpha * acc_sc[...] + jnp.einsum(
        "hqk,hkd->hqd", p.astype(jnp.bfloat16), v,
        preferred_element_type=jnp.float32)
    m_sc[...] = m_new

    @pl.when(j == pl.num_programs(2) - 1)
    def _finalize():
        inv_l = pl.reciprocal(l_sc[...], approx=True)            # (H, tq, 1)
        attn = (acc_sc[...] * inv_l).astype(jnp.bfloat16)        # (H, tq, hd)
        # Output projection decomposed per head: out = sum_h attn_h @ Wp_h.
        per_head = jnp.einsum("hqd,hdc->hqc", attn, wp_ref[...],
                              preferred_element_type=jnp.float32)
        out = jnp.sum(per_head, axis=0) + bp_ref[...]            # (tq, C) f32
        o_ref[0] = out.astype(o_ref.dtype)


def attention_forward(x, params, *, num_heads, block_q=128, block_kv=128):
    """x: (B, N, C) float32. params: plain (in, out) weight matrices + bias."""
    B, N, C = x.shape
    assert C % num_heads == 0
    head_dim = C // num_heads
    scale = head_dim ** (-0.5)

    tq = min(block_q, N)
    tkv = min(block_kv, N)
    assert N % tq == 0 and N % tkv == 0, "N must divide the chosen tile sizes"
    n_q, n_kv = N // tq, N // tkv

    # bf16 activations and head-major bf16 weights; fold softmax scale into Wq.
    xb = x.astype(jnp.bfloat16)

    def to_heads(w_t):  # (C, C) [in, out] -> (H, C, hd)
        return jnp.transpose(w_t.reshape(C, num_heads, head_dim), (1, 0, 2))

    wq_h = to_heads(params["wq_t"] * scale).astype(jnp.bfloat16)
    wk_h = to_heads(params["wk_t"]).astype(jnp.bfloat16)
    wv_h = to_heads(params["wv_t"]).astype(jnp.bfloat16)
    wp_h = params["wp_t"].reshape(num_heads, head_dim, C).astype(jnp.bfloat16)
    bp = params["bp"].astype(jnp.float32)

    kernel = functools.partial(_attention_kernel, num_heads=num_heads)

    cost = pl.CostEstimate(
        # q/k/v/out projections (~4 * 2*N*C*C per batch) + QK^T and PV.
        flops=int(8 * B * N * C * C + 4 * B * N * N * C),
        transcendentals=int(B * num_heads * N * N),
        bytes_accessed=int(B * N * C * 2 * (1 + n_q) + 8 * C * C + B * N * C * 4),
    )

    return pl.pallas_call(
        kernel,
        out_shape=jax.ShapeDtypeStruct((B, N, C), jnp.float32),
        grid_spec=pltpu.PrefetchScalarGridSpec(
            num_scalar_prefetch=0,
            grid=(B, n_q, n_kv),
            in_specs=[
                pl.BlockSpec((1, tq, C), lambda b, i, j: (b, i, 0)),    # x (q)
                pl.BlockSpec((1, tkv, C), lambda b, i, j: (b, j, 0)),   # x (kv)
                pl.BlockSpec((num_heads, C, head_dim), lambda b, i, j: (0, 0, 0)),
                pl.BlockSpec((num_heads, C, head_dim), lambda b, i, j: (0, 0, 0)),
                pl.BlockSpec((num_heads, C, head_dim), lambda b, i, j: (0, 0, 0)),
                pl.BlockSpec((num_heads, head_dim, C), lambda b, i, j: (0, 0, 0)),
                pl.BlockSpec((1, C), lambda b, i, j: (0, 0)),
            ],
            out_specs=pl.BlockSpec((1, tq, C), lambda b, i, j: (b, i, 0)),
            scratch_shapes=[
                pltpu.VMEM((num_heads, tq, head_dim), jnp.bfloat16),     # q
                pltpu.VMEM((n_kv, num_heads, tkv, head_dim), jnp.bfloat16),  # K cache
                pltpu.VMEM((n_kv, num_heads, tkv, head_dim), jnp.bfloat16),  # V cache
                pltpu.VMEM((num_heads, tq, 1), jnp.float32),             # m
                pltpu.VMEM((num_heads, tq, 1), jnp.float32),             # l
                pltpu.VMEM((num_heads, tq, head_dim), jnp.float32),      # acc
            ],
        ),
        compiler_params=pltpu.CompilerParams(
            # q-tile axis must be "arbitrary" so the per-batch K/V VMEM cache
            # persists across q tiles; megacore parallelism comes from batch.
            dimension_semantics=("parallel", "arbitrary", "arbitrary"),
            vmem_limit_bytes=32 * 1024 * 1024),
        cost_estimate=cost,
    )(xb, xb, wq_h, wk_h, wv_h, wp_h, bp)


def attention_reference(x, params, *, num_heads):
    """Plain-JAX f32 reference mirroring the PyTorch forward (sr_ratio=1)."""
    B, N, C = x.shape
    head_dim = C // num_heads
    scale = head_dim ** (-0.5)

    q = x @ params["wq_t"]
    k = x @ params["wk_t"]
    v = x @ params["wv_t"]

    def split_heads(t):  # (B, N, C) -> (B, H, N, hd)
        return t.reshape(B, N, num_heads, head_dim).transpose(0, 2, 1, 3)

    qh, kh, vh = split_heads(q), split_heads(k), split_heads(v)
    attn = jnp.einsum("bhqd,bhkd->bhqk", qh, kh) * scale
    attn = jax.nn.softmax(attn, axis=-1)
    out = jnp.einsum("bhqk,bhkd->bhqd", attn, vh)
    out = out.transpose(0, 2, 1, 3).reshape(B, N, C)
    return out @ params["wp_t"] + params["bp"][0]


def init_params(key, dim):
    # PyTorch Linear stores (out, in); we store the transpose directly.
    # The fused kv Linear is split into Wk / Wv (columns [:C] / [C:] of kv) —
    # mathematically identical to the reference module.
    k1, k2, k3, k4, k5 = jax.random.split(key, 5)
    std = 0.02
    return {
        "wq_t": (std * jax.random.normal(k1, (dim, dim))).astype(jnp.float32),
        "wk_t": (std * jax.random.normal(k2, (dim, dim))).astype(jnp.float32),
        "wv_t": (std * jax.random.normal(k3, (dim, dim))).astype(jnp.float32),
        "wp_t": (std * jax.random.normal(k4, (dim, dim))).astype(jnp.float32),
        "bp":   (std * jax.random.normal(k5, (1, dim))).astype(jnp.float32),
    }


if __name__ == "__main__":
    # Small shapes consistent with the module: B=2, H=W=16 -> N=256, C=32, 4 heads.
    # N=256 with 128-sized tiles exercises 2 q-tiles x 2 kv-tiles (online softmax
    # across kv tiles + K/V-cache reuse across q tiles).
    # sr_ratio=1 (module default): no Conv2d/LayerNorm spatial-reduction branch.
    B, H_img, W_img, C, num_heads = 2, 16, 16, 32, 4
    N = H_img * W_img

    key = jax.random.PRNGKey(0)
    kx, kp = jax.random.split(key)
    x = jax.random.normal(kx, (B, N, C), dtype=jnp.float32)
    params = init_params(kp, C)

    out = attention_forward(x, params, num_heads=num_heads)
    out = jax.block_until_ready(out)

    ref = attention_reference(x, params, num_heads=num_heads)
    assert out.shape == (B, N, C)
    max_err = float(jnp.max(jnp.abs(out - ref)))
    assert max_err < 2e-2, f"mismatch vs reference: max abs err = {max_err}"

    print("KERNEL_OK")
</pallas_src>

<mosaic_0001>
module attributes {stable_mosaic.version = 11 : i64} {
  func.func @_attention_kernel(%arg0: i32, %arg1: i32, %arg2: i32, %arg3: memref<1x128x32xbf16, #tpu.memory_space<vmem>>, %arg4: memref<1x128x32xbf16, #tpu.memory_space<vmem>>, %arg5: memref<4x32x8xbf16, #tpu.memory_space<vmem>>, %arg6: memref<4x32x8xbf16, #tpu.memory_space<vmem>>, %arg7: memref<4x32x8xbf16, #tpu.memory_space<vmem>>, %arg8: memref<4x8x32xbf16, #tpu.memory_space<vmem>>, %arg9: memref<1x32xf32, #tpu.memory_space<vmem>>, %arg10: memref<1x128x32xf32, #tpu.memory_space<vmem>>, %arg11: memref<4x128x8xbf16, #tpu.memory_space<vmem>>, %arg12: memref<2x4x128x8xbf16, #tpu.memory_space<vmem>>, %arg13: memref<2x4x128x8xbf16, #tpu.memory_space<vmem>>, %arg14: memref<4x128x1xf32, #tpu.memory_space<vmem>>, %arg15: memref<4x128x1xf32, #tpu.memory_space<vmem>>, %arg16: memref<4x128x8xf32, #tpu.memory_space<vmem>>) attributes {dimension_semantics = [#tpu.dimension_semantics<parallel>, #tpu.dimension_semantics<arbitrary>, #tpu.dimension_semantics<arbitrary>], iteration_bounds = array<i64: 2, 2, 2>, scalar_prefetch = 0 : i64, scratch_operands = 6 : i64, tpu.core_type = #tpu.core_type<tc>, window_params = [{transform_indices = @transform_0, window_bounds = array<i64: 1, 128, 32>}, {transform_indices = @transform_1, window_bounds = array<i64: 1, 128, 32>}, {pipeline_mode = #tpu.pipeline_mode<synchronous>, transform_indices = @transform_2, window_bounds = array<i64: 4, 32, 8>}, {pipeline_mode = #tpu.pipeline_mode<synchronous>, transform_indices = @transform_3, window_bounds = array<i64: 4, 32, 8>}, {pipeline_mode = #tpu.pipeline_mode<synchronous>, transform_indices = @transform_4, window_bounds = array<i64: 4, 32, 8>}, {pipeline_mode = #tpu.pipeline_mode<synchronous>, transform_indices = @transform_5, window_bounds = array<i64: 4, 8, 32>}, {pipeline_mode = #tpu.pipeline_mode<synchronous>, transform_indices = @transform_6, window_bounds = array<i64: 1, 32>}, {transform_indices = @transform_7, window_bounds = array<i64: 1, 128, 32>}]} {
    %c0_i32 = arith.constant 0 : i32
    %0 = arith.cmpi eq, %arg2, %c0_i32 : i32
    %1 = arith.extui %0 : i1 to i32
    %c0_i32_0 = arith.constant 0 : i32
    %2 = arith.cmpi ne, %1, %c0_i32_0 : i32
    scf.if %2 {
      %c0_33 = arith.constant 0 : index
      %c0_34 = arith.constant 0 : index
      %c0_35 = arith.constant 0 : index
      %40 = vector.load %arg3[%c0_33, %c0_34, %c0_35] : memref<1x128x32xbf16, #tpu.memory_space<vmem>>, vector<1x128x32xbf16>
      %41 = vector.shape_cast %40 : vector<1x128x32xbf16> to vector<128x32xbf16>
      %42 = vector.shape_cast %41 : vector<128x32xbf16> to vector<1x128x32xbf16>
      %43 = vector.broadcast %42 : vector<1x128x32xbf16> to vector<4x128x32xbf16>
      %c0_36 = arith.constant 0 : index
      %c0_37 = arith.constant 0 : index
      %c0_38 = arith.constant 0 : index
      %44 = vector.load %arg5[%c0_36, %c0_37, %c0_38] : memref<4x32x8xbf16, #tpu.memory_space<vmem>>, vector<4x32x8xbf16>
      "tpu.trace_start"() <{level = 10 : i32, message = "htc,hcd->htd"}> : () -> ()
      %cst_39 = arith.constant dense<0.000000e+00> : vector<4x128x8xf32>
      %45 = tpu.matmul %43, %44, %cst_39 {dimension_numbers = #tpu.dot_dimension_numbers<[2], [1], [1], [2], [0, 0, 0, 1, 1, 2], [0], [0]>} : vector<4x128x32xbf16>, vector<4x32x8xbf16>, vector<4x128x8xf32> -> vector<4x128x8xf32>
      "tpu.trace_stop"() : () -> ()
      %46 = arith.truncf %45 : vector<4x128x8xf32> to vector<4x128x8xbf16>
      %c0_40 = arith.constant 0 : index
      %c0_41 = arith.constant 0 : index
      %c0_42 = arith.constant 0 : index
      %47 = vector.load %arg11[%c0_40, %c0_41, %c0_42] : memref<4x128x8xbf16, #tpu.memory_space<vmem>>, vector<4x128x8xbf16>
      tpu.vector_store %arg11[%c0_40, %c0_41, %c0_42], %46 {strides = array<i32>} : memref<4x128x8xbf16, #tpu.memory_space<vmem>>, vector<4x128x8xbf16>,
      %cst_43 = arith.constant 0xFF800000 : f32
      %48 = vector.broadcast %cst_43 : f32 to vector<4x128x1xf32>
      %c0_44 = arith.constant 0 : index
      %c0_45 = arith.constant 0 : index
      %c0_46 = arith.constant 0 : index
      %49 = vector.load %arg14[%c0_44, %c0_45, %c0_46] : memref<4x128x1xf32, #tpu.memory_space<vmem>>, vector<4x128x1xf32>
      tpu.vector_store %arg14[%c0_44, %c0_45, %c0_46], %48 {strides = array<i32>} : memref<4x128x1xf32, #tpu.memory_space<vmem>>, vector<4x128x1xf32>,
      %cst_47 = arith.constant 0.000000e+00 : f32
      %50 = vector.broadcast %cst_47 : f32 to vector<4x128x1xf32>
      %c0_48 = arith.constant 0 : index
      %c0_49 = arith.constant 0 : index
      %c0_50 = arith.constant 0 : index
      %51 = vector.load %arg15[%c0_48, %c0_49, %c0_50] : memref<4x128x1xf32, #tpu.memory_space<vmem>>, vector<4x128x1xf32>
      tpu.vector_store %arg15[%c0_48, %c0_49, %c0_50], %50 {strides = array<i32>} : memref<4x128x1xf32, #tpu.memory_space<vmem>>, vector<4x128x1xf32>,
      %cst_51 = arith.constant 0.000000e+00 : f32
      %52 = vector.broadcast %cst_51 : f32 to vector<4x128x8xf32>
      %c0_52 = arith.constant 0 : index
      %c0_53 = arith.constant 0 : index
      %c0_54 = arith.constant 0 : index
      %53 = vector.load %arg16[%c0_52, %c0_53, %c0_54] : memref<4x128x8xf32, #tpu.memory_space<vmem>>, vector<4x128x8xf32>
      tpu.vector_store %arg16[%c0_52, %c0_53, %c0_54], %52 {strides = array<i32>} : memref<4x128x8xf32, #tpu.memory_space<vmem>>, vector<4x128x8xf32>,
    } else {
    }
    %c0_i32_1 = arith.constant 0 : i32
    %3 = arith.cmpi eq, %arg1, %c0_i32_1 : i32
    %4 = arith.extui %3 : i1 to i32
    %c0_i32_2 = arith.constant 0 : i32
    %5 = arith.cmpi ne, %4, %c0_i32_2 : i32
    scf.if %5 {
      %c0_33 = arith.constant 0 : index
      %c0_34 = arith.constant 0 : index
      %c0_35 = arith.constant 0 : index
      %40 = vector.load %arg4[%c0_33, %c0_34, %c0_35] : memref<1x128x32xbf16, #tpu.memory_space<vmem>>, vector<1x128x32xbf16>
      %41 = vector.shape_cast %40 : vector<1x128x32xbf16> to vector<128x32xbf16>
      %42 = vector.shape_cast %41 : vector<128x32xbf16> to vector<1x128x32xbf16>
      %43 = vector.broadcast %42 : vector<1x128x32xbf16> to vector<4x128x32xbf16>
      %c0_36 = arith.constant 0 : index
      %c0_37 = arith.constant 0 : index
      %c0_38 = arith.constant 0 : index
      %44 = vector.load %arg6[%c0_36, %c0_37, %c0_38] : memref<4x32x8xbf16, #tpu.memory_space<vmem>>, vector<4x32x8xbf16>
      "tpu.trace_start"() <{level = 10 : i32, message = "htc,hcd->htd"}> : () -> ()
      %cst_39 = arith.constant dense<0.000000e+00> : vector<4x128x8xf32>
      %45 = tpu.matmul %43, %44, %cst_39 {dimension_numbers = #tpu.dot_dimension_numbers<[2], [1], [1], [2], [0, 0, 0, 1, 1, 2], [0], [0]>} : vector<4x128x32xbf16>, vector<4x32x8xbf16>, vector<4x128x8xf32> -> vector<4x128x8xf32>
      "tpu.trace_stop"() : () -> ()
      %c0_40 = arith.constant 0 : index
      %c0_41 = arith.constant 0 : index
      %c0_42 = arith.constant 0 : index
      %46 = vector.load %arg7[%c0_40, %c0_41, %c0_42] : memref<4x32x8xbf16, #tpu.memory_space<vmem>>, vector<4x32x8xbf16>
      "tpu.trace_start"() <{level = 10 : i32, message = "htc,hcd->htd"}> : () -> ()
      %cst_43 = arith.constant dense<0.000000e+00> : vector<4x128x8xf32>
      %47 = tpu.matmul %43, %46, %cst_43 {dimension_numbers = #tpu.dot_dimension_numbers<[2], [1], [1], [2], [0, 0, 0, 1, 1, 2], [0], [0]>} : vector<4x128x32xbf16>, vector<4x32x8xbf16>, vector<4x128x8xf32> -> vector<4x128x8xf32>
      "tpu.trace_stop"() : () -> ()
      %48 = arith.truncf %45 : vector<4x128x8xf32> to vector<4x128x8xbf16>
      %49 = arith.index_cast %arg2 : i32 to index
      %c0_44 = arith.constant 0 : index
      %c0_45 = arith.constant 0 : index
      %c0_46 = arith.constant 0 : index
      %50 = vector.load %arg12[%49, %c0_44, %c0_45, %c0_46] : memref<2x4x128x8xbf16, #tpu.memory_space<vmem>>, vector<1x4x128x8xbf16>
      %51 = vector.shape_cast %50 : vector<1x4x128x8xbf16> to vector<4x128x8xbf16>
      %52 = vector.shape_cast %48 : vector<4x128x8xbf16> to vector<1x4x128x8xbf16>
      tpu.vector_store %arg12[%49, %c0_44, %c0_45, %c0_46], %52 {strides = array<i32>} : memref<2x4x128x8xbf16, #tpu.memory_space<vmem>>, vector<1x4x128x8xbf16>,
      %53 = arith.truncf %47 : vector<4x128x8xf32> to vector<4x128x8xbf16>
      %54 = arith.index_cast %arg2 : i32 to index
      %c0_47 = arith.constant 0 : index
      %c0_48 = arith.constant 0 : index
      %c0_49 = arith.constant 0 : index
      %55 = vector.load %arg13[%54, %c0_47, %c0_48, %c0_49] : memref<2x4x128x8xbf16, #tpu.memory_space<vmem>>, vector<1x4x128x8xbf16>
      %56 = vector.shape_cast %55 : vector<1x4x128x8xbf16> to vector<4x128x8xbf16>
      %57 = vector.shape_cast %53 : vector<4x128x8xbf16> to vector<1x4x128x8xbf16>
      tpu.vector_store %arg13[%54, %c0_47, %c0_48, %c0_49], %57 {strides = array<i32>} : memref<2x4x128x8xbf16, #tpu.memory_space<vmem>>, vector<1x4x128x8xbf16>,
    } else {
    }
    %6 = arith.index_cast %arg2 : i32 to index
    %c0 = arith.constant 0 : index
    %c0_3 = arith.constant 0 : index
    %c0_4 = arith.constant 0 : index
    %7 = vector.load %arg12[%6, %c0, %c0_3, %c0_4] : memref<2x4x128x8xbf16, #tpu.memory_space<vmem>>, vector<1x4x128x8xbf16>
    %8 = vector.shape_cast %7 : vector<1x4x128x8xbf16> to vector<4x128x8xbf16>
    %9 = arith.index_cast %arg2 : i32 to index
    %c0_5 = arith.constant 0 : index
    %c0_6 = arith.constant 0 : index
    %c0_7 = arith.constant 0 : index
    %10 = vector.load %arg13[%9, %c0_5, %c0_6, %c0_7] : memref<2x4x128x8xbf16, #tpu.memory_space<vmem>>, vector<1x4x128x8xbf16>
    %11 = vector.shape_cast %10 : vector<1x4x128x8xbf16> to vector<4x128x8xbf16>
    %c0_8 = arith.constant 0 : index
    %c0_9 = arith.constant 0 : index
    %c0_10 = arith.constant 0 : index
    %12 = vector.load %arg11[%c0_8, %c0_9, %c0_10] : memref<4x128x8xbf16, #tpu.memory_space<vmem>>, vector<4x128x8xbf16>
    "tpu.trace_start"() <{level = 10 : i32, message = "hqd,hkd->hqk"}> : () -> ()
    %cst = arith.constant dense<0.000000e+00> : vector<4x128x128xf32>
    %13 = tpu.matmul %12, %8, %cst {dimension_numbers = #tpu.dot_dimension_numbers<[2], [2], [1], [1], [0, 0, 0, 1, 1, 1], [0], [0]>} : vector<4x128x8xbf16>, vector<4x128x8xbf16>, vector<4x128x128xf32> -> vector<4x128x128xf32>
    "tpu.trace_stop"() : () -> ()
    %c0_11 = arith.constant 0 : index
    %c0_12 = arith.constant 0 : index
    %c0_13 = arith.constant 0 : index
    %14 = vector.load %arg14[%c0_11, %c0_12, %c0_13] : memref<4x128x1xf32, #tpu.memory_space<vmem>>, vector<4x128x1xf32>
    %cst_14 = arith.constant dense<0xFF800000> : vector<4x128xf32>
    %15 = vector.multi_reduction <maximumf>, %13, %cst_14 [2] : vector<4x128x128xf32> to vector<4x128xf32>
    %16 = vector.shape_cast %15 : vector<4x128xf32> to vector<4x128x1xf32>
    %17 = arith.maximumf %14, %16 : vector<4x128x1xf32>
    %18 = arith.subf %14, %17 : vector<4x128x1xf32>
    %19 = math.exp %18 : vector<4x128x1xf32>
    %20 = vector.broadcast %17 : vector<4x128x1xf32> to vector<4x128x128xf32>
    %21 = arith.subf %13, %20 : vector<4x128x128xf32>
    %22 = math.exp %21 : vector<4x128x128xf32>
    %c0_15 = arith.constant 0 : index
    %c0_16 = arith.constant 0 : index
    %c0_17 = arith.constant 0 : index
    %23 = vector.load %arg15[%c0_15, %c0_16, %c0_17] : memref<4x128x1xf32, #tpu.memory_space<vmem>>, vector<4x128x1xf32>
    %24 = arith.mulf %19, %23 : vector<4x128x1xf32>
    %cst_18 = arith.constant dense<0.000000e+00> : vector<4x128xf32>
    %25 = vector.multi_reduction <add>, %22, %cst_18 [2] : vector<4x128x128xf32> to vector<4x128xf32>
    %26 = vector.shape_cast %25 : vector<4x128xf32> to vector<4x128x1xf32>
    %27 = arith.addf %24, %26 : vector<4x128x1xf32>
    %c0_19 = arith.constant 0 : index
    %c0_20 = arith.constant 0 : index
    %c0_21 = arith.constant 0 : index
    %28 = vector.load %arg15[%c0_19, %c0_20, %c0_21] : memref<4x128x1xf32, #tpu.memory_space<vmem>>, vector<4x128x1xf32>
    tpu.vector_store %arg15[%c0_19, %c0_20, %c0_21], %27 {strides = array<i32>} : memref<4x128x1xf32, #tpu.memory_space<vmem>>, vector<4x128x1xf32>,
    %c0_22 = arith.constant 0 : index
    %c0_23 = arith.constant 0 : index
    %c0_24 = arith.constant 0 : index
    %29 = vector.load %arg16[%c0_22, %c0_23, %c0_24] : memref<4x128x8xf32, #tpu.memory_space<vmem>>, vector<4x128x8xf32>
    %30 = vector.broadcast %19 : vector<4x128x1xf32> to vector<4x128x8xf32>
    %31 = arith.mulf %30, %29 : vector<4x128x8xf32>
    %32 = arith.truncf %22 : vector<4x128x128xf32> to vector<4x128x128xbf16>
    "tpu.trace_start"() <{level = 10 : i32, message = "hqk,hkd->hqd"}> : () -> ()
    %cst_25 = arith.constant dense<0.000000e+00> : vector<4x128x8xf32>
    %33 = tpu.matmul %32, %11, %cst_25 {dimension_numbers = #tpu.dot_dimension_numbers<[2], [1], [1], [2], [0, 0, 0, 1, 1, 2], [0], [0]>} : vector<4x128x128xbf16>, vector<4x128x8xbf16>, vector<4x128x8xf32> -> vector<4x128x8xf32>
    "tpu.trace_stop"() : () -> ()
    %34 = arith.addf %31, %33 : vector<4x128x8xf32>
    %c0_26 = arith.constant 0 : index
    %c0_27 = arith.constant 0 : index
    %c0_28 = arith.constant 0 : index
    %35 = vector.load %arg16[%c0_26, %c0_27, %c0_28] : memref<4x128x8xf32, #tpu.memory_space<vmem>>, vector<4x128x8xf32>
    tpu.vector_store %arg16[%c0_26, %c0_27, %c0_28], %34 {strides = array<i32>} : memref<4x128x8xf32, #tpu.memory_space<vmem>>, vector<4x128x8xf32>,
    %c0_29 = arith.constant 0 : index
    %c0_30 = arith.constant 0 : index
    %c0_31 = arith.constant 0 : index
    %36 = vector.load %arg14[%c0_29, %c0_30, %c0_31] : memref<4x128x1xf32, #tpu.memory_space<vmem>>, vector<4x128x1xf32>
    tpu.vector_store %arg14[%c0_29, %c0_30, %c0_31], %17 {strides = array<i32>} : memref<4x128x1xf32, #tpu.memory_space<vmem>>, vector<4x128x1xf32>,
    %c1_i32 = arith.constant 1 : i32
    %37 = arith.cmpi eq, %arg2, %c1_i32 : i32
    %38 = arith.extui %37 : i1 to i32
    %c0_i32_32 = arith.constant 0 : i32
    %39 = arith.cmpi ne, %38, %c0_i32_32 : i32
    scf.if %39 {
      %c0_33 = arith.constant 0 : index
      %c0_34 = arith.constant 0 : index
      %c0_35 = arith.constant 0 : index
      %40 = vector.load %arg15[%c0_33, %c0_34, %c0_35] : memref<4x128x1xf32, #tpu.memory_space<vmem>>, vector<4x128x1xf32>
      %41 = tpu.reciprocal %40 {approx = true} : vector<4x128x1xf32> -> vector<4x128x1xf32>
      %c0_36 = arith.constant 0 : index
      %c0_37 = arith.constant 0 : index
      %c0_38 = arith.constant 0 : index
      %42 = vector.load %arg16[%c0_36, %c0_37, %c0_38] : memref<4x128x8xf32, #tpu.memory_space<vmem>>, vector<4x128x8xf32>
      %43 = vector.broadcast %41 : vector<4x128x1xf32> to vector<4x128x8xf32>
      %44 = arith.mulf %42, %43 : vector<4x128x8xf32>
      %45 = arith.truncf %44 : vector<4x128x8xf32> to vector<4x128x8xbf16>
      %c0_39 = arith.constant 0 : index
      %c0_40 = arith.constant 0 : index
      %c0_41 = arith.constant 0 : index
      %46 = vector.load %arg8[%c0_39, %c0_40, %c0_41] : memref<4x8x32xbf16, #tpu.memory_space<vmem>>, vector<4x8x32xbf16>
      "tpu.trace_start"() <{level = 10 : i32, message = "hqd,hdc->hqc"}> : () -> ()
      %cst_42 = arith.constant dense<0.000000e+00> : vector<4x128x32xf32>
      %47 = tpu.matmul %45, %46, %cst_42 {dimension_numbers = #tpu.dot_dimension_numbers<[2], [1], [1], [2], [0, 0, 0, 1, 1, 2], [0], [0]>} : vector<4x128x8xbf16>, vector<4x8x32xbf16>, vector<4x128x32xf32> -> vector<4x128x32xf32>
      "tpu.trace_stop"() : () -> ()
      %cst_43 = arith.constant dense<0.000000e+00> : vector<128x32xf32>
      %48 = vector.multi_reduction <add>, %47, %cst_43 [0] : vector<4x128x32xf32> to vector<128x32xf32>
      %c0_44 = arith.constant 0 : index
      %c0_45 = arith.constant 0 : index
      %49 = vector.load %arg9[%c0_44, %c0_45] : memref<1x32xf32, #tpu.memory_space<vmem>>, vector<1x32xf32>
      %50 = vector.broadcast %49 : vector<1x32xf32> to vector<128x32xf32>
      %51 = arith.addf %48, %50 : vector<128x32xf32>
      %c0_46 = arith.constant 0 : index
      %c0_47 = arith.constant 0 : index
      %c0_48 = arith.constant 0 : index
      %52 = vector.load %arg10[%c0_46, %c0_47, %c0_48] : memref<1x128x32xf32, #tpu.memory_space<vmem>>, vector<1x128x32xf32>
      %53 = vector.shape_cast %52 : vector<1x128x32xf32> to vector<128x32xf32>
      %54 = vector.shape_cast %51 : vector<128x32xf32> to vector<1x128x32xf32>
      tpu.vector_store %arg10[%c0_46, %c0_47, %c0_48], %54 {strides = array<i32>} : memref<1x128x32xf32, #tpu.memory_space<vmem>>, vector<1x128x32xf32>,
    } else {
    }
    return
  }
  func.func @transform_0(%arg0: i32, %arg1: i32, %arg2: i32) -> (i32, i32, i32) {
    %c0_i32 = arith.constant 0 : i32
    %c0_i32_0 = arith.constant 0 : i32
    return %arg0, %arg1, %c0_i32 : i32, i32, i32
  }
  func.func @transform_1(%arg0: i32, %arg1: i32, %arg2: i32) -> (i32, i32, i32) {
    %c0_i32 = arith.constant 0 : i32
    %c0_i32_0 = arith.constant 0 : i32
    return %arg0, %arg2, %c0_i32 : i32, i32, i32
  }
  func.func @transform_2(%arg0: i32, %arg1: i32, %arg2: i32) -> (i32, i32, i32) {
    %c0_i32 = arith.constant 0 : i32
    %c0_i32_0 = arith.constant 0 : i32
    %c0_i32_1 = arith.constant 0 : i32
    %c0_i32_2 = arith.constant 0 : i32
    return %c0_i32, %c0_i32_0, %c0_i32_1 : i32, i32, i32
  }
  func.func @transform_3(%arg0: i32, %arg1: i32, %arg2: i32) -> (i32, i32, i32) {
    %c0_i32 = arith.constant 0 : i32
    %c0_i32_0 = arith.constant 0 : i32
    %c0_i32_1 = arith.constant 0 : i32
    %c0_i32_2 = arith.constant 0 : i32
    return %c0_i32, %c0_i32_0, %c0_i32_1 : i32, i32, i32
  }
  func.func @transform_4(%arg0: i32, %arg1: i32, %arg2: i32) -> (i32, i32, i32) {
    %c0_i32 = arith.constant 0 : i32
    %c0_i32_0 = arith.constant 0 : i32
    %c0_i32_1 = arith.constant 0 : i32
    %c0_i32_2 = arith.constant 0 : i32
    return %c0_i32, %c0_i32_0, %c0_i32_1 : i32, i32, i32
  }
  func.func @transform_5(%arg0: i32, %arg1: i32, %arg2: i32) -> (i32, i32, i32) {
    %c0_i32 = arith.constant 0 : i32
    %c0_i32_0 = arith.constant 0 : i32
    %c0_i32_1 = arith.constant 0 : i32
    %c0_i32_2 = arith.constant 0 : i32
    return %c0_i32, %c0_i32_0, %c0_i32_1 : i32, i32, i32
  }
  func.func @transform_6(%arg0: i32, %arg1: i32, %arg2: i32) -> (i32, i32) {
    %c0_i32 = arith.constant 0 : i32
    %c0_i32_0 = arith.constant 0 : i32
    %c0_i32_1 = arith.constant 0 : i32
    return %c0_i32, %c0_i32_0 : i32, i32
  }
  func.func @transform_7(%arg0: i32, %arg1: i32, %arg2: i32) -> (i32, i32, i32) {
    %c0_i32 = arith.constant 0 : i32
    %c0_i32_0 = arith.constant 0 : i32
    return %arg0, %arg1, %c0_i32 : i32, i32, i32
  }
}

</mosaic_0001>

<llo_original>
// kernel: tpu_custom_call.1
$region0: #{tpu_custom_call.1}
  #allocation0 [shape = 'u32[]', space=smem, size = 0x4, offset = 0x4, fixed_abs, tag = 'smem constant byte address 0x4 - core index']
  #allocation1 [shape = 'u32[144,128]{1,0:T(1,128)}', space=vmem, size = 0x12000, scoped, tag = 'internal scratch']
  #allocation2 [shape = 'bf16[4,128,8]{2,1,0:T(16,128)(2,1)}', space=vmem, size = 0x20000, scoped, tag = 'scratch operand']
  #allocation3 [shape = 'bf16[2,4,128,8]{3,2,1,0:T(16,128)(2,1)}', space=vmem, size = 0x40000, scoped, tag = 'scratch operand']
  #allocation4 [shape = 'bf16[2,4,128,8]{3,2,1,0:T(16,128)(2,1)}', space=vmem, size = 0x40000, scoped, tag = 'scratch operand']
  #allocation5 [shape = 'f32[4,128,1]{2,1,0:T(8,128)}', space=vmem, size = 0x40000, scoped, tag = 'scratch operand']
  #allocation6 [shape = 'f32[4,128,1]{2,1,0:T(8,128)}', space=vmem, size = 0x40000, scoped, tag = 'scratch operand']
  #allocation7 [shape = 'f32[4,128,8]{2,1,0:T(8,128)}', space=vmem, size = 0x40000, scoped, tag = 'scratch operand']
  %s0 = inlined_call_operand.vmem [shape: bf16[2,256,32], index: 0, kind: input, shape index: {}]
  %s1 = inlined_call_operand.vmem [shape: bf16[2,256,32], index: 1, kind: input, shape index: {}]
  %s2 = inlined_call_operand.vmem [shape: bf16[4,32,8], index: 2, kind: input, shape index: {}]
  %s3 = inlined_call_operand.vmem [shape: bf16[4,32,8], index: 3, kind: input, shape index: {}]
  %s4 = inlined_call_operand.vmem [shape: bf16[4,32,8], index: 4, kind: input, shape index: {}]
  %s5 = inlined_call_operand.vmem [shape: bf16[4,8,32], index: 5, kind: input, shape index: {}]
  %s6 = inlined_call_operand.vmem [shape: f32[1,32], index: 6, kind: input, shape index: {}]
  %s7 = inlined_call_operand.vmem [shape: f32[2,256,32], index: 7, kind: output, shape index: {}]
  %s8 = sld [smem:[#allocation0]]
  $region73: #{tpu_custom_call.1} parent=0
    _
  %s10 = ssub.s32 1, %s8
  %s11 = scalar_select 0, %s10, %s8
  loop: start=0, step=1, limit=10
  $region2: #{tpu_custom_call.1} parent=0 // loop_pre_header
    _
  $region3: #{tpu_custom_call.1} parent=0 // loop_header
    %s13 = sphi 0, %s17
    %p14 = scmp.ge.s32.totalorder %s13, 10
    %s20 = sphi 0, %s39
    %s21 = sphi 0, %s35
    %s22 = sphi 0, %s31
    %s23 = sphi 0, %s20
    %s24 = sphi 0, %s21
    %s25 = sphi 0, %s22
    %s26 = sphi 0, %s23
    %s27 = sphi 0, %s24
    %s28 = sphi 0, %s25
    %s44 = sphi 0, %s46
    %s47 = sphi 0, %s44
    %s48 = sphi 0, %s47
    %s64 = sphi 0, %s48
    %s72 = sphi 0, %s74
    %s75 = sphi 0, %s72
    %s76 = sphi 0, %s75
    %s92 = sphi 0, %s76
    %s96 = sphi 0, %s96
    %s98 = sphi 0, %s96
    %s99 = sphi 0, %s98
    %s113 = sphi 0, %s99
    %s117 = sphi 0, %s117
    %s119 = sphi 0, %s117
    %s120 = sphi 0, %s119
    %s134 = sphi 0, %s120
    %s138 = sphi 0, %s138
    %s140 = sphi 0, %s138
    %s141 = sphi 0, %s140
    %s155 = sphi 0, %s141
    %s159 = sphi 0, %s159
    %s161 = sphi 0, %s159
    %s162 = sphi 0, %s161
    %s176 = sphi 0, %s162
    %s180 = sphi 0, %s180
    %s182 = sphi 0, %s180
    %s183 = sphi 0, %s182
    %s197 = sphi 0, %s183
    %s205 = sphi 0, %s207
    %s208 = sphi 0, %s205
    %s209 = sphi 0, %s208
    %s225 = sphi 0, %s209
  $region4: #{tpu_custom_call.1} parent=0 // loop_header_branch
    %16 = sbr.rel (%p14) target = $region8
  $region5: #{tpu_custom_call.1} parent=0 // loop_body
    %s18 = ssub.s32 %s13, 1
    %s19 = ssub.s32 %s13, 2
    %s29 = sadd.s32 1, %s22
    %p30 = scmp.ge.s32.totalorder %s29, 2
    %s31 = scalar_select %p30, 0, %s29
    %s32 = sadd.s32 1, %s21
    %s33 = scalar_select %p30, %s32, %s21
    %p34 = scmp.ge.s32.totalorder %s33, 2
    %s35 = scalar_select %p34, 0, %s33
    %s36 = sadd.s32 1, %s20
    %s37 = scalar_select %p34, %s36, %s20
    %p38 = scmp.ge.s32.totalorder %s37, 2
    %s39 = scalar_select %p38, 0, %s37
    %s40 = ssub.s32 %s20, %s39
    %s41 = ssub.s32 %s21, %s35
    %s42 = sor.u32 %s40, %s41
    %p43 = scmp.eq.s32.totalorder %s42, 0
    %s45 = sadd.s32 %s44, 1
    %s46 = scalar_select %p43, %s44, %s45
    %p49 = pneg %p43
    %p50 = scmp.eq.s32.totalorder %s13, 7
    %p51 = por %p49, %p50
    %p52 = scmp.ne.s32.totalorder %s44, %s47
    %p53 = scmp.eq.s32.totalorder %s13, 0
    %p54 = por %p52, %p53
    %p55 = scmp.ne.s32.totalorder %s44, %s47
    %p56 = scmp.eq.s32.totalorder %s18, 7
    %p57 = por %p55, %p56
    %p58 = scmp.ne.s32.totalorder %s47, %s48
    %p59 = scmp.eq.s32.totalorder %s18, 0
    %p60 = por %p58, %p59
    %p61 = scmp.ne.s32.totalorder %s47, %s48
    %p62 = scmp.eq.s32.totalorder %s19, 7
    %p63 = por %p61, %p62
    %p65 = scmp.ne.s32.totalorder %s48, %s64
    %p66 = scmp.eq.s32.totalorder %s19, 0
    %p67 = por %p65, %p66
    %s68 = ssub.s32 %s20, %s39
    %s69 = ssub.s32 %s22, %s31
    %s70 = sor.u32 %s68, %s69
    %p71 = scmp.eq.s32.totalorder %s70, 0
    %s73 = sadd.s32 %s72, 1
    %s74 = scalar_select %p71, %s72, %s73
    %p77 = pneg %p71
    %p78 = scmp.eq.s32.totalorder %s13, 7
    %p79 = por %p77, %p78
    %p80 = scmp.ne.s32.totalorder %s72, %s75
    %p81 = scmp.eq.s32.totalorder %s13, 0
    %p82 = por %p80, %p81
    %p83 = scmp.ne.s32.totalorder %s72, %s75
    %p84 = scmp.eq.s32.totalorder %s18, 7
    %p85 = por %p83, %p84
    %p86 = scmp.ne.s32.totalorder %s75, %s76
    %p87 = scmp.eq.s32.totalorder %s18, 0
    %p88 = por %p86, %p87
    %p89 = scmp.ne.s32.totalorder %s75, %s76
    %p90 = scmp.eq.s32.totalorder %s19, 7
    %p91 = por %p89, %p90
    %p93 = scmp.ne.s32.totalorder %s76, %s92
    %p94 = scmp.eq.s32.totalorder %s19, 0
    %p95 = por %p93, %p94
    %s97 = sadd.s32 %s96, 1
    %p100 = scmp.eq.s32.totalorder %s13, 7
    %p101 = scmp.ne.s32.totalorder %s96, %s98
    %p102 = scmp.eq.s32.totalorder %s13, 0
    %p103 = por %p101, %p102
    %p104 = scmp.ne.s32.totalorder %s96, %s98
    %p105 = scmp.eq.s32.totalorder %s18, 7
    %p106 = por %p104, %p105
    %p107 = scmp.ne.s32.totalorder %s98, %s99
    %p108 = scmp.eq.s32.totalorder %s18, 0
    %p109 = por %p107, %p108
    %p110 = scmp.ne.s32.totalorder %s98, %s99
    %p111 = scmp.eq.s32.totalorder %s19, 7
    %p112 = por %p110, %p111
    %p114 = scmp.ne.s32.totalorder %s99, %s113
    %p115 = scmp.eq.s32.totalorder %s19, 0
    %p116 = por %p114, %p115
    %s118 = sadd.s32 %s117, 1
    %p121 = scmp.eq.s32.totalorder %s13, 7
    %p122 = scmp.ne.s32.totalorder %s117, %s119
    %p123 = scmp.eq.s32.totalorder %s13, 0
    %p124 = por %p122, %p123
    %p125 = scmp.ne.s32.totalorder %s117, %s119
    %p126 = scmp.eq.s32.totalorder %s18, 7
    %p127 = por %p125, %p126
    %p128 = scmp.ne.s32.totalorder %s119, %s120
    %p129 = scmp.eq.s32.totalorder %s18, 0
    %p130 = por %p128, %p129
    %p131 = scmp.ne.s32.totalorder %s119, %s120
    %p132 = scmp.eq.s32.totalorder %s19, 7
    %p133 = por %p131, %p132
    %p135 = scmp.ne.s32.totalorder %s120, %s134
    %p136 = scmp.eq.s32.totalorder %s19, 0
    %p137 = por %p135, %p136
    %s139 = sadd.s32 %s138, 1
    %p142 = scmp.eq.s32.totalorder %s13, 7
    %p143 = scmp.ne.s32.totalorder %s138, %s140
    %p144 = scmp.eq.s32.totalorder %s13, 0
    %p145 = por %p143, %p144
    %p146 = scmp.ne.s32.totalorder %s138, %s140
    %p147 = scmp.eq.s32.totalorder %s18, 7
    %p148 = por %p146, %p147
    %p149 = scmp.ne.s32.totalorder %s140, %s141
    %p150 = scmp.eq.s32.totalorder %s18, 0
    %p151 = por %p149, %p150
    %p152 = scmp.ne.s32.totalorder %s140, %s141
    %p153 = scmp.eq.s32.totalorder %s19, 7
    %p154 = por %p152, %p153
    %p156 = scmp.ne.s32.totalorder %s141, %s155
    %p157 = scmp.eq.s32.totalorder %s19, 0
    %p158 = por %p156, %p157
    %s160 = sadd.s32 %s159, 1
    %p163 = scmp.eq.s32.totalorder %s13, 7
    %p164 = scmp.ne.s32.totalorder %s159, %s161
    %p165 = scmp.eq.s32.totalorder %s13, 0
    %p166 = por %p164, %p165
    %p167 = scmp.ne.s32.totalorder %s159, %s161
    %p168 = scmp.eq.s32.totalorder %s18, 7
    %p169 = por %p167, %p168
    %p170 = scmp.ne.s32.totalorder %s161, %s162
    %p171 = scmp.eq.s32.totalorder %s18, 0
    %p172 = por %p170, %p171
    %p173 = scmp.ne.s32.totalorder %s161, %s162
    %p174 = scmp.eq.s32.totalorder %s19, 7
    %p175 = por %p173, %p174
    %p177 = scmp.ne.s32.totalorder %s162, %s176
    %p178 = scmp.eq.s32.totalorder %s19, 0
    %p179 = por %p177, %p178
    %s181 = sadd.s32 %s180, 1
    %p184 = scmp.eq.s32.totalorder %s13, 7
    %p185 = scmp.ne.s32.totalorder %s180, %s182
    %p186 = scmp.eq.s32.totalorder %s13, 0
    %p187 = por %p185, %p186
    %p188 = scmp.ne.s32.totalorder %s180, %s182
    %p189 = scmp.eq.s32.totalorder %s18, 7
    %p190 = por %p188, %p189
    %p191 = scmp.ne.s32.totalorder %s182, %s183
    %p192 = scmp.eq.s32.totalorder %s18, 0
    %p193 = por %p191, %p192
    %p194 = scmp.ne.s32.totalorder %s182, %s183
    %p195 = scmp.eq.s32.totalorder %s19, 7
    %p196 = por %p194, %p195
    %p198 = scmp.ne.s32.totalorder %s183, %s197
    %p199 = scmp.eq.s32.totalorder %s19, 0
    %p200 = por %p198, %p199
    %s201 = ssub.s32 %s20, %s39
    %s202 = ssub.s32 %s21, %s35
    %s203 = sor.u32 %s201, %s202
    %p204 = scmp.eq.s32.totalorder %s203, 0
    %s206 = sadd.s32 %s205, 1
    %s207 = scalar_select %p204, %s205, %s206
    %p210 = pneg %p204
    %p211 = scmp.eq.s32.totalorder %s13, 7
    %p212 = por %p210, %p211
    %p213 = scmp.ne.s32.totalorder %s205, %s208
    %p214 = scmp.eq.s32.totalorder %s13, 0
    %p215 = por %p213, %p214
    %p216 = scmp.ne.s32.totalorder %s205, %s208
    %p217 = scmp.eq.s32.totalorder %s18, 7
    %p218 = por %p216, %p217
    %p219 = scmp.ne.s32.totalorder %s208, %s209
    %p220 = scmp.eq.s32.totalorder %s18, 0
    %p221 = por %p219, %p220
    %p222 = scmp.ne.s32.totalorder %s208, %s209
    %p223 = scmp.eq.s32.totalorder %s19, 7
    %p224 = por %p222, %p223
    %p226 = scmp.ne.s32.totalorder %s209, %s225
    %p227 = scmp.eq.s32.totalorder %s19, 0
    %p228 = por %p226, %p227
    %p229 = scmp.le.s32.totalorder 1, %s13
    %p230 = scmp.lt.s32.totalorder %s13, 9
    %p231 = pnand %p229, %p230
    %p232 = pneg %p231
    // Predicated region
    $region9: #{tpu_custom_call.1} parent=5 // pred_check
      _
    $region10: #{tpu_custom_call.1} parent=5 // pred_check_branch
      %234 = sbr.rel (%p231) target = $region12
    $region11: #{tpu_custom_call.1} parent=5 // pred_region
      %s235 = ssub.s32 %s13, 1
      // Predicated region
      $region13: #{tpu_custom_call.1} parent=11 // pred_check
        %p236 = pneg %p109
      $region14: #{tpu_custom_call.1} parent=11 // pred_check_branch
        %238 = sbr.rel (%p236) target = $region16
      $region15: #{tpu_custom_call.1} parent=11 // pred_region
        _
      $region16: #{tpu_custom_call.1} parent=11 // pred_fallthru
        _
      // Predicated region
      $region17: #{tpu_custom_call.1} parent=11 // pred_check
        %p239 = pneg %p130
      $region18: #{tpu_custom_call.1} parent=11 // pred_check_branch
        %241 = sbr.rel (%p239) target = $region20
      $region19: #{tpu_custom_call.1} parent=11 // pred_region
        _
      $region20: #{tpu_custom_call.1} parent=11 // pred_fallthru
        _
      // Predicated region
      $region21: #{tpu_custom_call.1} parent=11 // pred_check
        %p242 = pneg %p151
      $region22: #{tpu_custom_call.1} parent=11 // pred_check_branch
        %244 = sbr.rel (%p242) target = $region24
      $region23: #{tpu_custom_call.1} parent=11 // pred_region
        _
      $region24: #{tpu_custom_call.1} parent=11 // pred_fallthru
        _
      // Predicated region
      $region25: #{tpu_custom_call.1} parent=11 // pred_check
        %p245 = pneg %p172
      $region26: #{tpu_custom_call.1} parent=11 // pred_check_branch
        %247 = sbr.rel (%p245) target = $region28
      $region27: #{tpu_custom_call.1} parent=11 // pred_region
        _
      $region28: #{tpu_custom_call.1} parent=11 // pred_fallthru
        _
      // Predicated region
      $region29: #{tpu_custom_call.1} parent=11 // pred_check
        %p248 = pneg %p193
      $region30: #{tpu_custom_call.1} parent=11 // pred_check_branch
        %250 = sbr.rel (%p248) target = $region32
      $region31: #{tpu_custom_call.1} parent=11 // pred_region
        _
      $region32: #{tpu_custom_call.1} parent=11 // pred_fallthru
        _
    $region12: #{tpu_custom_call.1} parent=5 // pred_fallthru
      _
    %p251 = scmp.lt.s32.totalorder %s13, 8
    // Predicated region
    $region33: #{tpu_custom_call.1} parent=5 // pred_check
      %p252 = pneg %p251
    $region34: #{tpu_custom_call.1} parent=5 // pred_check_branch
      %254 = sbr.rel (%p252) target = $region36
    $region35: #{tpu_custom_call.1} parent=5 // pred_region
      // Predicated region
      $region37: #{tpu_custom_call.1} parent=35 // pred_check
        %p255 = pneg %p54
      $region38: #{tpu_custom_call.1} parent=35 // pred_check_branch
        %257 = sbr.rel (%p255) target = $region40
      $region39: #{tpu_custom_call.1} parent=35 // pred_region
        %s258 = smul.u32 16, %s21
        %p259 = scmp.lt.s32.totalorder %s20, 1
        %s260 = scalar_select %p259, %s20, 1
        %p261 = scmp.lt.s32.totalorder %s258, 31
        %s262 = scalar_select %p261, %s258, 31
        %s263 = smul.addr %s260, 32
        %s264 = sadd.s32 %s262, %s263
        %s265 = smul.addr %s264, 4
        %s266 = scalar_lea.vmem %s0, %s265
        %s267 = smul.u32 16, %s21
      $region40: #{tpu_custom_call.1} parent=35 // pred_fallthru
        _
      // Predicated region
      $region41: #{tpu_custom_call.1} parent=35 // pred_check
        %p268 = pneg %p82
      $region42: #{tpu_custom_call.1} parent=35 // pred_check_branch
        %270 = sbr.rel (%p268) target = $region44
      $region43: #{tpu_custom_call.1} parent=35 // pred_region
        %s271 = smul.u32 16, %s22
        %p272 = scmp.lt.s32.totalorder %s20, 1
        %s273 = scalar_select %p272, %s20, 1
        %p274 = scmp.lt.s32.totalorder %s271, 31
        %s275 = scalar_select %p274, %s271, 31
        %s276 = smul.addr %s273, 32
        %s277 = sadd.s32 %s275, %s276
        %s278 = smul.addr %s277, 4
        %s279 = scalar_lea.vmem %s1, %s278
        %s280 = smul.u32 16, %s22
      $region44: #{tpu_custom_call.1} parent=35 // pred_fallthru
        _
    $region36: #{tpu_custom_call.1} parent=5 // pred_fallthru
      _
    %p281 = scmp.le.s32.totalorder 1, %s13
    %p282 = scmp.lt.s32.totalorder %s13, 9
    %p283 = pnand %p281, %p282
    %p284 = pneg %p283
    // Predicated region
    $region45: #{tpu_custom_call.1} parent=5 // pred_check
      _
    $region46: #{tpu_custom_call.1} parent=5 // pred_check_branch
      %286 = sbr.rel (%p283) target = $region48
    $region47: #{tpu_custom_call.1} parent=5 // pred_region
      %s287 = ssub.s32 %s13, 1
      %s288 = smul.u32 16, %s24
      %p289 = scmp.lt.s32.totalorder %s23, 1
      %s290 = scalar_select %p289, %s23, 1
      %p291 = scmp.lt.s32.totalorder %s288, 31
      %s292 = scalar_select %p291, %s288, 31
      %s293 = smul.addr %s290, 32
      %s294 = sadd.s32 %s292, %s293
      %s295 = smul.addr %s294, 4
      %s296 = scalar_lea.vmem %s0, %s295
      %p297 = pneg %p60
      %p298 = pneg %p57
      %s299 = smul.u32 16, %s25
      %p300 = scmp.lt.s32.totalorder %s23, 1
      %s301 = scalar_select %p300, %s23, 1
      %p302 = scmp.lt.s32.totalorder %s299, 31
      %s303 = scalar_select %p302, %s299, 31
      %s304 = smul.addr %s301, 32
      %s305 = sadd.s32 %s303, %s304
      %s306 = smul.addr %s305, 4
      %s307 = scalar_lea.vmem %s1, %s306
      %p308 = pneg %p88
      %p309 = pneg %p85
      %p310 = pneg %p109
      %p311 = pneg %p106
      %p312 = pneg %p130
      %p313 = pneg %p127
      %p314 = pneg %p151
      %p315 = pneg %p148
      %p316 = pneg %p172
      %p317 = pneg %p169
      %p318 = pneg %p193
      %p319 = pneg %p190
      %p320 = pneg %p221
      %p321 = pneg %p218
      %s322 = smul.u32 16, %s24
      %p323 = scmp.lt.s32.totalorder %s23, 1
      %s324 = scalar_select %p323, %s23, 1
      %p325 = scmp.lt.s32.totalorder %s322, 31
      %s326 = scalar_select %p325, %s322, 31
      %s327 = smul.addr %s324, 32
      %s328 = sadd.s32 %s326, %s327
      %s329 = smul.addr %s328, 8
      %s330 = scalar_lea.vmem %s7, %s329
      %s331 = smul.u32 16, %s24
      %p332 = scmp.lt.s32.totalorder %s23, 1
      %s333 = scalar_select %p332, %s23, 1
      %p334 = scmp.lt.s32.totalorder %s331, 31
      %s335 = scalar_select %p334, %s331, 31
      %s336 = smul.addr %s333, 32
      %s337 = sadd.s32 %s335, %s336
      %s338 = smul.addr %s337, 4
      %s339 = scalar_lea.vmem %s0, %s338
      %s340 = smul.u32 16, %s24
      %s341 = smul.u32 16, %s25
      %p342 = scmp.lt.s32.totalorder %s23, 1
      %s343 = scalar_select %p342, %s23, 1
      %p344 = scmp.lt.s32.totalorder %s341, 31
      %s345 = scalar_select %p344, %s341, 31
      %s346 = smul.addr %s343, 32
      %s347 = sadd.s32 %s345, %s346
      %s348 = smul.addr %s347, 4
      %s349 = scalar_lea.vmem %s1, %s348
      %s350 = smul.u32 16, %s25
      %s351 = smul.u32 16, %s24
      %p352 = scmp.lt.s32.totalorder %s23, 1
      %s353 = scalar_select %p352, %s23, 1
      %p354 = scmp.lt.s32.totalorder %s351, 31
      %s355 = scalar_select %p354, %s351, 31
      %s356 = smul.addr %s353, 32
      %s357 = sadd.s32 %s355, %s356
      %s358 = smul.addr %s357, 8
      %s359 = scalar_lea.vmem %s7, %s358
      %s360 = smul.u32 16, %s24
      %p362 = scmp.eq.s32.totalorder %s25, 0
      // Predicated region
      $region49: #{tpu_custom_call.1} parent=47 // pred_check
        %p363 = pneg %p362
      $region50: #{tpu_custom_call.1} parent=47 // pred_check_branch
        %365 = sbr.rel (%p363) target = $region52
      $region51: #{tpu_custom_call.1} parent=47 // pred_region
        %v366 = vld [vmem:[%s339] sm:$0xf]
        %v367 = vld [vmem:[%s339 + $0x4] sm:$0xf]
        %v368 = vld [vmem:[%s339 + $0x8] sm:$0xf]
        %v369 = vld [vmem:[%s339 + $0xc] sm:$0xf]
        %v370 = vld [vmem:[%s339 + $0x10] sm:$0xf]
        %v371 = vld [vmem:[%s339 + $0x14] sm:$0xf]
        %v372 = vld [vmem:[%s339 + $0x18] sm:$0xf]
        %v373 = vld [vmem:[%s339 + $0x1c] sm:$0xf]
        %v374 = vld [vmem:[%s339 + $0x20] sm:$0xf]
        %v375 = vld [vmem:[%s339 + $0x24] sm:$0xf]
        %v376 = vld [vmem:[%s339 + $0x28] sm:$0xf]
        %v377 = vld [vmem:[%s339 + $0x2c] sm:$0xf]
        %v378 = vld [vmem:[%s339 + $0x30] sm:$0xf]
        %v379 = vld [vmem:[%s339 + $0x34] sm:$0xf]
        %v380 = vld [vmem:[%s339 + $0x38] sm:$0xf]
        %v381 = vld [vmem:[%s339 + $0x3c] sm:$0xf]
        %v382 = vld [vmem:[%s2] sm:$0xf]
        %v383 = vld [vmem:[%s2 + $0x4] sm:$0xf]
        %v384 = vld [vmem:[%s2 + $0x8] sm:$0xf]
        %v385 = vld [vmem:[%s2 + $0xc] sm:$0xf]
        %v386 = vld [vmem:[%s2 + $0x10] sm:$0xf]
        %v387 = vld [vmem:[%s2 + $0x14] sm:$0xf]
        %v388 = vld [vmem:[%s2 + $0x18] sm:$0xf]
        %v389 = vld [vmem:[%s2 + $0x1c] sm:$0xf]
        %v390 = vld [vmem:[%s2 + $0x20] sm:$0xf]
        %v391 = vld [vmem:[%s2 + $0x24] sm:$0xf]
        %v392 = vld [vmem:[%s2 + $0x28] sm:$0xf]
        %v393 = vld [vmem:[%s2 + $0x2c] sm:$0xf]
        %v394 = vld [vmem:[%s2 + $0x30] sm:$0xf]
        %v395 = vld [vmem:[%s2 + $0x34] sm:$0xf]
        %v396 = vld [vmem:[%s2 + $0x38] sm:$0xf]
        %v397 = vld [vmem:[%s2 + $0x3c] sm:$0xf]
        %v414 = vunpack.c.l.b16 %v366
        %v415 = vunpack.c.l.b16 %v367
        %v416 = vunpack.c.l.b16 %v368
        %v417 = vunpack.c.l.b16 %v369
        %v418 = vunpack.c.l.b16 %v370
        %v419 = vunpack.c.l.b16 %v371
        %v420 = vunpack.c.l.b16 %v372
        %v421 = vunpack.c.l.b16 %v373
        %v422 = vunpack.c.l.b16 %v374
        %v423 = vunpack.c.l.b16 %v375
        %v424 = vunpack.c.l.b16 %v376
        %v425 = vunpack.c.l.b16 %v377
        %v426 = vunpack.c.l.b16 %v378
        %v427 = vunpack.c.l.b16 %v379
        %v428 = vunpack.c.l.b16 %v380
        %v429 = vunpack.c.l.b16 %v381
        %v430 = vpack.c.b16 %v415, %v414
        %v431 = vpack.c.b16 %v417, %v416
        %v432 = vpack.c.b16 %v419, %v418
        %v433 = vpack.c.b16 %v421, %v420
        %v434 = vpack.c.b16 %v423, %v422
        %v435 = vpack.c.b16 %v425, %v424
        %v436 = vpack.c.b16 %v427, %v426
        %v437 = vpack.c.b16 %v429, %v428
        %v442 = vunpack.c.l.b16 %v382
        %v443 = vunpack.c.l.b16 %v383
        %v444 = vunpack.c.l.b16 %v384
        %v445 = vunpack.c.l.b16 %v385
        %v446 = vpack.c.b16 %v443, %v442
        %v447 = vpack.c.b16 %v445, %v444
        %vm450 = vcmask 261120
        %v452 = vsel %vm450, %v430, 0
        %v455 = vsel %vm450, %v431, 0
        %v458 = vsel %vm450, %v432, 0
        %v461 = vsel %vm450, %v433, 0
        %v464 = vsel %vm450, %v434, 0
        %v467 = vsel %vm450, %v435, 0
        %v470 = vsel %vm450, %v436, 0
        %v473 = vsel %vm450, %v437, 0
        %475 = vmatprep.subr.bf16.mxu0 0
        %476 = vmatpush1.bf16.msra.mxu0 %v446
        %477 = vmatprep.subr.bf16.mxu0 0
        %478 = vmatpush1.bf16.msra.mxu0 %v447
        %479 = vmatprep.subr.bf16.mxu0 0
        %480 = vmatpush1.bf16.msra.mxu0 0
        %481 = vmatprep.subr.bf16.mxu0 0
        %482 = vmatpush1.bf16.msra.mxu0 0
        %483 = vmatprep.subr.bf16.mxu0 0
        %484 = vmatpush1.bf16.msra.mxu0 0
        %485 = vmatprep.subr.bf16.mxu0 0
        %486 = vmatpush1.bf16.msra.mxu0 0
        %487 = vmatprep.subr.bf16.mxu0 0
        %488 = vmatpush1.bf16.msra.mxu0 0
        %489 = vmatprep.subr.bf16.mxu0 0
        %490 = vmatpush1.bf16.msra.mxu0 0
        %491 = vmatprep.subr.bf16.mxu0 0
        %492 = vmatpush1.bf16.msra.mxu0 0
        %493 = vmatprep.subr.bf16.mxu0 0
        %494 = vmatpush1.bf16.msra.mxu0 0
        %495 = vmatprep.subr.bf16.mxu0 0
        %496 = vmatpush1.bf16.msra.mxu0 0
        %497 = vmatprep.subr.bf16.mxu0 0
        %498 = vmatpush1.bf16.msra.mxu0 0
        %499 = vmatprep.subr.bf16.mxu0 0
        %500 = vmatpush1.bf16.msra.mxu0 0
        %501 = vmatprep.subr.bf16.mxu0 0
        %502 = vmatpush1.bf16.msra.mxu0 0
        %503 = vmatprep.subr.bf16.mxu0 0
        %504 = vmatpush1.bf16.msra.mxu0 0
        %505 = vmatprep.subr.bf16.mxu0 0
        %506 = vmatpush1.bf16.msra.mxu0 0
        %507 = vmatprep.mubr.bf16.mxu0 0
        %508 = vmatmul.mubr.bf16.gmra.mrb[0].mxu0 %v452
        %v509 = vpop.f32.mrb[0].mxu0
        %v510 = vadd.f32 0.0, %v509
        %v511 = vpop.f32.mrb[0].mxu0
        %v512 = vpop.f32.mrb[0].mxu0
        %v513 = vadd.f32 0.0, %v512
        %v514 = vpop.f32.mrb[0].mxu0
        %515 = vmatprep.mubr.bf16.mxu0 0
        %516 = vmatmul.mubr.bf16.gmra.mrb[0].mxu0 %v455
        %v517 = vpop.f32.mrb[0].mxu0
        %v518 = vadd.f32 0.0, %v517
        %v519 = vpop.f32.mrb[0].mxu0
        %v520 = vpop.f32.mrb[0].mxu0
        %v521 = vadd.f32 0.0, %v520
        %v522 = vpop.f32.mrb[0].mxu0
        %523 = vmatprep.mubr.bf16.mxu0 0
        %524 = vmatmul.mubr.bf16.gmra.mrb[0].mxu0 %v458
        %v525 = vpop.f32.mrb[0].mxu0
        %v526 = vadd.f32 0.0, %v525
        %v527 = vpop.f32.mrb[0].mxu0
        %v528 = vpop.f32.mrb[0].mxu0
        %v529 = vadd.f32 0.0, %v528
        %v530 = vpop.f32.mrb[0].mxu0
        %531 = vmatprep.mubr.bf16.mxu0 0
        %532 = vmatmul.mubr.bf16.gmra.mrb[0].mxu0 %v461
        %v533 = vpop.f32.mrb[0].mxu0
        %v534 = vadd.f32 0.0, %v533
        %v535 = vpop.f32.mrb[0].mxu0
        %v536 = vpop.f32.mrb[0].mxu0
        %v537 = vadd.f32 0.0, %v536
        %v538 = vpop.f32.mrb[0].mxu0
        %539 = vmatprep.mubr.bf16.mxu0 0
        %540 = vmatmul.mubr.bf16.gmra.mrb[0].mxu0 %v464
        %v541 = vpop.f32.mrb[0].mxu0
        %v542 = vadd.f32 0.0, %v541
        %v543 = vpop.f32.mrb[0].mxu0
        %v544 = vpop.f32.mrb[0].mxu0
        %v545 = vadd.f32 0.0, %v544
        %v546 = vpop.f32.mrb[0].mxu0
        %547 = vmatprep.mubr.bf16.mxu0 0
        %548 = vmatmul.mubr.bf16.gmra.mrb[0].mxu0 %v467
        %v549 = vpop.f32.mrb[0].mxu0
        %v550 = vadd.f32 0.0, %v549
        %v551 = vpop.f32.mrb[0].mxu0
        %v552 = vpop.f32.mrb[0].mxu0
        %v553 = vadd.f32 0.0, %v552
        %v554 = vpop.f32.mrb[0].mxu0
        %555 = vmatprep.mubr.bf16.mxu0 0
        %556 = vmatmul.mubr.bf16.gmra.mrb[0].mxu0 %v470
        %v557 = vpop.f32.mrb[0].mxu0
        %v558 = vadd.f32 0.0, %v557
        %v559 = vpop.f32.mrb[0].mxu0
        %v560 = vpop.f32.mrb[0].mxu0
        %v561 = vadd.f32 0.0, %v560
        %v562 = vpop.f32.mrb[0].mxu0
        %563 = vmatprep.mubr.bf16.mxu0 0
        %564 = vmatmul.mubr.bf16.gmra.mrb[0].mxu0 %v473
        %v565 = vpop.f32.mrb[0].mxu0
        %v566 = vadd.f32 0.0, %v565
        %v567 = vpop.f32.mrb[0].mxu0
        %v568 = vpop.f32.mrb[0].mxu0
        %v569 = vadd.f32 0.0, %v568
        %v570 = vpop.f32.mrb[0].mxu0
        %571 = vdwg.mxu0
        %v576 = vunpack.c.l.b16 %v386
        %v577 = vunpack.c.l.b16 %v387
        %v578 = vunpack.c.l.b16 %v388
        %v579 = vunpack.c.l.b16 %v389
        %v580 = vpack.c.b16 %v577, %v576
        %v581 = vpack.c.b16 %v579, %v578
        %584 = vmatprep.subr.bf16.mxu0 0
        %585 = vmatpush1.bf16.msra.mxu0 %v580
        %586 = vmatprep.subr.bf16.mxu0 0
        %587 = vmatpush1.bf16.msra.mxu0 %v581
        %588 = vmatprep.subr.bf16.mxu0 0
        %589 = vmatpush1.bf16.msra.mxu0 0
        %590 = vmatprep.subr.bf16.mxu0 0
        %591 = vmatpush1.bf16.msra.mxu0 0
        %592 = vmatprep.subr.bf16.mxu0 0
        %593 = vmatpush1.bf16.msra.mxu0 0
        %594 = vmatprep.subr.bf16.mxu0 0
        %595 = vmatpush1.bf16.msra.mxu0 0
        %596 = vmatprep.subr.bf16.mxu0 0
        %597 = vmatpush1.bf16.msra.mxu0 0
        %598 = vmatprep.subr.bf16.mxu0 0
        %599 = vmatpush1.bf16.msra.mxu0 0
        %600 = vmatprep.subr.bf16.mxu0 0
        %601 = vmatpush1.bf16.msra.mxu0 0
        %602 = vmatprep.subr.bf16.mxu0 0
        %603 = vmatpush1.bf16.msra.mxu0 0
        %604 = vmatprep.subr.bf16.mxu0 0
        %605 = vmatpush1.bf16.msra.mxu0 0
        %606 = vmatprep.subr.bf16.mxu0 0
        %607 = vmatpush1.bf16.msra.mxu0 0
        %608 = vmatprep.subr.bf16.mxu0 0
        %609 = vmatpush1.bf16.msra.mxu0 0
        %610 = vmatprep.subr.bf16.mxu0 0
        %611 = vmatpush1.bf16.msra.mxu0 0
        %612 = vmatprep.subr.bf16.mxu0 0
        %613 = vmatpush1.bf16.msra.mxu0 0
        %614 = vmatprep.subr.bf16.mxu0 0
        %615 = vmatpush1.bf16.msra.mxu0 0
        %616 = vmatprep.mubr.bf16.mxu0 0
        %617 = vmatmul.mubr.bf16.gmra.mrb[0].mxu0 %v452
        %v618 = vpop.f32.mrb[0].mxu0
        %v619 = vadd.f32 0.0, %v618
        %v620 = vpop.f32.mrb[0].mxu0
        %v621 = vpop.f32.mrb[0].mxu0
        %v622 = vadd.f32 0.0, %v621
        %v623 = vpop.f32.mrb[0].mxu0
        %624 = vmatprep.mubr.bf16.mxu0 0
        %625 = vmatmul.mubr.bf16.gmra.mrb[0].mxu0 %v455
        %v626 = vpop.f32.mrb[0].mxu0
        %v627 = vadd.f32 0.0, %v626
        %v628 = vpop.f32.mrb[0].mxu0
        %v629 = vpop.f32.mrb[0].mxu0
        %v630 = vadd.f32 0.0, %v629
        %v631 = vpop.f32.mrb[0].mxu0
        %632 = vmatprep.mubr.bf16.mxu0 0
        %633 = vmatmul.mubr.bf16.gmra.mrb[0].mxu0 %v458
        %v634 = vpop.f32.mrb[0].mxu0
        %v635 = vadd.f32 0.0, %v634
        %v636 = vpop.f32.mrb[0].mxu0
        %v637 = vpop.f32.mrb[0].mxu0
        %v638 = vadd.f32 0.0, %v637
        %v639 = vpop.f32.mrb[0].mxu0
        %640 = vmatprep.mubr.bf16.mxu0 0
        %641 = vmatmul.mubr.bf16.gmra.mrb[0].mxu0 %v461
        %v642 = vpop.f32.mrb[0].mxu0
        %v643 = vadd.f32 0.0, %v642
        %v644 = vpop.f32.mrb[0].mxu0
        %v645 = vpop.f32.mrb[0].mxu0
        %v646 = vadd.f32 0.0, %v645
        %v647 = vpop.f32.mrb[0].mxu0
        %648 = vmatprep.mubr.bf16.mxu0 0
        %649 = vmatmul.mubr.bf16.gmra.mrb[0].mxu0 %v464
        %v650 = vpop.f32.mrb[0].mxu0
        %v651 = vadd.f32 0.0, %v650
        %v652 = vpop.f32.mrb[0].mxu0
        %v653 = vpop.f32.mrb[0].mxu0
        %v654 = vadd.f32 0.0, %v653
        %v655 = vpop.f32.mrb[0].mxu0
        %656 = vmatprep.mubr.bf16.mxu0 0
        %657 = vmatmul.mubr.bf16.gmra.mrb[0].mxu0 %v467
        %v658 = vpop.f32.mrb[0].mxu0
        %v659 = vadd.f32 0.0, %v658
        %v660 = vpop.f32.mrb[0].mxu0
        %v661 = vpop.f32.mrb[0].mxu0
        %v662 = vadd.f32 0.0, %v661
        %v663 = vpop.f32.mrb[0].mxu0
        %664 = vmatprep.mubr.bf16.mxu0 0
        %665 = vmatmul.mubr.bf16.gmra.mrb[0].mxu0 %v470
        %v666 = vpop.f32.mrb[0].mxu0
        %v667 = vadd.f32 0.0, %v666
        %v668 = vpop.f32.mrb[0].mxu0
        %v669 = vpop.f32.mrb[0].mxu0
        %v670 = vadd.f32 0.0, %v669
        %v671 = vpop.f32.mrb[0].mxu0
        %672 = vmatprep.mubr.bf16.mxu0 0
        %673 = vmatmul.mubr.bf16.gmra.mrb[0].mxu0 %v473
        %v674 = vpop.f32.mrb[0].mxu0
        %v675 = vadd.f32 0.0, %v674
        %v676 = vpop.f32.mrb[0].mxu0
        %v677 = vpop.f32.mrb[0].mxu0
        %v678 = vadd.f32 0.0, %v677
        %v679 = vpop.f32.mrb[0].mxu0
        %680 = vdwg.mxu0
        %v685 = vunpack.c.l.b16 %v390
        %v686 = vunpack.c.l.b16 %v391
        %v687 = vunpack.c.l.b16 %v392
        %v688 = vunpack.c.l.b16 %v393
        %v689 = vpack.c.b16 %v686, %v685
        %v690 = vpack.c.b16 %v688, %v687
        %693 = vmatprep.subr.bf16.mxu0 0
        %694 = vmatpush1.bf16.msra.mxu0 %v689
        %695 = vmatprep.subr.bf16.mxu0 0
        %696 = vmatpush1.bf16.msra.mxu0 %v690
        %697 = vmatprep.subr.bf16.mxu0 0
        %698 = vmatpush1.bf16.msra.mxu0 0
        %699 = vmatprep.subr.bf16.mxu0 0
        %700 = vmatpush1.bf16.msra.mxu0 0
        %701 = vmatprep.subr.bf16.mxu0 0
        %702 = vmatpush1.bf16.msra.mxu0 0
        %703 = vmatprep.subr.bf16.mxu0 0
        %704 = vmatpush1.bf16.msra.mxu0 0
        %705 = vmatprep.subr.bf16.mxu0 0
        %706 = vmatpush1.bf16.msra.mxu0 0
        %707 = vmatprep.subr.bf16.mxu0 0
        %708 = vmatpush1.bf16.msra.mxu0 0
        %709 = vmatprep.subr.bf16.mxu0 0
        %710 = vmatpush1.bf16.msra.mxu0 0
        %711 = vmatprep.subr.bf16.mxu0 0
        %712 = vmatpush1.bf16.msra.mxu0 0
        %713 = vmatprep.subr.bf16.mxu0 0
        %714 = vmatpush1.bf16.msra.mxu0 0
        %715 = vmatprep.subr.bf16.mxu0 0
        %716 = vmatpush1.bf16.msra.mxu0 0
        %717 = vmatprep.subr.bf16.mxu0 0
        %718 = vmatpush1.bf16.msra.mxu0 0
        %719 = vmatprep.subr.bf16.mxu0 0
        %720 = vmatpush1.bf16.msra.mxu0 0
        %721 = vmatprep.subr.bf16.mxu0 0
        %722 = vmatpush1.bf16.msra.mxu0 0
        %723 = vmatprep.subr.bf16.mxu0 0
        %724 = vmatpush1.bf16.msra.mxu0 0
        %725 = vmatprep.mubr.bf16.mxu0 0
        %726 = vmatmul.mubr.bf16.gmra.mrb[0].mxu0 %v452
        %v727 = vpop.f32.mrb[0].mxu0
        %v728 = vadd.f32 0.0, %v727
        %v729 = vpop.f32.mrb[0].mxu0
        %v730 = vpop.f32.mrb[0].mxu0
        %v731 = vadd.f32 0.0, %v730
        %v732 = vpop.f32.mrb[0].mxu0
        %733 = vmatprep.mubr.bf16.mxu0 0
        %734 = vmatmul.mubr.bf16.gmra.mrb[0].mxu0 %v455
        %v735 = vpop.f32.mrb[0].mxu0
        %v736 = vadd.f32 0.0, %v735
        %v737 = vpop.f32.mrb[0].mxu0
        %v738 = vpop.f32.mrb[0].mxu0
        %v739 = vadd.f32 0.0, %v738
        %v740 = vpop.f32.mrb[0].mxu0
        %741 = vmatprep.mubr.bf16.mxu0 0
        %742 = vmatmul.mubr.bf16.gmra.mrb[0].mxu0 %v458
        %v743 = vpop.f32.mrb[0].mxu0
        %v744 = vadd.f32 0.0, %v743
        %v745 = vpop.f32.mrb[0].mxu0
        %v746 = vpop.f32.mrb[0].mxu0
        %v747 = vadd.f32 0.0, %v746
        %v748 = vpop.f32.mrb[0].mxu0
        %749 = vmatprep.mubr.bf16.mxu0 0
        %750 = vmatmul.mubr.bf16.gmra.mrb[0].mxu0 %v461
        %v751 = vpop.f32.mrb[0].mxu0
        %v752 = vadd.f32 0.0, %v751
        %v753 = vpop.f32.mrb[0].mxu0
        %v754 = vpop.f32.mrb[0].mxu0
        %v755 = vadd.f32 0.0, %v754
        %v756 = vpop.f32.mrb[0].mxu0
        %757 = vmatprep.mubr.bf16.mxu0 0
        %758 = vmatmul.mubr.bf16.gmra.mrb[0].mxu0 %v464
        %v759 = vpop.f32.mrb[0].mxu0
        %v760 = vadd.f32 0.0, %v759
        %v761 = vpop.f32.mrb[0].mxu0
        %v762 = vpop.f32.mrb[0].mxu0
        %v763 = vadd.f32 0.0, %v762
        %v764 = vpop.f32.mrb[0].mxu0
        %765 = vmatprep.mubr.bf16.mxu0 0
        %766 = vmatmul.mubr.bf16.gmra.mrb[0].mxu0 %v467
        %v767 = vpop.f32.mrb[0].mxu0
        %v768 = vadd.f32 0.0, %v767
        %v769 = vpop.f32.mrb[0].mxu0
        %v770 = vpop.f32.mrb[0].mxu0
        %v771 = vadd.f32 0.0, %v770
        %v772 = vpop.f32.mrb[0].mxu0
        %773 = vmatprep.mubr.bf16.mxu0 0
        %774 = vmatmul.mubr.bf16.gmra.mrb[0].mxu0 %v470
        %v775 = vpop.f32.mrb[0].mxu0
        %v776 = vadd.f32 0.0, %v775
        %v777 = vpop.f32.mrb[0].mxu0
        %v778 = vpop.f32.mrb[0].mxu0
        %v779 = vadd.f32 0.0, %v778
        %v780 = vpop.f32.mrb[0].mxu0
        %781 = vmatprep.mubr.bf16.mxu0 0
        %782 = vmatmul.mubr.bf16.gmra.mrb[0].mxu0 %v473
        %v783 = vpop.f32.mrb[0].mxu0
        %v784 = vadd.f32 0.0, %v783
        %v785 = vpop.f32.mrb[0].mxu0
        %v786 = vpop.f32.mrb[0].mxu0
        %v787 = vadd.f32 0.0, %v786
        %v788 = vpop.f32.mrb[0].mxu0
        %789 = vdwg.mxu0
        %v794 = vunpack.c.l.b16 %v394
        %v795 = vunpack.c.l.b16 %v395
        %v796 = vunpack.c.l.b16 %v396
        %v797 = vunpack.c.l.b16 %v397
        %v798 = vpack.c.b16 %v795, %v794
        %v799 = vpack.c.b16 %v797, %v796
        %802 = vmatprep.subr.bf16.mxu0 0
        %803 = vmatpush1.bf16.msra.mxu0 %v798
        %804 = vmatprep.subr.bf16.mxu0 0
        %805 = vmatpush1.bf16.msra.mxu0 %v799
        %806 = vmatprep.subr.bf16.mxu0 0
        %807 = vmatpush1.bf16.msra.mxu0 0
        %808 = vmatprep.subr.bf16.mxu0 0
        %809 = vmatpush1.bf16.msra.mxu0 0
        %810 = vmatprep.subr.bf16.mxu0 0
        %811 = vmatpush1.bf16.msra.mxu0 0
        %812 = vmatprep.subr.bf16.mxu0 0
        %813 = vmatpush1.bf16.msra.mxu0 0
        %814 = vmatprep.subr.bf16.mxu0 0
        %815 = vmatpush1.bf16.msra.mxu0 0
        %816 = vmatprep.subr.bf16.mxu0 0
        %817 = vmatpush1.bf16.msra.mxu0 0
        %818 = vmatprep.subr.bf16.mxu0 0
        %819 = vmatpush1.bf16.msra.mxu0 0
        %820 = vmatprep.subr.bf16.mxu0 0
        %821 = vmatpush1.bf16.msra.mxu0 0
        %822 = vmatprep.subr.bf16.mxu0 0
        %823 = vmatpush1.bf16.msra.mxu0 0
        %824 = vmatprep.subr.bf16.mxu0 0
        %825 = vmatpush1.bf16.msra.mxu0 0
        %826 = vmatprep.subr.bf16.mxu0 0
        %827 = vmatpush1.bf16.msra.mxu0 0
        %828 = vmatprep.subr.bf16.mxu0 0
        %829 = vmatpush1.bf16.msra.mxu0 0
        %830 = vmatprep.subr.bf16.mxu0 0
        %831 = vmatpush1.bf16.msra.mxu0 0
        %832 = vmatprep.subr.bf16.mxu0 0
        %833 = vmatpush1.bf16.msra.mxu0 0
        %834 = vmatprep.mubr.bf16.mxu0 0
        %835 = vmatmul.mubr.bf16.gmra.mrb[0].mxu0 %v452
        %v836 = vpop.f32.mrb[0].mxu0
        %v837 = vadd.f32 0.0, %v836
        %v838 = vpop.f32.mrb[0].mxu0
        %v839 = vpop.f32.mrb[0].mxu0
        %v840 = vadd.f32 0.0, %v839
        %v841 = vpop.f32.mrb[0].mxu0
        %842 = vmatprep.mubr.bf16.mxu0 0
        %843 = vmatmul.mubr.bf16.gmra.mrb[0].mxu0 %v455
        %v844 = vpop.f32.mrb[0].mxu0
        %v845 = vadd.f32 0.0, %v844
        %v846 = vpop.f32.mrb[0].mxu0
        %v847 = vpop.f32.mrb[0].mxu0
        %v848 = vadd.f32 0.0, %v847
        %v849 = vpop.f32.mrb[0].mxu0
        %850 = vmatprep.mubr.bf16.mxu0 0
        %851 = vmatmul.mubr.bf16.gmra.mrb[0].mxu0 %v458
        %v852 = vpop.f32.mrb[0].mxu0
        %v853 = vadd.f32 0.0, %v852
        %v854 = vpop.f32.mrb[0].mxu0
        %v855 = vpop.f32.mrb[0].mxu0
        %v856 = vadd.f32 0.0, %v855
        %v857 = vpop.f32.mrb[0].mxu0
        %858 = vmatprep.mubr.bf16.mxu0 0
        %859 = vmatmul.mubr.bf16.gmra.mrb[0].mxu0 %v461
        %v860 = vpop.f32.mrb[0].mxu0
        %v861 = vadd.f32 0.0, %v860
        %v862 = vpop.f32.mrb[0].mxu0
        %v863 = vpop.f32.mrb[0].mxu0
        %v864 = vadd.f32 0.0, %v863
        %v865 = vpop.f32.mrb[0].mxu0
        %866 = vmatprep.mubr.bf16.mxu0 0
        %867 = vmatmul.mubr.bf16.gmra.mrb[0].mxu0 %v464
        %v868 = vpop.f32.mrb[0].mxu0
        %v869 = vadd.f32 0.0, %v868
        %v870 = vpop.f32.mrb[0].mxu0
        %v871 = vpop.f32.mrb[0].mxu0
        %v872 = vadd.f32 0.0, %v871
        %v873 = vpop.f32.mrb[0].mxu0
        %874 = vmatprep.mubr.bf16.mxu0 0
        %875 = vmatmul.mubr.bf16.gmra.mrb[0].mxu0 %v467
        %v876 = vpop.f32.mrb[0].mxu0
        %v877 = vadd.f32 0.0, %v876
        %v878 = vpop.f32.mrb[0].mxu0
        %v879 = vpop.f32.mrb[0].mxu0
        %v880 = vadd.f32 0.0, %v879
        %v881 = vpop.f32.mrb[0].mxu0
        %882 = vmatprep.mubr.bf16.mxu0 0
        %883 = vmatmul.mubr.bf16.gmra.mrb[0].mxu0 %v470
        %v884 = vpop.f32.mrb[0].mxu0
        %v885 = vadd.f32 0.0, %v884
        %v886 = vpop.f32.mrb[0].mxu0
        %v887 = vpop.f32.mrb[0].mxu0
        %v888 = vadd.f32 0.0, %v887
        %v889 = vpop.f32.mrb[0].mxu0
        %890 = vmatprep.mubr.bf16.mxu0 0
        %891 = vmatmul.mubr.bf16.gmra.mrb[0].mxu0 %v473
        %v892 = vpop.f32.mrb[0].mxu0
        %v893 = vadd.f32 0.0, %v892
        %v894 = vpop.f32.mrb[0].mxu0
        %v895 = vpop.f32.mrb[0].mxu0
        %v896 = vadd.f32 0.0, %v895
        %v897 = vpop.f32.mrb[0].mxu0
        %898 = vdwg.mxu0
        %v899 = vpack.c.bf16 %v513, %v510
        %v900 = vpack.c.bf16 %v521, %v518
        %v901 = vpack.c.bf16 %v529, %v526
        %v902 = vpack.c.bf16 %v537, %v534
        %v903 = vpack.c.bf16 %v545, %v542
        %v904 = vpack.c.bf16 %v553, %v550
        %v905 = vpack.c.bf16 %v561, %v558
        %v906 = vpack.c.bf16 %v569, %v566
        %v907 = vpack.c.bf16 %v622, %v619
        %v908 = vpack.c.bf16 %v630, %v627
        %v909 = vpack.c.bf16 %v638, %v635
        %v910 = vpack.c.bf16 %v646, %v643
        %v911 = vpack.c.bf16 %v654, %v651
        %v912 = vpack.c.bf16 %v662, %v659
        %v913 = vpack.c.bf16 %v670, %v667
        %v914 = vpack.c.bf16 %v678, %v675
        %v915 = vpack.c.bf16 %v731, %v728
        %v916 = vpack.c.bf16 %v739, %v736
        %v917 = vpack.c.bf16 %v747, %v744
        %v918 = vpack.c.bf16 %v755, %v752
        %v919 = vpack.c.bf16 %v763, %v760
        %v920 = vpack.c.bf16 %v771, %v768
        %v921 = vpack.c.bf16 %v779, %v776
        %v922 = vpack.c.bf16 %v787, %v784
        %v923 = vpack.c.bf16 %v840, %v837
        %v924 = vpack.c.bf16 %v848, %v845
        %v925 = vpack.c.bf16 %v856, %v853
        %v926 = vpack.c.bf16 %v864, %v861
        %v927 = vpack.c.bf16 %v872, %v869
        %v928 = vpack.c.bf16 %v880, %v877
        %v929 = vpack.c.bf16 %v888, %v885
        %v930 = vpack.c.bf16 %v896, %v893
        %vm931 = vcmask 64512
        %932 = vst.msk [vmem:[#allocation2] sm:$0xff] %vm931, %v899
        %933 = vst.msk [vmem:[#allocation2 + $0x8] sm:$0xff] %vm931, %v900
        %934 = vst.msk [vmem:[#allocation2 + $0x10] sm:$0xff] %vm931, %v901
        %935 = vst.msk [vmem:[#allocation2 + $0x18] sm:$0xff] %vm931, %v902
        %936 = vst.msk [vmem:[#allocation2 + $0x20] sm:$0xff] %vm931, %v903
        %937 = vst.msk [vmem:[#allocation2 + $0x28] sm:$0xff] %vm931, %v904
        %938 = vst.msk [vmem:[#allocation2 + $0x30] sm:$0xff] %vm931, %v905
        %939 = vst.msk [vmem:[#allocation2 + $0x38] sm:$0xff] %vm931, %v906
        %940 = vst.msk [vmem:[#allocation2 + $0x40] sm:$0xff] %vm931, %v907
        %941 = vst.msk [vmem:[#allocation2 + $0x48] sm:$0xff] %vm931, %v908
        %942 = vst.msk [vmem:[#allocation2 + $0x50] sm:$0xff] %vm931, %v909
        %943 = vst.msk [vmem:[#allocation2 + $0x58] sm:$0xff] %vm931, %v910
        %944 = vst.msk [vmem:[#allocation2 + $0x60] sm:$0xff] %vm931, %v911
        %945 = vst.msk [vmem:[#allocation2 + $0x68] sm:$0xff] %vm931, %v912
        %946 = vst.msk [vmem:[#allocation2 + $0x70] sm:$0xff] %vm931, %v913
        %947 = vst.msk [vmem:[#allocation2 + $0x78] sm:$0xff] %vm931, %v914
        %948 = vst.msk [vmem:[#allocation2 + $0x80] sm:$0xff] %vm931, %v915
        %949 = vst.msk [vmem:[#allocation2 + $0x88] sm:$0xff] %vm931, %v916
        %950 = vst.msk [vmem:[#allocation2 + $0x90] sm:$0xff] %vm931, %v917
        %951 = vst.msk [vmem:[#allocation2 + $0x98] sm:$0xff] %vm931, %v918
        %952 = vst.msk [vmem:[#allocation2 + $0xa0] sm:$0xff] %vm931, %v919
        %953 = vst.msk [vmem:[#allocation2 + $0xa8] sm:$0xff] %vm931, %v920
        %954 = vst.msk [vmem:[#allocation2 + $0xb0] sm:$0xff] %vm931, %v921
        %955 = vst.msk [vmem:[#allocation2 + $0xb8] sm:$0xff] %vm931, %v922
        %956 = vst.msk [vmem:[#allocation2 + $0xc0] sm:$0xff] %vm931, %v923
        %957 = vst.msk [vmem:[#allocation2 + $0xc8] sm:$0xff] %vm931, %v924
        %958 = vst.msk [vmem:[#allocation2 + $0xd0] sm:$0xff] %vm931, %v925
        %959 = vst.msk [vmem:[#allocation2 + $0xd8] sm:$0xff] %vm931, %v926
        %960 = vst.msk [vmem:[#allocation2 + $0xe0] sm:$0xff] %vm931, %v927
        %961 = vst.msk [vmem:[#allocation2 + $0xe8] sm:$0xff] %vm931, %v928
        %962 = vst.msk [vmem:[#allocation2 + $0xf0] sm:$0xff] %vm931, %v929
        %963 = vst.msk [vmem:[#allocation2 + $0xf8] sm:$0xff] %vm931, %v930
        %vm964 = vcmask 7168
        %965 = vst.msk [vmem:[#allocation5] sm:$0xff] %vm964, -inf
        %966 = vst.msk [vmem:[#allocation5 + $0x8] sm:$0xff] %vm964, -inf
        %967 = vst.msk [vmem:[#allocation5 + $0x10] sm:$0xff] %vm964, -inf
        %968 = vst.msk [vmem:[#allocation5 + $0x18] sm:$0xff] %vm964, -inf
        %969 = vst.msk [vmem:[#allocation5 + $0x20] sm:$0xff] %vm964, -inf
        %970 = vst.msk [vmem:[#allocation5 + $0x28] sm:$0xff] %vm964, -inf
        %971 = vst.msk [vmem:[#allocation5 + $0x30] sm:$0xff] %vm964, -inf
        %972 = vst.msk [vmem:[#allocation5 + $0x38] sm:$0xff] %vm964, -inf
        %973 = vst.msk [vmem:[#allocation5 + $0x40] sm:$0xff] %vm964, -inf
        %974 = vst.msk [vmem:[#allocation5 + $0x48] sm:$0xff] %vm964, -inf
        %975 = vst.msk [vmem:[#allocation5 + $0x50] sm:$0xff] %vm964, -inf
        %976 = vst.msk [vmem:[#allocation5 + $0x58] sm:$0xff] %vm964, -inf
        %977 = vst.msk [vmem:[#allocation5 + $0x60] sm:$0xff] %vm964, -inf
        %978 = vst.msk [vmem:[#allocation5 + $0x68] sm:$0xff] %vm964, -inf
        %979 = vst.msk [vmem:[#allocation5 + $0x70] sm:$0xff] %vm964, -inf
        %980 = vst.msk [vmem:[#allocation5 + $0x78] sm:$0xff] %vm964, -inf
        %981 = vst.msk [vmem:[#allocation5 + $0x80] sm:$0xff] %vm964, -inf
        %982 = vst.msk [vmem:[#allocation5 + $0x88] sm:$0xff] %vm964, -inf
        %983 = vst.msk [vmem:[#allocation5 + $0x90] sm:$0xff] %vm964, -inf
        %984 = vst.msk [vmem:[#allocation5 + $0x98] sm:$0xff] %vm964, -inf
        %985 = vst.msk [vmem:[#allocation5 + $0xa0] sm:$0xff] %vm964, -inf
        %986 = vst.msk [vmem:[#allocation5 + $0xa8] sm:$0xff] %vm964, -inf
        %987 = vst.msk [vmem:[#allocation5 + $0xb0] sm:$0xff] %vm964, -inf
        %988 = vst.msk [vmem:[#allocation5 + $0xb8] sm:$0xff] %vm964, -inf
        %989 = vst.msk [vmem:[#allocation5 + $0xc0] sm:$0xff] %vm964, -inf
        %990 = vst.msk [vmem:[#allocation5 + $0xc8] sm:$0xff] %vm964, -inf
        %991 = vst.msk [vmem:[#allocation5 + $0xd0] sm:$0xff] %vm964, -inf
        %992 = vst.msk [vmem:[#allocation5 + $0xd8] sm:$0xff] %vm964, -inf
        %993 = vst.msk [vmem:[#allocation5 + $0xe0] sm:$0xff] %vm964, -inf
        %994 = vst.msk [vmem:[#allocation5 + $0xe8] sm:$0xff] %vm964, -inf
        %995 = vst.msk [vmem:[#allocation5 + $0xf0] sm:$0xff] %vm964, -inf
        %996 = vst.msk [vmem:[#allocation5 + $0xf8] sm:$0xff] %vm964, -inf
        %997 = vst.msk [vmem:[#allocation5 + $0x100] sm:$0xff] %vm964, -inf
        %998 = vst.msk [vmem:[#allocation5 + $0x108] sm:$0xff] %vm964, -inf
        %999 = vst.msk [vmem:[#allocation5 + $0x110] sm:$0xff] %vm964, -inf
        %1000 = vst.msk [vmem:[#allocation5 + $0x118] sm:$0xff] %vm964, -inf
        %1001 = vst.msk [vmem:[#allocation5 + $0x120] sm:$0xff] %vm964, -inf
        %1002 = vst.msk [vmem:[#allocation5 + $0x128] sm:$0xff] %vm964, -inf
        %1003 = vst.msk [vmem:[#allocation5 + $0x130] sm:$0xff] %vm964, -inf
        %1004 = vst.msk [vmem:[#allocation5 + $0x138] sm:$0xff] %vm964, -inf
        %1005 = vst.msk [vmem:[#allocation5 + $0x140] sm:$0xff] %vm964, -inf
        %1006 = vst.msk [vmem:[#allocation5 + $0x148] sm:$0xff] %vm964, -inf
        %1007 = vst.msk [vmem:[#allocation5 + $0x150] sm:$0xff] %vm964, -inf
        %1008 = vst.msk [vmem:[#allocation5 + $0x158] sm:$0xff] %vm964, -inf
        %1009 = vst.msk [vmem:[#allocation5 + $0x160] sm:$0xff] %vm964, -inf
        %1010 = vst.msk [vmem:[#allocation5 + $0x168] sm:$0xff] %vm964, -inf
        %1011 = vst.msk [vmem:[#allocation5 + $0x170] sm:$0xff] %vm964, -inf
        %1012 = vst.msk [vmem:[#allocation5 + $0x178] sm:$0xff] %vm964, -inf
        %1013 = vst.msk [vmem:[#allocation5 + $0x180] sm:$0xff] %vm964, -inf
        %1014 = vst.msk [vmem:[#allocation5 + $0x188] sm:$0xff] %vm964, -inf
        %1015 = vst.msk [vmem:[#allocation5 + $0x190] sm:$0xff] %vm964, -inf
        %1016 = vst.msk [vmem:[#allocation5 + $0x198] sm:$0xff] %vm964, -inf
        %1017 = vst.msk [vmem:[#allocation5 + $0x1a0] sm:$0xff] %vm964, -inf
        %1018 = vst.msk [vmem:[#allocation5 + $0x1a8] sm:$0xff] %vm964, -inf
        %1019 = vst.msk [vmem:[#allocation5 + $0x1b0] sm:$0xff] %vm964, -inf
        %1020 = vst.msk [vmem:[#allocation5 + $0x1b8] sm:$0xff] %vm964, -inf
        %1021 = vst.msk [vmem:[#allocation5 + $0x1c0] sm:$0xff] %vm964, -inf
        %1022 = vst.msk [vmem:[#allocation5 + $0x1c8] sm:$0xff] %vm964, -inf
        %1023 = vst.msk [vmem:[#allocation5 + $0x1d0] sm:$0xff] %vm964, -inf
        %1024 = vst.msk [vmem:[#allocation5 + $0x1d8] sm:$0xff] %vm964, -inf
        %1025 = vst.msk [vmem:[#allocation5 + $0x1e0] sm:$0xff] %vm964, -inf
        %1026 = vst.msk [vmem:[#allocation5 + $0x1e8] sm:$0xff] %vm964, -inf
        %1027 = vst.msk [vmem:[#allocation5 + $0x1f0] sm:$0xff] %vm964, -inf
        %1028 = vst.msk [vmem:[#allocation5 + $0x1f8] sm:$0xff] %vm964, -inf
        %1029 = vst.msk [vmem:[#allocation6] sm:$0xff] %vm964, 0.0
        %1030 = vst.msk [vmem:[#allocation6 + $0x8] sm:$0xff] %vm964, 0.0
        %1031 = vst.msk [vmem:[#allocation6 + $0x10] sm:$0xff] %vm964, 0.0
        %1032 = vst.msk [vmem:[#allocation6 + $0x18] sm:$0xff] %vm964, 0.0
        %1033 = vst.msk [vmem:[#allocation6 + $0x20] sm:$0xff] %vm964, 0.0
        %1034 = vst.msk [vmem:[#allocation6 + $0x28] sm:$0xff] %vm964, 0.0
        %1035 = vst.msk [vmem:[#allocation6 + $0x30] sm:$0xff] %vm964, 0.0
        %1036 = vst.msk [vmem:[#allocation6 + $0x38] sm:$0xff] %vm964, 0.0
        %1037 = vst.msk [vmem:[#allocation6 + $0x40] sm:$0xff] %vm964, 0.0
        %1038 = vst.msk [vmem:[#allocation6 + $0x48] sm:$0xff] %vm964, 0.0
        %1039 = vst.msk [vmem:[#allocation6 + $0x50] sm:$0xff] %vm964, 0.0
        %1040 = vst.msk [vmem:[#allocation6 + $0x58] sm:$0xff] %vm964, 0.0
        %1041 = vst.msk [vmem:[#allocation6 + $0x60] sm:$0xff] %vm964, 0.0
        %1042 = vst.msk [vmem:[#allocation6 + $0x68] sm:$0xff] %vm964, 0.0
        %1043 = vst.msk [vmem:[#allocation6 + $0x70] sm:$0xff] %vm964, 0.0
        %1044 = vst.msk [vmem:[#allocation6 + $0x78] sm:$0xff] %vm964, 0.0
        %1045 = vst.msk [vmem:[#allocation6 + $0x80] sm:$0xff] %vm964, 0.0
        %1046 = vst.msk [vmem:[#allocation6 + $0x88] sm:$0xff] %vm964, 0.0
        %1047 = vst.msk [vmem:[#allocation6 + $0x90] sm:$0xff] %vm964, 0.0
        %1048 = vst.msk [vmem:[#allocation6 + $0x98] sm:$0xff] %vm964, 0.0
        %1049 = vst.msk [vmem:[#allocation6 + $0xa0] sm:$0xff] %vm964, 0.0
        %1050 = vst.msk [vmem:[#allocation6 + $0xa8] sm:$0xff] %vm964, 0.0
        %1051 = vst.msk [vmem:[#allocation6 + $0xb0] sm:$0xff] %vm964, 0.0
        %1052 = vst.msk [vmem:[#allocation6 + $0xb8] sm:$0xff] %vm964, 0.0
        %1053 = vst.msk [vmem:[#allocation6 + $0xc0] sm:$0xff] %vm964, 0.0
        %1054 = vst.msk [vmem:[#allocation6 + $0xc8] sm:$0xff] %vm964, 0.0
        %1055 = vst.msk [vmem:[#allocation6 + $0xd0] sm:$0xff] %vm964, 0.0
        %1056 = vst.msk [vmem:[#allocation6 + $0xd8] sm:$0xff] %vm964, 0.0
        %1057 = vst.msk [vmem:[#allocation6 + $0xe0] sm:$0xff] %vm964, 0.0
        %1058 = vst.msk [vmem:[#allocation6 + $0xe8] sm:$0xff] %vm964, 0.0
        %1059 = vst.msk [vmem:[#allocation6 + $0xf0] sm:$0xff] %vm964, 0.0
        %1060 = vst.msk [vmem:[#allocation6 + $0xf8] sm:$0xff] %vm964, 0.0
        %1061 = vst.msk [vmem:[#allocation6 + $0x100] sm:$0xff] %vm964, 0.0
        %1062 = vst.msk [vmem:[#allocation6 + $0x108] sm:$0xff] %vm964, 0.0
        %1063 = vst.msk [vmem:[#allocation6 + $0x110] sm:$0xff] %vm964, 0.0
        %1064 = vst.msk [vmem:[#allocation6 + $0x118] sm:$0xff] %vm964, 0.0
        %1065 = vst.msk [vmem:[#allocation6 + $0x120] sm:$0xff] %vm964, 0.0
        %1066 = vst.msk [vmem:[#allocation6 + $0x128] sm:$0xff] %vm964, 0.0
        %1067 = vst.msk [vmem:[#allocation6 + $0x130] sm:$0xff] %vm964, 0.0
        %1068 = vst.msk [vmem:[#allocation6 + $0x138] sm:$0xff] %vm964, 0.0
        %1069 = vst.msk [vmem:[#allocation6 + $0x140] sm:$0xff] %vm964, 0.0
        %1070 = vst.msk [vmem:[#allocation6 + $0x148] sm:$0xff] %vm964, 0.0
        %1071 = vst.msk [vmem:[#allocation6 + $0x150] sm:$0xff] %vm964, 0.0
        %1072 = vst.msk [vmem:[#allocation6 + $0x158] sm:$0xff] %vm964, 0.0
        %1073 = vst.msk [vmem:[#allocation6 + $0x160] sm:$0xff] %vm964, 0.0
        %1074 = vst.msk [vmem:[#allocation6 + $0x168] sm:$0xff] %vm964, 0.0
        %1075 = vst.msk [vmem:[#allocation6 + $0x170] sm:$0xff] %vm964, 0.0
        %1076 = vst.msk [vmem:[#allocation6 + $0x178] sm:$0xff] %vm964, 0.0
        %1077 = vst.msk [vmem:[#allocation6 + $0x180] sm:$0xff] %vm964, 0.0
        %1078 = vst.msk [vmem:[#allocation6 + $0x188] sm:$0xff] %vm964, 0.0
        %1079 = vst.msk [vmem:[#allocation6 + $0x190] sm:$0xff] %vm964, 0.0
        %1080 = vst.msk [vmem:[#allocation6 + $0x198] sm:$0xff] %vm964, 0.0
        %1081 = vst.msk [vmem:[#allocation6 + $0x1a0] sm:$0xff] %vm964, 0.0
        %1082 = vst.msk [vmem:[#allocation6 + $0x1a8] sm:$0xff] %vm964, 0.0
        %1083 = vst.msk [vmem:[#allocation6 + $0x1b0] sm:$0xff] %vm964, 0.0
        %1084 = vst.msk [vmem:[#allocation6 + $0x1b8] sm:$0xff] %vm964, 0.0
        %1085 = vst.msk [vmem:[#allocation6 + $0x1c0] sm:$0xff] %vm964, 0.0
        %1086 = vst.msk [vmem:[#allocation6 + $0x1c8] sm:$0xff] %vm964, 0.0
        %1087 = vst.msk [vmem:[#allocation6 + $0x1d0] sm:$0xff] %vm964, 0.0
        %1088 = vst.msk [vmem:[#allocation6 + $0x1d8] sm:$0xff] %vm964, 0.0
        %1089 = vst.msk [vmem:[#allocation6 + $0x1e0] sm:$0xff] %vm964, 0.0
        %1090 = vst.msk [vmem:[#allocation6 + $0x1e8] sm:$0xff] %vm964, 0.0
        %1091 = vst.msk [vmem:[#allocation6 + $0x1f0] sm:$0xff] %vm964, 0.0
        %1092 = vst.msk [vmem:[#allocation6 + $0x1f8] sm:$0xff] %vm964, 0.0
        %1093 = vst.msk [vmem:[#allocation7] sm:$0xff] %vm931, 0.0
        %1094 = vst.msk [vmem:[#allocation7 + $0x8] sm:$0xff] %vm931, 0.0
        %1095 = vst.msk [vmem:[#allocation7 + $0x10] sm:$0xff] %vm931, 0.0
        %1096 = vst.msk [vmem:[#allocation7 + $0x18] sm:$0xff] %vm931, 0.0
        %1097 = vst.msk [vmem:[#allocation7 + $0x20] sm:$0xff] %vm931, 0.0
        %1098 = vst.msk [vmem:[#allocation7 + $0x28] sm:$0xff] %vm931, 0.0
        %1099 = vst.msk [vmem:[#allocation7 + $0x30] sm:$0xff] %vm931, 0.0
        %1100 = vst.msk [vmem:[#allocation7 + $0x38] sm:$0xff] %vm931, 0.0
        %1101 = vst.msk [vmem:[#allocation7 + $0x40] sm:$0xff] %vm931, 0.0
        %1102 = vst.msk [vmem:[#allocation7 + $0x48] sm:$0xff] %vm931, 0.0
        %1103 = vst.msk [vmem:[#allocation7 + $0x50] sm:$0xff] %vm931, 0.0
        %1104 = vst.msk [vmem:[#allocation7 + $0x58] sm:$0xff] %vm931, 0.0
        %1105 = vst.msk [vmem:[#allocation7 + $0x60] sm:$0xff] %vm931, 0.0
        %1106 = vst.msk [vmem:[#allocation7 + $0x68] sm:$0xff] %vm931, 0.0
        %1107 = vst.msk [vmem:[#allocation7 + $0x70] sm:$0xff] %vm931, 0.0
        %1108 = vst.msk [vmem:[#allocation7 + $0x78] sm:$0xff] %vm931, 0.0
        %1109 = vst.msk [vmem:[#allocation7 + $0x80] sm:$0xff] %vm931, 0.0
        %1110 = vst.msk [vmem:[#allocation7 + $0x88] sm:$0xff] %vm931, 0.0
        %1111 = vst.msk [vmem:[#allocation7 + $0x90] sm:$0xff] %vm931, 0.0
        %1112 = vst.msk [vmem:[#allocation7 + $0x98] sm:$0xff] %vm931, 0.0
        %1113 = vst.msk [vmem:[#allocation7 + $0xa0] sm:$0xff] %vm931, 0.0
        %1114 = vst.msk [vmem:[#allocation7 + $0xa8] sm:$0xff] %vm931, 0.0
        %1115 = vst.msk [vmem:[#allocation7 + $0xb0] sm:$0xff] %vm931, 0.0
        %1116 = vst.msk [vmem:[#allocation7 + $0xb8] sm:$0xff] %vm931, 0.0
        %1117 = vst.msk [vmem:[#allocation7 + $0xc0] sm:$0xff] %vm931, 0.0
        %1118 = vst.msk [vmem:[#allocation7 + $0xc8] sm:$0xff] %vm931, 0.0
        %1119 = vst.msk [vmem:[#allocation7 + $0xd0] sm:$0xff] %vm931, 0.0
        %1120 = vst.msk [vmem:[#allocation7 + $0xd8] sm:$0xff] %vm931, 0.0
        %1121 = vst.msk [vmem:[#allocation7 + $0xe0] sm:$0xff] %vm931, 0.0
        %1122 = vst.msk [vmem:[#allocation7 + $0xe8] sm:$0xff] %vm931, 0.0
        %1123 = vst.msk [vmem:[#allocation7 + $0xf0] sm:$0xff] %vm931, 0.0
        %1124 = vst.msk [vmem:[#allocation7 + $0xf8] sm:$0xff] %vm931, 0.0
        %1125 = vst.msk [vmem:[#allocation7 + $0x100] sm:$0xff] %vm931, 0.0
        %1126 = vst.msk [vmem:[#allocation7 + $0x108] sm:$0xff] %vm931, 0.0
        %1127 = vst.msk [vmem:[#allocation7 + $0x110] sm:$0xff] %vm931, 0.0
        %1128 = vst.msk [vmem:[#allocation7 + $0x118] sm:$0xff] %vm931, 0.0
        %1129 = vst.msk [vmem:[#allocation7 + $0x120] sm:$0xff] %vm931, 0.0
        %1130 = vst.msk [vmem:[#allocation7 + $0x128] sm:$0xff] %vm931, 0.0
        %1131 = vst.msk [vmem:[#allocation7 + $0x130] sm:$0xff] %vm931, 0.0
        %1132 = vst.msk [vmem:[#allocation7 + $0x138] sm:$0xff] %vm931, 0.0
        %1133 = vst.msk [vmem:[#allocation7 + $0x140] sm:$0xff] %vm931, 0.0
        %1134 = vst.msk [vmem:[#allocation7 + $0x148] sm:$0xff] %vm931, 0.0
        %1135 = vst.msk [vmem:[#allocation7 + $0x150] sm:$0xff] %vm931, 0.0
        %1136 = vst.msk [vmem:[#allocation7 + $0x158] sm:$0xff] %vm931, 0.0
        %1137 = vst.msk [vmem:[#allocation7 + $0x160] sm:$0xff] %vm931, 0.0
        %1138 = vst.msk [vmem:[#allocation7 + $0x168] sm:$0xff] %vm931, 0.0
        %1139 = vst.msk [vmem:[#allocation7 + $0x170] sm:$0xff] %vm931, 0.0
        %1140 = vst.msk [vmem:[#allocation7 + $0x178] sm:$0xff] %vm931, 0.0
        %1141 = vst.msk [vmem:[#allocation7 + $0x180] sm:$0xff] %vm931, 0.0
        %1142 = vst.msk [vmem:[#allocation7 + $0x188] sm:$0xff] %vm931, 0.0
        %1143 = vst.msk [vmem:[#allocation7 + $0x190] sm:$0xff] %vm931, 0.0
        %1144 = vst.msk [vmem:[#allocation7 + $0x198] sm:$0xff] %vm931, 0.0
        %1145 = vst.msk [vmem:[#allocation7 + $0x1a0] sm:$0xff] %vm931, 0.0
        %1146 = vst.msk [vmem:[#allocation7 + $0x1a8] sm:$0xff] %vm931, 0.0
        %1147 = vst.msk [vmem:[#allocation7 + $0x1b0] sm:$0xff] %vm931, 0.0
        %1148 = vst.msk [vmem:[#allocation7 + $0x1b8] sm:$0xff] %vm931, 0.0
        %1149 = vst.msk [vmem:[#allocation7 + $0x1c0] sm:$0xff] %vm931, 0.0
        %1150 = vst.msk [vmem:[#allocation7 + $0x1c8] sm:$0xff] %vm931, 0.0
        %1151 = vst.msk [vmem:[#allocation7 + $0x1d0] sm:$0xff] %vm931, 0.0
        %1152 = vst.msk [vmem:[#allocation7 + $0x1d8] sm:$0xff] %vm931, 0.0
        %1153 = vst.msk [vmem:[#allocation7 + $0x1e0] sm:$0xff] %vm931, 0.0
        %1154 = vst.msk [vmem:[#allocation7 + $0x1e8] sm:$0xff] %vm931, 0.0
        %1155 = vst.msk [vmem:[#allocation7 + $0x1f0] sm:$0xff] %vm931, 0.0
        %1156 = vst.msk [vmem:[#allocation7 + $0x1f8] sm:$0xff] %vm931, 0.0
      $region52: #{tpu_custom_call.1} parent=47 // pred_fallthru
        _
      %p1157 = scmp.eq.s32.totalorder %s24, 0
      // Predicated region
      $region53: #{tpu_custom_call.1} parent=47 // pred_check
        %p1158 = pneg %p1157
      $region54: #{tpu_custom_call.1} parent=47 // pred_check_branch
        %1160 = sbr.rel (%p1158) target = $region56
      $region55: #{tpu_custom_call.1} parent=47 // pred_region
        %v1161 = vld [vmem:[%s349] sm:$0xf]
        %v1162 = vld [vmem:[%s349 + $0x4] sm:$0xf]
        %v1163 = vld [vmem:[%s349 + $0x8] sm:$0xf]
        %v1164 = vld [vmem:[%s349 + $0xc] sm:$0xf]
        %v1165 = vld [vmem:[%s349 + $0x10] sm:$0xf]
        %v1166 = vld [vmem:[%s349 + $0x14] sm:$0xf]
        %v1167 = vld [vmem:[%s349 + $0x18] sm:$0xf]
        %v1168 = vld [vmem:[%s349 + $0x1c] sm:$0xf]
        %v1169 = vld [vmem:[%s349 + $0x20] sm:$0xf]
        %v1170 = vld [vmem:[%s349 + $0x24] sm:$0xf]
        %v1171 = vld [vmem:[%s349 + $0x28] sm:$0xf]
        %v1172 = vld [vmem:[%s349 + $0x2c] sm:$0xf]
        %v1173 = vld [vmem:[%s349 + $0x30] sm:$0xf]
        %v1174 = vld [vmem:[%s349 + $0x34] sm:$0xf]
        %v1175 = vld [vmem:[%s349 + $0x38] sm:$0xf]
        %v1176 = vld [vmem:[%s349 + $0x3c] sm:$0xf]
        %v1177 = vld [vmem:[%s3] sm:$0xf]
        %v1178 = vld [vmem:[%s3 + $0x4] sm:$0xf]
        %v1179 = vld [vmem:[%s3 + $0x8] sm:$0xf]
        %v1180 = vld [vmem:[%s3 + $0xc] sm:$0xf]
        %v1181 = vld [vmem:[%s3 + $0x10] sm:$0xf]
        %v1182 = vld [vmem:[%s3 + $0x14] sm:$0xf]
        %v1183 = vld [vmem:[%s3 + $0x18] sm:$0xf]
        %v1184 = vld [vmem:[%s3 + $0x1c] sm:$0xf]
        %v1185 = vld [vmem:[%s3 + $0x20] sm:$0xf]
        %v1186 = vld [vmem:[%s3 + $0x24] sm:$0xf]
        %v1187 = vld [vmem:[%s3 + $0x28] sm:$0xf]
        %v1188 = vld [vmem:[%s3 + $0x2c] sm:$0xf]
        %v1189 = vld [vmem:[%s3 + $0x30] sm:$0xf]
        %v1190 = vld [vmem:[%s3 + $0x34] sm:$0xf]
        %v1191 = vld [vmem:[%s3 + $0x38] sm:$0xf]
        %v1192 = vld [vmem:[%s3 + $0x3c] sm:$0xf]
        %v1209 = vunpack.c.l.b16 %v1161
        %v1210 = vunpack.c.l.b16 %v1162
        %v1211 = vunpack.c.l.b16 %v1163
        %v1212 = vunpack.c.l.b16 %v1164
        %v1213 = vunpack.c.l.b16 %v1165
        %v1214 = vunpack.c.l.b16 %v1166
        %v1215 = vunpack.c.l.b16 %v1167
        %v1216 = vunpack.c.l.b16 %v1168
        %v1217 = vunpack.c.l.b16 %v1169
        %v1218 = vunpack.c.l.b16 %v1170
        %v1219 = vunpack.c.l.b16 %v1171
        %v1220 = vunpack.c.l.b16 %v1172
        %v1221 = vunpack.c.l.b16 %v1173
        %v1222 = vunpack.c.l.b16 %v1174
        %v1223 = vunpack.c.l.b16 %v1175
        %v1224 = vunpack.c.l.b16 %v1176
        %v1225 = vpack.c.b16 %v1210, %v1209
        %v1226 = vpack.c.b16 %v1212, %v1211
        %v1227 = vpack.c.b16 %v1214, %v1213
        %v1228 = vpack.c.b16 %v1216, %v1215
        %v1229 = vpack.c.b16 %v1218, %v1217
        %v1230 = vpack.c.b16 %v1220, %v1219
        %v1231 = vpack.c.b16 %v1222, %v1221
        %v1232 = vpack.c.b16 %v1224, %v1223
        %v1237 = vunpack.c.l.b16 %v1177
        %v1238 = vunpack.c.l.b16 %v1178
        %v1239 = vunpack.c.l.b16 %v1179
        %v1240 = vunpack.c.l.b16 %v1180
        %v1241 = vpack.c.b16 %v1238, %v1237
        %v1242 = vpack.c.b16 %v1240, %v1239
        %vm1245 = vcmask 261120
        %v1247 = vsel %vm1245, %v1225, 0
        %v1250 = vsel %vm1245, %v1226, 0
        %v1253 = vsel %vm1245, %v1227, 0
        %v1256 = vsel %vm1245, %v1228, 0
        %v1259 = vsel %vm1245, %v1229, 0
        %v1262 = vsel %vm1245, %v1230, 0
        %v1265 = vsel %vm1245, %v1231, 0
        %v1268 = vsel %vm1245, %v1232, 0
        %1270 = vmatprep.subr.bf16.mxu0 0
        %1271 = vmatpush1.bf16.msra.mxu0 %v1241
        %1272 = vmatprep.subr.bf16.mxu0 0
        %1273 = vmatpush1.bf16.msra.mxu0 %v1242
        %1274 = vmatprep.subr.bf16.mxu0 0
        %1275 = vmatpush1.bf16.msra.mxu0 0
        %1276 = vmatprep.subr.bf16.mxu0 0
        %1277 = vmatpush1.bf16.msra.mxu0 0
        %1278 = vmatprep.subr.bf16.mxu0 0
        %1279 = vmatpush1.bf16.msra.mxu0 0
        %1280 = vmatprep.subr.bf16.mxu0 0
        %1281 = vmatpush1.bf16.msra.mxu0 0
        %1282 = vmatprep.subr.bf16.mxu0 0
        %1283 = vmatpush1.bf16.msra.mxu0 0
        %1284 = vmatprep.subr.bf16.mxu0 0
        %1285 = vmatpush1.bf16.msra.mxu0 0
        %1286 = vmatprep.subr.bf16.mxu0 0
        %1287 = vmatpush1.bf16.msra.mxu0 0
        %1288 = vmatprep.subr.bf16.mxu0 0
        %1289 = vmatpush1.bf16.msra.mxu0 0
        %1290 = vmatprep.subr.bf16.mxu0 0
        %1291 = vmatpush1.bf16.msra.mxu0 0
        %1292 = vmatprep.subr.bf16.mxu0 0
        %1293 = vmatpush1.bf16.msra.mxu0 0
        %1294 = vmatprep.subr.bf16.mxu0 0
        %1295 = vmatpush1.bf16.msra.mxu0 0
        %1296 = vmatprep.subr.bf16.mxu0 0
        %1297 = vmatpush1.bf16.msra.mxu0 0
        %1298 = vmatprep.subr.bf16.mxu0 0
        %1299 = vmatpush1.bf16.msra.mxu0 0
        %1300 = vmatprep.subr.bf16.mxu0 0
        %1301 = vmatpush1.bf16.msra.mxu0 0
        %1302 = vmatprep.mubr.bf16.mxu0 0
        %1303 = vmatmul.mubr.bf16.gmra.mrb[0].mxu0 %v1247
        %v1304 = vpop.f32.mrb[0].mxu0
        %v1305 = vadd.f32 0.0, %v1304
        %v1306 = vpop.f32.mrb[0].mxu0
        %v1307 = vpop.f32.mrb[0].mxu0
        %v1308 = vadd.f32 0.0, %v1307
        %v1309 = vpop.f32.mrb[0].mxu0
        %1310 = vmatprep.mubr.bf16.mxu0 0
        %1311 = vmatmul.mubr.bf16.gmra.mrb[0].mxu0 %v1250
        %v1312 = vpop.f32.mrb[0].mxu0
        %v1313 = vadd.f32 0.0, %v1312
        %v1314 = vpop.f32.mrb[0].mxu0
        %v1315 = vpop.f32.mrb[0].mxu0
        %v1316 = vadd.f32 0.0, %v1315
        %v1317 = vpop.f32.mrb[0].mxu0
        %1318 = vmatprep.mubr.bf16.mxu0 0
        %1319 = vmatmul.mubr.bf16.gmra.mrb[0].mxu0 %v1253
        %v1320 = vpop.f32.mrb[0].mxu0
        %v1321 = vadd.f32 0.0, %v1320
        %v1322 = vpop.f32.mrb[0].mxu0
        %v1323 = vpop.f32.mrb[0].mxu0
        %v1324 = vadd.f32 0.0, %v1323
        %v1325 = vpop.f32.mrb[0].mxu0
        %1326 = vmatprep.mubr.bf16.mxu0 0
        %1327 = vmatmul.mubr.bf16.gmra.mrb[0].mxu0 %v1256
        %v1328 = vpop.f32.mrb[0].mxu0
        %v1329 = vadd.f32 0.0, %v1328
        %v1330 = vpop.f32.mrb[0].mxu0
        %v1331 = vpop.f32.mrb[0].mxu0
        %v1332 = vadd.f32 0.0, %v1331
        %v1333 = vpop.f32.mrb[0].mxu0
        %1334 = vmatprep.mubr.bf16.mxu0 0
        %1335 = vmatmul.mubr.bf16.gmra.mrb[0].mxu0 %v1259
        %v1336 = vpop.f32.mrb[0].mxu0
        %v1337 = vadd.f32 0.0, %v1336
        %v1338 = vpop.f32.mrb[0].mxu0
        %v1339 = vpop.f32.mrb[0].mxu0
        %v1340 = vadd.f32 0.0, %v1339
        %v1341 = vpop.f32.mrb[0].mxu0
        %1342 = vmatprep.mubr.bf16.mxu0 0
        %1343 = vmatmul.mubr.bf16.gmra.mrb[0].mxu0 %v1262
        %v1344 = vpop.f32.mrb[0].mxu0
        %v1345 = vadd.f32 0.0, %v1344
        %v1346 = vpop.f32.mrb[0].mxu0
        %v1347 = vpop.f32.mrb[0].mxu0
        %v1348 = vadd.f32 0.0, %v1347
        %v1349 = vpop.f32.mrb[0].mxu0
        %1350 = vmatprep.mubr.bf16.mxu0 0
        %1351 = vmatmul.mubr.bf16.gmra.mrb[0].mxu0 %v1265
        %v1352 = vpop.f32.mrb[0].mxu0
        %v1353 = vadd.f32 0.0, %v1352
        %v1354 = vpop.f32.mrb[0].mxu0
        %v1355 = vpop.f32.mrb[0].mxu0
        %v1356 = vadd.f32 0.0, %v1355
        %v1357 = vpop.f32.mrb[0].mxu0
        %1358 = vmatprep.mubr.bf16.mxu0 0
        %1359 = vmatmul.mubr.bf16.gmra.mrb[0].mxu0 %v1268
        %v1360 = vpop.f32.mrb[0].mxu0
        %v1361 = vadd.f32 0.0, %v1360
        %v1362 = vpop.f32.mrb[0].mxu0
        %v1363 = vpop.f32.mrb[0].mxu0
        %v1364 = vadd.f32 0.0, %v1363
        %v1365 = vpop.f32.mrb[0].mxu0
        %1366 = vdwg.mxu0
        %v1371 = vunpack.c.l.b16 %v1181
        %v1372 = vunpack.c.l.b16 %v1182
        %v1373 = vunpack.c.l.b16 %v1183
        %v1374 = vunpack.c.l.b16 %v1184
        %v1375 = vpack.c.b16 %v1372, %v1371
        %v1376 = vpack.c.b16 %v1374, %v1373
        %1379 = vmatprep.subr.bf16.mxu0 0
        %1380 = vmatpush1.bf16.msra.mxu0 %v1375
        %1381 = vmatprep.subr.bf16.mxu0 0
        %1382 = vmatpush1.bf16.msra.mxu0 %v1376
        %1383 = vmatprep.subr.bf16.mxu0 0
        %1384 = vmatpush1.bf16.msra.mxu0 0
        %1385 = vmatprep.subr.bf16.mxu0 0
        %1386 = vmatpush1.bf16.msra.mxu0 0
        %1387 = vmatprep.subr.bf16.mxu0 0
        %1388 = vmatpush1.bf16.msra.mxu0 0
        %1389 = vmatprep.subr.bf16.mxu0 0
        %1390 = vmatpush1.bf16.msra.mxu0 0
        %1391 = vmatprep.subr.bf16.mxu0 0
        %1392 = vmatpush1.bf16.msra.mxu0 0
        %1393 = vmatprep.subr.bf16.mxu0 0
        %1394 = vmatpush1.bf16.msra.mxu0 0
        %1395 = vmatprep.subr.bf16.mxu0 0
        %1396 = vmatpush1.bf16.msra.mxu0 0
        %1397 = vmatprep.subr.bf16.mxu0 0
        %1398 = vmatpush1.bf16.msra.mxu0 0
        %1399 = vmatprep.subr.bf16.mxu0 0
        %1400 = vmatpush1.bf16.msra.mxu0 0
        %1401 = vmatprep.subr.bf16.mxu0 0
        %1402 = vmatpush1.bf16.msra.mxu0 0
        %1403 = vmatprep.subr.bf16.mxu0 0
        %1404 = vmatpush1.bf16.msra.mxu0 0
        %1405 = vmatprep.subr.bf16.mxu0 0
        %1406 = vmatpush1.bf16.msra.mxu0 0
        %1407 = vmatprep.subr.bf16.mxu0 0
        %1408 = vmatpush1.bf16.msra.mxu0 0
        %1409 = vmatprep.subr.bf16.mxu0 0
        %1410 = vmatpush1.bf16.msra.mxu0 0
        %1411 = vmatprep.mubr.bf16.mxu0 0
        %1412 = vmatmul.mubr.bf16.gmra.mrb[0].mxu0 %v1247
        %v1413 = vpop.f32.mrb[0].mxu0
        %v1414 = vadd.f32 0.0, %v1413
        %v1415 = vpop.f32.mrb[0].mxu0
        %v1416 = vpop.f32.mrb[0].mxu0
        %v1417 = vadd.f32 0.0, %v1416
        %v1418 = vpop.f32.mrb[0].mxu0
        %1419 = vmatprep.mubr.bf16.mxu0 0
        %1420 = vmatmul.mubr.bf16.gmra.mrb[0].mxu0 %v1250
        %v1421 = vpop.f32.mrb[0].mxu0
        %v1422 = vadd.f32 0.0, %v1421
        %v1423 = vpop.f32.mrb[0].mxu0
        %v1424 = vpop.f32.mrb[0].mxu0
        %v1425 = vadd.f32 0.0, %v1424
        %v1426 = vpop.f32.mrb[0].mxu0
        %1427 = vmatprep.mubr.bf16.mxu0 0
        %1428 = vmatmul.mubr.bf16.gmra.mrb[0].mxu0 %v1253
        %v1429 = vpop.f32.mrb[0].mxu0
        %v1430 = vadd.f32 0.0, %v1429
        %v1431 = vpop.f32.mrb[0].mxu0
        %v1432 = vpop.f32.mrb[0].mxu0
        %v1433 = vadd.f32 0.0, %v1432
        %v1434 = vpop.f32.mrb[0].mxu0
        %1435 = vmatprep.mubr.bf16.mxu0 0
        %1436 = vmatmul.mubr.bf16.gmra.mrb[0].mxu0 %v1256
        %v1437 = vpop.f32.mrb[0].mxu0
        %v1438 = vadd.f32 0.0, %v1437
        %v1439 = vpop.f32.mrb[0].mxu0
        %v1440 = vpop.f32.mrb[0].mxu0
        %v1441 = vadd.f32 0.0, %v1440
        %v1442 = vpop.f32.mrb[0].mxu0
        %1443 = vmatprep.mubr.bf16.mxu0 0
        %1444 = vmatmul.mubr.bf16.gmra.mrb[0].mxu0 %v1259
        %v1445 = vpop.f32.mrb[0].mxu0
        %v1446 = vadd.f32 0.0, %v1445
        %v1447 = vpop.f32.mrb[0].mxu0
        %v1448 = vpop.f32.mrb[0].mxu0
        %v1449 = vadd.f32 0.0, %v1448
        %v1450 = vpop.f32.mrb[0].mxu0
        %1451 = vmatprep.mubr.bf16.mxu0 0
        %1452 = vmatmul.mubr.bf16.gmra.mrb[0].mxu0 %v1262
        %v1453 = vpop.f32.mrb[0].mxu0
        %v1454 = vadd.f32 0.0, %v1453
        %v1455 = vpop.f32.mrb[0].mxu0
        %v1456 = vpop.f32.mrb[0].mxu0
        %v1457 = vadd.f32 0.0, %v1456
        %v1458 = vpop.f32.mrb[0].mxu0
        %1459 = vmatprep.mubr.bf16.mxu0 0
        %1460 = vmatmul.mubr.bf16.gmra.mrb[0].mxu0 %v1265
        %v1461 = vpop.f32.mrb[0].mxu0
        %v1462 = vadd.f32 0.0, %v1461
        %v1463 = vpop.f32.mrb[0].mxu0
        %v1464 = vpop.f32.mrb[0].mxu0
        %v1465 = vadd.f32 0.0, %v1464
        %v1466 = vpop.f32.mrb[0].mxu0
        %1467 = vmatprep.mubr.bf16.mxu0 0
        %1468 = vmatmul.mubr.bf16.gmra.mrb[0].mxu0 %v1268
        %v1469 = vpop.f32.mrb[0].mxu0
        %v1470 = vadd.f32 0.0, %v1469
        %v1471 = vpop.f32.mrb[0].mxu0
        %v1472 = vpop.f32.mrb[0].mxu0
        %v1473 = vadd.f32 0.0, %v1472
        %v1474 = vpop.f32.mrb[0].mxu0
        %1475 = vdwg.mxu0
        %v1480 = vunpack.c.l.b16 %v1185
        %v1481 = vunpack.c.l.b16 %v1186
        %v1482 = vunpack.c.l.b16 %v1187
        %v1483 = vunpack.c.l.b16 %v1188
        %v1484 = vpack.c.b16 %v1481, %v1480
        %v1485 = vpack.c.b16 %v1483, %v1482
        %1488 = vmatprep.subr.bf16.mxu0 0
        %1489 = vmatpush1.bf16.msra.mxu0 %v1484
        %1490 = vmatprep.subr.bf16.mxu0 0
        %1491 = vmatpush1.bf16.msra.mxu0 %v1485
        %1492 = vmatprep.subr.bf16.mxu0 0
        %1493 = vmatpush1.bf16.msra.mxu0 0
        %1494 = vmatprep.subr.bf16.mxu0 0
        %1495 = vmatpush1.bf16.msra.mxu0 0
        %1496 = vmatprep.subr.bf16.mxu0 0
        %1497 = vmatpush1.bf16.msra.mxu0 0
        %1498 = vmatprep.subr.bf16.mxu0 0
        %1499 = vmatpush1.bf16.msra.mxu0 0
        %1500 = vmatprep.subr.bf16.mxu0 0
        %1501 = vmatpush1.bf16.msra.mxu0 0
        %1502 = vmatprep.subr.bf16.mxu0 0
        %1503 = vmatpush1.bf16.msra.mxu0 0
        %1504 = vmatprep.subr.bf16.mxu0 0
        %1505 = vmatpush1.bf16.msra.mxu0 0
        %1506 = vmatprep.subr.bf16.mxu0 0
        %1507 = vmatpush1.bf16.msra.mxu0 0
        %1508 = vmatprep.subr.bf16.mxu0 0
        %1509 = vmatpush1.bf16.msra.mxu0 0
        %1510 = vmatprep.subr.bf16.mxu0 0
        %1511 = vmatpush1.bf16.msra.mxu0 0
        %1512 = vmatprep.subr.bf16.mxu0 0
        %1513 = vmatpush1.bf16.msra.mxu0 0
        %1514 = vmatprep.subr.bf16.mxu0 0
        %1515 = vmatpush1.bf16.msra.mxu0 0
        %1516 = vmatprep.subr.bf16.mxu0 0
        %1517 = vmatpush1.bf16.msra.mxu0 0
        %1518 = vmatprep.subr.bf16.mxu0 0
        %1519 = vmatpush1.bf16.msra.mxu0 0
        %1520 = vmatprep.mubr.bf16.mxu0 0
        %1521 = vmatmul.mubr.bf16.gmra.mrb[0].mxu0 %v1247
        %v1522 = vpop.f32.mrb[0].mxu0
        %v1523 = vadd.f32 0.0, %v1522
        %v1524 = vpop.f32.mrb[0].mxu0
        %v1525 = vpop.f32.mrb[0].mxu0
        %v1526 = vadd.f32 0.0, %v1525
        %v1527 = vpop.f32.mrb[0].mxu0
        %1528 = vmatprep.mubr.bf16.mxu0 0
        %1529 = vmatmul.mubr.bf16.gmra.mrb[0].mxu0 %v1250
        %v1530 = vpop.f32.mrb[0].mxu0
        %v1531 = vadd.f32 0.0, %v1530
        %v1532 = vpop.f32.mrb[0].mxu0
        %v1533 = vpop.f32.mrb[0].mxu0
        %v1534 = vadd.f32 0.0, %v1533
        %v1535 = vpop.f32.mrb[0].mxu0
        %1536 = vmatprep.mubr.bf16.mxu0 0
        %1537 = vmatmul.mubr.bf16.gmra.mrb[0].mxu0 %v1253
        %v1538 = vpop.f32.mrb[0].mxu0
        %v1539 = vadd.f32 0.0, %v1538
        %v1540 = vpop.f32.mrb[0].mxu0
        %v1541 = vpop.f32.mrb[0].mxu0
        %v1542 = vadd.f32 0.0, %v1541
        %v1543 = vpop.f32.mrb[0].mxu0
        %1544 = vmatprep.mubr.bf16.mxu0 0
        %1545 = vmatmul.mubr.bf16.gmra.mrb[0].mxu0 %v1256
        %v1546 = vpop.f32.mrb[0].mxu0
        %v1547 = vadd.f32 0.0, %v1546
        %v1548 = vpop.f32.mrb[0].mxu0
        %v1549 = vpop.f32.mrb[0].mxu0
        %v1550 = vadd.f32 0.0, %v1549
        %v1551 = vpop.f32.mrb[0].mxu0
        %1552 = vmatprep.mubr.bf16.mxu0 0
        %1553 = vmatmul.mubr.bf16.gmra.mrb[0].mxu0 %v1259
        %v1554 = vpop.f32.mrb[0].mxu0
        %v1555 = vadd.f32 0.0, %v1554
        %v1556 = vpop.f32.mrb[0].mxu0
        %v1557 = vpop.f32.mrb[0].mxu0
        %v1558 = vadd.f32 0.0, %v1557
        %v1559 = vpop.f32.mrb[0].mxu0
        %1560 = vmatprep.mubr.bf16.mxu0 0
        %1561 = vmatmul.mubr.bf16.gmra.mrb[0].mxu0 %v1262
        %v1562 = vpop.f32.mrb[0].mxu0
        %v1563 = vadd.f32 0.0, %v1562
        %v1564 = vpop.f32.mrb[0].mxu0
        %v1565 = vpop.f32.mrb[0].mxu0
        %v1566 = vadd.f32 0.0, %v1565
        %v1567 = vpop.f32.mrb[0].mxu0
        %1568 = vmatprep.mubr.bf16.mxu0 0
        %1569 = vmatmul.mubr.bf16.gmra.mrb[0].mxu0 %v1265
        %v1570 = vpop.f32.mrb[0].mxu0
        %v1571 = vadd.f32 0.0, %v1570
        %v1572 = vpop.f32.mrb[0].mxu0
        %v1573 = vpop.f32.mrb[0].mxu0
        %v1574 = vadd.f32 0.0, %v1573
        %v1575 = vpop.f32.mrb[0].mxu0
        %1576 = vmatprep.mubr.bf16.mxu0 0
        %1577 = vmatmul.mubr.bf16.gmra.mrb[0].mxu0 %v1268
        %v1578 = vpop.f32.mrb[0].mxu0
        %v1579 = vadd.f32 0.0, %v1578
        %v1580 = vpop.f32.mrb[0].mxu0
        %v1581 = vpop.f32.mrb[0].mxu0
        %v1582 = vadd.f32 0.0, %v1581
        %v1583 = vpop.f32.mrb[0].mxu0
        %1584 = vdwg.mxu0
        %v1589 = vunpack.c.l.b16 %v1189
        %v1590 = vunpack.c.l.b16 %v1190
        %v1591 = vunpack.c.l.b16 %v1191
        %v1592 = vunpack.c.l.b16 %v1192
        %v1593 = vpack.c.b16 %v1590, %v1589
        %v1594 = vpack.c.b16 %v1592, %v1591
        %1597 = vmatprep.subr.bf16.mxu0 0
        %1598 = vmatpush1.bf16.msra.mxu0 %v1593
        %1599 = vmatprep.subr.bf16.mxu0 0
        %1600 = vmatpush1.bf16.msra.mxu0 %v1594
        %1601 = vmatprep.subr.bf16.mxu0 0
        %1602 = vmatpush1.bf16.msra.mxu0 0
        %1603 = vmatprep.subr.bf16.mxu0 0
        %1604 = vmatpush1.bf16.msra.mxu0 0
        %1605 = vmatprep.subr.bf16.mxu0 0
        %1606 = vmatpush1.bf16.msra.mxu0 0
        %1607 = vmatprep.subr.bf16.mxu0 0
        %1608 = vmatpush1.bf16.msra.mxu0 0
        %1609 = vmatprep.subr.bf16.mxu0 0
        %1610 = vmatpush1.bf16.msra.mxu0 0
        %1611 = vmatprep.subr.bf16.mxu0 0
        %1612 = vmatpush1.bf16.msra.mxu0 0
        %1613 = vmatprep.subr.bf16.mxu0 0
        %1614 = vmatpush1.bf16.msra.mxu0 0
        %1615 = vmatprep.subr.bf16.mxu0 0
        %1616 = vmatpush1.bf16.msra.mxu0 0
        %1617 = vmatprep.subr.bf16.mxu0 0
        %1618 = vmatpush1.bf16.msra.mxu0 0
        %1619 = vmatprep.subr.bf16.mxu0 0
        %1620 = vmatpush1.bf16.msra.mxu0 0
        %1621 = vmatprep.subr.bf16.mxu0 0
        %1622 = vmatpush1.bf16.msra.mxu0 0
        %1623 = vmatprep.subr.bf16.mxu0 0
        %1624 = vmatpush1.bf16.msra.mxu0 0
        %1625 = vmatprep.subr.bf16.mxu0 0
        %1626 = vmatpush1.bf16.msra.mxu0 0
        %1627 = vmatprep.subr.bf16.mxu0 0
        %1628 = vmatpush1.bf16.msra.mxu0 0
        %1629 = vmatprep.mubr.bf16.mxu0 0
        %1630 = vmatmul.mubr.bf16.gmra.mrb[0].mxu0 %v1247
        %v1631 = vpop.f32.mrb[0].mxu0
        %v1632 = vadd.f32 0.0, %v1631
        %v1633 = vpop.f32.mrb[0].mxu0
        %v1634 = vpop.f32.mrb[0].mxu0
        %v1635 = vadd.f32 0.0, %v1634
        %v1636 = vpop.f32.mrb[0].mxu0
        %1637 = vmatprep.mubr.bf16.mxu0 0
        %1638 = vmatmul.mubr.bf16.gmra.mrb[0].mxu0 %v1250
        %v1639 = vpop.f32.mrb[0].mxu0
        %v1640 = vadd.f32 0.0, %v1639
        %v1641 = vpop.f32.mrb[0].mxu0
        %v1642 = vpop.f32.mrb[0].mxu0
        %v1643 = vadd.f32 0.0, %v1642
        %v1644 = vpop.f32.mrb[0].mxu0
        %1645 = vmatprep.mubr.bf16.mxu0 0
        %1646 = vmatmul.mubr.bf16.gmra.mrb[0].mxu0 %v1253
        %v1647 = vpop.f32.mrb[0].mxu0
        %v1648 = vadd.f32 0.0, %v1647
        %v1649 = vpop.f32.mrb[0].mxu0
        %v1650 = vpop.f32.mrb[0].mxu0
        %v1651 = vadd.f32 0.0, %v1650
        %v1652 = vpop.f32.mrb[0].mxu0
        %1653 = vmatprep.mubr.bf16.mxu0 0
        %1654 = vmatmul.mubr.bf16.gmra.mrb[0].mxu0 %v1256
        %v1655 = vpop.f32.mrb[0].mxu0
        %v1656 = vadd.f32 0.0, %v1655
        %v1657 = vpop.f32.mrb[0].mxu0
        %v1658 = vpop.f32.mrb[0].mxu0
        %v1659 = vadd.f32 0.0, %v1658
        %v1660 = vpop.f32.mrb[0].mxu0
        %1661 = vmatprep.mubr.bf16.mxu0 0
        %1662 = vmatmul.mubr.bf16.gmra.mrb[0].mxu0 %v1259
        %v1663 = vpop.f32.mrb[0].mxu0
        %v1664 = vadd.f32 0.0, %v1663
        %v1665 = vpop.f32.mrb[0].mxu0
        %v1666 = vpop.f32.mrb[0].mxu0
        %v1667 = vadd.f32 0.0, %v1666
        %v1668 = vpop.f32.mrb[0].mxu0
        %1669 = vmatprep.mubr.bf16.mxu0 0
        %1670 = vmatmul.mubr.bf16.gmra.mrb[0].mxu0 %v1262
        %v1671 = vpop.f32.mrb[0].mxu0
        %v1672 = vadd.f32 0.0, %v1671
        %v1673 = vpop.f32.mrb[0].mxu0
        %v1674 = vpop.f32.mrb[0].mxu0
        %v1675 = vadd.f32 0.0, %v1674
        %v1676 = vpop.f32.mrb[0].mxu0
        %1677 = vmatprep.mubr.bf16.mxu0 0
        %1678 = vmatmul.mubr.bf16.gmra.mrb[0].mxu0 %v1265
        %v1679 = vpop.f32.mrb[0].mxu0
        %v1680 = vadd.f32 0.0, %v1679
        %v1681 = vpop.f32.mrb[0].mxu0
        %v1682 = vpop.f32.mrb[0].mxu0
        %v1683 = vadd.f32 0.0, %v1682
        %v1684 = vpop.f32.mrb[0].mxu0
        %1685 = vmatprep.mubr.bf16.mxu0 0
        %1686 = vmatmul.mubr.bf16.gmra.mrb[0].mxu0 %v1268
        %v1687 = vpop.f32.mrb[0].mxu0
        %v1688 = vadd.f32 0.0, %v1687
        %v1689 = vpop.f32.mrb[0].mxu0
        %v1690 = vpop.f32.mrb[0].mxu0
        %v1691 = vadd.f32 0.0, %v1690
        %v1692 = vpop.f32.mrb[0].mxu0
        %1693 = vdwg.mxu0
        %v1694 = vld [vmem:[%s4] sm:$0xf]
        %v1695 = vld [vmem:[%s4 + $0x4] sm:$0xf]
        %v1696 = vld [vmem:[%s4 + $0x8] sm:$0xf]
        %v1697 = vld [vmem:[%s4 + $0xc] sm:$0xf]
        %v1698 = vld [vmem:[%s4 + $0x10] sm:$0xf]
        %v1699 = vld [vmem:[%s4 + $0x14] sm:$0xf]
        %v1700 = vld [vmem:[%s4 + $0x18] sm:$0xf]
        %v1701 = vld [vmem:[%s4 + $0x1c] sm:$0xf]
        %v1702 = vld [vmem:[%s4 + $0x20] sm:$0xf]
        %v1703 = vld [vmem:[%s4 + $0x24] sm:$0xf]
        %v1704 = vld [vmem:[%s4 + $0x28] sm:$0xf]
        %v1705 = vld [vmem:[%s4 + $0x2c] sm:$0xf]
        %v1706 = vld [vmem:[%s4 + $0x30] sm:$0xf]
        %v1707 = vld [vmem:[%s4 + $0x34] sm:$0xf]
        %v1708 = vld [vmem:[%s4 + $0x38] sm:$0xf]
        %v1709 = vld [vmem:[%s4 + $0x3c] sm:$0xf]
        %v1714 = vunpack.c.l.b16 %v1694
        %v1715 = vunpack.c.l.b16 %v1695
        %v1716 = vunpack.c.l.b16 %v1696
        %v1717 = vunpack.c.l.b16 %v1697
        %v1718 = vpack.c.b16 %v1715, %v1714
        %v1719 = vpack.c.b16 %v1717, %v1716
        %1722 = vmatprep.subr.bf16.mxu0 0
        %1723 = vmatpush1.bf16.msra.mxu0 %v1718
        %1724 = vmatprep.subr.bf16.mxu0 0
        %1725 = vmatpush1.bf16.msra.mxu0 %v1719
        %1726 = vmatprep.subr.bf16.mxu0 0
        %1727 = vmatpush1.bf16.msra.mxu0 0
        %1728 = vmatprep.subr.bf16.mxu0 0
        %1729 = vmatpush1.bf16.msra.mxu0 0
        %1730 = vmatprep.subr.bf16.mxu0 0
        %1731 = vmatpush1.bf16.msra.mxu0 0
        %1732 = vmatprep.subr.bf16.mxu0 0
        %1733 = vmatpush1.bf16.msra.mxu0 0
        %1734 = vmatprep.subr.bf16.mxu0 0
        %1735 = vmatpush1.bf16.msra.mxu0 0
        %1736 = vmatprep.subr.bf16.mxu0 0
        %1737 = vmatpush1.bf16.msra.mxu0 0
        %1738 = vmatprep.subr.bf16.mxu0 0
        %1739 = vmatpush1.bf16.msra.mxu0 0
        %1740 = vmatprep.subr.bf16.mxu0 0
        %1741 = vmatpush1.bf16.msra.mxu0 0
        %1742 = vmatprep.subr.bf16.mxu0 0
        %1743 = vmatpush1.bf16.msra.mxu0 0
        %1744 = vmatprep.subr.bf16.mxu0 0
        %1745 = vmatpush1.bf16.msra.mxu0 0
        %1746 = vmatprep.subr.bf16.mxu0 0
        %1747 = vmatpush1.bf16.msra.mxu0 0
        %1748 = vmatprep.subr.bf16.mxu0 0
        %1749 = vmatpush1.bf16.msra.mxu0 0
        %1750 = vmatprep.subr.bf16.mxu0 0
        %1751 = vmatpush1.bf16.msra.mxu0 0
        %1752 = vmatprep.subr.bf16.mxu0 0
        %1753 = vmatpush1.bf16.msra.mxu0 0
        %1754 = vmatprep.mubr.bf16.mxu0 0
        %1755 = vmatmul.mubr.bf16.gmra.mrb[0].mxu0 %v1247
        %v1756 = vpop.f32.mrb[0].mxu0
        %v1757 = vadd.f32 0.0, %v1756
        %v1758 = vpop.f32.mrb[0].mxu0
        %v1759 = vpop.f32.mrb[0].mxu0
        %v1760 = vadd.f32 0.0, %v1759
        %v1761 = vpop.f32.mrb[0].mxu0
        %1762 = vmatprep.mubr.bf16.mxu0 0
        %1763 = vmatmul.mubr.bf16.gmra.mrb[0].mxu0 %v1250
        %v1764 = vpop.f32.mrb[0].mxu0
        %v1765 = vadd.f32 0.0, %v1764
        %v1766 = vpop.f32.mrb[0].mxu0
        %v1767 = vpop.f32.mrb[0].mxu0
        %v1768 = vadd.f32 0.0, %v1767
        %v1769 = vpop.f32.mrb[0].mxu0
        %1770 = vmatprep.mubr.bf16.mxu0 0
        %1771 = vmatmul.mubr.bf16.gmra.mrb[0].mxu0 %v1253
        %v1772 = vpop.f32.mrb[0].mxu0
        %v1773 = vadd.f32 0.0, %v1772
        %v1774 = vpop.f32.mrb[0].mxu0
        %v1775 = vpop.f32.mrb[0].mxu0
        %v1776 = vadd.f32 0.0, %v1775
        %v1777 = vpop.f32.mrb[0].mxu0
        %1778 = vmatprep.mubr.bf16.mxu0 0
        %1779 = vmatmul.mubr.bf16.gmra.mrb[0].mxu0 %v1256
        %v1780 = vpop.f32.mrb[0].mxu0
        %v1781 = vadd.f32 0.0, %v1780
        %v1782 = vpop.f32.mrb[0].mxu0
        %v1783 = vpop.f32.mrb[0].mxu0
        %v1784 = vadd.f32 0.0, %v1783
        %v1785 = vpop.f32.mrb[0].mxu0
        %1786 = vmatprep.mubr.bf16.mxu0 0
        %1787 = vmatmul.mubr.bf16.gmra.mrb[0].mxu0 %v1259
        %v1788 = vpop.f32.mrb[0].mxu0
        %v1789 = vadd.f32 0.0, %v1788
        %v1790 = vpop.f32.mrb[0].mxu0
        %v1791 = vpop.f32.mrb[0].mxu0
        %v1792 = vadd.f32 0.0, %v1791
        %v1793 = vpop.f32.mrb[0].mxu0
        %1794 = vmatprep.mubr.bf16.mxu0 0
        %1795 = vmatmul.mubr.bf16.gmra.mrb[0].mxu0 %v1262
        %v1796 = vpop.f32.mrb[0].mxu0
        %v1797 = vadd.f32 0.0, %v1796
        %v1798 = vpop.f32.mrb[0].mxu0
        %v1799 = vpop.f32.mrb[0].mxu0
        %v1800 = vadd.f32 0.0, %v1799
        %v1801 = vpop.f32.mrb[0].mxu0
        %1802 = vmatprep.mubr.bf16.mxu0 0
        %1803 = vmatmul.mubr.bf16.gmra.mrb[0].mxu0 %v1265
        %v1804 = vpop.f32.mrb[0].mxu0
        %v1805 = vadd.f32 0.0, %v1804
        %v1806 = vpop.f32.mrb[0].mxu0
        %v1807 = vpop.f32.mrb[0].mxu0
        %v1808 = vadd.f32 0.0, %v1807
        %v1809 = vpop.f32.mrb[0].mxu0
        %1810 = vmatprep.mubr.bf16.mxu0 0
        %1811 = vmatmul.mubr.bf16.gmra.mrb[0].mxu0 %v1268
        %v1812 = vpop.f32.mrb[0].mxu0
        %v1813 = vadd.f32 0.0, %v1812
        %v1814 = vpop.f32.mrb[0].mxu0
        %v1815 = vpop.f32.mrb[0].mxu0
        %v1816 = vadd.f32 0.0, %v1815
        %v1817 = vpop.f32.mrb[0].mxu0
        %1818 = vdwg.mxu0
        %v1823 = vunpack.c.l.b16 %v1698
        %v1824 = vunpack.c.l.b16 %v1699
        %v1825 = vunpack.c.l.b16 %v1700
        %v1826 = vunpack.c.l.b16 %v1701
        %v1827 = vpack.c.b16 %v1824, %v1823
        %v1828 = vpack.c.b16 %v1826, %v1825
        %1831 = vmatprep.subr.bf16.mxu0 0
        %1832 = vmatpush1.bf16.msra.mxu0 %v1827
        %1833 = vmatprep.subr.bf16.mxu0 0
        %1834 = vmatpush1.bf16.msra.mxu0 %v1828
        %1835 = vmatprep.subr.bf16.mxu0 0
        %1836 = vmatpush1.bf16.msra.mxu0 0
        %1837 = vmatprep.subr.bf16.mxu0 0
        %1838 = vmatpush1.bf16.msra.mxu0 0
        %1839 = vmatprep.subr.bf16.mxu0 0
        %1840 = vmatpush1.bf16.msra.mxu0 0
        %1841 = vmatprep.subr.bf16.mxu0 0
        %1842 = vmatpush1.bf16.msra.mxu0 0
        %1843 = vmatprep.subr.bf16.mxu0 0
        %1844 = vmatpush1.bf16.msra.mxu0 0
        %1845 = vmatprep.subr.bf16.mxu0 0
        %1846 = vmatpush1.bf16.msra.mxu0 0
        %1847 = vmatprep.subr.bf16.mxu0 0
        %1848 = vmatpush1.bf16.msra.mxu0 0
        %1849 = vmatprep.subr.bf16.mxu0 0
        %1850 = vmatpush1.bf16.msra.mxu0 0
        %1851 = vmatprep.subr.bf16.mxu0 0
        %1852 = vmatpush1.bf16.msra.mxu0 0
        %1853 = vmatprep.subr.bf16.mxu0 0
        %1854 = vmatpush1.bf16.msra.mxu0 0
        %1855 = vmatprep.subr.bf16.mxu0 0
        %1856 = vmatpush1.bf16.msra.mxu0 0
        %1857 = vmatprep.subr.bf16.mxu0 0
        %1858 = vmatpush1.bf16.msra.mxu0 0
        %1859 = vmatprep.subr.bf16.mxu0 0
        %1860 = vmatpush1.bf16.msra.mxu0 0
        %1861 = vmatprep.subr.bf16.mxu0 0
        %1862 = vmatpush1.bf16.msra.mxu0 0
        %1863 = vmatprep.mubr.bf16.mxu0 0
        %1864 = vmatmul.mubr.bf16.gmra.mrb[0].mxu0 %v1247
        %v1865 = vpop.f32.mrb[0].mxu0
        %v1866 = vadd.f32 0.0, %v1865
        %v1867 = vpop.f32.mrb[0].mxu0
        %v1868 = vpop.f32.mrb[0].mxu0
        %v1869 = vadd.f32 0.0, %v1868
        %v1870 = vpop.f32.mrb[0].mxu0
        %1871 = vmatprep.mubr.bf16.mxu0 0
        %1872 = vmatmul.mubr.bf16.gmra.mrb[0].mxu0 %v1250
        %v1873 = vpop.f32.mrb[0].mxu0
        %v1874 = vadd.f32 0.0, %v1873
        %v1875 = vpop.f32.mrb[0].mxu0
        %v1876 = vpop.f32.mrb[0].mxu0
        %v1877 = vadd.f32 0.0, %v1876
        %v1878 = vpop.f32.mrb[0].mxu0
        %1879 = vmatprep.mubr.bf16.mxu0 0
        %1880 = vmatmul.mubr.bf16.gmra.mrb[0].mxu0 %v1253
        %v1881 = vpop.f32.mrb[0].mxu0
        %v1882 = vadd.f32 0.0, %v1881
        %v1883 = vpop.f32.mrb[0].mxu0
        %v1884 = vpop.f32.mrb[0].mxu0
        %v1885 = vadd.f32 0.0, %v1884
        %v1886 = vpop.f32.mrb[0].mxu0
        %1887 = vmatprep.mubr.bf16.mxu0 0
        %1888 = vmatmul.mubr.bf16.gmra.mrb[0].mxu0 %v1256
        %v1889 = vpop.f32.mrb[0].mxu0
        %v1890 = vadd.f32 0.0, %v1889
        %v1891 = vpop.f32.mrb[0].mxu0
        %v1892 = vpop.f32.mrb[0].mxu0
        %v1893 = vadd.f32 0.0, %v1892
        %v1894 = vpop.f32.mrb[0].mxu0
        %1895 = vmatprep.mubr.bf16.mxu0 0
        %1896 = vmatmul.mubr.bf16.gmra.mrb[0].mxu0 %v1259
        %v1897 = vpop.f32.mrb[0].mxu0
        %v1898 = vadd.f32 0.0, %v1897
        %v1899 = vpop.f32.mrb[0].mxu0
        %v1900 = vpop.f32.mrb[0].mxu0
        %v1901 = vadd.f32 0.0, %v1900
        %v1902 = vpop.f32.mrb[0].mxu0
        %1903 = vmatprep.mubr.bf16.mxu0 0
        %1904 = vmatmul.mubr.bf16.gmra.mrb[0].mxu0 %v1262
        %v1905 = vpop.f32.mrb[0].mxu0
        %v1906 = vadd.f32 0.0, %v1905
        %v1907 = vpop.f32.mrb[0].mxu0
        %v1908 = vpop.f32.mrb[0].mxu0
        %v1909 = vadd.f32 0.0, %v1908
        %v1910 = vpop.f32.mrb[0].mxu0
        %1911 = vmatprep.mubr.bf16.mxu0 0
        %1912 = vmatmul.mubr.bf16.gmra.mrb[0].mxu0 %v1265
        %v1913 = vpop.f32.mrb[0].mxu0
        %v1914 = vadd.f32 0.0, %v1913
        %v1915 = vpop.f32.mrb[0].mxu0
        %v1916 = vpop.f32.mrb[0].mxu0
        %v1917 = vadd.f32 0.0, %v1916
        %v1918 = vpop.f32.mrb[0].mxu0
        %1919 = vmatprep.mubr.bf16.mxu0 0
        %1920 = vmatmul.mubr.bf16.gmra.mrb[0].mxu0 %v1268
        %v1921 = vpop.f32.mrb[0].mxu0
        %v1922 = vadd.f32 0.0, %v1921
        %v1923 = vpop.f32.mrb[0].mxu0
        %v1924 = vpop.f32.mrb[0].mxu0
        %v1925 = vadd.f32 0.0, %v1924
        %v1926 = vpop.f32.mrb[0].mxu0
        %1927 = vdwg.mxu0
        %v1932 = vunpack.c.l.b16 %v1702
        %v1933 = vunpack.c.l.b16 %v1703
        %v1934 = vunpack.c.l.b16 %v1704
        %v1935 = vunpack.c.l.b16 %v1705
        %v1936 = vpack.c.b16 %v1933, %v1932
        %v1937 = vpack.c.b16 %v1935, %v1934
        %1940 = vmatprep.subr.bf16.mxu0 0
        %1941 = vmatpush1.bf16.msra.mxu0 %v1936
        %1942 = vmatprep.subr.bf16.mxu0 0
        %1943 = vmatpush1.bf16.msra.mxu0 %v1937
        %1944 = vmatprep.subr.bf16.mxu0 0
        %1945 = vmatpush1.bf16.msra.mxu0 0
        %1946 = vmatprep.subr.bf16.mxu0 0
        %1947 = vmatpush1.bf16.msra.mxu0 0
        %1948 = vmatprep.subr.bf16.mxu0 0
        %1949 = vmatpush1.bf16.msra.mxu0 0
        %1950 = vmatprep.subr.bf16.mxu0 0
        %1951 = vmatpush1.bf16.msra.mxu0 0
        %1952 = vmatprep.subr.bf16.mxu0 0
        %1953 = vmatpush1.bf16.msra.mxu0 0
        %1954 = vmatprep.subr.bf16.mxu0 0
        %1955 = vmatpush1.bf16.msra.mxu0 0
        %1956 = vmatprep.subr.bf16.mxu0 0
        %1957 = vmatpush1.bf16.msra.mxu0 0
        %1958 = vmatprep.subr.bf16.mxu0 0
        %1959 = vmatpush1.bf16.msra.mxu0 0
        %1960 = vmatprep.subr.bf16.mxu0 0
        %1961 = vmatpush1.bf16.msra.mxu0 0
        %1962 = vmatprep.subr.bf16.mxu0 0
        %1963 = vmatpush1.bf16.msra.mxu0 0
        %1964 = vmatprep.subr.bf16.mxu0 0
        %1965 = vmatpush1.bf16.msra.mxu0 0
        %1966 = vmatprep.subr.bf16.mxu0 0
        %1967 = vmatpush1.bf16.msra.mxu0 0
        %1968 = vmatprep.subr.bf16.mxu0 0
        %1969 = vmatpush1.bf16.msra.mxu0 0
        %1970 = vmatprep.subr.bf16.mxu0 0
        %1971 = vmatpush1.bf16.msra.mxu0 0
        %1972 = vmatprep.mubr.bf16.mxu0 0
        %1973 = vmatmul.mubr.bf16.gmra.mrb[0].mxu0 %v1247
        %v1974 = vpop.f32.mrb[0].mxu0
        %v1975 = vadd.f32 0.0, %v1974
        %v1976 = vpop.f32.mrb[0].mxu0
        %v1977 = vpop.f32.mrb[0].mxu0
        %v1978 = vadd.f32 0.0, %v1977
        %v1979 = vpop.f32.mrb[0].mxu0
        %1980 = vmatprep.mubr.bf16.mxu0 0
        %1981 = vmatmul.mubr.bf16.gmra.mrb[0].mxu0 %v1250
        %v1982 = vpop.f32.mrb[0].mxu0
        %v1983 = vadd.f32 0.0, %v1982
        %v1984 = vpop.f32.mrb[0].mxu0
        %v1985 = vpop.f32.mrb[0].mxu0
        %v1986 = vadd.f32 0.0, %v1985
        %v1987 = vpop.f32.mrb[0].mxu0
        %1988 = vmatprep.mubr.bf16.mxu0 0
        %1989 = vmatmul.mubr.bf16.gmra.mrb[0].mxu0 %v1253
        %v1990 = vpop.f32.mrb[0].mxu0
        %v1991 = vadd.f32 0.0, %v1990
        %v1992 = vpop.f32.mrb[0].mxu0
        %v1993 = vpop.f32.mrb[0].mxu0
        %v1994 = vadd.f32 0.0, %v1993
        %v1995 = vpop.f32.mrb[0].mxu0
        %1996 = vmatprep.mubr.bf16.mxu0 0
        %1997 = vmatmul.mubr.bf16.gmra.mrb[0].mxu0 %v1256
        %v1998 = vpop.f32.mrb[0].mxu0
        %v1999 = vadd.f32 0.0, %v1998
        %v2000 = vpop.f32.mrb[0].mxu0
        %v2001 = vpop.f32.mrb[0].mxu0
        %v2002 = vadd.f32 0.0, %v2001
        %v2003 = vpop.f32.mrb[0].mxu0
        %2004 = vmatprep.mubr.bf16.mxu0 0
        %2005 = vmatmul.mubr.bf16.gmra.mrb[0].mxu0 %v1259
        %v2006 = vpop.f32.mrb[0].mxu0
        %v2007 = vadd.f32 0.0, %v2006
        %v2008 = vpop.f32.mrb[0].mxu0
        %v2009 = vpop.f32.mrb[0].mxu0
        %v2010 = vadd.f32 0.0, %v2009
        %v2011 = vpop.f32.mrb[0].mxu0
        %2012 = vmatprep.mubr.bf16.mxu0 0
        %2013 = vmatmul.mubr.bf16.gmra.mrb[0].mxu0 %v1262
        %v2014 = vpop.f32.mrb[0].mxu0
        %v2015 = vadd.f32 0.0, %v2014
        %v2016 = vpop.f32.mrb[0].mxu0
        %v2017 = vpop.f32.mrb[0].mxu0
        %v2018 = vadd.f32 0.0, %v2017
        %v2019 = vpop.f32.mrb[0].mxu0
        %2020 = vmatprep.mubr.bf16.mxu0 0
        %2021 = vmatmul.mubr.bf16.gmra.mrb[0].mxu0 %v1265
        %v2022 = vpop.f32.mrb[0].mxu0
        %v2023 = vadd.f32 0.0, %v2022
        %v2024 = vpop.f32.mrb[0].mxu0
        %v2025 = vpop.f32.mrb[0].mxu0
        %v2026 = vadd.f32 0.0, %v2025
        %v2027 = vpop.f32.mrb[0].mxu0
        %2028 = vmatprep.mubr.bf16.mxu0 0
        %2029 = vmatmul.mubr.bf16.gmra.mrb[0].mxu0 %v1268
        %v2030 = vpop.f32.mrb[0].mxu0
        %v2031 = vadd.f32 0.0, %v2030
        %v2032 = vpop.f32.mrb[0].mxu0
        %v2033 = vpop.f32.mrb[0].mxu0
        %v2034 = vadd.f32 0.0, %v2033
        %v2035 = vpop.f32.mrb[0].mxu0
        %2036 = vdwg.mxu0
        %v2041 = vunpack.c.l.b16 %v1706
        %v2042 = vunpack.c.l.b16 %v1707
        %v2043 = vunpack.c.l.b16 %v1708
        %v2044 = vunpack.c.l.b16 %v1709
        %v2045 = vpack.c.b16 %v2042, %v2041
        %v2046 = vpack.c.b16 %v2044, %v2043
        %2049 = vmatprep.subr.bf16.mxu0 0
        %2050 = vmatpush1.bf16.msra.mxu0 %v2045
        %2051 = vmatprep.subr.bf16.mxu0 0
        %2052 = vmatpush1.bf16.msra.mxu0 %v2046
        %2053 = vmatprep.subr.bf16.mxu0 0
        %2054 = vmatpush1.bf16.msra.mxu0 0
        %2055 = vmatprep.subr.bf16.mxu0 0
        %2056 = vmatpush1.bf16.msra.mxu0 0
        %2057 = vmatprep.subr.bf16.mxu0 0
        %2058 = vmatpush1.bf16.msra.mxu0 0
        %2059 = vmatprep.subr.bf16.mxu0 0
        %2060 = vmatpush1.bf16.msra.mxu0 0
        %2061 = vmatprep.subr.bf16.mxu0 0
        %2062 = vmatpush1.bf16.msra.mxu0 0
        %2063 = vmatprep.subr.bf16.mxu0 0
        %2064 = vmatpush1.bf16.msra.mxu0 0
        %2065 = vmatprep.subr.bf16.mxu0 0
        %2066 = vmatpush1.bf16.msra.mxu0 0
        %2067 = vmatprep.subr.bf16.mxu0 0
        %2068 = vmatpush1.bf16.msra.mxu0 0
        %2069 = vmatprep.subr.bf16.mxu0 0
        %2070 = vmatpush1.bf16.msra.mxu0 0
        %2071 = vmatprep.subr.bf16.mxu0 0
        %2072 = vmatpush1.bf16.msra.mxu0 0
        %2073 = vmatprep.subr.bf16.mxu0 0
        %2074 = vmatpush1.bf16.msra.mxu0 0
        %2075 = vmatprep.subr.bf16.mxu0 0
        %2076 = vmatpush1.bf16.msra.mxu0 0
        %2077 = vmatprep.subr.bf16.mxu0 0
        %2078 = vmatpush1.bf16.msra.mxu0 0
        %2079 = vmatprep.subr.bf16.mxu0 0
        %2080 = vmatpush1.bf16.msra.mxu0 0
        %2081 = vmatprep.mubr.bf16.mxu0 0
        %2082 = vmatmul.mubr.bf16.gmra.mrb[0].mxu0 %v1247
        %v2083 = vpop.f32.mrb[0].mxu0
        %v2084 = vadd.f32 0.0, %v2083
        %v2085 = vpop.f32.mrb[0].mxu0
        %v2086 = vpop.f32.mrb[0].mxu0
        %v2087 = vadd.f32 0.0, %v2086
        %v2088 = vpop.f32.mrb[0].mxu0
        %2089 = vmatprep.mubr.bf16.mxu0 0
        %2090 = vmatmul.mubr.bf16.gmra.mrb[0].mxu0 %v1250
        %v2091 = vpop.f32.mrb[0].mxu0
        %v2092 = vadd.f32 0.0, %v2091
        %v2093 = vpop.f32.mrb[0].mxu0
        %v2094 = vpop.f32.mrb[0].mxu0
        %v2095 = vadd.f32 0.0, %v2094
        %v2096 = vpop.f32.mrb[0].mxu0
        %2097 = vmatprep.mubr.bf16.mxu0 0
        %2098 = vmatmul.mubr.bf16.gmra.mrb[0].mxu0 %v1253
        %v2099 = vpop.f32.mrb[0].mxu0
        %v2100 = vadd.f32 0.0, %v2099
        %v2101 = vpop.f32.mrb[0].mxu0
        %v2102 = vpop.f32.mrb[0].mxu0
        %v2103 = vadd.f32 0.0, %v2102
        %v2104 = vpop.f32.mrb[0].mxu0
        %2105 = vmatprep.mubr.bf16.mxu0 0
        %2106 = vmatmul.mubr.bf16.gmra.mrb[0].mxu0 %v1256
        %v2107 = vpop.f32.mrb[0].mxu0
        %v2108 = vadd.f32 0.0, %v2107
        %v2109 = vpop.f32.mrb[0].mxu0
        %v2110 = vpop.f32.mrb[0].mxu0
        %v2111 = vadd.f32 0.0, %v2110
        %v2112 = vpop.f32.mrb[0].mxu0
        %2113 = vmatprep.mubr.bf16.mxu0 0
        %2114 = vmatmul.mubr.bf16.gmra.mrb[0].mxu0 %v1259
        %v2115 = vpop.f32.mrb[0].mxu0
        %v2116 = vadd.f32 0.0, %v2115
        %v2117 = vpop.f32.mrb[0].mxu0
        %v2118 = vpop.f32.mrb[0].mxu0
        %v2119 = vadd.f32 0.0, %v2118
        %v2120 = vpop.f32.mrb[0].mxu0
        %2121 = vmatprep.mubr.bf16.mxu0 0
        %2122 = vmatmul.mubr.bf16.gmra.mrb[0].mxu0 %v1262
        %v2123 = vpop.f32.mrb[0].mxu0
        %v2124 = vadd.f32 0.0, %v2123
        %v2125 = vpop.f32.mrb[0].mxu0
        %v2126 = vpop.f32.mrb[0].mxu0
        %v2127 = vadd.f32 0.0, %v2126
        %v2128 = vpop.f32.mrb[0].mxu0
        %2129 = vmatprep.mubr.bf16.mxu0 0
        %2130 = vmatmul.mubr.bf16.gmra.mrb[0].mxu0 %v1265
        %v2131 = vpop.f32.mrb[0].mxu0
        %v2132 = vadd.f32 0.0, %v2131
        %v2133 = vpop.f32.mrb[0].mxu0
        %v2134 = vpop.f32.mrb[0].mxu0
        %v2135 = vadd.f32 0.0, %v2134
        %v2136 = vpop.f32.mrb[0].mxu0
        %2137 = vmatprep.mubr.bf16.mxu0 0
        %2138 = vmatmul.mubr.bf16.gmra.mrb[0].mxu0 %v1268
        %v2139 = vpop.f32.mrb[0].mxu0
        %v2140 = vadd.f32 0.0, %v2139
        %v2141 = vpop.f32.mrb[0].mxu0
        %v2142 = vpop.f32.mrb[0].mxu0
        %v2143 = vadd.f32 0.0, %v2142
        %v2144 = vpop.f32.mrb[0].mxu0
        %2145 = vdwg.mxu0
        %v2146 = vpack.c.bf16 %v1308, %v1305
        %v2147 = vpack.c.bf16 %v1316, %v1313
        %v2148 = vpack.c.bf16 %v1324, %v1321
        %v2149 = vpack.c.bf16 %v1332, %v1329
        %v2150 = vpack.c.bf16 %v1340, %v1337
        %v2151 = vpack.c.bf16 %v1348, %v1345
        %v2152 = vpack.c.bf16 %v1356, %v1353
        %v2153 = vpack.c.bf16 %v1364, %v1361
        %v2154 = vpack.c.bf16 %v1417, %v1414
        %v2155 = vpack.c.bf16 %v1425, %v1422
        %v2156 = vpack.c.bf16 %v1433, %v1430
        %v2157 = vpack.c.bf16 %v1441, %v1438
        %v2158 = vpack.c.bf16 %v1449, %v1446
        %v2159 = vpack.c.bf16 %v1457, %v1454
        %v2160 = vpack.c.bf16 %v1465, %v1462
        %v2161 = vpack.c.bf16 %v1473, %v1470
        %v2162 = vpack.c.bf16 %v1526, %v1523
        %v2163 = vpack.c.bf16 %v1534, %v1531
        %v2164 = vpack.c.bf16 %v1542, %v1539
        %v2165 = vpack.c.bf16 %v1550, %v1547
        %v2166 = vpack.c.bf16 %v1558, %v1555
        %v2167 = vpack.c.bf16 %v1566, %v1563
        %v2168 = vpack.c.bf16 %v1574, %v1571
        %v2169 = vpack.c.bf16 %v1582, %v1579
        %v2170 = vpack.c.bf16 %v1635, %v1632
        %v2171 = vpack.c.bf16 %v1643, %v1640
        %v2172 = vpack.c.bf16 %v1651, %v1648
        %v2173 = vpack.c.bf16 %v1659, %v1656
        %v2174 = vpack.c.bf16 %v1667, %v1664
        %v2175 = vpack.c.bf16 %v1675, %v1672
        %v2176 = vpack.c.bf16 %v1683, %v1680
        %v2177 = vpack.c.bf16 %v1691, %v1688
        %s2178 = smul.u32 %s25, 32
        %s2179 = smul.addr %s2178, 8
        %s2180 = scalar_lea.vmem [#allocation3], %s2179
        %vm2181 = vcmask 64512
        %2182 = vst.msk [vmem:[%s2180] sm:$0xff] %vm2181, %v2146
        %2183 = vst.msk [vmem:[%s2180 + $0x8] sm:$0xff] %vm2181, %v2147
        %2184 = vst.msk [vmem:[%s2180 + $0x10] sm:$0xff] %vm2181, %v2148
        %2185 = vst.msk [vmem:[%s2180 + $0x18] sm:$0xff] %vm2181, %v2149
        %2186 = vst.msk [vmem:[%s2180 + $0x20] sm:$0xff] %vm2181, %v2150
        %2187 = vst.msk [vmem:[%s2180 + $0x28] sm:$0xff] %vm2181, %v2151
        %2188 = vst.msk [vmem:[%s2180 + $0x30] sm:$0xff] %vm2181, %v2152
        %2189 = vst.msk [vmem:[%s2180 + $0x38] sm:$0xff] %vm2181, %v2153
        %2190 = vst.msk [vmem:[%s2180 + $0x40] sm:$0xff] %vm2181, %v2154
        %2191 = vst.msk [vmem:[%s2180 + $0x48] sm:$0xff] %vm2181, %v2155
        %2192 = vst.msk [vmem:[%s2180 + $0x50] sm:$0xff] %vm2181, %v2156
        %2193 = vst.msk [vmem:[%s2180 + $0x58] sm:$0xff] %vm2181, %v2157
        %2194 = vst.msk [vmem:[%s2180 + $0x60] sm:$0xff] %vm2181, %v2158
        %2195 = vst.msk [vmem:[%s2180 + $0x68] sm:$0xff] %vm2181, %v2159
        %2196 = vst.msk [vmem:[%s2180 + $0x70] sm:$0xff] %vm2181, %v2160
        %2197 = vst.msk [vmem:[%s2180 + $0x78] sm:$0xff] %vm2181, %v2161
        %2198 = vst.msk [vmem:[%s2180 + $0x80] sm:$0xff] %vm2181, %v2162
        %2199 = vst.msk [vmem:[%s2180 + $0x88] sm:$0xff] %vm2181, %v2163
        %2200 = vst.msk [vmem:[%s2180 + $0x90] sm:$0xff] %vm2181, %v2164
        %2201 = vst.msk [vmem:[%s2180 + $0x98] sm:$0xff] %vm2181, %v2165
        %2202 = vst.msk [vmem:[%s2180 + $0xa0] sm:$0xff] %vm2181, %v2166
        %2203 = vst.msk [vmem:[%s2180 + $0xa8] sm:$0xff] %vm2181, %v2167
        %2204 = vst.msk [vmem:[%s2180 + $0xb0] sm:$0xff] %vm2181, %v2168
        %2205 = vst.msk [vmem:[%s2180 + $0xb8] sm:$0xff] %vm2181, %v2169
        %2206 = vst.msk [vmem:[%s2180 + $0xc0] sm:$0xff] %vm2181, %v2170
        %2207 = vst.msk [vmem:[%s2180 + $0xc8] sm:$0xff] %vm2181, %v2171
        %2208 = vst.msk [vmem:[%s2180 + $0xd0] sm:$0xff] %vm2181, %v2172
        %2209 = vst.msk [vmem:[%s2180 + $0xd8] sm:$0xff] %vm2181, %v2173
        %2210 = vst.msk [vmem:[%s2180 + $0xe0] sm:$0xff] %vm2181, %v2174
        %2211 = vst.msk [vmem:[%s2180 + $0xe8] sm:$0xff] %vm2181, %v2175
        %2212 = vst.msk [vmem:[%s2180 + $0xf0] sm:$0xff] %vm2181, %v2176
        %2213 = vst.msk [vmem:[%s2180 + $0xf8] sm:$0xff] %vm2181, %v2177
        %v2214 = vpack.c.bf16 %v1760, %v1757
        %v2215 = vpack.c.bf16 %v1768, %v1765
        %v2216 = vpack.c.bf16 %v1776, %v1773
        %v2217 = vpack.c.bf16 %v1784, %v1781
        %v2218 = vpack.c.bf16 %v1792, %v1789
        %v2219 = vpack.c.bf16 %v1800, %v1797
        %v2220 = vpack.c.bf16 %v1808, %v1805
        %v2221 = vpack.c.bf16 %v1816, %v1813
        %v2222 = vpack.c.bf16 %v1869, %v1866
        %v2223 = vpack.c.bf16 %v1877, %v1874
        %v2224 = vpack.c.bf16 %v1885, %v1882
        %v2225 = vpack.c.bf16 %v1893, %v1890
        %v2226 = vpack.c.bf16 %v1901, %v1898
        %v2227 = vpack.c.bf16 %v1909, %v1906
        %v2228 = vpack.c.bf16 %v1917, %v1914
        %v2229 = vpack.c.bf16 %v1925, %v1922
        %v2230 = vpack.c.bf16 %v1978, %v1975
        %v2231 = vpack.c.bf16 %v1986, %v1983
        %v2232 = vpack.c.bf16 %v1994, %v1991
        %v2233 = vpack.c.bf16 %v2002, %v1999
        %v2234 = vpack.c.bf16 %v2010, %v2007
        %v2235 = vpack.c.bf16 %v2018, %v2015
        %v2236 = vpack.c.bf16 %v2026, %v2023
        %v2237 = vpack.c.bf16 %v2034, %v2031
        %v2238 = vpack.c.bf16 %v2087, %v2084
        %v2239 = vpack.c.bf16 %v2095, %v2092
        %v2240 = vpack.c.bf16 %v2103, %v2100
        %v2241 = vpack.c.bf16 %v2111, %v2108
        %v2242 = vpack.c.bf16 %v2119, %v2116
        %v2243 = vpack.c.bf16 %v2127, %v2124
        %v2244 = vpack.c.bf16 %v2135, %v2132
        %v2245 = vpack.c.bf16 %v2143, %v2140
        %s2246 = smul.addr %s2178, 8
        %s2247 = scalar_lea.vmem [#allocation4], %s2246
        %2248 = vst.msk [vmem:[%s2247] sm:$0xff] %vm2181, %v2214
        %2249 = vst.msk [vmem:[%s2247 + $0x8] sm:$0xff] %vm2181, %v2215
        %2250 = vst.msk [vmem:[%s2247 + $0x10] sm:$0xff] %vm2181, %v2216
        %2251 = vst.msk [vmem:[%s2247 + $0x18] sm:$0xff] %vm2181, %v2217
        %2252 = vst.msk [vmem:[%s2247 + $0x20] sm:$0xff] %vm2181, %v2218
        %2253 = vst.msk [vmem:[%s2247 + $0x28] sm:$0xff] %vm2181, %v2219
        %2254 = vst.msk [vmem:[%s2247 + $0x30] sm:$0xff] %vm2181, %v2220
        %2255 = vst.msk [vmem:[%s2247 + $0x38] sm:$0xff] %vm2181, %v2221
        %2256 = vst.msk [vmem:[%s2247 + $0x40] sm:$0xff] %vm2181, %v2222
        %2257 = vst.msk [vmem:[%s2247 + $0x48] sm:$0xff] %vm2181, %v2223
        %2258 = vst.msk [vmem:[%s2247 + $0x50] sm:$0xff] %vm2181, %v2224
        %2259 = vst.msk [vmem:[%s2247 + $0x58] sm:$0xff] %vm2181, %v2225
        %2260 = vst.msk [vmem:[%s2247 + $0x60] sm:$0xff] %vm2181, %v2226
        %2261 = vst.msk [vmem:[%s2247 + $0x68] sm:$0xff] %vm2181, %v2227
        %2262 = vst.msk [vmem:[%s2247 + $0x70] sm:$0xff] %vm2181, %v2228
        %2263 = vst.msk [vmem:[%s2247 + $0x78] sm:$0xff] %vm2181, %v2229
        %2264 = vst.msk [vmem:[%s2247 + $0x80] sm:$0xff] %vm2181, %v2230
        %2265 = vst.msk [vmem:[%s2247 + $0x88] sm:$0xff] %vm2181, %v2231
        %2266 = vst.msk [vmem:[%s2247 + $0x90] sm:$0xff] %vm2181, %v2232
        %2267 = vst.msk [vmem:[%s2247 + $0x98] sm:$0xff] %vm2181, %v2233
        %2268 = vst.msk [vmem:[%s2247 + $0xa0] sm:$0xff] %vm2181, %v2234
        %2269 = vst.msk [vmem:[%s2247 + $0xa8] sm:$0xff] %vm2181, %v2235
        %2270 = vst.msk [vmem:[%s2247 + $0xb0] sm:$0xff] %vm2181, %v2236
        %2271 = vst.msk [vmem:[%s2247 + $0xb8] sm:$0xff] %vm2181, %v2237
        %2272 = vst.msk [vmem:[%s2247 + $0xc0] sm:$0xff] %vm2181, %v2238
        %2273 = vst.msk [vmem:[%s2247 + $0xc8] sm:$0xff] %vm2181, %v2239
        %2274 = vst.msk [vmem:[%s2247 + $0xd0] sm:$0xff] %vm2181, %v2240
        %2275 = vst.msk [vmem:[%s2247 + $0xd8] sm:$0xff] %vm2181, %v2241
        %2276 = vst.msk [vmem:[%s2247 + $0xe0] sm:$0xff] %vm2181, %v2242
        %2277 = vst.msk [vmem:[%s2247 + $0xe8] sm:$0xff] %vm2181, %v2243
        %2278 = vst.msk [vmem:[%s2247 + $0xf0] sm:$0xff] %vm2181, %v2244
        %2279 = vst.msk [vmem:[%s2247 + $0xf8] sm:$0xff] %vm2181, %v2245
      $region56: #{tpu_custom_call.1} parent=47 // pred_fallthru
        _
      %s2280 = smul.u32 %s25, 32
      %s2281 = smul.addr %s2280, 8
      %s2282 = scalar_lea.vmem [#allocation3], %s2281
      %v2283 = vld [vmem:[%s2282] sm:$0xff]
      %v2284 = vld [vmem:[%s2282 + $0x8] sm:$0xff]
      %v2285 = vld [vmem:[%s2282 + $0x10] sm:$0xff]
      %v2286 = vld [vmem:[%s2282 + $0x18] sm:$0xff]
      %v2287 = vld [vmem:[%s2282 + $0x20] sm:$0xff]
      %v2288 = vld [vmem:[%s2282 + $0x28] sm:$0xff]
      %v2289 = vld [vmem:[%s2282 + $0x30] sm:$0xff]
      %v2290 = vld [vmem:[%s2282 + $0x38] sm:$0xff]
      %v2291 = vld [vmem:[%s2282 + $0x40] sm:$0xff]
      %v2292 = vld [vmem:[%s2282 + $0x48] sm:$0xff]
      %v2293 = vld [vmem:[%s2282 + $0x50] sm:$0xff]
      %v2294 = vld [vmem:[%s2282 + $0x58] sm:$0xff]
      %v2295 = vld [vmem:[%s2282 + $0x60] sm:$0xff]
      %v2296 = vld [vmem:[%s2282 + $0x68] sm:$0xff]
      %v2297 = vld [vmem:[%s2282 + $0x70] sm:$0xff]
      %v2298 = vld [vmem:[%s2282 + $0x78] sm:$0xff]
      %v2299 = vld [vmem:[%s2282 + $0x80] sm:$0xff]
      %v2300 = vld [vmem:[%s2282 + $0x88] sm:$0xff]
      %v2301 = vld [vmem:[%s2282 + $0x90] sm:$0xff]
      %v2302 = vld [vmem:[%s2282 + $0x98] sm:$0xff]
      %v2303 = vld [vmem:[%s2282 + $0xa0] sm:$0xff]
      %v2304 = vld [vmem:[%s2282 + $0xa8] sm:$0xff]
      %v2305 = vld [vmem:[%s2282 + $0xb0] sm:$0xff]
      %v2306 = vld [vmem:[%s2282 + $0xb8] sm:$0xff]
      %v2307 = vld [vmem:[%s2282 + $0xc0] sm:$0xff]
      %v2308 = vld [vmem:[%s2282 + $0xc8] sm:$0xff]
      %v2309 = vld [vmem:[%s2282 + $0xd0] sm:$0xff]
      %v2310 = vld [vmem:[%s2282 + $0xd8] sm:$0xff]
      %v2311 = vld [vmem:[%s2282 + $0xe0] sm:$0xff]
      %v2312 = vld [vmem:[%s2282 + $0xe8] sm:$0xff]
      %v2313 = vld [vmem:[%s2282 + $0xf0] sm:$0xff]
      %v2314 = vld [vmem:[%s2282 + $0xf8] sm:$0xff]
      %s2315 = smul.addr %s2280, 8
      %s2316 = scalar_lea.vmem [#allocation4], %s2315
      %v2317 = vld [vmem:[%s2316] sm:$0xff]
      %v2318 = vld [vmem:[%s2316 + $0x8] sm:$0xff]
      %v2319 = vld [vmem:[%s2316 + $0x10] sm:$0xff]
      %v2320 = vld [vmem:[%s2316 + $0x18] sm:$0xff]
      %v2321 = vld [vmem:[%s2316 + $0x20] sm:$0xff]
      %v2322 = vld [vmem:[%s2316 + $0x28] sm:$0xff]
      %v2323 = vld [vmem:[%s2316 + $0x30] sm:$0xff]
      %v2324 = vld [vmem:[%s2316 + $0x38] sm:$0xff]
      %v2325 = vld [vmem:[%s2316 + $0x40] sm:$0xff]
      %v2326 = vld [vmem:[%s2316 + $0x48] sm:$0xff]
      %v2327 = vld [vmem:[%s2316 + $0x50] sm:$0xff]
      %v2328 = vld [vmem:[%s2316 + $0x58] sm:$0xff]
      %v2329 = vld [vmem:[%s2316 + $0x60] sm:$0xff]
      %v2330 = vld [vmem:[%s2316 + $0x68] sm:$0xff]
      %v2331 = vld [vmem:[%s2316 + $0x70] sm:$0xff]
      %v2332 = vld [vmem:[%s2316 + $0x78] sm:$0xff]
      %v2333 = vld [vmem:[%s2316 + $0x80] sm:$0xff]
      %v2334 = vld [vmem:[%s2316 + $0x88] sm:$0xff]
      %v2335 = vld [vmem:[%s2316 + $0x90] sm:$0xff]
      %v2336 = vld [vmem:[%s2316 + $0x98] sm:$0xff]
      %v2337 = vld [vmem:[%s2316 + $0xa0] sm:$0xff]
      %v2338 = vld [vmem:[%s2316 + $0xa8] sm:$0xff]
      %v2339 = vld [vmem:[%s2316 + $0xb0] sm:$0xff]
      %v2340 = vld [vmem:[%s2316 + $0xb8] sm:$0xff]
      %v2341 = vld [vmem:[%s2316 + $0xc0] sm:$0xff]
      %v2342 = vld [vmem:[%s2316 + $0xc8] sm:$0xff]
      %v2343 = vld [vmem:[%s2316 + $0xd0] sm:$0xff]
      %v2344 = vld [vmem:[%s2316 + $0xd8] sm:$0xff]
      %v2345 = vld [vmem:[%s2316 + $0xe0] sm:$0xff]
      %v2346 = vld [vmem:[%s2316 + $0xe8] sm:$0xff]
      %v2347 = vld [vmem:[%s2316 + $0xf0] sm:$0xff]
      %v2348 = vld [vmem:[%s2316 + $0xf8] sm:$0xff]
      %v2349 = vld [vmem:[#allocation2] sm:$0xff]
      %v2350 = vld [vmem:[#allocation2 + $0x8] sm:$0xff]
      %v2351 = vld [vmem:[#allocation2 + $0x10] sm:$0xff]
      %v2352 = vld [vmem:[#allocation2 + $0x18] sm:$0xff]
      %v2353 = vld [vmem:[#allocation2 + $0x20] sm:$0xff]
      %v2354 = vld [vmem:[#allocation2 + $0x28] sm:$0xff]
      %v2355 = vld [vmem:[#allocation2 + $0x30] sm:$0xff]
      %v2356 = vld [vmem:[#allocation2 + $0x38] sm:$0xff]
      %v2357 = vld [vmem:[#allocation2 + $0x40] sm:$0xff]
      %v2358 = vld [vmem:[#allocation2 + $0x48] sm:$0xff]
      %v2359 = vld [vmem:[#allocation2 + $0x50] sm:$0xff]
      %v2360 = vld [vmem:[#allocation2 + $0x58] sm:$0xff]
      %v2361 = vld [vmem:[#allocation2 + $0x60] sm:$0xff]
      %v2362 = vld [vmem:[#allocation2 + $0x68] sm:$0xff]
      %v2363 = vld [vmem:[#allocation2 + $0x70] sm:$0xff]
      %v2364 = vld [vmem:[#allocation2 + $0x78] sm:$0xff]
      %v2365 = vld [vmem:[#allocation2 + $0x80] sm:$0xff]
      %v2366 = vld [vmem:[#allocation2 + $0x88] sm:$0xff]
      %v2367 = vld [vmem:[#allocation2 + $0x90] sm:$0xff]
      %v2368 = vld [vmem:[#allocation2 + $0x98] sm:$0xff]
      %v2369 = vld [vmem:[#allocation2 + $0xa0] sm:$0xff]
      %v2370 = vld [vmem:[#allocation2 + $0xa8] sm:$0xff]
      %v2371 = vld [vmem:[#allocation2 + $0xb0] sm:$0xff]
      %v2372 = vld [vmem:[#allocation2 + $0xb8] sm:$0xff]
      %v2373 = vld [vmem:[#allocation2 + $0xc0] sm:$0xff]
      %v2374 = vld [vmem:[#allocation2 + $0xc8] sm:$0xff]
      %v2375 = vld [vmem:[#allocation2 + $0xd0] sm:$0xff]
      %v2376 = vld [vmem:[#allocation2 + $0xd8] sm:$0xff]
      %v2377 = vld [vmem:[#allocation2 + $0xe0] sm:$0xff]
      %v2378 = vld [vmem:[#allocation2 + $0xe8] sm:$0xff]
      %v2379 = vld [vmem:[#allocation2 + $0xf0] sm:$0xff]
      %v2380 = vld [vmem:[#allocation2 + $0xf8] sm:$0xff]
      %vm2381 = vcmask 64512
      %v2383 = vsel %vm2381, %v2349, 0
      %v2386 = vsel %vm2381, %v2350, 0
      %v2389 = vsel %vm2381, %v2351, 0
      %v2392 = vsel %vm2381, %v2352, 0
      %v2395 = vsel %vm2381, %v2353, 0
      %v2398 = vsel %vm2381, %v2354, 0
      %v2401 = vsel %vm2381, %v2355, 0
      %v2404 = vsel %vm2381, %v2356, 0
      %v2407 = vsel %vm2381, %v2283, 0
      %v2410 = vsel %vm2381, %v2284, 0
      %v2413 = vsel %vm2381, %v2285, 0
      %v2416 = vsel %vm2381, %v2286, 0
      %v2419 = vsel %vm2381, %v2287, 0
      %v2422 = vsel %vm2381, %v2288, 0
      %v2425 = vsel %vm2381, %v2289, 0
      %v2428 = vsel %vm2381, %v2290, 0
      %2430 = vmatprep.subr.bf16.mxu0 0
      %2431 = vmatpush1.bf16.xpose.msra.mxu0 %v2407
      %2432 = vmatprep.subr.bf16.mxu0 0
      %2433 = vmatpush1.bf16.xpose.msra.mxu0 %v2410
      %2434 = vmatprep.subr.bf16.mxu0 0
      %2435 = vmatpush1.bf16.xpose.msra.mxu0 %v2413
      %2436 = vmatprep.subr.bf16.mxu0 0
      %2437 = vmatpush1.bf16.xpose.msra.mxu0 %v2416
      %2438 = vmatprep.subr.bf16.mxu0 0
      %2439 = vmatpush1.bf16.xpose.msra.mxu0 %v2419
      %2440 = vmatprep.subr.bf16.mxu0 0
      %2441 = vmatpush1.bf16.xpose.msra.mxu0 %v2422
      %2442 = vmatprep.subr.bf16.mxu0 0
      %2443 = vmatpush1.bf16.xpose.msra.mxu0 %v2425
      %2444 = vmatprep.subr.bf16.mxu0 0
      %2445 = vmatpush1.bf16.xpose.msra.mxu0 %v2428
      %2446 = vmatprep.subr.bf16.mxu0 0
      %2447 = vmatpush1.bf16.xpose.msra.mxu0 0
      %2448 = vmatprep.subr.bf16.mxu0 0
      %2449 = vmatpush1.bf16.xpose.msra.mxu0 0
      %2450 = vmatprep.subr.bf16.mxu0 0
      %2451 = vmatpush1.bf16.xpose.msra.mxu0 0
      %2452 = vmatprep.subr.bf16.mxu0 0
      %2453 = vmatpush1.bf16.xpose.msra.mxu0 0
      %2454 = vmatprep.subr.bf16.mxu0 0
      %2455 = vmatpush1.bf16.xpose.msra.mxu0 0
      %2456 = vmatprep.subr.bf16.mxu0 0
      %2457 = vmatpush1.bf16.xpose.msra.mxu0 0
      %2458 = vmatprep.subr.bf16.mxu0 0
      %2459 = vmatpush1.bf16.xpose.msra.mxu0 0
      %2460 = vmatprep.subr.bf16.mxu0 0
      %2461 = vmatpush1.bf16.xpose.msra.mxu0 0
      %2462 = vmatprep.mubr.bf16.mxu0 0
      %2463 = vmatmul.mubr.bf16.gmra.mrb[0].mxu0 %v2383
      %v2464 = vpop.f32.mrb[0].mxu0
      %v2465 = vadd.f32 0.0, %v2464
      %v2466 = vpop.f32.mrb[0].mxu0
      %v2467 = vpop.f32.mrb[0].mxu0
      %v2468 = vadd.f32 0.0, %v2467
      %v2469 = vpop.f32.mrb[0].mxu0
      %2470 = vmatprep.mubr.bf16.mxu0 0
      %2471 = vmatmul.mubr.bf16.gmra.mrb[0].mxu0 %v2386
      %v2472 = vpop.f32.mrb[0].mxu0
      %v2473 = vadd.f32 0.0, %v2472
      %v2474 = vpop.f32.mrb[0].mxu0
      %v2475 = vpop.f32.mrb[0].mxu0
      %v2476 = vadd.f32 0.0, %v2475
      %v2477 = vpop.f32.mrb[0].mxu0
      %2478 = vmatprep.mubr.bf16.mxu0 0
      %2479 = vmatmul.mubr.bf16.gmra.mrb[0].mxu0 %v2389
      %v2480 = vpop.f32.mrb[0].mxu0
      %v2481 = vadd.f32 0.0, %v2480
      %v2482 = vpop.f32.mrb[0].mxu0
      %v2483 = vpop.f32.mrb[0].mxu0
      %v2484 = vadd.f32 0.0, %v2483
      %v2485 = vpop.f32.mrb[0].mxu0
      %2486 = vmatprep.mubr.bf16.mxu0 0
      %2487 = vmatmul.mubr.bf16.gmra.mrb[0].mxu0 %v2392
      %v2488 = vpop.f32.mrb[0].mxu0
      %v2489 = vadd.f32 0.0, %v2488
      %v2490 = vpop.f32.mrb[0].mxu0
      %v2491 = vpop.f32.mrb[0].mxu0
      %v2492 = vadd.f32 0.0, %v2491
      %v2493 = vpop.f32.mrb[0].mxu0
      %2494 = vmatprep.mubr.bf16.mxu0 0
      %2495 = vmatmul.mubr.bf16.gmra.mrb[0].mxu0 %v2395
      %v2496 = vpop.f32.mrb[0].mxu0
      %v2497 = vadd.f32 0.0, %v2496
      %v2498 = vpop.f32.mrb[0].mxu0
      %v2499 = vpop.f32.mrb[0].mxu0
      %v2500 = vadd.f32 0.0, %v2499
      %v2501 = vpop.f32.mrb[0].mxu0
      %2502 = vmatprep.mubr.bf16.mxu0 0
      %2503 = vmatmul.mubr.bf16.gmra.mrb[0].mxu0 %v2398
      %v2504 = vpop.f32.mrb[0].mxu0
      %v2505 = vadd.f32 0.0, %v2504
      %v2506 = vpop.f32.mrb[0].mxu0
      %v2507 = vpop.f32.mrb[0].mxu0
      %v2508 = vadd.f32 0.0, %v2507
      %v2509 = vpop.f32.mrb[0].mxu0
      %2510 = vmatprep.mubr.bf16.mxu0 0
      %2511 = vmatmul.mubr.bf16.gmra.mrb[0].mxu0 %v2401
      %v2512 = vpop.f32.mrb[0].mxu0
      %v2513 = vadd.f32 0.0, %v2512
      %v2514 = vpop.f32.mrb[0].mxu0
      %v2515 = vpop.f32.mrb[0].mxu0
      %v2516 = vadd.f32 0.0, %v2515
      %v2517 = vpop.f32.mrb[0].mxu0
      %2518 = vmatprep.mubr.bf16.mxu0 0
      %2519 = vmatmul.mubr.bf16.gmra.mrb[0].mxu0 %v2404
      %v2520 = vpop.f32.mrb[0].mxu0
      %v2521 = vadd.f32 0.0, %v2520
      %v2522 = vpop.f32.mrb[0].mxu0
      %v2523 = vpop.f32.mrb[0].mxu0
      %v2524 = vadd.f32 0.0, %v2523
      %v2525 = vpop.f32.mrb[0].mxu0
      %2526 = vdwg.mxu0
      %v2528 = vsel %vm2381, %v2357, 0
      %v2531 = vsel %vm2381, %v2358, 0
      %v2534 = vsel %vm2381, %v2359, 0
      %v2537 = vsel %vm2381, %v2360, 0
      %v2540 = vsel %vm2381, %v2361, 0
      %v2543 = vsel %vm2381, %v2362, 0
      %v2546 = vsel %vm2381, %v2363, 0
      %v2549 = vsel %vm2381, %v2364, 0
      %v2552 = vsel %vm2381, %v2291, 0
      %v2555 = vsel %vm2381, %v2292, 0
      %v2558 = vsel %vm2381, %v2293, 0
      %v2561 = vsel %vm2381, %v2294, 0
      %v2564 = vsel %vm2381, %v2295, 0
      %v2567 = vsel %vm2381, %v2296, 0
      %v2570 = vsel %vm2381, %v2297, 0
      %v2573 = vsel %vm2381, %v2298, 0
      %2575 = vmatprep.subr.bf16.mxu0 0
      %2576 = vmatpush1.bf16.xpose.msra.mxu0 %v2552
      %2577 = vmatprep.subr.bf16.mxu0 0
      %2578 = vmatpush1.bf16.xpose.msra.mxu0 %v2555
      %2579 = vmatprep.subr.bf16.mxu0 0
      %2580 = vmatpush1.bf16.xpose.msra.mxu0 %v2558
      %2581 = vmatprep.subr.bf16.mxu0 0
      %2582 = vmatpush1.bf16.xpose.msra.mxu0 %v2561
      %2583 = vmatprep.subr.bf16.mxu0 0
      %2584 = vmatpush1.bf16.xpose.msra.mxu0 %v2564
      %2585 = vmatprep.subr.bf16.mxu0 0
      %2586 = vmatpush1.bf16.xpose.msra.mxu0 %v2567
      %2587 = vmatprep.subr.bf16.mxu0 0
      %2588 = vmatpush1.bf16.xpose.msra.mxu0 %v2570
      %2589 = vmatprep.subr.bf16.mxu0 0
      %2590 = vmatpush1.bf16.xpose.msra.mxu0 %v2573
      %2591 = vmatprep.subr.bf16.mxu0 0
      %2592 = vmatpush1.bf16.xpose.msra.mxu0 0
      %2593 = vmatprep.subr.bf16.mxu0 0
      %2594 = vmatpush1.bf16.xpose.msra.mxu0 0
      %2595 = vmatprep.subr.bf16.mxu0 0
      %2596 = vmatpush1.bf16.xpose.msra.mxu0 0
      %2597 = vmatprep.subr.bf16.mxu0 0
      %2598 = vmatpush1.bf16.xpose.msra.mxu0 0
      %2599 = vmatprep.subr.bf16.mxu0 0
      %2600 = vmatpush1.bf16.xpose.msra.mxu0 0
      %2601 = vmatprep.subr.bf16.mxu0 0
      %2602 = vmatpush1.bf16.xpose.msra.mxu0 0
      %2603 = vmatprep.subr.bf16.mxu0 0
      %2604 = vmatpush1.bf16.xpose.msra.mxu0 0
      %2605 = vmatprep.subr.bf16.mxu0 0
      %2606 = vmatpush1.bf16.xpose.msra.mxu0 0
      %2607 = vmatprep.mubr.bf16.mxu0 0
      %2608 = vmatmul.mubr.bf16.gmra.mrb[0].mxu0 %v2528
      %v2609 = vpop.f32.mrb[0].mxu0
      %v2610 = vadd.f32 0.0, %v2609
      %v2611 = vpop.f32.mrb[0].mxu0
      %v2612 = vpop.f32.mrb[0].mxu0
      %v2613 = vadd.f32 0.0, %v2612
      %v2614 = vpop.f32.mrb[0].mxu0
      %2615 = vmatprep.mubr.bf16.mxu0 0
      %2616 = vmatmul.mubr.bf16.gmra.mrb[0].mxu0 %v2531
      %v2617 = vpop.f32.mrb[0].mxu0
      %v2618 = vadd.f32 0.0, %v2617
      %v2619 = vpop.f32.mrb[0].mxu0
      %v2620 = vpop.f32.mrb[0].mxu0
      %v2621 = vadd.f32 0.0, %v2620
      %v2622 = vpop.f32.mrb[0].mxu0
      %2623 = vmatprep.mubr.bf16.mxu0 0
      %2624 = vmatmul.mubr.bf16.gmra.mrb[0].mxu0 %v2534
      %v2625 = vpop.f32.mrb[0].mxu0
      %v2626 = vadd.f32 0.0, %v2625
      %v2627 = vpop.f32.mrb[0].mxu0
      %v2628 = vpop.f32.mrb[0].mxu0
      %v2629 = vadd.f32 0.0, %v2628
      %v2630 = vpop.f32.mrb[0].mxu0
      %2631 = vmatprep.mubr.bf16.mxu0 0
      %2632 = vmatmul.mubr.bf16.gmra.mrb[0].mxu0 %v2537
      %v2633 = vpop.f32.mrb[0].mxu0
      %v2634 = vadd.f32 0.0, %v2633
      %v2635 = vpop.f32.mrb[0].mxu0
      %v2636 = vpop.f32.mrb[0].mxu0
      %v2637 = vadd.f32 0.0, %v2636
      %v2638 = vpop.f32.mrb[0].mxu0
      %2639 = vmatprep.mubr.bf16.mxu0 0
      %2640 = vmatmul.mubr.bf16.gmra.mrb[0].mxu0 %v2540
      %v2641 = vpop.f32.mrb[0].mxu0
      %v2642 = vadd.f32 0.0, %v2641
      %v2643 = vpop.f32.mrb[0].mxu0
      %v2644 = vpop.f32.mrb[0].mxu0
      %v2645 = vadd.f32 0.0, %v2644
      %v2646 = vpop.f32.mrb[0].mxu0
      %2647 = vmatprep.mubr.bf16.mxu0 0
      %2648 = vmatmul.mubr.bf16.gmra.mrb[0].mxu0 %v2543
      %v2649 = vpop.f32.mrb[0].mxu0
      %v2650 = vadd.f32 0.0, %v2649
      %v2651 = vpop.f32.mrb[0].mxu0
      %v2652 = vpop.f32.mrb[0].mxu0
      %v2653 = vadd.f32 0.0, %v2652
      %v2654 = vpop.f32.mrb[0].mxu0
      %2655 = vmatprep.mubr.bf16.mxu0 0
      %2656 = vmatmul.mubr.bf16.gmra.mrb[0].mxu0 %v2546
      %v2657 = vpop.f32.mrb[0].mxu0
      %v2658 = vadd.f32 0.0, %v2657
      %v2659 = vpop.f32.mrb[0].mxu0
      %v2660 = vpop.f32.mrb[0].mxu0
      %v2661 = vadd.f32 0.0, %v2660
      %v2662 = vpop.f32.mrb[0].mxu0
      %2663 = vmatprep.mubr.bf16.mxu0 0
      %2664 = vmatmul.mubr.bf16.gmra.mrb[0].mxu0 %v2549
      %v2665 = vpop.f32.mrb[0].mxu0
      %v2666 = vadd.f32 0.0, %v2665
      %v2667 = vpop.f32.mrb[0].mxu0
      %v2668 = vpop.f32.mrb[0].mxu0
      %v2669 = vadd.f32 0.0, %v2668
      %v2670 = vpop.f32.mrb[0].mxu0
      %2671 = vdwg.mxu0
      %v2673 = vsel %vm2381, %v2365, 0
      %v2676 = vsel %vm2381, %v2366, 0
      %v2679 = vsel %vm2381, %v2367, 0
      %v2682 = vsel %vm2381, %v2368, 0
      %v2685 = vsel %vm2381, %v2369, 0
      %v2688 = vsel %vm2381, %v2370, 0
      %v2691 = vsel %vm2381, %v2371, 0
      %v2694 = vsel %vm2381, %v2372, 0
      %v2697 = vsel %vm2381, %v2299, 0
      %v2700 = vsel %vm2381, %v2300, 0
      %v2703 = vsel %vm2381, %v2301, 0
      %v2706 = vsel %vm2381, %v2302, 0
      %v2709 = vsel %vm2381, %v2303, 0
      %v2712 = vsel %vm2381, %v2304, 0
      %v2715 = vsel %vm2381, %v2305, 0
      %v2718 = vsel %vm2381, %v2306, 0
      %2720 = vmatprep.subr.bf16.mxu0 0
      %2721 = vmatpush1.bf16.xpose.msra.mxu0 %v2697
      %2722 = vmatprep.subr.bf16.mxu0 0
      %2723 = vmatpush1.bf16.xpose.msra.mxu0 %v2700
      %2724 = vmatprep.subr.bf16.mxu0 0
      %2725 = vmatpush1.bf16.xpose.msra.mxu0 %v2703
      %2726 = vmatprep.subr.bf16.mxu0 0
      %2727 = vmatpush1.bf16.xpose.msra.mxu0 %v2706
      %2728 = vmatprep.subr.bf16.mxu0 0
      %2729 = vmatpush1.bf16.xpose.msra.mxu0 %v2709
      %2730 = vmatprep.subr.bf16.mxu0 0
      %2731 = vmatpush1.bf16.xpose.msra.mxu0 %v2712
      %2732 = vmatprep.subr.bf16.mxu0 0
      %2733 = vmatpush1.bf16.xpose.msra.mxu0 %v2715
      %2734 = vmatprep.subr.bf16.mxu0 0
      %2735 = vmatpush1.bf16.xpose.msra.mxu0 %v2718
      %2736 = vmatprep.subr.bf16.mxu0 0
      %2737 = vmatpush1.bf16.xpose.msra.mxu0 0
      %2738 = vmatprep.subr.bf16.mxu0 0
      %2739 = vmatpush1.bf16.xpose.msra.mxu0 0
      %2740 = vmatprep.subr.bf16.mxu0 0
      %2741 = vmatpush1.bf16.xpose.msra.mxu0 0
      %2742 = vmatprep.subr.bf16.mxu0 0
      %2743 = vmatpush1.bf16.xpose.msra.mxu0 0
      %2744 = vmatprep.subr.bf16.mxu0 0
      %2745 = vmatpush1.bf16.xpose.msra.mxu0 0
      %2746 = vmatprep.subr.bf16.mxu0 0
      %2747 = vmatpush1.bf16.xpose.msra.mxu0 0
      %2748 = vmatprep.subr.bf16.mxu0 0
      %2749 = vmatpush1.bf16.xpose.msra.mxu0 0
      %2750 = vmatprep.subr.bf16.mxu0 0
      %2751 = vmatpush1.bf16.xpose.msra.mxu0 0
      %2752 = vmatprep.mubr.bf16.mxu0 0
      %2753 = vmatmul.mubr.bf16.gmra.mrb[0].mxu0 %v2673
      %v2754 = vpop.f32.mrb[0].mxu0
      %v2755 = vadd.f32 0.0, %v2754
      %v2756 = vpop.f32.mrb[0].mxu0
      %v2757 = vpop.f32.mrb[0].mxu0
      %v2758 = vadd.f32 0.0, %v2757
      %v2759 = vpop.f32.mrb[0].mxu0
      %2760 = vmatprep.mubr.bf16.mxu0 0
      %2761 = vmatmul.mubr.bf16.gmra.mrb[0].mxu0 %v2676
      %v2762 = vpop.f32.mrb[0].mxu0
      %v2763 = vadd.f32 0.0, %v2762
      %v2764 = vpop.f32.mrb[0].mxu0
      %v2765 = vpop.f32.mrb[0].mxu0
      %v2766 = vadd.f32 0.0, %v2765
      %v2767 = vpop.f32.mrb[0].mxu0
      %2768 = vmatprep.mubr.bf16.mxu0 0
      %2769 = vmatmul.mubr.bf16.gmra.mrb[0].mxu0 %v2679
      %v2770 = vpop.f32.mrb[0].mxu0
      %v2771 = vadd.f32 0.0, %v2770
      %v2772 = vpop.f32.mrb[0].mxu0
      %v2773 = vpop.f32.mrb[0].mxu0
      %v2774 = vadd.f32 0.0, %v2773
      %v2775 = vpop.f32.mrb[0].mxu0
      %2776 = vmatprep.mubr.bf16.mxu0 0
      %2777 = vmatmul.mubr.bf16.gmra.mrb[0].mxu0 %v2682
      %v2778 = vpop.f32.mrb[0].mxu0
      %v2779 = vadd.f32 0.0, %v2778
      %v2780 = vpop.f32.mrb[0].mxu0
      %v2781 = vpop.f32.mrb[0].mxu0
      %v2782 = vadd.f32 0.0, %v2781
      %v2783 = vpop.f32.mrb[0].mxu0
      %2784 = vmatprep.mubr.bf16.mxu0 0
      %2785 = vmatmul.mubr.bf16.gmra.mrb[0].mxu0 %v2685
      %v2786 = vpop.f32.mrb[0].mxu0
      %v2787 = vadd.f32 0.0, %v2786
      %v2788 = vpop.f32.mrb[0].mxu0
      %v2789 = vpop.f32.mrb[0].mxu0
      %v2790 = vadd.f32 0.0, %v2789
      %v2791 = vpop.f32.mrb[0].mxu0
      %2792 = vmatprep.mubr.bf16.mxu0 0
      %2793 = vmatmul.mubr.bf16.gmra.mrb[0].mxu0 %v2688
      %v2794 = vpop.f32.mrb[0].mxu0
      %v2795 = vadd.f32 0.0, %v2794
      %v2796 = vpop.f32.mrb[0].mxu0
      %v2797 = vpop.f32.mrb[0].mxu0
      %v2798 = vadd.f32 0.0, %v2797
      %v2799 = vpop.f32.mrb[0].mxu0
      %2800 = vmatprep.mubr.bf16.mxu0 0
      %2801 = vmatmul.mubr.bf16.gmra.mrb[0].mxu0 %v2691
      %v2802 = vpop.f32.mrb[0].mxu0
      %v2803 = vadd.f32 0.0, %v2802
      %v2804 = vpop.f32.mrb[0].mxu0
      %v2805 = vpop.f32.mrb[0].mxu0
      %v2806 = vadd.f32 0.0, %v2805
      %v2807 = vpop.f32.mrb[0].mxu0
      %2808 = vmatprep.mubr.bf16.mxu0 0
      %2809 = vmatmul.mubr.bf16.gmra.mrb[0].mxu0 %v2694
      %v2810 = vpop.f32.mrb[0].mxu0
      %v2811 = vadd.f32 0.0, %v2810
      %v2812 = vpop.f32.mrb[0].mxu0
      %v2813 = vpop.f32.mrb[0].mxu0
      %v2814 = vadd.f32 0.0, %v2813
      %v2815 = vpop.f32.mrb[0].mxu0
      %2816 = vdwg.mxu0
      %v2818 = vsel %vm2381, %v2373, 0
      %v2821 = vsel %vm2381, %v2374, 0
      %v2824 = vsel %vm2381, %v2375, 0
      %v2827 = vsel %vm2381, %v2376, 0
      %v2830 = vsel %vm2381, %v2377, 0
      %v2833 = vsel %vm2381, %v2378, 0
      %v2836 = vsel %vm2381, %v2379, 0
      %v2839 = vsel %vm2381, %v2380, 0
      %v2842 = vsel %vm2381, %v2307, 0
      %v2845 = vsel %vm2381, %v2308, 0
      %v2848 = vsel %vm2381, %v2309, 0
      %v2851 = vsel %vm2381, %v2310, 0
      %v2854 = vsel %vm2381, %v2311, 0
      %v2857 = vsel %vm2381, %v2312, 0
      %v2860 = vsel %vm2381, %v2313, 0
      %v2863 = vsel %vm2381, %v2314, 0
      %2865 = vmatprep.subr.bf16.mxu0 0
      %2866 = vmatpush1.bf16.xpose.msra.mxu0 %v2842
      %2867 = vmatprep.subr.bf16.mxu0 0
      %2868 = vmatpush1.bf16.xpose.msra.mxu0 %v2845
      %2869 = vmatprep.subr.bf16.mxu0 0
      %2870 = vmatpush1.bf16.xpose.msra.mxu0 %v2848
      %2871 = vmatprep.subr.bf16.mxu0 0
      %2872 = vmatpush1.bf16.xpose.msra.mxu0 %v2851
      %2873 = vmatprep.subr.bf16.mxu0 0
      %2874 = vmatpush1.bf16.xpose.msra.mxu0 %v2854
      %2875 = vmatprep.subr.bf16.mxu0 0
      %2876 = vmatpush1.bf16.xpose.msra.mxu0 %v2857
      %2877 = vmatprep.subr.bf16.mxu0 0
      %2878 = vmatpush1.bf16.xpose.msra.mxu0 %v2860
      %2879 = vmatprep.subr.bf16.mxu0 0
      %2880 = vmatpush1.bf16.xpose.msra.mxu0 %v2863
      %2881 = vmatprep.subr.bf16.mxu0 0
      %2882 = vmatpush1.bf16.xpose.msra.mxu0 0
      %2883 = vmatprep.subr.bf16.mxu0 0
      %2884 = vmatpush1.bf16.xpose.msra.mxu0 0
      %2885 = vmatprep.subr.bf16.mxu0 0
      %2886 = vmatpush1.bf16.xpose.msra.mxu0 0
      %2887 = vmatprep.subr.bf16.mxu0 0
      %2888 = vmatpush1.bf16.xpose.msra.mxu0 0
      %2889 = vmatprep.subr.bf16.mxu0 0
      %2890 = vmatpush1.bf16.xpose.msra.mxu0 0
      %2891 = vmatprep.subr.bf16.mxu0 0
      %2892 = vmatpush1.bf16.xpose.msra.mxu0 0
      %2893 = vmatprep.subr.bf16.mxu0 0
      %2894 = vmatpush1.bf16.xpose.msra.mxu0 0
      %2895 = vmatprep.subr.bf16.mxu0 0
      %2896 = vmatpush1.bf16.xpose.msra.mxu0 0
      %2897 = vmatprep.mubr.bf16.mxu0 0
      %2898 = vmatmul.mubr.bf16.gmra.mrb[0].mxu0 %v2818
      %v2899 = vpop.f32.mrb[0].mxu0
      %v2900 = vadd.f32 0.0, %v2899
      %v2901 = vpop.f32.mrb[0].mxu0
      %v2902 = vpop.f32.mrb[0].mxu0
      %v2903 = vadd.f32 0.0, %v2902
      %v2904 = vpop.f32.mrb[0].mxu0
      %2905 = vmatprep.mubr.bf16.mxu0 0
      %2906 = vmatmul.mubr.bf16.gmra.mrb[0].mxu0 %v2821
      %v2907 = vpop.f32.mrb[0].mxu0
      %v2908 = vadd.f32 0.0, %v2907
      %v2909 = vpop.f32.mrb[0].mxu0
      %v2910 = vpop.f32.mrb[0].mxu0
      %v2911 = vadd.f32 0.0, %v2910
      %v2912 = vpop.f32.mrb[0].mxu0
      %2913 = vmatprep.mubr.bf16.mxu0 0
      %2914 = vmatmul.mubr.bf16.gmra.mrb[0].mxu0 %v2824
      %v2915 = vpop.f32.mrb[0].mxu0
      %v2916 = vadd.f32 0.0, %v2915
      %v2917 = vpop.f32.mrb[0].mxu0
      %v2918 = vpop.f32.mrb[0].mxu0
      %v2919 = vadd.f32 0.0, %v2918
      %v2920 = vpop.f32.mrb[0].mxu0
      %2921 = vmatprep.mubr.bf16.mxu0 0
      %2922 = vmatmul.mubr.bf16.gmra.mrb[0].mxu0 %v2827
      %v2923 = vpop.f32.mrb[0].mxu0
      %v2924 = vadd.f32 0.0, %v2923
      %v2925 = vpop.f32.mrb[0].mxu0
      %v2926 = vpop.f32.mrb[0].mxu0
      %v2927 = vadd.f32 0.0, %v2926
      %v2928 = vpop.f32.mrb[0].mxu0
      %2929 = vmatprep.mubr.bf16.mxu0 0
      %2930 = vmatmul.mubr.bf16.gmra.mrb[0].mxu0 %v2830
      %v2931 = vpop.f32.mrb[0].mxu0
      %v2932 = vadd.f32 0.0, %v2931
      %v2933 = vpop.f32.mrb[0].mxu0
      %v2934 = vpop.f32.mrb[0].mxu0
      %v2935 = vadd.f32 0.0, %v2934
      %v2936 = vpop.f32.mrb[0].mxu0
      %2937 = vmatprep.mubr.bf16.mxu0 0
      %2938 = vmatmul.mubr.bf16.gmra.mrb[0].mxu0 %v2833
      %v2939 = vpop.f32.mrb[0].mxu0
      %v2940 = vadd.f32 0.0, %v2939
      %v2941 = vpop.f32.mrb[0].mxu0
      %v2942 = vpop.f32.mrb[0].mxu0
      %v2943 = vadd.f32 0.0, %v2942
      %v2944 = vpop.f32.mrb[0].mxu0
      %2945 = vmatprep.mubr.bf16.mxu0 0
      %2946 = vmatmul.mubr.bf16.gmra.mrb[0].mxu0 %v2836
      %v2947 = vpop.f32.mrb[0].mxu0
      %v2948 = vadd.f32 0.0, %v2947
      %v2949 = vpop.f32.mrb[0].mxu0
      %v2950 = vpop.f32.mrb[0].mxu0
      %v2951 = vadd.f32 0.0, %v2950
      %v2952 = vpop.f32.mrb[0].mxu0
      %2953 = vmatprep.mubr.bf16.mxu0 0
      %2954 = vmatmul.mubr.bf16.gmra.mrb[0].mxu0 %v2839
      %v2955 = vpop.f32.mrb[0].mxu0
      %v2956 = vadd.f32 0.0, %v2955
      %v2957 = vpop.f32.mrb[0].mxu0
      %v2958 = vpop.f32.mrb[0].mxu0
      %v2959 = vadd.f32 0.0, %v2958
      %v2960 = vpop.f32.mrb[0].mxu0
      %2961 = vdwg.mxu0
      %v2962 = vld [vmem:[#allocation5] sm:$0xff]
      %v2963 = vld [vmem:[#allocation5 + $0x8] sm:$0xff]
      %v2964 = vld [vmem:[#allocation5 + $0x10] sm:$0xff]
      %v2965 = vld [vmem:[#allocation5 + $0x18] sm:$0xff]
      %v2966 = vld [vmem:[#allocation5 + $0x20] sm:$0xff]
      %v2967 = vld [vmem:[#allocation5 + $0x28] sm:$0xff]
      %v2968 = vld [vmem:[#allocation5 + $0x30] sm:$0xff]
      %v2969 = vld [vmem:[#allocation5 + $0x38] sm:$0xff]
      %v2970 = vld [vmem:[#allocation5 + $0x40] sm:$0xff]
      %v2971 = vld [vmem:[#allocation5 + $0x48] sm:$0xff]
      %v2972 = vld [vmem:[#allocation5 + $0x50] sm:$0xff]
      %v2973 = vld [vmem:[#allocation5 + $0x58] sm:$0xff]
      %v2974 = vld [vmem:[#allocation5 + $0x60] sm:$0xff]
      %v2975 = vld [vmem:[#allocation5 + $0x68] sm:$0xff]
      %v2976 = vld [vmem:[#allocation5 + $0x70] sm:$0xff]
      %v2977 = vld [vmem:[#allocation5 + $0x78] sm:$0xff]
      %v2978 = vld [vmem:[#allocation5 + $0x80] sm:$0xff]
      %v2979 = vld [vmem:[#allocation5 + $0x88] sm:$0xff]
      %v2980 = vld [vmem:[#allocation5 + $0x90] sm:$0xff]
      %v2981 = vld [vmem:[#allocation5 + $0x98] sm:$0xff]
      %v2982 = vld [vmem:[#allocation5 + $0xa0] sm:$0xff]
      %v2983 = vld [vmem:[#allocation5 + $0xa8] sm:$0xff]
      %v2984 = vld [vmem:[#allocation5 + $0xb0] sm:$0xff]
      %v2985 = vld [vmem:[#allocation5 + $0xb8] sm:$0xff]
      %v2986 = vld [vmem:[#allocation5 + $0xc0] sm:$0xff]
      %v2987 = vld [vmem:[#allocation5 + $0xc8] sm:$0xff]
      %v2988 = vld [vmem:[#allocation5 + $0xd0] sm:$0xff]
      %v2989 = vld [vmem:[#allocation5 + $0xd8] sm:$0xff]
      %v2990 = vld [vmem:[#allocation5 + $0xe0] sm:$0xff]
      %v2991 = vld [vmem:[#allocation5 + $0xe8] sm:$0xff]
      %v2992 = vld [vmem:[#allocation5 + $0xf0] sm:$0xff]
      %v2993 = vld [vmem:[#allocation5 + $0xf8] sm:$0xff]
      %v2994 = vld [vmem:[#allocation5 + $0x100] sm:$0xff]
      %v2995 = vld [vmem:[#allocation5 + $0x108] sm:$0xff]
      %v2996 = vld [vmem:[#allocation5 + $0x110] sm:$0xff]
      %v2997 = vld [vmem:[#allocation5 + $0x118] sm:$0xff]
      %v2998 = vld [vmem:[#allocation5 + $0x120] sm:$0xff]
      %v2999 = vld [vmem:[#allocation5 + $0x128] sm:$0xff]
      %v3000 = vld [vmem:[#allocation5 + $0x130] sm:$0xff]
      %v3001 = vld [vmem:[#allocation5 + $0x138] sm:$0xff]
      %v3002 = vld [vmem:[#allocation5 + $0x140] sm:$0xff]
      %v3003 = vld [vmem:[#allocation5 + $0x148] sm:$0xff]
      %v3004 = vld [vmem:[#allocation5 + $0x150] sm:$0xff]
      %v3005 = vld [vmem:[#allocation5 + $0x158] sm:$0xff]
      %v3006 = vld [vmem:[#allocation5 + $0x160] sm:$0xff]
      %v3007 = vld [vmem:[#allocation5 + $0x168] sm:$0xff]
      %v3008 = vld [vmem:[#allocation5 + $0x170] sm:$0xff]
      %v3009 = vld [vmem:[#allocation5 + $0x178] sm:$0xff]
      %v3010 = vld [vmem:[#allocation5 + $0x180] sm:$0xff]
      %v3011 = vld [vmem:[#allocation5 + $0x188] sm:$0xff]
      %v3012 = vld [vmem:[#allocation5 + $0x190] sm:$0xff]
      %v3013 = vld [vmem:[#allocation5 + $0x198] sm:$0xff]
      %v3014 = vld [vmem:[#allocation5 + $0x1a0] sm:$0xff]
      %v3015 = vld [vmem:[#allocation5 + $0x1a8] sm:$0xff]
      %v3016 = vld [vmem:[#allocation5 + $0x1b0] sm:$0xff]
      %v3017 = vld [vmem:[#allocation5 + $0x1b8] sm:$0xff]
      %v3018 = vld [vmem:[#allocation5 + $0x1c0] sm:$0xff]
      %v3019 = vld [vmem:[#allocation5 + $0x1c8] sm:$0xff]
      %v3020 = vld [vmem:[#allocation5 + $0x1d0] sm:$0xff]
      %v3021 = vld [vmem:[#allocation5 + $0x1d8] sm:$0xff]
      %v3022 = vld [vmem:[#allocation5 + $0x1e0] sm:$0xff]
      %v3023 = vld [vmem:[#allocation5 + $0x1e8] sm:$0xff]
      %v3024 = vld [vmem:[#allocation5 + $0x1f0] sm:$0xff]
      %v3025 = vld [vmem:[#allocation5 + $0x1f8] sm:$0xff]
      %3026 = vmax.xlane.f32.xlu0 %v2465
      %v3027 = vpop.xlane.xlu0 %3026
      %3028 = vmax.xlane.f32.xlu0 %v2468
      %v3029 = vpop.xlane.xlu0 %3028
      %3030 = vmax.xlane.f32.xlu0 %v2473
      %v3031 = vpop.xlane.xlu0 %3030
      %3032 = vmax.xlane.f32.xlu0 %v2476
      %v3033 = vpop.xlane.xlu0 %3032
      %3034 = vmax.xlane.f32.xlu0 %v2481
      %v3035 = vpop.xlane.xlu0 %3034
      %3036 = vmax.xlane.f32.xlu0 %v2484
      %v3037 = vpop.xlane.xlu0 %3036
      %3038 = vmax.xlane.f32.xlu0 %v2489
      %v3039 = vpop.xlane.xlu0 %3038
      %3040 = vmax.xlane.f32.xlu0 %v2492
      %v3041 = vpop.xlane.xlu0 %3040
      %3042 = vmax.xlane.f32.xlu0 %v2497
      %v3043 = vpop.xlane.xlu0 %3042
      %3044 = vmax.xlane.f32.xlu0 %v2500
      %v3045 = vpop.xlane.xlu0 %3044
      %3046 = vmax.xlane.f32.xlu0 %v2505
      %v3047 = vpop.xlane.xlu0 %3046
      %3048 = vmax.xlane.f32.xlu0 %v2508
      %v3049 = vpop.xlane.xlu0 %3048
      %3050 = vmax.xlane.f32.xlu0 %v2513
      %v3051 = vpop.xlane.xlu0 %3050
      %3052 = vmax.xlane.f32.xlu0 %v2516
      %v3053 = vpop.xlane.xlu0 %3052
      %3054 = vmax.xlane.f32.xlu0 %v2521
      %v3055 = vpop.xlane.xlu0 %3054
      %3056 = vmax.xlane.f32.xlu0 %v2524
      %v3057 = vpop.xlane.xlu0 %3056
      %3058 = vmax.xlane.f32.xlu0 %v2610
      %v3059 = vpop.xlane.xlu0 %3058
      %3060 = vmax.xlane.f32.xlu0 %v2613
      %v3061 = vpop.xlane.xlu0 %3060
      %3062 = vmax.xlane.f32.xlu0 %v2618
      %v3063 = vpop.xlane.xlu0 %3062
      %3064 = vmax.xlane.f32.xlu0 %v2621
      %v3065 = vpop.xlane.xlu0 %3064
      %3066 = vmax.xlane.f32.xlu0 %v2626
      %v3067 = vpop.xlane.xlu0 %3066
      %3068 = vmax.xlane.f32.xlu0 %v2629
      %v3069 = vpop.xlane.xlu0 %3068
      %3070 = vmax.xlane.f32.xlu0 %v2634
      %v3071 = vpop.xlane.xlu0 %3070
      %3072 = vmax.xlane.f32.xlu0 %v2637
      %v3073 = vpop.xlane.xlu0 %3072
      %3074 = vmax.xlane.f32.xlu0 %v2642
      %v3075 = vpop.xlane.xlu0 %3074
      %3076 = vmax.xlane.f32.xlu0 %v2645
      %v3077 = vpop.xlane.xlu0 %3076
      %3078 = vmax.xlane.f32.xlu0 %v2650
      %v3079 = vpop.xlane.xlu0 %3078
      %3080 = vmax.xlane.f32.xlu0 %v2653
      %v3081 = vpop.xlane.xlu0 %3080
      %3082 = vmax.xlane.f32.xlu0 %v2658
      %v3083 = vpop.xlane.xlu0 %3082
      %3084 = vmax.xlane.f32.xlu0 %v2661
      %v3085 = vpop.xlane.xlu0 %3084
      %3086 = vmax.xlane.f32.xlu0 %v2666
      %v3087 = vpop.xlane.xlu0 %3086
      %3088 = vmax.xlane.f32.xlu0 %v2669
      %v3089 = vpop.xlane.xlu0 %3088
      %3090 = vmax.xlane.f32.xlu0 %v2755
      %v3091 = vpop.xlane.xlu0 %3090
      %3092 = vmax.xlane.f32.xlu0 %v2758
      %v3093 = vpop.xlane.xlu0 %3092
      %3094 = vmax.xlane.f32.xlu0 %v2763
      %v3095 = vpop.xlane.xlu0 %3094
      %3096 = vmax.xlane.f32.xlu0 %v2766
      %v3097 = vpop.xlane.xlu0 %3096
      %3098 = vmax.xlane.f32.xlu0 %v2771
      %v3099 = vpop.xlane.xlu0 %3098
      %3100 = vmax.xlane.f32.xlu0 %v2774
      %v3101 = vpop.xlane.xlu0 %3100
      %3102 = vmax.xlane.f32.xlu0 %v2779
      %v3103 = vpop.xlane.xlu0 %3102
      %3104 = vmax.xlane.f32.xlu0 %v2782
      %v3105 = vpop.xlane.xlu0 %3104
      %3106 = vmax.xlane.f32.xlu0 %v2787
      %v3107 = vpop.xlane.xlu0 %3106
      %3108 = vmax.xlane.f32.xlu0 %v2790
      %v3109 = vpop.xlane.xlu0 %3108
      %3110 = vmax.xlane.f32.xlu0 %v2795
      %v3111 = vpop.xlane.xlu0 %3110
      %3112 = vmax.xlane.f32.xlu0 %v2798
      %v3113 = vpop.xlane.xlu0 %3112
      %3114 = vmax.xlane.f32.xlu0 %v2803
      %v3115 = vpop.xlane.xlu0 %3114
      %3116 = vmax.xlane.f32.xlu0 %v2806
      %v3117 = vpop.xlane.xlu0 %3116
      %3118 = vmax.xlane.f32.xlu0 %v2811
      %v3119 = vpop.xlane.xlu0 %3118
      %3120 = vmax.xlane.f32.xlu0 %v2814
      %v3121 = vpop.xlane.xlu0 %3120
      %3122 = vmax.xlane.f32.xlu0 %v2900
      %v3123 = vpop.xlane.xlu0 %3122
      %3124 = vmax.xlane.f32.xlu0 %v2903
      %v3125 = vpop.xlane.xlu0 %3124
      %3126 = vmax.xlane.f32.xlu0 %v2908
      %v3127 = vpop.xlane.xlu0 %3126
      %3128 = vmax.xlane.f32.xlu0 %v2911
      %v3129 = vpop.xlane.xlu0 %3128
      %3130 = vmax.xlane.f32.xlu0 %v2916
      %v3131 = vpop.xlane.xlu0 %3130
      %3132 = vmax.xlane.f32.xlu0 %v2919
      %v3133 = vpop.xlane.xlu0 %3132
      %3134 = vmax.xlane.f32.xlu0 %v2924
      %v3135 = vpop.xlane.xlu0 %3134
      %3136 = vmax.xlane.f32.xlu0 %v2927
      %v3137 = vpop.xlane.xlu0 %3136
      %3138 = vmax.xlane.f32.xlu0 %v2932
      %v3139 = vpop.xlane.xlu0 %3138
      %3140 = vmax.xlane.f32.xlu0 %v2935
      %v3141 = vpop.xlane.xlu0 %3140
      %3142 = vmax.xlane.f32.xlu0 %v2940
      %v3143 = vpop.xlane.xlu0 %3142
      %3144 = vmax.xlane.f32.xlu0 %v2943
      %v3145 = vpop.xlane.xlu0 %3144
      %3146 = vmax.xlane.f32.xlu0 %v2948
      %v3147 = vpop.xlane.xlu0 %3146
      %3148 = vmax.xlane.f32.xlu0 %v2951
      %v3149 = vpop.xlane.xlu0 %3148
      %3150 = vmax.xlane.f32.xlu0 %v2956
      %v3151 = vpop.xlane.xlu0 %3150
      %3152 = vmax.xlane.f32.xlu0 %v2959
      %v3153 = vpop.xlane.xlu0 %3152
      %v3154 = vmax.f32 %v2962, %v3027
      %v3155 = vmax.f32 %v2963, %v3029
      %v3156 = vmax.f32 %v2964, %v3031
      %v3157 = vmax.f32 %v2965, %v3033
      %v3158 = vmax.f32 %v2966, %v3035
      %v3159 = vmax.f32 %v2967, %v3037
      %v3160 = vmax.f32 %v2968, %v3039
      %v3161 = vmax.f32 %v2969, %v3041
      %v3162 = vmax.f32 %v2970, %v3043
      %v3163 = vmax.f32 %v2971, %v3045
      %v3164 = vmax.f32 %v2972, %v3047
      %v3165 = vmax.f32 %v2973, %v3049
      %v3166 = vmax.f32 %v2974, %v3051
      %v3167 = vmax.f32 %v2975, %v3053
      %v3168 = vmax.f32 %v2976, %v3055
      %v3169 = vmax.f32 %v2977, %v3057
      %v3170 = vmax.f32 %v2978, %v3059
      %v3171 = vmax.f32 %v2979, %v3061
      %v3172 = vmax.f32 %v2980, %v3063
      %v3173 = vmax.f32 %v2981, %v3065
      %v3174 = vmax.f32 %v2982, %v3067
      %v3175 = vmax.f32 %v2983, %v3069
      %v3176 = vmax.f32 %v2984, %v3071
      %v3177 = vmax.f32 %v2985, %v3073
      %v3178 = vmax.f32 %v2986, %v3075
      %v3179 = vmax.f32 %v2987, %v3077
      %v3180 = vmax.f32 %v2988, %v3079
      %v3181 = vmax.f32 %v2989, %v3081
      %v3182 = vmax.f32 %v2990, %v3083
      %v3183 = vmax.f32 %v2991, %v3085
      %v3184 = vmax.f32 %v2992, %v3087
      %v3185 = vmax.f32 %v2993, %v3089
      %v3186 = vmax.f32 %v2994, %v3091
      %v3187 = vmax.f32 %v2995, %v3093
      %v3188 = vmax.f32 %v2996, %v3095
      %v3189 = vmax.f32 %v2997, %v3097
      %v3190 = vmax.f32 %v2998, %v3099
      %v3191 = vmax.f32 %v2999, %v3101
      %v3192 = vmax.f32 %v3000, %v3103
      %v3193 = vmax.f32 %v3001, %v3105
      %v3194 = vmax.f32 %v3002, %v3107
      %v3195 = vmax.f32 %v3003, %v3109
      %v3196 = vmax.f32 %v3004, %v3111
      %v3197 = vmax.f32 %v3005, %v3113
      %v3198 = vmax.f32 %v3006, %v3115
      %v3199 = vmax.f32 %v3007, %v3117
      %v3200 = vmax.f32 %v3008, %v3119
      %v3201 = vmax.f32 %v3009, %v3121
      %v3202 = vmax.f32 %v3010, %v3123
      %v3203 = vmax.f32 %v3011, %v3125
      %v3204 = vmax.f32 %v3012, %v3127
      %v3205 = vmax.f32 %v3013, %v3129
      %v3206 = vmax.f32 %v3014, %v3131
      %v3207 = vmax.f32 %v3015, %v3133
      %v3208 = vmax.f32 %v3016, %v3135
      %v3209 = vmax.f32 %v3017, %v3137
      %v3210 = vmax.f32 %v3018, %v3139
      %v3211 = vmax.f32 %v3019, %v3141
      %v3212 = vmax.f32 %v3020, %v3143
      %v3213 = vmax.f32 %v3021, %v3145
      %v3214 = vmax.f32 %v3022, %v3147
      %v3215 = vmax.f32 %v3023, %v3149
      %v3216 = vmax.f32 %v3024, %v3151
      %v3217 = vmax.f32 %v3025, %v3153
      %v3218 = vsub.f32 %v2962, %v3154
      %v3219 = vsub.f32 %v2963, %v3155
      %v3220 = vsub.f32 %v2964, %v3156
      %v3221 = vsub.f32 %v2965, %v3157
      %v3222 = vsub.f32 %v2966, %v3158
      %v3223 = vsub.f32 %v2967, %v3159
      %v3224 = vsub.f32 %v2968, %v3160
      %v3225 = vsub.f32 %v2969, %v3161
      %v3226 = vsub.f32 %v2970, %v3162
      %v3227 = vsub.f32 %v2971, %v3163
      %v3228 = vsub.f32 %v2972, %v3164
      %v3229 = vsub.f32 %v2973, %v3165
      %v3230 = vsub.f32 %v2974, %v3166
      %v3231 = vsub.f32 %v2975, %v3167
      %v3232 = vsub.f32 %v2976, %v3168
      %v3233 = vsub.f32 %v2977, %v3169
      %v3234 = vsub.f32 %v2978, %v3170
      %v3235 = vsub.f32 %v2979, %v3171
      %v3236 = vsub.f32 %v2980, %v3172
      %v3237 = vsub.f32 %v2981, %v3173
      %v3238 = vsub.f32 %v2982, %v3174
      %v3239 = vsub.f32 %v2983, %v3175
      %v3240 = vsub.f32 %v2984, %v3176
      %v3241 = vsub.f32 %v2985, %v3177
      %v3242 = vsub.f32 %v2986, %v3178
      %v3243 = vsub.f32 %v2987, %v3179
      %v3244 = vsub.f32 %v2988, %v3180
      %v3245 = vsub.f32 %v2989, %v3181
      %v3246 = vsub.f32 %v2990, %v3182
      %v3247 = vsub.f32 %v2991, %v3183
      %v3248 = vsub.f32 %v2992, %v3184
      %v3249 = vsub.f32 %v2993, %v3185
      %v3250 = vsub.f32 %v2994, %v3186
      %v3251 = vsub.f32 %v2995, %v3187
      %v3252 = vsub.f32 %v2996, %v3188
      %v3253 = vsub.f32 %v2997, %v3189
      %v3254 = vsub.f32 %v2998, %v3190
      %v3255 = vsub.f32 %v2999, %v3191
      %v3256 = vsub.f32 %v3000, %v3192
      %v3257 = vsub.f32 %v3001, %v3193
      %v3258 = vsub.f32 %v3002, %v3194
      %v3259 = vsub.f32 %v3003, %v3195
      %v3260 = vsub.f32 %v3004, %v3196
      %v3261 = vsub.f32 %v3005, %v3197
      %v3262 = vsub.f32 %v3006, %v3198
      %v3263 = vsub.f32 %v3007, %v3199
      %v3264 = vsub.f32 %v3008, %v3200
      %v3265 = vsub.f32 %v3009, %v3201
      %v3266 = vsub.f32 %v3010, %v3202
      %v3267 = vsub.f32 %v3011, %v3203
      %v3268 = vsub.f32 %v3012, %v3204
      %v3269 = vsub.f32 %v3013, %v3205
      %v3270 = vsub.f32 %v3014, %v3206
      %v3271 = vsub.f32 %v3015, %v3207
      %v3272 = vsub.f32 %v3016, %v3208
      %v3273 = vsub.f32 %v3017, %v3209
      %v3274 = vsub.f32 %v3018, %v3210
      %v3275 = vsub.f32 %v3019, %v3211
      %v3276 = vsub.f32 %v3020, %v3212
      %v3277 = vsub.f32 %v3021, %v3213
      %v3278 = vsub.f32 %v3022, %v3214
      %v3279 = vsub.f32 %v3023, %v3215
      %v3280 = vsub.f32 %v3024, %v3216
      %v3281 = vsub.f32 %v3025, %v3217
      %v3282 = vmul.f32 %v3218, 1.442695
      %v3283 = vpow.pop %v3282
      %v3284 = vmul.f32 %v3219, 1.442695
      %v3285 = vpow.pop %v3284
      %v3286 = vmul.f32 %v3220, 1.442695
      %v3287 = vpow.pop %v3286
      %v3288 = vmul.f32 %v3221, 1.442695
      %v3289 = vpow.pop %v3288
      %v3290 = vmul.f32 %v3222, 1.442695
      %v3291 = vpow.pop %v3290
      %v3292 = vmul.f32 %v3223, 1.442695
      %v3293 = vpow.pop %v3292
      %v3294 = vmul.f32 %v3224, 1.442695
      %v3295 = vpow.pop %v3294
      %v3296 = vmul.f32 %v3225, 1.442695
      %v3297 = vpow.pop %v3296
      %v3298 = vmul.f32 %v3226, 1.442695
      %v3299 = vpow.pop %v3298
      %v3300 = vmul.f32 %v3227, 1.442695
      %v3301 = vpow.pop %v3300
      %v3302 = vmul.f32 %v3228, 1.442695
      %v3303 = vpow.pop %v3302
      %v3304 = vmul.f32 %v3229, 1.442695
      %v3305 = vpow.pop %v3304
      %v3306 = vmul.f32 %v3230, 1.442695
      %v3307 = vpow.pop %v3306
      %v3308 = vmul.f32 %v3231, 1.442695
      %v3309 = vpow.pop %v3308
      %v3310 = vmul.f32 %v3232, 1.442695
      %v3311 = vpow.pop %v3310
      %v3312 = vmul.f32 %v3233, 1.442695
      %v3313 = vpow.pop %v3312
      %v3314 = vmul.f32 %v3234, 1.442695
      %v3315 = vpow.pop %v3314
      %v3316 = vmul.f32 %v3235, 1.442695
      %v3317 = vpow.pop %v3316
      %v3318 = vmul.f32 %v3236, 1.442695
      %v3319 = vpow.pop %v3318
      %v3320 = vmul.f32 %v3237, 1.442695
      %v3321 = vpow.pop %v3320
      %v3322 = vmul.f32 %v3238, 1.442695
      %v3323 = vpow.pop %v3322
      %v3324 = vmul.f32 %v3239, 1.442695
      %v3325 = vpow.pop %v3324
      %v3326 = vmul.f32 %v3240, 1.442695
      %v3327 = vpow.pop %v3326
      %v3328 = vmul.f32 %v3241, 1.442695
      %v3329 = vpow.pop %v3328
      %v3330 = vmul.f32 %v3242, 1.442695
      %v3331 = vpow.pop %v3330
      %v3332 = vmul.f32 %v3243, 1.442695
      %v3333 = vpow.pop %v3332
      %v3334 = vmul.f32 %v3244, 1.442695
      %v3335 = vpow.pop %v3334
      %v3336 = vmul.f32 %v3245, 1.442695
      %v3337 = vpow.pop %v3336
      %v3338 = vmul.f32 %v3246, 1.442695
      %v3339 = vpow.pop %v3338
      %v3340 = vmul.f32 %v3247, 1.442695
      %v3341 = vpow.pop %v3340
      %v3342 = vmul.f32 %v3248, 1.442695
      %v3343 = vpow.pop %v3342
      %v3344 = vmul.f32 %v3249, 1.442695
      %v3345 = vpow.pop %v3344
      %v3346 = vmul.f32 %v3250, 1.442695
      %v3347 = vpow.pop %v3346
      %v3348 = vmul.f32 %v3251, 1.442695
      %v3349 = vpow.pop %v3348
      %v3350 = vmul.f32 %v3252, 1.442695
      %v3351 = vpow.pop %v3350
      %v3352 = vmul.f32 %v3253, 1.442695
      %v3353 = vpow.pop %v3352
      %v3354 = vmul.f32 %v3254, 1.442695
      %v3355 = vpow.pop %v3354
      %v3356 = vmul.f32 %v3255, 1.442695
      %v3357 = vpow.pop %v3356
      %v3358 = vmul.f32 %v3256, 1.442695
      %v3359 = vpow.pop %v3358
      %v3360 = vmul.f32 %v3257, 1.442695
      %v3361 = vpow.pop %v3360
      %v3362 = vmul.f32 %v3258, 1.442695
      %v3363 = vpow.pop %v3362
      %v3364 = vmul.f32 %v3259, 1.442695
      %v3365 = vpow.pop %v3364
      %v3366 = vmul.f32 %v3260, 1.442695
      %v3367 = vpow.pop %v3366
      %v3368 = vmul.f32 %v3261, 1.442695
      %v3369 = vpow.pop %v3368
      %v3370 = vmul.f32 %v3262, 1.442695
      %v3371 = vpow.pop %v3370
      %v3372 = vmul.f32 %v3263, 1.442695
      %v3373 = vpow.pop %v3372
      %v3374 = vmul.f32 %v3264, 1.442695
      %v3375 = vpow.pop %v3374
      %v3376 = vmul.f32 %v3265, 1.442695
      %v3377 = vpow.pop %v3376
      %v3378 = vmul.f32 %v3266, 1.442695
      %v3379 = vpow.pop %v3378
      %v3380 = vmul.f32 %v3267, 1.442695
      %v3381 = vpow.pop %v3380
      %v3382 = vmul.f32 %v3268, 1.442695
      %v3383 = vpow.pop %v3382
      %v3384 = vmul.f32 %v3269, 1.442695
      %v3385 = vpow.pop %v3384
      %v3386 = vmul.f32 %v3270, 1.442695
      %v3387 = vpow.pop %v3386
      %v3388 = vmul.f32 %v3271, 1.442695
      %v3389 = vpow.pop %v3388
      %v3390 = vmul.f32 %v3272, 1.442695
      %v3391 = vpow.pop %v3390
      %v3392 = vmul.f32 %v3273, 1.442695
      %v3393 = vpow.pop %v3392
      %v3394 = vmul.f32 %v3274, 1.442695
      %v3395 = vpow.pop %v3394
      %v3396 = vmul.f32 %v3275, 1.442695
      %v3397 = vpow.pop %v3396
      %v3398 = vmul.f32 %v3276, 1.442695
      %v3399 = vpow.pop %v3398
      %v3400 = vmul.f32 %v3277, 1.442695
      %v3401 = vpow.pop %v3400
      %v3402 = vmul.f32 %v3278, 1.442695
      %v3403 = vpow.pop %v3402
      %v3404 = vmul.f32 %v3279, 1.442695
      %v3405 = vpow.pop %v3404
      %v3406 = vmul.f32 %v3280, 1.442695
      %v3407 = vpow.pop %v3406
      %v3408 = vmul.f32 %v3281, 1.442695
      %v3409 = vpow.pop %v3408
      %3411 = vset.pattern.permute.xlu0 0
      %3412 = vperm.xlu0 %3411, %v3154
      %v3413 = vpop.permute.xlu0 %3412
      %3416 = vset.pattern.permute.xlu0 0
      %3417 = vperm.xlu0 %3416, %v3155
      %v3418 = vpop.permute.xlu0 %3417
      %3421 = vset.pattern.permute.xlu0 0
      %3422 = vperm.xlu0 %3421, %v3156
      %v3423 = vpop.permute.xlu0 %3422
      %3426 = vset.pattern.permute.xlu0 0
      %3427 = vperm.xlu0 %3426, %v3157
      %v3428 = vpop.permute.xlu0 %3427
      %3431 = vset.pattern.permute.xlu0 0
      %3432 = vperm.xlu0 %3431, %v3158
      %v3433 = vpop.permute.xlu0 %3432
      %3436 = vset.pattern.permute.xlu0 0
      %3437 = vperm.xlu0 %3436, %v3159
      %v3438 = vpop.permute.xlu0 %3437
      %3441 = vset.pattern.permute.xlu0 0
      %3442 = vperm.xlu0 %3441, %v3160
      %v3443 = vpop.permute.xlu0 %3442
      %3446 = vset.pattern.permute.xlu0 0
      %3447 = vperm.xlu0 %3446, %v3161
      %v3448 = vpop.permute.xlu0 %3447
      %3451 = vset.pattern.permute.xlu0 0
      %3452 = vperm.xlu0 %3451, %v3162
      %v3453 = vpop.permute.xlu0 %3452
      %3456 = vset.pattern.permute.xlu0 0
      %3457 = vperm.xlu0 %3456, %v3163
      %v3458 = vpop.permute.xlu0 %3457
      %3461 = vset.pattern.permute.xlu0 0
      %3462 = vperm.xlu0 %3461, %v3164
      %v3463 = vpop.permute.xlu0 %3462
      %3466 = vset.pattern.permute.xlu0 0
      %3467 = vperm.xlu0 %3466, %v3165
      %v3468 = vpop.permute.xlu0 %3467
      %3471 = vset.pattern.permute.xlu0 0
      %3472 = vperm.xlu0 %3471, %v3166
      %v3473 = vpop.permute.xlu0 %3472
      %3476 = vset.pattern.permute.xlu0 0
      %3477 = vperm.xlu0 %3476, %v3167
      %v3478 = vpop.permute.xlu0 %3477
      %3481 = vset.pattern.permute.xlu0 0
      %3482 = vperm.xlu0 %3481, %v3168
      %v3483 = vpop.permute.xlu0 %3482
      %3486 = vset.pattern.permute.xlu0 0
      %3487 = vperm.xlu0 %3486, %v3169
      %v3488 = vpop.permute.xlu0 %3487
      %3491 = vset.pattern.permute.xlu0 0
      %3492 = vperm.xlu0 %3491, %v3170
      %v3493 = vpop.permute.xlu0 %3492
      %3496 = vset.pattern.permute.xlu0 0
      %3497 = vperm.xlu0 %3496, %v3171
      %v3498 = vpop.permute.xlu0 %3497
      %3501 = vset.pattern.permute.xlu0 0
      %3502 = vperm.xlu0 %3501, %v3172
      %v3503 = vpop.permute.xlu0 %3502
      %3506 = vset.pattern.permute.xlu0 0
      %3507 = vperm.xlu0 %3506, %v3173
      %v3508 = vpop.permute.xlu0 %3507
      %3511 = vset.pattern.permute.xlu0 0
      %3512 = vperm.xlu0 %3511, %v3174
      %v3513 = vpop.permute.xlu0 %3512
      %3516 = vset.pattern.permute.xlu0 0
      %3517 = vperm.xlu0 %3516, %v3175
      %v3518 = vpop.permute.xlu0 %3517
      %3521 = vset.pattern.permute.xlu0 0
      %3522 = vperm.xlu0 %3521, %v3176
      %v3523 = vpop.permute.xlu0 %3522
      %3526 = vset.pattern.permute.xlu0 0
      %3527 = vperm.xlu0 %3526, %v3177
      %v3528 = vpop.permute.xlu0 %3527
      %3531 = vset.pattern.permute.xlu0 0
      %3532 = vperm.xlu0 %3531, %v3178
      %v3533 = vpop.permute.xlu0 %3532
      %3536 = vset.pattern.permute.xlu0 0
      %3537 = vperm.xlu0 %3536, %v3179
      %v3538 = vpop.permute.xlu0 %3537
      %3541 = vset.pattern.permute.xlu0 0
      %3542 = vperm.xlu0 %3541, %v3180
      %v3543 = vpop.permute.xlu0 %3542
      %3546 = vset.pattern.permute.xlu0 0
      %3547 = vperm.xlu0 %3546, %v3181
      %v3548 = vpop.permute.xlu0 %3547
      %3551 = vset.pattern.permute.xlu0 0
      %3552 = vperm.xlu0 %3551, %v3182
      %v3553 = vpop.permute.xlu0 %3552
      %3556 = vset.pattern.permute.xlu0 0
      %3557 = vperm.xlu0 %3556, %v3183
      %v3558 = vpop.permute.xlu0 %3557
      %3561 = vset.pattern.permute.xlu0 0
      %3562 = vperm.xlu0 %3561, %v3184
      %v3563 = vpop.permute.xlu0 %3562
      %3566 = vset.pattern.permute.xlu0 0
      %3567 = vperm.xlu0 %3566, %v3185
      %v3568 = vpop.permute.xlu0 %3567
      %3571 = vset.pattern.permute.xlu0 0
      %3572 = vperm.xlu0 %3571, %v3186
      %v3573 = vpop.permute.xlu0 %3572
      %3576 = vset.pattern.permute.xlu0 0
      %3577 = vperm.xlu0 %3576, %v3187
      %v3578 = vpop.permute.xlu0 %3577
      %3581 = vset.pattern.permute.xlu0 0
      %3582 = vperm.xlu0 %3581, %v3188
      %v3583 = vpop.permute.xlu0 %3582
      %3586 = vset.pattern.permute.xlu0 0
      %3587 = vperm.xlu0 %3586, %v3189
      %v3588 = vpop.permute.xlu0 %3587
      %3591 = vset.pattern.permute.xlu0 0
      %3592 = vperm.xlu0 %3591, %v3190
      %v3593 = vpop.permute.xlu0 %3592
      %3596 = vset.pattern.permute.xlu0 0
      %3597 = vperm.xlu0 %3596, %v3191
      %v3598 = vpop.permute.xlu0 %3597
      %3601 = vset.pattern.permute.xlu0 0
      %3602 = vperm.xlu0 %3601, %v3192
      %v3603 = vpop.permute.xlu0 %3602
      %3606 = vset.pattern.permute.xlu0 0
      %3607 = vperm.xlu0 %3606, %v3193
      %v3608 = vpop.permute.xlu0 %3607
      %3611 = vset.pattern.permute.xlu0 0
      %3612 = vperm.xlu0 %3611, %v3194
      %v3613 = vpop.permute.xlu0 %3612
      %3616 = vset.pattern.permute.xlu0 0
      %3617 = vperm.xlu0 %3616, %v3195
      %v3618 = vpop.permute.xlu0 %3617
      %3621 = vset.pattern.permute.xlu0 0
      %3622 = vperm.xlu0 %3621, %v3196
      %v3623 = vpop.permute.xlu0 %3622
      %3626 = vset.pattern.permute.xlu0 0
      %3627 = vperm.xlu0 %3626, %v3197
      %v3628 = vpop.permute.xlu0 %3627
      %3631 = vset.pattern.permute.xlu0 0
      %3632 = vperm.xlu0 %3631, %v3198
      %v3633 = vpop.permute.xlu0 %3632
      %3636 = vset.pattern.permute.xlu0 0
      %3637 = vperm.xlu0 %3636, %v3199
      %v3638 = vpop.permute.xlu0 %3637
      %3641 = vset.pattern.permute.xlu0 0
      %3642 = vperm.xlu0 %3641, %v3200
      %v3643 = vpop.permute.xlu0 %3642
      %3646 = vset.pattern.permute.xlu0 0
      %3647 = vperm.xlu0 %3646, %v3201
      %v3648 = vpop.permute.xlu0 %3647
      %3651 = vset.pattern.permute.xlu0 0
      %3652 = vperm.xlu0 %3651, %v3202
      %v3653 = vpop.permute.xlu0 %3652
      %3656 = vset.pattern.permute.xlu0 0
      %3657 = vperm.xlu0 %3656, %v3203
      %v3658 = vpop.permute.xlu0 %3657
      %3661 = vset.pattern.permute.xlu0 0
      %3662 = vperm.xlu0 %3661, %v3204
      %v3663 = vpop.permute.xlu0 %3662
      %3666 = vset.pattern.permute.xlu0 0
      %3667 = vperm.xlu0 %3666, %v3205
      %v3668 = vpop.permute.xlu0 %3667
      %3671 = vset.pattern.permute.xlu0 0
      %3672 = vperm.xlu0 %3671, %v3206
      %v3673 = vpop.permute.xlu0 %3672
      %3676 = vset.pattern.permute.xlu0 0
      %3677 = vperm.xlu0 %3676, %v3207
      %v3678 = vpop.permute.xlu0 %3677
      %3681 = vset.pattern.permute.xlu0 0
      %3682 = vperm.xlu0 %3681, %v3208
      %v3683 = vpop.permute.xlu0 %3682
      %3686 = vset.pattern.permute.xlu0 0
      %3687 = vperm.xlu0 %3686, %v3209
      %v3688 = vpop.permute.xlu0 %3687
      %3691 = vset.pattern.permute.xlu0 0
      %3692 = vperm.xlu0 %3691, %v3210
      %v3693 = vpop.permute.xlu0 %3692
      %3696 = vset.pattern.permute.xlu0 0
      %3697 = vperm.xlu0 %3696, %v3211
      %v3698 = vpop.permute.xlu0 %3697
      %3701 = vset.pattern.permute.xlu0 0
      %3702 = vperm.xlu0 %3701, %v3212
      %v3703 = vpop.permute.xlu0 %3702
      %3706 = vset.pattern.permute.xlu0 0
      %3707 = vperm.xlu0 %3706, %v3213
      %v3708 = vpop.permute.xlu0 %3707
      %3711 = vset.pattern.permute.xlu0 0
      %3712 = vperm.xlu0 %3711, %v3214
      %v3713 = vpop.permute.xlu0 %3712
      %3716 = vset.pattern.permute.xlu0 0
      %3717 = vperm.xlu0 %3716, %v3215
      %v3718 = vpop.permute.xlu0 %3717
      %3721 = vset.pattern.permute.xlu0 0
      %3722 = vperm.xlu0 %3721, %v3216
      %v3723 = vpop.permute.xlu0 %3722
      %3726 = vset.pattern.permute.xlu0 0
      %3727 = vperm.xlu0 %3726, %v3217
      %v3728 = vpop.permute.xlu0 %3727
      %v3730 = vsub.f32 %v2465, %v3413
      %v3731 = vsub.f32 %v2468, %v3418
      %v3732 = vsub.f32 %v2473, %v3423
      %v3733 = vsub.f32 %v2476, %v3428
      %v3734 = vsub.f32 %v2481, %v3433
      %v3735 = vsub.f32 %v2484, %v3438
      %v3736 = vsub.f32 %v2489, %v3443
      %v3737 = vsub.f32 %v2492, %v3448
      %v3738 = vsub.f32 %v2497, %v3453
      %v3739 = vsub.f32 %v2500, %v3458
      %v3740 = vsub.f32 %v2505, %v3463
      %v3741 = vsub.f32 %v2508, %v3468
      %v3742 = vsub.f32 %v2513, %v3473
      %v3743 = vsub.f32 %v2516, %v3478
      %v3744 = vsub.f32 %v2521, %v3483
      %v3745 = vsub.f32 %v2524, %v3488
      %v3746 = vsub.f32 %v2610, %v3493
      %v3747 = vsub.f32 %v2613, %v3498
      %v3748 = vsub.f32 %v2618, %v3503
      %v3749 = vsub.f32 %v2621, %v3508
      %v3750 = vsub.f32 %v2626, %v3513
      %v3751 = vsub.f32 %v2629, %v3518
      %v3752 = vsub.f32 %v2634, %v3523
      %v3753 = vsub.f32 %v2637, %v3528
      %v3754 = vsub.f32 %v2642, %v3533
      %v3755 = vsub.f32 %v2645, %v3538
      %v3756 = vsub.f32 %v2650, %v3543
      %v3757 = vsub.f32 %v2653, %v3548
      %v3758 = vsub.f32 %v2658, %v3553
      %v3759 = vsub.f32 %v2661, %v3558
      %v3760 = vsub.f32 %v2666, %v3563
      %v3761 = vsub.f32 %v2669, %v3568
      %v3762 = vsub.f32 %v2755, %v3573
      %v3763 = vsub.f32 %v2758, %v3578
      %v3764 = vsub.f32 %v2763, %v3583
      %v3765 = vsub.f32 %v2766, %v3588
      %v3766 = vsub.f32 %v2771, %v3593
      %v3767 = vsub.f32 %v2774, %v3598
      %v3768 = vsub.f32 %v2779, %v3603
      %v3769 = vsub.f32 %v2782, %v3608
      %v3770 = vsub.f32 %v2787, %v3613
      %v3771 = vsub.f32 %v2790, %v3618
      %v3772 = vsub.f32 %v2795, %v3623
      %v3773 = vsub.f32 %v2798, %v3628
      %v3774 = vsub.f32 %v2803, %v3633
      %v3775 = vsub.f32 %v2806, %v3638
      %v3776 = vsub.f32 %v2811, %v3643
      %v3777 = vsub.f32 %v2814, %v3648
      %v3778 = vsub.f32 %v2900, %v3653
      %v3779 = vsub.f32 %v2903, %v3658
      %v3780 = vsub.f32 %v2908, %v3663
      %v3781 = vsub.f32 %v2911, %v3668
      %v3782 = vsub.f32 %v2916, %v3673
      %v3783 = vsub.f32 %v2919, %v3678
      %v3784 = vsub.f32 %v2924, %v3683
      %v3785 = vsub.f32 %v2927, %v3688
      %v3786 = vsub.f32 %v2932, %v3693
      %v3787 = vsub.f32 %v2935, %v3698
      %v3788 = vsub.f32 %v2940, %v3703
      %v3789 = vsub.f32 %v2943, %v3708
      %v3790 = vsub.f32 %v2948, %v3713
      %v3791 = vsub.f32 %v2951, %v3718
      %v3792 = vsub.f32 %v2956, %v3723
      %v3793 = vsub.f32 %v2959, %v3728
      %v3794 = vmul.f32 %v3730, 1.442695
      %v3795 = vpow.pop %v3794
      %v3796 = vmul.f32 %v3731, 1.442695
      %v3797 = vpow.pop %v3796
      %v3798 = vmul.f32 %v3732, 1.442695
      %v3799 = vpow.pop %v3798
      %v3800 = vmul.f32 %v3733, 1.442695
      %v3801 = vpow.pop %v3800
      %v3802 = vmul.f32 %v3734, 1.442695
      %v3803 = vpow.pop %v3802
      %v3804 = vmul.f32 %v3735, 1.442695
      %v3805 = vpow.pop %v3804
      %v3806 = vmul.f32 %v3736, 1.442695
      %v3807 = vpow.pop %v3806
      %v3808 = vmul.f32 %v3737, 1.442695
      %v3809 = vpow.pop %v3808
      %v3810 = vmul.f32 %v3738, 1.442695
      %v3811 = vpow.pop %v3810
      %v3812 = vmul.f32 %v3739, 1.442695
      %v3813 = vpow.pop %v3812
      %v3814 = vmul.f32 %v3740, 1.442695
      %v3815 = vpow.pop %v3814
      %v3816 = vmul.f32 %v3741, 1.442695
      %v3817 = vpow.pop %v3816
      %v3818 = vmul.f32 %v3742, 1.442695
      %v3819 = vpow.pop %v3818
      %v3820 = vmul.f32 %v3743, 1.442695
      %v3821 = vpow.pop %v3820
      %v3822 = vmul.f32 %v3744, 1.442695
      %v3823 = vpow.pop %v3822
      %v3824 = vmul.f32 %v3745, 1.442695
      %v3825 = vpow.pop %v3824
      %v3826 = vmul.f32 %v3746, 1.442695
      %v3827 = vpow.pop %v3826
      %v3828 = vmul.f32 %v3747, 1.442695
      %v3829 = vpow.pop %v3828
      %v3830 = vmul.f32 %v3748, 1.442695
      %v3831 = vpow.pop %v3830
      %v3832 = vmul.f32 %v3749, 1.442695
      %v3833 = vpow.pop %v3832
      %v3834 = vmul.f32 %v3750, 1.442695
      %v3835 = vpow.pop %v3834
      %v3836 = vmul.f32 %v3751, 1.442695
      %v3837 = vpow.pop %v3836
      %v3838 = vmul.f32 %v3752, 1.442695
      %v3839 = vpow.pop %v3838
      %v3840 = vmul.f32 %v3753, 1.442695
      %v3841 = vpow.pop %v3840
      %v3842 = vmul.f32 %v3754, 1.442695
      %v3843 = vpow.pop %v3842
      %v3844 = vmul.f32 %v3755, 1.442695
      %v3845 = vpow.pop %v3844
      %v3846 = vmul.f32 %v3756, 1.442695
      %v3847 = vpow.pop %v3846
      %v3848 = vmul.f32 %v3757, 1.442695
      %v3849 = vpow.pop %v3848
      %v3850 = vmul.f32 %v3758, 1.442695
      %v3851 = vpow.pop %v3850
      %v3852 = vmul.f32 %v3759, 1.442695
      %v3853 = vpow.pop %v3852
      %v3854 = vmul.f32 %v3760, 1.442695
      %v3855 = vpow.pop %v3854
      %v3856 = vmul.f32 %v3761, 1.442695
      %v3857 = vpow.pop %v3856
      %v3858 = vmul.f32 %v3762, 1.442695
      %v3859 = vpow.pop %v3858
      %v3860 = vmul.f32 %v3763, 1.442695
      %v3861 = vpow.pop %v3860
      %v3862 = vmul.f32 %v3764, 1.442695
      %v3863 = vpow.pop %v3862
      %v3864 = vmul.f32 %v3765, 1.442695
      %v3865 = vpow.pop %v3864
      %v3866 = vmul.f32 %v3766, 1.442695
      %v3867 = vpow.pop %v3866
      %v3868 = vmul.f32 %v3767, 1.442695
      %v3869 = vpow.pop %v3868
      %v3870 = vmul.f32 %v3768, 1.442695
      %v3871 = vpow.pop %v3870
      %v3872 = vmul.f32 %v3769, 1.442695
      %v3873 = vpow.pop %v3872
      %v3874 = vmul.f32 %v3770, 1.442695
      %v3875 = vpow.pop %v3874
      %v3876 = vmul.f32 %v3771, 1.442695
      %v3877 = vpow.pop %v3876
      %v3878 = vmul.f32 %v3772, 1.442695
      %v3879 = vpow.pop %v3878
      %v3880 = vmul.f32 %v3773, 1.442695
      %v3881 = vpow.pop %v3880
      %v3882 = vmul.f32 %v3774, 1.442695
      %v3883 = vpow.pop %v3882
      %v3884 = vmul.f32 %v3775, 1.442695
      %v3885 = vpow.pop %v3884
      %v3886 = vmul.f32 %v3776, 1.442695
      %v3887 = vpow.pop %v3886
      %v3888 = vmul.f32 %v3777, 1.442695
      %v3889 = vpow.pop %v3888
      %v3890 = vmul.f32 %v3778, 1.442695
      %v3891 = vpow.pop %v3890
      %v3892 = vmul.f32 %v3779, 1.442695
      %v3893 = vpow.pop %v3892
      %v3894 = vmul.f32 %v3780, 1.442695
      %v3895 = vpow.pop %v3894
      %v3896 = vmul.f32 %v3781, 1.442695
      %v3897 = vpow.pop %v3896
      %v3898 = vmul.f32 %v3782, 1.442695
      %v3899 = vpow.pop %v3898
      %v3900 = vmul.f32 %v3783, 1.442695
      %v3901 = vpow.pop %v3900
      %v3902 = vmul.f32 %v3784, 1.442695
      %v3903 = vpow.pop %v3902
      %v3904 = vmul.f32 %v3785, 1.442695
      %v3905 = vpow.pop %v3904
      %v3906 = vmul.f32 %v3786, 1.442695
      %v3907 = vpow.pop %v3906
      %v3908 = vmul.f32 %v3787, 1.442695
      %v3909 = vpow.pop %v3908
      %v3910 = vmul.f32 %v3788, 1.442695
      %v3911 = vpow.pop %v3910
      %v3912 = vmul.f32 %v3789, 1.442695
      %v3913 = vpow.pop %v3912
      %v3914 = vmul.f32 %v3790, 1.442695
      %v3915 = vpow.pop %v3914
      %v3916 = vmul.f32 %v3791, 1.442695
      %v3917 = vpow.pop %v3916
      %v3918 = vmul.f32 %v3792, 1.442695
      %v3919 = vpow.pop %v3918
      %v3920 = vmul.f32 %v3793, 1.442695
      %v3921 = vpow.pop %v3920
      %v3922 = vld [vmem:[#allocation6] sm:$0xff]
      %v3923 = vld [vmem:[#allocation6 + $0x8] sm:$0xff]
      %v3924 = vld [vmem:[#allocation6 + $0x10] sm:$0xff]
      %v3925 = vld [vmem:[#allocation6 + $0x18] sm:$0xff]
      %v3926 = vld [vmem:[#allocation6 + $0x20] sm:$0xff]
      %v3927 = vld [vmem:[#allocation6 + $0x28] sm:$0xff]
      %v3928 = vld [vmem:[#allocation6 + $0x30] sm:$0xff]
      %v3929 = vld [vmem:[#allocation6 + $0x38] sm:$0xff]
      %v3930 = vld [vmem:[#allocation6 + $0x40] sm:$0xff]
      %v3931 = vld [vmem:[#allocation6 + $0x48] sm:$0xff]
      %v3932 = vld [vmem:[#allocation6 + $0x50] sm:$0xff]
      %v3933 = vld [vmem:[#allocation6 + $0x58] sm:$0xff]
      %v3934 = vld [vmem:[#allocation6 + $0x60] sm:$0xff]
      %v3935 = vld [vmem:[#allocation6 + $0x68] sm:$0xff]
      %v3936 = vld [vmem:[#allocation6 + $0x70] sm:$0xff]
      %v3937 = vld [vmem:[#allocation6 + $0x78] sm:$0xff]
      %v3938 = vld [vmem:[#allocation6 + $0x80] sm:$0xff]
      %v3939 = vld [vmem:[#allocation6 + $0x88] sm:$0xff]
      %v3940 = vld [vmem:[#allocation6 + $0x90] sm:$0xff]
      %v3941 = vld [vmem:[#allocation6 + $0x98] sm:$0xff]
      %v3942 = vld [vmem:[#allocation6 + $0xa0] sm:$0xff]
      %v3943 = vld [vmem:[#allocation6 + $0xa8] sm:$0xff]
      %v3944 = vld [vmem:[#allocation6 + $0xb0] sm:$0xff]
      %v3945 = vld [vmem:[#allocation6 + $0xb8] sm:$0xff]
      %v3946 = vld [vmem:[#allocation6 + $0xc0] sm:$0xff]
      %v3947 = vld [vmem:[#allocation6 + $0xc8] sm:$0xff]
      %v3948 = vld [vmem:[#allocation6 + $0xd0] sm:$0xff]
      %v3949 = vld [vmem:[#allocation6 + $0xd8] sm:$0xff]
      %v3950 = vld [vmem:[#allocation6 + $0xe0] sm:$0xff]
      %v3951 = vld [vmem:[#allocation6 + $0xe8] sm:$0xff]
      %v3952 = vld [vmem:[#allocation6 + $0xf0] sm:$0xff]
      %v3953 = vld [vmem:[#allocation6 + $0xf8] sm:$0xff]
      %v3954 = vld [vmem:[#allocation6 + $0x100] sm:$0xff]
      %v3955 = vld [vmem:[#allocation6 + $0x108] sm:$0xff]
      %v3956 = vld [vmem:[#allocation6 + $0x110] sm:$0xff]
      %v3957 = vld [vmem:[#allocation6 + $0x118] sm:$0xff]
      %v3958 = vld [vmem:[#allocation6 + $0x120] sm:$0xff]
      %v3959 = vld [vmem:[#allocation6 + $0x128] sm:$0xff]
      %v3960 = vld [vmem:[#allocation6 + $0x130] sm:$0xff]
      %v3961 = vld [vmem:[#allocation6 + $0x138] sm:$0xff]
      %v3962 = vld [vmem:[#allocation6 + $0x140] sm:$0xff]
      %v3963 = vld [vmem:[#allocation6 + $0x148] sm:$0xff]
      %v3964 = vld [vmem:[#allocation6 + $0x150] sm:$0xff]
      %v3965 = vld [vmem:[#allocation6 + $0x158] sm:$0xff]
      %v3966 = vld [vmem:[#allocation6 + $0x160] sm:$0xff]
      %v3967 = vld [vmem:[#allocation6 + $0x168] sm:$0xff]
      %v3968 = vld [vmem:[#allocation6 + $0x170] sm:$0xff]
      %v3969 = vld [vmem:[#allocation6 + $0x178] sm:$0xff]
      %v3970 = vld [vmem:[#allocation6 + $0x180] sm:$0xff]
      %v3971 = vld [vmem:[#allocation6 + $0x188] sm:$0xff]
      %v3972 = vld [vmem:[#allocation6 + $0x190] sm:$0xff]
      %v3973 = vld [vmem:[#allocation6 + $0x198] sm:$0xff]
      %v3974 = vld [vmem:[#allocation6 + $0x1a0] sm:$0xff]
      %v3975 = vld [vmem:[#allocation6 + $0x1a8] sm:$0xff]
      %v3976 = vld [vmem:[#allocation6 + $0x1b0] sm:$0xff]
      %v3977 = vld [vmem:[#allocation6 + $0x1b8] sm:$0xff]
      %v3978 = vld [vmem:[#allocation6 + $0x1c0] sm:$0xff]
      %v3979 = vld [vmem:[#allocation6 + $0x1c8] sm:$0xff]
      %v3980 = vld [vmem:[#allocation6 + $0x1d0] sm:$0xff]
      %v3981 = vld [vmem:[#allocation6 + $0x1d8] sm:$0xff]
      %v3982 = vld [vmem:[#allocation6 + $0x1e0] sm:$0xff]
      %v3983 = vld [vmem:[#allocation6 + $0x1e8] sm:$0xff]
      %v3984 = vld [vmem:[#allocation6 + $0x1f0] sm:$0xff]
      %v3985 = vld [vmem:[#allocation6 + $0x1f8] sm:$0xff]
      %v3986 = vmul.f32 %v3283, %v3922
      %v3987 = vmul.f32 %v3285, %v3923
      %v3988 = vmul.f32 %v3287, %v3924
      %v3989 = vmul.f32 %v3289, %v3925
      %v3990 = vmul.f32 %v3291, %v3926
      %v3991 = vmul.f32 %v3293, %v3927
      %v3992 = vmul.f32 %v3295, %v3928
      %v3993 = vmul.f32 %v3297, %v3929
      %v3994 = vmul.f32 %v3299, %v3930
      %v3995 = vmul.f32 %v3301, %v3931
      %v3996 = vmul.f32 %v3303, %v3932
      %v3997 = vmul.f32 %v3305, %v3933
      %v3998 = vmul.f32 %v3307, %v3934
      %v3999 = vmul.f32 %v3309, %v3935
      %v4000 = vmul.f32 %v3311, %v3936
      %v4001 = vmul.f32 %v3313, %v3937
      %v4002 = vmul.f32 %v3315, %v3938
      %v4003 = vmul.f32 %v3317, %v3939
      %v4004 = vmul.f32 %v3319, %v3940
      %v4005 = vmul.f32 %v3321, %v3941
      %v4006 = vmul.f32 %v3323, %v3942
      %v4007 = vmul.f32 %v3325, %v3943
      %v4008 = vmul.f32 %v3327, %v3944
      %v4009 = vmul.f32 %v3329, %v3945
      %v4010 = vmul.f32 %v3331, %v3946
      %v4011 = vmul.f32 %v3333, %v3947
      %v4012 = vmul.f32 %v3335, %v3948
      %v4013 = vmul.f32 %v3337, %v3949
      %v4014 = vmul.f32 %v3339, %v3950
      %v4015 = vmul.f32 %v3341, %v3951
      %v4016 = vmul.f32 %v3343, %v3952
      %v4017 = vmul.f32 %v3345, %v3953
      %v4018 = vmul.f32 %v3347, %v3954
      %v4019 = vmul.f32 %v3349, %v3955
      %v4020 = vmul.f32 %v3351, %v3956
      %v4021 = vmul.f32 %v3353, %v3957
      %v4022 = vmul.f32 %v3355, %v3958
      %v4023 = vmul.f32 %v3357, %v3959
      %v4024 = vmul.f32 %v3359, %v3960
      %v4025 = vmul.f32 %v3361, %v3961
      %v4026 = vmul.f32 %v3363, %v3962
      %v4027 = vmul.f32 %v3365, %v3963
      %v4028 = vmul.f32 %v3367, %v3964
      %v4029 = vmul.f32 %v3369, %v3965
      %v4030 = vmul.f32 %v3371, %v3966
      %v4031 = vmul.f32 %v3373, %v3967
      %v4032 = vmul.f32 %v3375, %v3968
      %v4033 = vmul.f32 %v3377, %v3969
      %v4034 = vmul.f32 %v3379, %v3970
      %v4035 = vmul.f32 %v3381, %v3971
      %v4036 = vmul.f32 %v3383, %v3972
      %v4037 = vmul.f32 %v3385, %v3973
      %v4038 = vmul.f32 %v3387, %v3974
      %v4039 = vmul.f32 %v3389, %v3975
      %v4040 = vmul.f32 %v3391, %v3976
      %v4041 = vmul.f32 %v3393, %v3977
      %v4042 = vmul.f32 %v3395, %v3978
      %v4043 = vmul.f32 %v3397, %v3979
      %v4044 = vmul.f32 %v3399, %v3980
      %v4045 = vmul.f32 %v3401, %v3981
      %v4046 = vmul.f32 %v3403, %v3982
      %v4047 = vmul.f32 %v3405, %v3983
      %v4048 = vmul.f32 %v3407, %v3984
      %v4049 = vmul.f32 %v3409, %v3985
      %4050 = vadd.xlane.f32.xlu0 %v3795
      %v4051 = vpop.xlane.xlu0 %4050
      %4052 = vadd.xlane.f32.xlu0 %v3797
      %v4053 = vpop.xlane.xlu0 %4052
      %4054 = vadd.xlane.f32.xlu0 %v3799
      %v4055 = vpop.xlane.xlu0 %4054
      %4056 = vadd.xlane.f32.xlu0 %v3801
      %v4057 = vpop.xlane.xlu0 %4056
      %4058 = vadd.xlane.f32.xlu0 %v3803
      %v4059 = vpop.xlane.xlu0 %4058
      %4060 = vadd.xlane.f32.xlu0 %v3805
      %v4061 = vpop.xlane.xlu0 %4060
      %4062 = vadd.xlane.f32.xlu0 %v3807
      %v4063 = vpop.xlane.xlu0 %4062
      %4064 = vadd.xlane.f32.xlu0 %v3809
      %v4065 = vpop.xlane.xlu0 %4064
      %4066 = vadd.xlane.f32.xlu0 %v3811
      %v4067 = vpop.xlane.xlu0 %4066
      %4068 = vadd.xlane.f32.xlu0 %v3813
      %v4069 = vpop.xlane.xlu0 %4068
      %4070 = vadd.xlane.f32.xlu0 %v3815
      %v4071 = vpop.xlane.xlu0 %4070
      %4072 = vadd.xlane.f32.xlu0 %v3817
      %v4073 = vpop.xlane.xlu0 %4072
      %4074 = vadd.xlane.f32.xlu0 %v3819
      %v4075 = vpop.xlane.xlu0 %4074
      %4076 = vadd.xlane.f32.xlu0 %v3821
      %v4077 = vpop.xlane.xlu0 %4076
      %4078 = vadd.xlane.f32.xlu0 %v3823
      %v4079 = vpop.xlane.xlu0 %4078
      %4080 = vadd.xlane.f32.xlu0 %v3825
      %v4081 = vpop.xlane.xlu0 %4080
      %4082 = vadd.xlane.f32.xlu0 %v3827
      %v4083 = vpop.xlane.xlu0 %4082
      %4084 = vadd.xlane.f32.xlu0 %v3829
      %v4085 = vpop.xlane.xlu0 %4084
      %4086 = vadd.xlane.f32.xlu0 %v3831
      %v4087 = vpop.xlane.xlu0 %4086
      %4088 = vadd.xlane.f32.xlu0 %v3833
      %v4089 = vpop.xlane.xlu0 %4088
      %4090 = vadd.xlane.f32.xlu0 %v3835
      %v4091 = vpop.xlane.xlu0 %4090
      %4092 = vadd.xlane.f32.xlu0 %v3837
      %v4093 = vpop.xlane.xlu0 %4092
      %4094 = vadd.xlane.f32.xlu0 %v3839
      %v4095 = vpop.xlane.xlu0 %4094
      %4096 = vadd.xlane.f32.xlu0 %v3841
      %v4097 = vpop.xlane.xlu0 %4096
      %4098 = vadd.xlane.f32.xlu0 %v3843
      %v4099 = vpop.xlane.xlu0 %4098
      %4100 = vadd.xlane.f32.xlu0 %v3845
      %v4101 = vpop.xlane.xlu0 %4100
      %4102 = vadd.xlane.f32.xlu0 %v3847
      %v4103 = vpop.xlane.xlu0 %4102
      %4104 = vadd.xlane.f32.xlu0 %v3849
      %v4105 = vpop.xlane.xlu0 %4104
      %4106 = vadd.xlane.f32.xlu0 %v3851
      %v4107 = vpop.xlane.xlu0 %4106
      %4108 = vadd.xlane.f32.xlu0 %v3853
      %v4109 = vpop.xlane.xlu0 %4108
      %4110 = vadd.xlane.f32.xlu0 %v3855
      %v4111 = vpop.xlane.xlu0 %4110
      %4112 = vadd.xlane.f32.xlu0 %v3857
      %v4113 = vpop.xlane.xlu0 %4112
      %4114 = vadd.xlane.f32.xlu0 %v3859
      %v4115 = vpop.xlane.xlu0 %4114
      %4116 = vadd.xlane.f32.xlu0 %v3861
      %v4117 = vpop.xlane.xlu0 %4116
      %4118 = vadd.xlane.f32.xlu0 %v3863
      %v4119 = vpop.xlane.xlu0 %4118
      %4120 = vadd.xlane.f32.xlu0 %v3865
      %v4121 = vpop.xlane.xlu0 %4120
      %4122 = vadd.xlane.f32.xlu0 %v3867
      %v4123 = vpop.xlane.xlu0 %4122
      %4124 = vadd.xlane.f32.xlu0 %v3869
      %v4125 = vpop.xlane.xlu0 %4124
      %4126 = vadd.xlane.f32.xlu0 %v3871
      %v4127 = vpop.xlane.xlu0 %4126
      %4128 = vadd.xlane.f32.xlu0 %v3873
      %v4129 = vpop.xlane.xlu0 %4128
      %4130 = vadd.xlane.f32.xlu0 %v3875
      %v4131 = vpop.xlane.xlu0 %4130
      %4132 = vadd.xlane.f32.xlu0 %v3877
      %v4133 = vpop.xlane.xlu0 %4132
      %4134 = vadd.xlane.f32.xlu0 %v3879
      %v4135 = vpop.xlane.xlu0 %4134
      %4136 = vadd.xlane.f32.xlu0 %v3881
      %v4137 = vpop.xlane.xlu0 %4136
      %4138 = vadd.xlane.f32.xlu0 %v3883
      %v4139 = vpop.xlane.xlu0 %4138
      %4140 = vadd.xlane.f32.xlu0 %v3885
      %v4141 = vpop.xlane.xlu0 %4140
      %4142 = vadd.xlane.f32.xlu0 %v3887
      %v4143 = vpop.xlane.xlu0 %4142
      %4144 = vadd.xlane.f32.xlu0 %v3889
      %v4145 = vpop.xlane.xlu0 %4144
      %4146 = vadd.xlane.f32.xlu0 %v3891
      %v4147 = vpop.xlane.xlu0 %4146
      %4148 = vadd.xlane.f32.xlu0 %v3893
      %v4149 = vpop.xlane.xlu0 %4148
      %4150 = vadd.xlane.f32.xlu0 %v3895
      %v4151 = vpop.xlane.xlu0 %4150
      %4152 = vadd.xlane.f32.xlu0 %v3897
      %v4153 = vpop.xlane.xlu0 %4152
      %4154 = vadd.xlane.f32.xlu0 %v3899
      %v4155 = vpop.xlane.xlu0 %4154
      %4156 = vadd.xlane.f32.xlu0 %v3901
      %v4157 = vpop.xlane.xlu0 %4156
      %4158 = vadd.xlane.f32.xlu0 %v3903
      %v4159 = vpop.xlane.xlu0 %4158
      %4160 = vadd.xlane.f32.xlu0 %v3905
      %v4161 = vpop.xlane.xlu0 %4160
      %4162 = vadd.xlane.f32.xlu0 %v3907
      %v4163 = vpop.xlane.xlu0 %4162
      %4164 = vadd.xlane.f32.xlu0 %v3909
      %v4165 = vpop.xlane.xlu0 %4164
      %4166 = vadd.xlane.f32.xlu0 %v3911
      %v4167 = vpop.xlane.xlu0 %4166
      %4168 = vadd.xlane.f32.xlu0 %v3913
      %v4169 = vpop.xlane.xlu0 %4168
      %4170 = vadd.xlane.f32.xlu0 %v3915
      %v4171 = vpop.xlane.xlu0 %4170
      %4172 = vadd.xlane.f32.xlu0 %v3917
      %v4173 = vpop.xlane.xlu0 %4172
      %4174 = vadd.xlane.f32.xlu0 %v3919
      %v4175 = vpop.xlane.xlu0 %4174
      %4176 = vadd.xlane.f32.xlu0 %v3921
      %v4177 = vpop.xlane.xlu0 %4176
      %v4178 = vadd.f32 %v3986, %v4051
      %v4179 = vadd.f32 %v3987, %v4053
      %v4180 = vadd.f32 %v3988, %v4055
      %v4181 = vadd.f32 %v3989, %v4057
      %v4182 = vadd.f32 %v3990, %v4059
      %v4183 = vadd.f32 %v3991, %v4061
      %v4184 = vadd.f32 %v3992, %v4063
      %v4185 = vadd.f32 %v3993, %v4065
      %v4186 = vadd.f32 %v3994, %v4067
      %v4187 = vadd.f32 %v3995, %v4069
      %v4188 = vadd.f32 %v3996, %v4071
      %v4189 = vadd.f32 %v3997, %v4073
      %v4190 = vadd.f32 %v3998, %v4075
      %v4191 = vadd.f32 %v3999, %v4077
      %v4192 = vadd.f32 %v4000, %v4079
      %v4193 = vadd.f32 %v4001, %v4081
      %v4194 = vadd.f32 %v4002, %v4083
      %v4195 = vadd.f32 %v4003, %v4085
      %v4196 = vadd.f32 %v4004, %v4087
      %v4197 = vadd.f32 %v4005, %v4089
      %v4198 = vadd.f32 %v4006, %v4091
      %v4199 = vadd.f32 %v4007, %v4093
      %v4200 = vadd.f32 %v4008, %v4095
      %v4201 = vadd.f32 %v4009, %v4097
      %v4202 = vadd.f32 %v4010, %v4099
      %v4203 = vadd.f32 %v4011, %v4101
      %v4204 = vadd.f32 %v4012, %v4103
      %v4205 = vadd.f32 %v4013, %v4105
      %v4206 = vadd.f32 %v4014, %v4107
      %v4207 = vadd.f32 %v4015, %v4109
      %v4208 = vadd.f32 %v4016, %v4111
      %v4209 = vadd.f32 %v4017, %v4113
      %v4210 = vadd.f32 %v4018, %v4115
      %v4211 = vadd.f32 %v4019, %v4117
      %v4212 = vadd.f32 %v4020, %v4119
      %v4213 = vadd.f32 %v4021, %v4121
      %v4214 = vadd.f32 %v4022, %v4123
      %v4215 = vadd.f32 %v4023, %v4125
      %v4216 = vadd.f32 %v4024, %v4127
      %v4217 = vadd.f32 %v4025, %v4129
      %v4218 = vadd.f32 %v4026, %v4131
      %v4219 = vadd.f32 %v4027, %v4133
      %v4220 = vadd.f32 %v4028, %v4135
      %v4221 = vadd.f32 %v4029, %v4137
      %v4222 = vadd.f32 %v4030, %v4139
      %v4223 = vadd.f32 %v4031, %v4141
      %v4224 = vadd.f32 %v4032, %v4143
      %v4225 = vadd.f32 %v4033, %v4145
      %v4226 = vadd.f32 %v4034, %v4147
      %v4227 = vadd.f32 %v4035, %v4149
      %v4228 = vadd.f32 %v4036, %v4151
      %v4229 = vadd.f32 %v4037, %v4153
      %v4230 = vadd.f32 %v4038, %v4155
      %v4231 = vadd.f32 %v4039, %v4157
      %v4232 = vadd.f32 %v4040, %v4159
      %v4233 = vadd.f32 %v4041, %v4161
      %v4234 = vadd.f32 %v4042, %v4163
      %v4235 = vadd.f32 %v4043, %v4165
      %v4236 = vadd.f32 %v4044, %v4167
      %v4237 = vadd.f32 %v4045, %v4169
      %v4238 = vadd.f32 %v4046, %v4171
      %v4239 = vadd.f32 %v4047, %v4173
      %v4240 = vadd.f32 %v4048, %v4175
      %v4241 = vadd.f32 %v4049, %v4177
      %vm4242 = vcmask 7168
      %4243 = vst.msk [vmem:[#allocation6] sm:$0xff] %vm4242, %v4178
      %4244 = vst.msk [vmem:[#allocation6 + $0x8] sm:$0xff] %vm4242, %v4179
      %4245 = vst.msk [vmem:[#allocation6 + $0x10] sm:$0xff] %vm4242, %v4180
      %4246 = vst.msk [vmem:[#allocation6 + $0x18] sm:$0xff] %vm4242, %v4181
      %4247 = vst.msk [vmem:[#allocation6 + $0x20] sm:$0xff] %vm4242, %v4182
      %4248 = vst.msk [vmem:[#allocation6 + $0x28] sm:$0xff] %vm4242, %v4183
      %4249 = vst.msk [vmem:[#allocation6 + $0x30] sm:$0xff] %vm4242, %v4184
      %4250 = vst.msk [vmem:[#allocation6 + $0x38] sm:$0xff] %vm4242, %v4185
      %4251 = vst.msk [vmem:[#allocation6 + $0x40] sm:$0xff] %vm4242, %v4186
      %4252 = vst.msk [vmem:[#allocation6 + $0x48] sm:$0xff] %vm4242, %v4187
      %4253 = vst.msk [vmem:[#allocation6 + $0x50] sm:$0xff] %vm4242, %v4188
      %4254 = vst.msk [vmem:[#allocation6 + $0x58] sm:$0xff] %vm4242, %v4189
      %4255 = vst.msk [vmem:[#allocation6 + $0x60] sm:$0xff] %vm4242, %v4190
      %4256 = vst.msk [vmem:[#allocation6 + $0x68] sm:$0xff] %vm4242, %v4191
      %4257 = vst.msk [vmem:[#allocation6 + $0x70] sm:$0xff] %vm4242, %v4192
      %4258 = vst.msk [vmem:[#allocation6 + $0x78] sm:$0xff] %vm4242, %v4193
      %4259 = vst.msk [vmem:[#allocation6 + $0x80] sm:$0xff] %vm4242, %v4194
      %4260 = vst.msk [vmem:[#allocation6 + $0x88] sm:$0xff] %vm4242, %v4195
      %4261 = vst.msk [vmem:[#allocation6 + $0x90] sm:$0xff] %vm4242, %v4196
      %4262 = vst.msk [vmem:[#allocation6 + $0x98] sm:$0xff] %vm4242, %v4197
      %4263 = vst.msk [vmem:[#allocation6 + $0xa0] sm:$0xff] %vm4242, %v4198
      %4264 = vst.msk [vmem:[#allocation6 + $0xa8] sm:$0xff] %vm4242, %v4199
      %4265 = vst.msk [vmem:[#allocation6 + $0xb0] sm:$0xff] %vm4242, %v4200
      %4266 = vst.msk [vmem:[#allocation6 + $0xb8] sm:$0xff] %vm4242, %v4201
      %4267 = vst.msk [vmem:[#allocation6 + $0xc0] sm:$0xff] %vm4242, %v4202
      %4268 = vst.msk [vmem:[#allocation6 + $0xc8] sm:$0xff] %vm4242, %v4203
      %4269 = vst.msk [vmem:[#allocation6 + $0xd0] sm:$0xff] %vm4242, %v4204
      %4270 = vst.msk [vmem:[#allocation6 + $0xd8] sm:$0xff] %vm4242, %v4205
      %4271 = vst.msk [vmem:[#allocation6 + $0xe0] sm:$0xff] %vm4242, %v4206
      %4272 = vst.msk [vmem:[#allocation6 + $0xe8] sm:$0xff] %vm4242, %v4207
      %4273 = vst.msk [vmem:[#allocation6 + $0xf0] sm:$0xff] %vm4242, %v4208
      %4274 = vst.msk [vmem:[#allocation6 + $0xf8] sm:$0xff] %vm4242, %v4209
      %4275 = vst.msk [vmem:[#allocation6 + $0x100] sm:$0xff] %vm4242, %v4210
      %4276 = vst.msk [vmem:[#allocation6 + $0x108] sm:$0xff] %vm4242, %v4211
      %4277 = vst.msk [vmem:[#allocation6 + $0x110] sm:$0xff] %vm4242, %v4212
      %4278 = vst.msk [vmem:[#allocation6 + $0x118] sm:$0xff] %vm4242, %v4213
      %4279 = vst.msk [vmem:[#allocation6 + $0x120] sm:$0xff] %vm4242, %v4214
      %4280 = vst.msk [vmem:[#allocation6 + $0x128] sm:$0xff] %vm4242, %v4215
      %4281 = vst.msk [vmem:[#allocation6 + $0x130] sm:$0xff] %vm4242, %v4216
      %4282 = vst.msk [vmem:[#allocation6 + $0x138] sm:$0xff] %vm4242, %v4217
      %4283 = vst.msk [vmem:[#allocation6 + $0x140] sm:$0xff] %vm4242, %v4218
      %4284 = vst.msk [vmem:[#allocation6 + $0x148] sm:$0xff] %vm4242, %v4219
      %4285 = vst.msk [vmem:[#allocation6 + $0x150] sm:$0xff] %vm4242, %v4220
      %4286 = vst.msk [vmem:[#allocation6 + $0x158] sm:$0xff] %vm4242, %v4221
      %4287 = vst.msk [vmem:[#allocation6 + $0x160] sm:$0xff] %vm4242, %v4222
      %4288 = vst.msk [vmem:[#allocation6 + $0x168] sm:$0xff] %vm4242, %v4223
      %4289 = vst.msk [vmem:[#allocation6 + $0x170] sm:$0xff] %vm4242, %v4224
      %4290 = vst.msk [vmem:[#allocation6 + $0x178] sm:$0xff] %vm4242, %v4225
      %4291 = vst.msk [vmem:[#allocation6 + $0x180] sm:$0xff] %vm4242, %v4226
      %4292 = vst.msk [vmem:[#allocation6 + $0x188] sm:$0xff] %vm4242, %v4227
      %4293 = vst.msk [vmem:[#allocation6 + $0x190] sm:$0xff] %vm4242, %v4228
      %4294 = vst.msk [vmem:[#allocation6 + $0x198] sm:$0xff] %vm4242, %v4229
      %4295 = vst.msk [vmem:[#allocation6 + $0x1a0] sm:$0xff] %vm4242, %v4230
      %4296 = vst.msk [vmem:[#allocation6 + $0x1a8] sm:$0xff] %vm4242, %v4231
      %4297 = vst.msk [vmem:[#allocation6 + $0x1b0] sm:$0xff] %vm4242, %v4232
      %4298 = vst.msk [vmem:[#allocation6 + $0x1b8] sm:$0xff] %vm4242, %v4233
      %4299 = vst.msk [vmem:[#allocation6 + $0x1c0] sm:$0xff] %vm4242, %v4234
      %4300 = vst.msk [vmem:[#allocation6 + $0x1c8] sm:$0xff] %vm4242, %v4235
      %4301 = vst.msk [vmem:[#allocation6 + $0x1d0] sm:$0xff] %vm4242, %v4236
      %4302 = vst.msk [vmem:[#allocation6 + $0x1d8] sm:$0xff] %vm4242, %v4237
      %4303 = vst.msk [vmem:[#allocation6 + $0x1e0] sm:$0xff] %vm4242, %v4238
      %4304 = vst.msk [vmem:[#allocation6 + $0x1e8] sm:$0xff] %vm4242, %v4239
      %4305 = vst.msk [vmem:[#allocation6 + $0x1f0] sm:$0xff] %vm4242, %v4240
      %4306 = vst.msk [vmem:[#allocation6 + $0x1f8] sm:$0xff] %vm4242, %v4241
      %v4307 = vld [vmem:[#allocation7] sm:$0xff]
      %v4308 = vld [vmem:[#allocation7 + $0x8] sm:$0xff]
      %v4309 = vld [vmem:[#allocation7 + $0x10] sm:$0xff]
      %v4310 = vld [vmem:[#allocation7 + $0x18] sm:$0xff]
      %v4311 = vld [vmem:[#allocation7 + $0x20] sm:$0xff]
      %v4312 = vld [vmem:[#allocation7 + $0x28] sm:$0xff]
      %v4313 = vld [vmem:[#allocation7 + $0x30] sm:$0xff]
      %v4314 = vld [vmem:[#allocation7 + $0x38] sm:$0xff]
      %v4315 = vld [vmem:[#allocation7 + $0x40] sm:$0xff]
      %v4316 = vld [vmem:[#allocation7 + $0x48] sm:$0xff]
      %v4317 = vld [vmem:[#allocation7 + $0x50] sm:$0xff]
      %v4318 = vld [vmem:[#allocation7 + $0x58] sm:$0xff]
      %v4319 = vld [vmem:[#allocation7 + $0x60] sm:$0xff]
      %v4320 = vld [vmem:[#allocation7 + $0x68] sm:$0xff]
      %v4321 = vld [vmem:[#allocation7 + $0x70] sm:$0xff]
      %v4322 = vld [vmem:[#allocation7 + $0x78] sm:$0xff]
      %v4323 = vld [vmem:[#allocation7 + $0x80] sm:$0xff]
      %v4324 = vld [vmem:[#allocation7 + $0x88] sm:$0xff]
      %v4325 = vld [vmem:[#allocation7 + $0x90] sm:$0xff]
      %v4326 = vld [vmem:[#allocation7 + $0x98] sm:$0xff]
      %v4327 = vld [vmem:[#allocation7 + $0xa0] sm:$0xff]
      %v4328 = vld [vmem:[#allocation7 + $0xa8] sm:$0xff]
      %v4329 = vld [vmem:[#allocation7 + $0xb0] sm:$0xff]
      %v4330 = vld [vmem:[#allocation7 + $0xb8] sm:$0xff]
      %v4331 = vld [vmem:[#allocation7 + $0xc0] sm:$0xff]
      %v4332 = vld [vmem:[#allocation7 + $0xc8] sm:$0xff]
      %v4333 = vld [vmem:[#allocation7 + $0xd0] sm:$0xff]
      %v4334 = vld [vmem:[#allocation7 + $0xd8] sm:$0xff]
      %v4335 = vld [vmem:[#allocation7 + $0xe0] sm:$0xff]
      %v4336 = vld [vmem:[#allocation7 + $0xe8] sm:$0xff]
      %v4337 = vld [vmem:[#allocation7 + $0xf0] sm:$0xff]
      %v4338 = vld [vmem:[#allocation7 + $0xf8] sm:$0xff]
      %v4339 = vld [vmem:[#allocation7 + $0x100] sm:$0xff]
      %v4340 = vld [vmem:[#allocation7 + $0x108] sm:$0xff]
      %v4341 = vld [vmem:[#allocation7 + $0x110] sm:$0xff]
      %v4342 = vld [vmem:[#allocation7 + $0x118] sm:$0xff]
      %v4343 = vld [vmem:[#allocation7 + $0x120] sm:$0xff]
      %v4344 = vld [vmem:[#allocation7 + $0x128] sm:$0xff]
      %v4345 = vld [vmem:[#allocation7 + $0x130] sm:$0xff]
      %v4346 = vld [vmem:[#allocation7 + $0x138] sm:$0xff]
      %v4347 = vld [vmem:[#allocation7 + $0x140] sm:$0xff]
      %v4348 = vld [vmem:[#allocation7 + $0x148] sm:$0xff]
      %v4349 = vld [vmem:[#allocation7 + $0x150] sm:$0xff]
      %v4350 = vld [vmem:[#allocation7 + $0x158] sm:$0xff]
      %v4351 = vld [vmem:[#allocation7 + $0x160] sm:$0xff]
      %v4352 = vld [vmem:[#allocation7 + $0x168] sm:$0xff]
      %v4353 = vld [vmem:[#allocation7 + $0x170] sm:$0xff]
      %v4354 = vld [vmem:[#allocation7 + $0x178] sm:$0xff]
      %v4355 = vld [vmem:[#allocation7 + $0x180] sm:$0xff]
      %v4356 = vld [vmem:[#allocation7 + $0x188] sm:$0xff]
      %v4357 = vld [vmem:[#allocation7 + $0x190] sm:$0xff]
      %v4358 = vld [vmem:[#allocation7 + $0x198] sm:$0xff]
      %v4359 = vld [vmem:[#allocation7 + $0x1a0] sm:$0xff]
      %v4360 = vld [vmem:[#allocation7 + $0x1a8] sm:$0xff]
      %v4361 = vld [vmem:[#allocation7 + $0x1b0] sm:$0xff]
      %v4362 = vld [vmem:[#allocation7 + $0x1b8] sm:$0xff]
      %v4363 = vld [vmem:[#allocation7 + $0x1c0] sm:$0xff]
      %v4364 = vld [vmem:[#allocation7 + $0x1c8] sm:$0xff]
      %v4365 = vld [vmem:[#allocation7 + $0x1d0] sm:$0xff]
      %v4366 = vld [vmem:[#allocation7 + $0x1d8] sm:$0xff]
      %v4367 = vld [vmem:[#allocation7 + $0x1e0] sm:$0xff]
      %v4368 = vld [vmem:[#allocation7 + $0x1e8] sm:$0xff]
      %v4369 = vld [vmem:[#allocation7 + $0x1f0] sm:$0xff]
      %v4370 = vld [vmem:[#allocation7 + $0x1f8] sm:$0xff]
      %4372 = vset.pattern.permute.xlu0 0
      %4373 = vperm.xlu0 %4372, %v3283
      %v4374 = vpop.permute.xlu0 %4373
      %4377 = vset.pattern.permute.xlu0 0
      %4378 = vperm.xlu0 %4377, %v3285
      %v4379 = vpop.permute.xlu0 %4378
      %4382 = vset.pattern.permute.xlu0 0
      %4383 = vperm.xlu0 %4382, %v3287
      %v4384 = vpop.permute.xlu0 %4383
      %4387 = vset.pattern.permute.xlu0 0
      %4388 = vperm.xlu0 %4387, %v3289
      %v4389 = vpop.permute.xlu0 %4388
      %4392 = vset.pattern.permute.xlu0 0
      %4393 = vperm.xlu0 %4392, %v3291
      %v4394 = vpop.permute.xlu0 %4393
      %4397 = vset.pattern.permute.xlu0 0
      %4398 = vperm.xlu0 %4397, %v3293
      %v4399 = vpop.permute.xlu0 %4398
      %4402 = vset.pattern.permute.xlu0 0
      %4403 = vperm.xlu0 %4402, %v3295
      %v4404 = vpop.permute.xlu0 %4403
      %4407 = vset.pattern.permute.xlu0 0
      %4408 = vperm.xlu0 %4407, %v3297
      %v4409 = vpop.permute.xlu0 %4408
      %4412 = vset.pattern.permute.xlu0 0
      %4413 = vperm.xlu0 %4412, %v3299
      %v4414 = vpop.permute.xlu0 %4413
      %4417 = vset.pattern.permute.xlu0 0
      %4418 = vperm.xlu0 %4417, %v3301
      %v4419 = vpop.permute.xlu0 %4418
      %4422 = vset.pattern.permute.xlu0 0
      %4423 = vperm.xlu0 %4422, %v3303
      %v4424 = vpop.permute.xlu0 %4423
      %4427 = vset.pattern.permute.xlu0 0
      %4428 = vperm.xlu0 %4427, %v3305
      %v4429 = vpop.permute.xlu0 %4428
      %4432 = vset.pattern.permute.xlu0 0
      %4433 = vperm.xlu0 %4432, %v3307
      %v4434 = vpop.permute.xlu0 %4433
      %4437 = vset.pattern.permute.xlu0 0
      %4438 = vperm.xlu0 %4437, %v3309
      %v4439 = vpop.permute.xlu0 %4438
      %4442 = vset.pattern.permute.xlu0 0
      %4443 = vperm.xlu0 %4442, %v3311
      %v4444 = vpop.permute.xlu0 %4443
      %4447 = vset.pattern.permute.xlu0 0
      %4448 = vperm.xlu0 %4447, %v3313
      %v4449 = vpop.permute.xlu0 %4448
      %4452 = vset.pattern.permute.xlu0 0
      %4453 = vperm.xlu0 %4452, %v3315
      %v4454 = vpop.permute.xlu0 %4453
      %4457 = vset.pattern.permute.xlu0 0
      %4458 = vperm.xlu0 %4457, %v3317
      %v4459 = vpop.permute.xlu0 %4458
      %4462 = vset.pattern.permute.xlu0 0
      %4463 = vperm.xlu0 %4462, %v3319
      %v4464 = vpop.permute.xlu0 %4463
      %4467 = vset.pattern.permute.xlu0 0
      %4468 = vperm.xlu0 %4467, %v3321
      %v4469 = vpop.permute.xlu0 %4468
      %4472 = vset.pattern.permute.xlu0 0
      %4473 = vperm.xlu0 %4472, %v3323
      %v4474 = vpop.permute.xlu0 %4473
      %4477 = vset.pattern.permute.xlu0 0
      %4478 = vperm.xlu0 %4477, %v3325
      %v4479 = vpop.permute.xlu0 %4478
      %4482 = vset.pattern.permute.xlu0 0
      %4483 = vperm.xlu0 %4482, %v3327
      %v4484 = vpop.permute.xlu0 %4483
      %4487 = vset.pattern.permute.xlu0 0
      %4488 = vperm.xlu0 %4487, %v3329
      %v4489 = vpop.permute.xlu0 %4488
      %4492 = vset.pattern.permute.xlu0 0
      %4493 = vperm.xlu0 %4492, %v3331
      %v4494 = vpop.permute.xlu0 %4493
      %4497 = vset.pattern.permute.xlu0 0
      %4498 = vperm.xlu0 %4497, %v3333
      %v4499 = vpop.permute.xlu0 %4498
      %4502 = vset.pattern.permute.xlu0 0
      %4503 = vperm.xlu0 %4502, %v3335
      %v4504 = vpop.permute.xlu0 %4503
      %4507 = vset.pattern.permute.xlu0 0
      %4508 = vperm.xlu0 %4507, %v3337
      %v4509 = vpop.permute.xlu0 %4508
      %4512 = vset.pattern.permute.xlu0 0
      %4513 = vperm.xlu0 %4512, %v3339
      %v4514 = vpop.permute.xlu0 %4513
      %4517 = vset.pattern.permute.xlu0 0
      %4518 = vperm.xlu0 %4517, %v3341
      %v4519 = vpop.permute.xlu0 %4518
      %4522 = vset.pattern.permute.xlu0 0
      %4523 = vperm.xlu0 %4522, %v3343
      %v4524 = vpop.permute.xlu0 %4523
      %4527 = vset.pattern.permute.xlu0 0
      %4528 = vperm.xlu0 %4527, %v3345
      %v4529 = vpop.permute.xlu0 %4528
      %4532 = vset.pattern.permute.xlu0 0
      %4533 = vperm.xlu0 %4532, %v3347
      %v4534 = vpop.permute.xlu0 %4533
      %4537 = vset.pattern.permute.xlu0 0
      %4538 = vperm.xlu0 %4537, %v3349
      %v4539 = vpop.permute.xlu0 %4538
      %4542 = vset.pattern.permute.xlu0 0
      %4543 = vperm.xlu0 %4542, %v3351
      %v4544 = vpop.permute.xlu0 %4543
      %4547 = vset.pattern.permute.xlu0 0
      %4548 = vperm.xlu0 %4547, %v3353
      %v4549 = vpop.permute.xlu0 %4548
      %4552 = vset.pattern.permute.xlu0 0
      %4553 = vperm.xlu0 %4552, %v3355
      %v4554 = vpop.permute.xlu0 %4553
      %4557 = vset.pattern.permute.xlu0 0
      %4558 = vperm.xlu0 %4557, %v3357
      %v4559 = vpop.permute.xlu0 %4558
      %4562 = vset.pattern.permute.xlu0 0
      %4563 = vperm.xlu0 %4562, %v3359
      %v4564 = vpop.permute.xlu0 %4563
      %4567 = vset.pattern.permute.xlu0 0
      %4568 = vperm.xlu0 %4567, %v3361
      %v4569 = vpop.permute.xlu0 %4568
      %4572 = vset.pattern.permute.xlu0 0
      %4573 = vperm.xlu0 %4572, %v3363
      %v4574 = vpop.permute.xlu0 %4573
      %4577 = vset.pattern.permute.xlu0 0
      %4578 = vperm.xlu0 %4577, %v3365
      %v4579 = vpop.permute.xlu0 %4578
      %4582 = vset.pattern.permute.xlu0 0
      %4583 = vperm.xlu0 %4582, %v3367
      %v4584 = vpop.permute.xlu0 %4583
      %4587 = vset.pattern.permute.xlu0 0
      %4588 = vperm.xlu0 %4587, %v3369
      %v4589 = vpop.permute.xlu0 %4588
      %4592 = vset.pattern.permute.xlu0 0
      %4593 = vperm.xlu0 %4592, %v3371
      %v4594 = vpop.permute.xlu0 %4593
      %4597 = vset.pattern.permute.xlu0 0
      %4598 = vperm.xlu0 %4597, %v3373
      %v4599 = vpop.permute.xlu0 %4598
      %4602 = vset.pattern.permute.xlu0 0
      %4603 = vperm.xlu0 %4602, %v3375
      %v4604 = vpop.permute.xlu0 %4603
      %4607 = vset.pattern.permute.xlu0 0
      %4608 = vperm.xlu0 %4607, %v3377
      %v4609 = vpop.permute.xlu0 %4608
      %4612 = vset.pattern.permute.xlu0 0
      %4613 = vperm.xlu0 %4612, %v3379
      %v4614 = vpop.permute.xlu0 %4613
      %4617 = vset.pattern.permute.xlu0 0
      %4618 = vperm.xlu0 %4617, %v3381
      %v4619 = vpop.permute.xlu0 %4618
      %4622 = vset.pattern.permute.xlu0 0
      %4623 = vperm.xlu0 %4622, %v3383
      %v4624 = vpop.permute.xlu0 %4623
      %4627 = vset.pattern.permute.xlu0 0
      %4628 = vperm.xlu0 %4627, %v3385
      %v4629 = vpop.permute.xlu0 %4628
      %4632 = vset.pattern.permute.xlu0 0
      %4633 = vperm.xlu0 %4632, %v3387
      %v4634 = vpop.permute.xlu0 %4633
      %4637 = vset.pattern.permute.xlu0 0
      %4638 = vperm.xlu0 %4637, %v3389
      %v4639 = vpop.permute.xlu0 %4638
      %4642 = vset.pattern.permute.xlu0 0
      %4643 = vperm.xlu0 %4642, %v3391
      %v4644 = vpop.permute.xlu0 %4643
      %4647 = vset.pattern.permute.xlu0 0
      %4648 = vperm.xlu0 %4647, %v3393
      %v4649 = vpop.permute.xlu0 %4648
      %4652 = vset.pattern.permute.xlu0 0
      %4653 = vperm.xlu0 %4652, %v3395
      %v4654 = vpop.permute.xlu0 %4653
      %4657 = vset.pattern.permute.xlu0 0
      %4658 = vperm.xlu0 %4657, %v3397
      %v4659 = vpop.permute.xlu0 %4658
      %4662 = vset.pattern.permute.xlu0 0
      %4663 = vperm.xlu0 %4662, %v3399
      %v4664 = vpop.permute.xlu0 %4663
      %4667 = vset.pattern.permute.xlu0 0
      %4668 = vperm.xlu0 %4667, %v3401
      %v4669 = vpop.permute.xlu0 %4668
      %4672 = vset.pattern.permute.xlu0 0
      %4673 = vperm.xlu0 %4672, %v3403
      %v4674 = vpop.permute.xlu0 %4673
      %4677 = vset.pattern.permute.xlu0 0
      %4678 = vperm.xlu0 %4677, %v3405
      %v4679 = vpop.permute.xlu0 %4678
      %4682 = vset.pattern.permute.xlu0 0
      %4683 = vperm.xlu0 %4682, %v3407
      %v4684 = vpop.permute.xlu0 %4683
      %4687 = vset.pattern.permute.xlu0 0
      %4688 = vperm.xlu0 %4687, %v3409
      %v4689 = vpop.permute.xlu0 %4688
      %v4691 = vmul.f32 %v4374, %v4307
      %v4692 = vmul.f32 %v4379, %v4308
      %v4693 = vmul.f32 %v4384, %v4309
      %v4694 = vmul.f32 %v4389, %v4310
      %v4695 = vmul.f32 %v4394, %v4311
      %v4696 = vmul.f32 %v4399, %v4312
      %v4697 = vmul.f32 %v4404, %v4313
      %v4698 = vmul.f32 %v4409, %v4314
      %v4699 = vmul.f32 %v4414, %v4315
      %v4700 = vmul.f32 %v4419, %v4316
      %v4701 = vmul.f32 %v4424, %v4317
      %v4702 = vmul.f32 %v4429, %v4318
      %v4703 = vmul.f32 %v4434, %v4319
      %v4704 = vmul.f32 %v4439, %v4320
      %v4705 = vmul.f32 %v4444, %v4321
      %v4706 = vmul.f32 %v4449, %v4322
      %v4707 = vmul.f32 %v4454, %v4323
      %v4708 = vmul.f32 %v4459, %v4324
      %v4709 = vmul.f32 %v4464, %v4325
      %v4710 = vmul.f32 %v4469, %v4326
      %v4711 = vmul.f32 %v4474, %v4327
      %v4712 = vmul.f32 %v4479, %v4328
      %v4713 = vmul.f32 %v4484, %v4329
      %v4714 = vmul.f32 %v4489, %v4330
      %v4715 = vmul.f32 %v4494, %v4331
      %v4716 = vmul.f32 %v4499, %v4332
      %v4717 = vmul.f32 %v4504, %v4333
      %v4718 = vmul.f32 %v4509, %v4334
      %v4719 = vmul.f32 %v4514, %v4335
      %v4720 = vmul.f32 %v4519, %v4336
      %v4721 = vmul.f32 %v4524, %v4337
      %v4722 = vmul.f32 %v4529, %v4338
      %v4723 = vmul.f32 %v4534, %v4339
      %v4724 = vmul.f32 %v4539, %v4340
      %v4725 = vmul.f32 %v4544, %v4341
      %v4726 = vmul.f32 %v4549, %v4342
      %v4727 = vmul.f32 %v4554, %v4343
      %v4728 = vmul.f32 %v4559, %v4344
      %v4729 = vmul.f32 %v4564, %v4345
      %v4730 = vmul.f32 %v4569, %v4346
      %v4731 = vmul.f32 %v4574, %v4347
      %v4732 = vmul.f32 %v4579, %v4348
      %v4733 = vmul.f32 %v4584, %v4349
      %v4734 = vmul.f32 %v4589, %v4350
      %v4735 = vmul.f32 %v4594, %v4351
      %v4736 = vmul.f32 %v4599, %v4352
      %v4737 = vmul.f32 %v4604, %v4353
      %v4738 = vmul.f32 %v4609, %v4354
      %v4739 = vmul.f32 %v4614, %v4355
      %v4740 = vmul.f32 %v4619, %v4356
      %v4741 = vmul.f32 %v4624, %v4357
      %v4742 = vmul.f32 %v4629, %v4358
      %v4743 = vmul.f32 %v4634, %v4359
      %v4744 = vmul.f32 %v4639, %v4360
      %v4745 = vmul.f32 %v4644, %v4361
      %v4746 = vmul.f32 %v4649, %v4362
      %v4747 = vmul.f32 %v4654, %v4363
      %v4748 = vmul.f32 %v4659, %v4364
      %v4749 = vmul.f32 %v4664, %v4365
      %v4750 = vmul.f32 %v4669, %v4366
      %v4751 = vmul.f32 %v4674, %v4367
      %v4752 = vmul.f32 %v4679, %v4368
      %v4753 = vmul.f32 %v4684, %v4369
      %v4754 = vmul.f32 %v4689, %v4370
      %v4755 = vpack.c.bf16 %v3797, %v3795
      %v4756 = vpack.c.bf16 %v3801, %v3799
      %v4757 = vpack.c.bf16 %v3805, %v3803
      %v4758 = vpack.c.bf16 %v3809, %v3807
      %v4759 = vpack.c.bf16 %v3813, %v3811
      %v4760 = vpack.c.bf16 %v3817, %v3815
      %v4761 = vpack.c.bf16 %v3821, %v3819
      %v4762 = vpack.c.bf16 %v3825, %v3823
      %v4763 = vpack.c.bf16 %v3829, %v3827
      %v4764 = vpack.c.bf16 %v3833, %v3831
      %v4765 = vpack.c.bf16 %v3837, %v3835
      %v4766 = vpack.c.bf16 %v3841, %v3839
      %v4767 = vpack.c.bf16 %v3845, %v3843
      %v4768 = vpack.c.bf16 %v3849, %v3847
      %v4769 = vpack.c.bf16 %v3853, %v3851
      %v4770 = vpack.c.bf16 %v3857, %v3855
      %v4771 = vpack.c.bf16 %v3861, %v3859
      %v4772 = vpack.c.bf16 %v3865, %v3863
      %v4773 = vpack.c.bf16 %v3869, %v3867
      %v4774 = vpack.c.bf16 %v3873, %v3871
      %v4775 = vpack.c.bf16 %v3877, %v3875
      %v4776 = vpack.c.bf16 %v3881, %v3879
      %v4777 = vpack.c.bf16 %v3885, %v3883
      %v4778 = vpack.c.bf16 %v3889, %v3887
      %v4779 = vpack.c.bf16 %v3893, %v3891
      %v4780 = vpack.c.bf16 %v3897, %v3895
      %v4781 = vpack.c.bf16 %v3901, %v3899
      %v4782 = vpack.c.bf16 %v3905, %v3903
      %v4783 = vpack.c.bf16 %v3909, %v3907
      %v4784 = vpack.c.bf16 %v3913, %v3911
      %v4785 = vpack.c.bf16 %v3917, %v3915
      %v4786 = vpack.c.bf16 %v3921, %v3919
      %4787 = vmatprep.subr.bf16.mxu0 0
      %4788 = vmatpush1.bf16.msra.mxu0 %v2317
      %4789 = vmatprep.subr.bf16.mxu0 0
      %4790 = vmatpush1.bf16.msra.mxu0 %v2318
      %4791 = vmatprep.subr.bf16.mxu0 0
      %4792 = vmatpush1.bf16.msra.mxu0 %v2319
      %4793 = vmatprep.subr.bf16.mxu0 0
      %4794 = vmatpush1.bf16.msra.mxu0 %v2320
      %4795 = vmatprep.subr.bf16.mxu0 0
      %4796 = vmatpush1.bf16.msra.mxu0 %v2321
      %4797 = vmatprep.subr.bf16.mxu0 0
      %4798 = vmatpush1.bf16.msra.mxu0 %v2322
      %4799 = vmatprep.subr.bf16.mxu0 0
      %4800 = vmatpush1.bf16.msra.mxu0 %v2323
      %4801 = vmatprep.subr.bf16.mxu0 0
      %4802 = vmatpush1.bf16.msra.mxu0 %v2324
      %4803 = vmatprep.subr.bf16.mxu0 0
      %4804 = vmatpush1.bf16.msra.mxu0 0
      %4805 = vmatprep.subr.bf16.mxu0 0
      %4806 = vmatpush1.bf16.msra.mxu0 0
      %4807 = vmatprep.subr.bf16.mxu0 0
      %4808 = vmatpush1.bf16.msra.mxu0 0
      %4809 = vmatprep.subr.bf16.mxu0 0
      %4810 = vmatpush1.bf16.msra.mxu0 0
      %4811 = vmatprep.subr.bf16.mxu0 0
      %4812 = vmatpush1.bf16.msra.mxu0 0
      %4813 = vmatprep.subr.bf16.mxu0 0
      %4814 = vmatpush1.bf16.msra.mxu0 0
      %4815 = vmatprep.subr.bf16.mxu0 0
      %4816 = vmatpush1.bf16.msra.mxu0 0
      %4817 = vmatprep.subr.bf16.mxu0 0
      %4818 = vmatpush1.bf16.msra.mxu0 0
      %4819 = vmatprep.mubr.bf16.mxu0 0
      %4820 = vmatmul.mubr.bf16.gmra.mrb[0].mxu0 %v4755
      %v4821 = vpop.f32.mrb[0].mxu0
      %v4822 = vadd.f32 0.0, %v4821
      %v4823 = vpop.f32.mrb[0].mxu0
      %v4824 = vpop.f32.mrb[0].mxu0
      %v4825 = vadd.f32 0.0, %v4824
      %v4826 = vpop.f32.mrb[0].mxu0
      %4827 = vmatprep.mubr.bf16.mxu0 0
      %4828 = vmatmul.mubr.bf16.gmra.mrb[0].mxu0 %v4756
      %v4829 = vpop.f32.mrb[0].mxu0
      %v4830 = vadd.f32 0.0, %v4829
      %v4831 = vpop.f32.mrb[0].mxu0
      %v4832 = vpop.f32.mrb[0].mxu0
      %v4833 = vadd.f32 0.0, %v4832
      %v4834 = vpop.f32.mrb[0].mxu0
      %4835 = vmatprep.mubr.bf16.mxu0 0
      %4836 = vmatmul.mubr.bf16.gmra.mrb[0].mxu0 %v4757
      %v4837 = vpop.f32.mrb[0].mxu0
      %v4838 = vadd.f32 0.0, %v4837
      %v4839 = vpop.f32.mrb[0].mxu0
      %v4840 = vpop.f32.mrb[0].mxu0
      %v4841 = vadd.f32 0.0, %v4840
      %v4842 = vpop.f32.mrb[0].mxu0
      %4843 = vmatprep.mubr.bf16.mxu0 0
      %4844 = vmatmul.mubr.bf16.gmra.mrb[0].mxu0 %v4758
      %v4845 = vpop.f32.mrb[0].mxu0
      %v4846 = vadd.f32 0.0, %v4845
      %v4847 = vpop.f32.mrb[0].mxu0
      %v4848 = vpop.f32.mrb[0].mxu0
      %v4849 = vadd.f32 0.0, %v4848
      %v4850 = vpop.f32.mrb[0].mxu0
      %4851 = vmatprep.mubr.bf16.mxu0 0
      %4852 = vmatmul.mubr.bf16.gmra.mrb[0].mxu0 %v4759
      %v4853 = vpop.f32.mrb[0].mxu0
      %v4854 = vadd.f32 0.0, %v4853
      %v4855 = vpop.f32.mrb[0].mxu0
      %v4856 = vpop.f32.mrb[0].mxu0
      %v4857 = vadd.f32 0.0, %v4856
      %v4858 = vpop.f32.mrb[0].mxu0
      %4859 = vmatprep.mubr.bf16.mxu0 0
      %4860 = vmatmul.mubr.bf16.gmra.mrb[0].mxu0 %v4760
      %v4861 = vpop.f32.mrb[0].mxu0
      %v4862 = vadd.f32 0.0, %v4861
      %v4863 = vpop.f32.mrb[0].mxu0
      %v4864 = vpop.f32.mrb[0].mxu0
      %v4865 = vadd.f32 0.0, %v4864
      %v4866 = vpop.f32.mrb[0].mxu0
      %4867 = vmatprep.mubr.bf16.mxu0 0
      %4868 = vmatmul.mubr.bf16.gmra.mrb[0].mxu0 %v4761
      %v4869 = vpop.f32.mrb[0].mxu0
      %v4870 = vadd.f32 0.0, %v4869
      %v4871 = vpop.f32.mrb[0].mxu0
      %v4872 = vpop.f32.mrb[0].mxu0
      %v4873 = vadd.f32 0.0, %v4872
      %v4874 = vpop.f32.mrb[0].mxu0
      %4875 = vmatprep.mubr.bf16.mxu0 0
      %4876 = vmatmul.mubr.bf16.gmra.mrb[0].mxu0 %v4762
      %v4877 = vpop.f32.mrb[0].mxu0
      %v4878 = vadd.f32 0.0, %v4877
      %v4879 = vpop.f32.mrb[0].mxu0
      %v4880 = vpop.f32.mrb[0].mxu0
      %v4881 = vadd.f32 0.0, %v4880
      %v4882 = vpop.f32.mrb[0].mxu0
      %4883 = vdwg.mxu0
      %4884 = vmatprep.subr.bf16.mxu0 0
      %4885 = vmatpush1.bf16.msra.mxu0 %v2325
      %4886 = vmatprep.subr.bf16.mxu0 0
      %4887 = vmatpush1.bf16.msra.mxu0 %v2326
      %4888 = vmatprep.subr.bf16.mxu0 0
      %4889 = vmatpush1.bf16.msra.mxu0 %v2327
      %4890 = vmatprep.subr.bf16.mxu0 0
      %4891 = vmatpush1.bf16.msra.mxu0 %v2328
      %4892 = vmatprep.subr.bf16.mxu0 0
      %4893 = vmatpush1.bf16.msra.mxu0 %v2329
      %4894 = vmatprep.subr.bf16.mxu0 0
      %4895 = vmatpush1.bf16.msra.mxu0 %v2330
      %4896 = vmatprep.subr.bf16.mxu0 0
      %4897 = vmatpush1.bf16.msra.mxu0 %v2331
      %4898 = vmatprep.subr.bf16.mxu0 0
      %4899 = vmatpush1.bf16.msra.mxu0 %v2332
      %4900 = vmatprep.subr.bf16.mxu0 0
      %4901 = vmatpush1.bf16.msra.mxu0 0
      %4902 = vmatprep.subr.bf16.mxu0 0
      %4903 = vmatpush1.bf16.msra.mxu0 0
      %4904 = vmatprep.subr.bf16.mxu0 0
      %4905 = vmatpush1.bf16.msra.mxu0 0
      %4906 = vmatprep.subr.bf16.mxu0 0
      %4907 = vmatpush1.bf16.msra.mxu0 0
      %4908 = vmatprep.subr.bf16.mxu0 0
      %4909 = vmatpush1.bf16.msra.mxu0 0
      %4910 = vmatprep.subr.bf16.mxu0 0
      %4911 = vmatpush1.bf16.msra.mxu0 0
      %4912 = vmatprep.subr.bf16.mxu0 0
      %4913 = vmatpush1.bf16.msra.mxu0 0
      %4914 = vmatprep.subr.bf16.mxu0 0
      %4915 = vmatpush1.bf16.msra.mxu0 0
      %4916 = vmatprep.mubr.bf16.mxu0 0
      %4917 = vmatmul.mubr.bf16.gmra.mrb[0].mxu0 %v4763
      %v4918 = vpop.f32.mrb[0].mxu0
      %v4919 = vadd.f32 0.0, %v4918
      %v4920 = vpop.f32.mrb[0].mxu0
      %v4921 = vpop.f32.mrb[0].mxu0
      %v4922 = vadd.f32 0.0, %v4921
      %v4923 = vpop.f32.mrb[0].mxu0
      %4924 = vmatprep.mubr.bf16.mxu0 0
      %4925 = vmatmul.mubr.bf16.gmra.mrb[0].mxu0 %v4764
      %v4926 = vpop.f32.mrb[0].mxu0
      %v4927 = vadd.f32 0.0, %v4926
      %v4928 = vpop.f32.mrb[0].mxu0
      %v4929 = vpop.f32.mrb[0].mxu0
      %v4930 = vadd.f32 0.0, %v4929
      %v4931 = vpop.f32.mrb[0].mxu0
      %4932 = vmatprep.mubr.bf16.mxu0 0
      %4933 = vmatmul.mubr.bf16.gmra.mrb[0].mxu0 %v4765
      %v4934 = vpop.f32.mrb[0].mxu0
      %v4935 = vadd.f32 0.0, %v4934
      %v4936 = vpop.f32.mrb[0].mxu0
      %v4937 = vpop.f32.mrb[0].mxu0
      %v4938 = vadd.f32 0.0, %v4937
      %v4939 = vpop.f32.mrb[0].mxu0
      %4940 = vmatprep.mubr.bf16.mxu0 0
      %4941 = vmatmul.mubr.bf16.gmra.mrb[0].mxu0 %v4766
      %v4942 = vpop.f32.mrb[0].mxu0
      %v4943 = vadd.f32 0.0, %v4942
      %v4944 = vpop.f32.mrb[0].mxu0
      %v4945 = vpop.f32.mrb[0].mxu0
      %v4946 = vadd.f32 0.0, %v4945
      %v4947 = vpop.f32.mrb[0].mxu0
      %4948 = vmatprep.mubr.bf16.mxu0 0
      %4949 = vmatmul.mubr.bf16.gmra.mrb[0].mxu0 %v4767
      %v4950 = vpop.f32.mrb[0].mxu0
      %v4951 = vadd.f32 0.0, %v4950
      %v4952 = vpop.f32.mrb[0].mxu0
      %v4953 = vpop.f32.mrb[0].mxu0
      %v4954 = vadd.f32 0.0, %v4953
      %v4955 = vpop.f32.mrb[0].mxu0
      %4956 = vmatprep.mubr.bf16.mxu0 0
      %4957 = vmatmul.mubr.bf16.gmra.mrb[0].mxu0 %v4768
      %v4958 = vpop.f32.mrb[0].mxu0
      %v4959 = vadd.f32 0.0, %v4958
      %v4960 = vpop.f32.mrb[0].mxu0
      %v4961 = vpop.f32.mrb[0].mxu0
      %v4962 = vadd.f32 0.0, %v4961
      %v4963 = vpop.f32.mrb[0].mxu0
      %4964 = vmatprep.mubr.bf16.mxu0 0
      %4965 = vmatmul.mubr.bf16.gmra.mrb[0].mxu0 %v4769
      %v4966 = vpop.f32.mrb[0].mxu0
      %v4967 = vadd.f32 0.0, %v4966
      %v4968 = vpop.f32.mrb[0].mxu0
      %v4969 = vpop.f32.mrb[0].mxu0
      %v4970 = vadd.f32 0.0, %v4969
      %v4971 = vpop.f32.mrb[0].mxu0
      %4972 = vmatprep.mubr.bf16.mxu0 0
      %4973 = vmatmul.mubr.bf16.gmra.mrb[0].mxu0 %v4770
      %v4974 = vpop.f32.mrb[0].mxu0
      %v4975 = vadd.f32 0.0, %v4974
      %v4976 = vpop.f32.mrb[0].mxu0
      %v4977 = vpop.f32.mrb[0].mxu0
      %v4978 = vadd.f32 0.0, %v4977
      %v4979 = vpop.f32.mrb[0].mxu0
      %4980 = vdwg.mxu0
      %4981 = vmatprep.subr.bf16.mxu0 0
      %4982 = vmatpush1.bf16.msra.mxu0 %v2333
      %4983 = vmatprep.subr.bf16.mxu0 0
      %4984 = vmatpush1.bf16.msra.mxu0 %v2334
      %4985 = vmatprep.subr.bf16.mxu0 0
      %4986 = vmatpush1.bf16.msra.mxu0 %v2335
      %4987 = vmatprep.subr.bf16.mxu0 0
      %4988 = vmatpush1.bf16.msra.mxu0 %v2336
      %4989 = vmatprep.subr.bf16.mxu0 0
      %4990 = vmatpush1.bf16.msra.mxu0 %v2337
      %4991 = vmatprep.subr.bf16.mxu0 0
      %4992 = vmatpush1.bf16.msra.mxu0 %v2338
      %4993 = vmatprep.subr.bf16.mxu0 0
      %4994 = vmatpush1.bf16.msra.mxu0 %v2339
      %4995 = vmatprep.subr.bf16.mxu0 0
      %4996 = vmatpush1.bf16.msra.mxu0 %v2340
      %4997 = vmatprep.subr.bf16.mxu0 0
      %4998 = vmatpush1.bf16.msra.mxu0 0
      %4999 = vmatprep.subr.bf16.mxu0 0
      %5000 = vmatpush1.bf16.msra.mxu0 0
      %5001 = vmatprep.subr.bf16.mxu0 0
      %5002 = vmatpush1.bf16.msra.mxu0 0
      %5003 = vmatprep.subr.bf16.mxu0 0
      %5004 = vmatpush1.bf16.msra.mxu0 0
      %5005 = vmatprep.subr.bf16.mxu0 0
      %5006 = vmatpush1.bf16.msra.mxu0 0
      %5007 = vmatprep.subr.bf16.mxu0 0
      %5008 = vmatpush1.bf16.msra.mxu0 0
      %5009 = vmatprep.subr.bf16.mxu0 0
      %5010 = vmatpush1.bf16.msra.mxu0 0
      %5011 = vmatprep.subr.bf16.mxu0 0
      %5012 = vmatpush1.bf16.msra.mxu0 0
      %5013 = vmatprep.mubr.bf16.mxu0 0
      %5014 = vmatmul.mubr.bf16.gmra.mrb[0].mxu0 %v4771
      %v5015 = vpop.f32.mrb[0].mxu0
      %v5016 = vadd.f32 0.0, %v5015
      %v5017 = vpop.f32.mrb[0].mxu0
      %v5018 = vpop.f32.mrb[0].mxu0
      %v5019 = vadd.f32 0.0, %v5018
      %v5020 = vpop.f32.mrb[0].mxu0
      %5021 = vmatprep.mubr.bf16.mxu0 0
      %5022 = vmatmul.mubr.bf16.gmra.mrb[0].mxu0 %v4772
      %v5023 = vpop.f32.mrb[0].mxu0
      %v5024 = vadd.f32 0.0, %v5023
      %v5025 = vpop.f32.mrb[0].mxu0
      %v5026 = vpop.f32.mrb[0].mxu0
      %v5027 = vadd.f32 0.0, %v5026
      %v5028 = vpop.f32.mrb[0].mxu0
      %5029 = vmatprep.mubr.bf16.mxu0 0
      %5030 = vmatmul.mubr.bf16.gmra.mrb[0].mxu0 %v4773
      %v5031 = vpop.f32.mrb[0].mxu0
      %v5032 = vadd.f32 0.0, %v5031
      %v5033 = vpop.f32.mrb[0].mxu0
      %v5034 = vpop.f32.mrb[0].mxu0
      %v5035 = vadd.f32 0.0, %v5034
      %v5036 = vpop.f32.mrb[0].mxu0
      %5037 = vmatprep.mubr.bf16.mxu0 0
      %5038 = vmatmul.mubr.bf16.gmra.mrb[0].mxu0 %v4774
      %v5039 = vpop.f32.mrb[0].mxu0
      %v5040 = vadd.f32 0.0, %v5039
      %v5041 = vpop.f32.mrb[0].mxu0
      %v5042 = vpop.f32.mrb[0].mxu0
      %v5043 = vadd.f32 0.0, %v5042
      %v5044 = vpop.f32.mrb[0].mxu0
      %5045 = vmatprep.mubr.bf16.mxu0 0
      %5046 = vmatmul.mubr.bf16.gmra.mrb[0].mxu0 %v4775
      %v5047 = vpop.f32.mrb[0].mxu0
      %v5048 = vadd.f32 0.0, %v5047
      %v5049 = vpop.f32.mrb[0].mxu0
      %v5050 = vpop.f32.mrb[0].mxu0
      %v5051 = vadd.f32 0.0, %v5050
      %v5052 = vpop.f32.mrb[0].mxu0
      %5053 = vmatprep.mubr.bf16.mxu0 0
      %5054 = vmatmul.mubr.bf16.gmra.mrb[0].mxu0 %v4776
      %v5055 = vpop.f32.mrb[0].mxu0
      %v5056 = vadd.f32 0.0, %v5055
      %v5057 = vpop.f32.mrb[0].mxu0
      %v5058 = vpop.f32.mrb[0].mxu0
      %v5059 = vadd.f32 0.0, %v5058
      %v5060 = vpop.f32.mrb[0].mxu0
      %5061 = vmatprep.mubr.bf16.mxu0 0
      %5062 = vmatmul.mubr.bf16.gmra.mrb[0].mxu0 %v4777
      %v5063 = vpop.f32.mrb[0].mxu0
      %v5064 = vadd.f32 0.0, %v5063
      %v5065 = vpop.f32.mrb[0].mxu0
      %v5066 = vpop.f32.mrb[0].mxu0
      %v5067 = vadd.f32 0.0, %v5066
      %v5068 = vpop.f32.mrb[0].mxu0
      %5069 = vmatprep.mubr.bf16.mxu0 0
      %5070 = vmatmul.mubr.bf16.gmra.mrb[0].mxu0 %v4778
      %v5071 = vpop.f32.mrb[0].mxu0
      %v5072 = vadd.f32 0.0, %v5071
      %v5073 = vpop.f32.mrb[0].mxu0
      %v5074 = vpop.f32.mrb[0].mxu0
      %v5075 = vadd.f32 0.0, %v5074
      %v5076 = vpop.f32.mrb[0].mxu0
      %5077 = vdwg.mxu0
      %5078 = vmatprep.subr.bf16.mxu0 0
      %5079 = vmatpush1.bf16.msra.mxu0 %v2341
      %5080 = vmatprep.subr.bf16.mxu0 0
      %5081 = vmatpush1.bf16.msra.mxu0 %v2342
      %5082 = vmatprep.subr.bf16.mxu0 0
      %5083 = vmatpush1.bf16.msra.mxu0 %v2343
      %5084 = vmatprep.subr.bf16.mxu0 0
      %5085 = vmatpush1.bf16.msra.mxu0 %v2344
      %5086 = vmatprep.subr.bf16.mxu0 0
      %5087 = vmatpush1.bf16.msra.mxu0 %v2345
      %5088 = vmatprep.subr.bf16.mxu0 0
      %5089 = vmatpush1.bf16.msra.mxu0 %v2346
      %5090 = vmatprep.subr.bf16.mxu0 0
      %5091 = vmatpush1.bf16.msra.mxu0 %v2347
      %5092 = vmatprep.subr.bf16.mxu0 0
      %5093 = vmatpush1.bf16.msra.mxu0 %v2348
      %5094 = vmatprep.subr.bf16.mxu0 0
      %5095 = vmatpush1.bf16.msra.mxu0 0
      %5096 = vmatprep.subr.bf16.mxu0 0
      %5097 = vmatpush1.bf16.msra.mxu0 0
      %5098 = vmatprep.subr.bf16.mxu0 0
      %5099 = vmatpush1.bf16.msra.mxu0 0
      %5100 = vmatprep.subr.bf16.mxu0 0
      %5101 = vmatpush1.bf16.msra.mxu0 0
      %5102 = vmatprep.subr.bf16.mxu0 0
      %5103 = vmatpush1.bf16.msra.mxu0 0
      %5104 = vmatprep.subr.bf16.mxu0 0
      %5105 = vmatpush1.bf16.msra.mxu0 0
      %5106 = vmatprep.subr.bf16.mxu0 0
      %5107 = vmatpush1.bf16.msra.mxu0 0
      %5108 = vmatprep.subr.bf16.mxu0 0
      %5109 = vmatpush1.bf16.msra.mxu0 0
      %5110 = vmatprep.mubr.bf16.mxu0 0
      %5111 = vmatmul.mubr.bf16.gmra.mrb[0].mxu0 %v4779
      %v5112 = vpop.f32.mrb[0].mxu0
      %v5113 = vadd.f32 0.0, %v5112
      %v5114 = vpop.f32.mrb[0].mxu0
      %v5115 = vpop.f32.mrb[0].mxu0
      %v5116 = vadd.f32 0.0, %v5115
      %v5117 = vpop.f32.mrb[0].mxu0
      %5118 = vmatprep.mubr.bf16.mxu0 0
      %5119 = vmatmul.mubr.bf16.gmra.mrb[0].mxu0 %v4780
      %v5120 = vpop.f32.mrb[0].mxu0
      %v5121 = vadd.f32 0.0, %v5120
      %v5122 = vpop.f32.mrb[0].mxu0
      %v5123 = vpop.f32.mrb[0].mxu0
      %v5124 = vadd.f32 0.0, %v5123
      %v5125 = vpop.f32.mrb[0].mxu0
      %5126 = vmatprep.mubr.bf16.mxu0 0
      %5127 = vmatmul.mubr.bf16.gmra.mrb[0].mxu0 %v4781
      %v5128 = vpop.f32.mrb[0].mxu0
      %v5129 = vadd.f32 0.0, %v5128
      %v5130 = vpop.f32.mrb[0].mxu0
      %v5131 = vpop.f32.mrb[0].mxu0
      %v5132 = vadd.f32 0.0, %v5131
      %v5133 = vpop.f32.mrb[0].mxu0
      %5134 = vmatprep.mubr.bf16.mxu0 0
      %5135 = vmatmul.mubr.bf16.gmra.mrb[0].mxu0 %v4782
      %v5136 = vpop.f32.mrb[0].mxu0
      %v5137 = vadd.f32 0.0, %v5136
      %v5138 = vpop.f32.mrb[0].mxu0
      %v5139 = vpop.f32.mrb[0].mxu0
      %v5140 = vadd.f32 0.0, %v5139
      %v5141 = vpop.f32.mrb[0].mxu0
      %5142 = vmatprep.mubr.bf16.mxu0 0
      %5143 = vmatmul.mubr.bf16.gmra.mrb[0].mxu0 %v4783
      %v5144 = vpop.f32.mrb[0].mxu0
      %v5145 = vadd.f32 0.0, %v5144
      %v5146 = vpop.f32.mrb[0].mxu0
      %v5147 = vpop.f32.mrb[0].mxu0
      %v5148 = vadd.f32 0.0, %v5147
      %v5149 = vpop.f32.mrb[0].mxu0
      %5150 = vmatprep.mubr.bf16.mxu0 0
      %5151 = vmatmul.mubr.bf16.gmra.mrb[0].mxu0 %v4784
      %v5152 = vpop.f32.mrb[0].mxu0
      %v5153 = vadd.f32 0.0, %v5152
      %v5154 = vpop.f32.mrb[0].mxu0
      %v5155 = vpop.f32.mrb[0].mxu0
      %v5156 = vadd.f32 0.0, %v5155
      %v5157 = vpop.f32.mrb[0].mxu0
      %5158 = vmatprep.mubr.bf16.mxu0 0
      %5159 = vmatmul.mubr.bf16.gmra.mrb[0].mxu0 %v4785
      %v5160 = vpop.f32.mrb[0].mxu0
      %v5161 = vadd.f32 0.0, %v5160
      %v5162 = vpop.f32.mrb[0].mxu0
      %v5163 = vpop.f32.mrb[0].mxu0
      %v5164 = vadd.f32 0.0, %v5163
      %v5165 = vpop.f32.mrb[0].mxu0
      %5166 = vmatprep.mubr.bf16.mxu0 0
      %5167 = vmatmul.mubr.bf16.gmra.mrb[0].mxu0 %v4786
      %v5168 = vpop.f32.mrb[0].mxu0
      %v5169 = vadd.f32 0.0, %v5168
      %v5170 = vpop.f32.mrb[0].mxu0
      %v5171 = vpop.f32.mrb[0].mxu0
      %v5172 = vadd.f32 0.0, %v5171
      %v5173 = vpop.f32.mrb[0].mxu0
      %5174 = vdwg.mxu0
      %v5175 = vadd.f32 %v4691, %v4822
      %v5176 = vadd.f32 %v4692, %v4825
      %v5177 = vadd.f32 %v4693, %v4830
      %v5178 = vadd.f32 %v4694, %v4833
      %v5179 = vadd.f32 %v4695, %v4838
      %v5180 = vadd.f32 %v4696, %v4841
      %v5181 = vadd.f32 %v4697, %v4846
      %v5182 = vadd.f32 %v4698, %v4849
      %v5183 = vadd.f32 %v4699, %v4854
      %v5184 = vadd.f32 %v4700, %v4857
      %v5185 = vadd.f32 %v4701, %v4862
      %v5186 = vadd.f32 %v4702, %v4865
      %v5187 = vadd.f32 %v4703, %v4870
      %v5188 = vadd.f32 %v4704, %v4873
      %v5189 = vadd.f32 %v4705, %v4878
      %v5190 = vadd.f32 %v4706, %v4881
      %v5191 = vadd.f32 %v4707, %v4919
      %v5192 = vadd.f32 %v4708, %v4922
      %v5193 = vadd.f32 %v4709, %v4927
      %v5194 = vadd.f32 %v4710, %v4930
      %v5195 = vadd.f32 %v4711, %v4935
      %v5196 = vadd.f32 %v4712, %v4938
      %v5197 = vadd.f32 %v4713, %v4943
      %v5198 = vadd.f32 %v4714, %v4946
      %v5199 = vadd.f32 %v4715, %v4951
      %v5200 = vadd.f32 %v4716, %v4954
      %v5201 = vadd.f32 %v4717, %v4959
      %v5202 = vadd.f32 %v4718, %v4962
      %v5203 = vadd.f32 %v4719, %v4967
      %v5204 = vadd.f32 %v4720, %v4970
      %v5205 = vadd.f32 %v4721, %v4975
      %v5206 = vadd.f32 %v4722, %v4978
      %v5207 = vadd.f32 %v4723, %v5016
      %v5208 = vadd.f32 %v4724, %v5019
      %v5209 = vadd.f32 %v4725, %v5024
      %v5210 = vadd.f32 %v4726, %v5027
      %v5211 = vadd.f32 %v4727, %v5032
      %v5212 = vadd.f32 %v4728, %v5035
      %v5213 = vadd.f32 %v4729, %v5040
      %v5214 = vadd.f32 %v4730, %v5043
      %v5215 = vadd.f32 %v4731, %v5048
      %v5216 = vadd.f32 %v4732, %v5051
      %v5217 = vadd.f32 %v4733, %v5056
      %v5218 = vadd.f32 %v4734, %v5059
      %v5219 = vadd.f32 %v4735, %v5064
      %v5220 = vadd.f32 %v4736, %v5067
      %v5221 = vadd.f32 %v4737, %v5072
      %v5222 = vadd.f32 %v4738, %v5075
      %v5223 = vadd.f32 %v4739, %v5113
      %v5224 = vadd.f32 %v4740, %v5116
      %v5225 = vadd.f32 %v4741, %v5121
      %v5226 = vadd.f32 %v4742, %v5124
      %v5227 = vadd.f32 %v4743, %v5129
      %v5228 = vadd.f32 %v4744, %v5132
      %v5229 = vadd.f32 %v4745, %v5137
      %v5230 = vadd.f32 %v4746, %v5140
      %v5231 = vadd.f32 %v4747, %v5145
      %v5232 = vadd.f32 %v4748, %v5148
      %v5233 = vadd.f32 %v4749, %v5153
      %v5234 = vadd.f32 %v4750, %v5156
      %v5235 = vadd.f32 %v4751, %v5161
      %v5236 = vadd.f32 %v4752, %v5164
      %v5237 = vadd.f32 %v4753, %v5169
      %v5238 = vadd.f32 %v4754, %v5172
      %5239 = vst.msk [vmem:[#allocation7] sm:$0xff] %vm2381, %v5175
      %5240 = vst.msk [vmem:[#allocation7 + $0x8] sm:$0xff] %vm2381, %v5176
      %5241 = vst.msk [vmem:[#allocation7 + $0x10] sm:$0xff] %vm2381, %v5177
      %5242 = vst.msk [vmem:[#allocation7 + $0x18] sm:$0xff] %vm2381, %v5178
      %5243 = vst.msk [vmem:[#allocation7 + $0x20] sm:$0xff] %vm2381, %v5179
      %5244 = vst.msk [vmem:[#allocation7 + $0x28] sm:$0xff] %vm2381, %v5180
      %5245 = vst.msk [vmem:[#allocation7 + $0x30] sm:$0xff] %vm2381, %v5181
      %5246 = vst.msk [vmem:[#allocation7 + $0x38] sm:$0xff] %vm2381, %v5182
      %5247 = vst.msk [vmem:[#allocation7 + $0x40] sm:$0xff] %vm2381, %v5183
      %5248 = vst.msk [vmem:[#allocation7 + $0x48] sm:$0xff] %vm2381, %v5184
      %5249 = vst.msk [vmem:[#allocation7 + $0x50] sm:$0xff] %vm2381, %v5185
      %5250 = vst.msk [vmem:[#allocation7 + $0x58] sm:$0xff] %vm2381, %v5186
      %5251 = vst.msk [vmem:[#allocation7 + $0x60] sm:$0xff] %vm2381, %v5187
      %5252 = vst.msk [vmem:[#allocation7 + $0x68] sm:$0xff] %vm2381, %v5188
      %5253 = vst.msk [vmem:[#allocation7 + $0x70] sm:$0xff] %vm2381, %v5189
      %5254 = vst.msk [vmem:[#allocation7 + $0x78] sm:$0xff] %vm2381, %v5190
      %5255 = vst.msk [vmem:[#allocation7 + $0x80] sm:$0xff] %vm2381, %v5191
      %5256 = vst.msk [vmem:[#allocation7 + $0x88] sm:$0xff] %vm2381, %v5192
      %5257 = vst.msk [vmem:[#allocation7 + $0x90] sm:$0xff] %vm2381, %v5193
      %5258 = vst.msk [vmem:[#allocation7 + $0x98] sm:$0xff] %vm2381, %v5194
      %5259 = vst.msk [vmem:[#allocation7 + $0xa0] sm:$0xff] %vm2381, %v5195
      %5260 = vst.msk [vmem:[#allocation7 + $0xa8] sm:$0xff] %vm2381, %v5196
      %5261 = vst.msk [vmem:[#allocation7 + $0xb0] sm:$0xff] %vm2381, %v5197
      %5262 = vst.msk [vmem:[#allocation7 + $0xb8] sm:$0xff] %vm2381, %v5198
      %5263 = vst.msk [vmem:[#allocation7 + $0xc0] sm:$0xff] %vm2381, %v5199
      %5264 = vst.msk [vmem:[#allocation7 + $0xc8] sm:$0xff] %vm2381, %v5200
      %5265 = vst.msk [vmem:[#allocation7 + $0xd0] sm:$0xff] %vm2381, %v5201
      %5266 = vst.msk [vmem:[#allocation7 + $0xd8] sm:$0xff] %vm2381, %v5202
      %5267 = vst.msk [vmem:[#allocation7 + $0xe0] sm:$0xff] %vm2381, %v5203
      %5268 = vst.msk [vmem:[#allocation7 + $0xe8] sm:$0xff] %vm2381, %v5204
      %5269 = vst.msk [vmem:[#allocation7 + $0xf0] sm:$0xff] %vm2381, %v5205
      %5270 = vst.msk [vmem:[#allocation7 + $0xf8] sm:$0xff] %vm2381, %v5206
      %5271 = vst.msk [vmem:[#allocation7 + $0x100] sm:$0xff] %vm2381, %v5207
      %5272 = vst.msk [vmem:[#allocation7 + $0x108] sm:$0xff] %vm2381, %v5208
      %5273 = vst.msk [vmem:[#allocation7 + $0x110] sm:$0xff] %vm2381, %v5209
      %5274 = vst.msk [vmem:[#allocation7 + $0x118] sm:$0xff] %vm2381, %v5210
      %5275 = vst.msk [vmem:[#allocation7 + $0x120] sm:$0xff] %vm2381, %v5211
      %5276 = vst.msk [vmem:[#allocation7 + $0x128] sm:$0xff] %vm2381, %v5212
      %5277 = vst.msk [vmem:[#allocation7 + $0x130] sm:$0xff] %vm2381, %v5213
      %5278 = vst.msk [vmem:[#allocation7 + $0x138] sm:$0xff] %vm2381, %v5214
      %5279 = vst.msk [vmem:[#allocation7 + $0x140] sm:$0xff] %vm2381, %v5215
      %5280 = vst.msk [vmem:[#allocation7 + $0x148] sm:$0xff] %vm2381, %v5216
      %5281 = vst.msk [vmem:[#allocation7 + $0x150] sm:$0xff] %vm2381, %v5217
      %5282 = vst.msk [vmem:[#allocation7 + $0x158] sm:$0xff] %vm2381, %v5218
      %5283 = vst.msk [vmem:[#allocation7 + $0x160] sm:$0xff] %vm2381, %v5219
      %5284 = vst.msk [vmem:[#allocation7 + $0x168] sm:$0xff] %vm2381, %v5220
      %5285 = vst.msk [vmem:[#allocation7 + $0x170] sm:$0xff] %vm2381, %v5221
      %5286 = vst.msk [vmem:[#allocation7 + $0x178] sm:$0xff] %vm2381, %v5222
      %5287 = vst.msk [vmem:[#allocation7 + $0x180] sm:$0xff] %vm2381, %v5223
      %5288 = vst.msk [vmem:[#allocation7 + $0x188] sm:$0xff] %vm2381, %v5224
      %5289 = vst.msk [vmem:[#allocation7 + $0x190] sm:$0xff] %vm2381, %v5225
      %5290 = vst.msk [vmem:[#allocation7 + $0x198] sm:$0xff] %vm2381, %v5226
      %5291 = vst.msk [vmem:[#allocation7 + $0x1a0] sm:$0xff] %vm2381, %v5227
      %5292 = vst.msk [vmem:[#allocation7 + $0x1a8] sm:$0xff] %vm2381, %v5228
      %5293 = vst.msk [vmem:[#allocation7 + $0x1b0] sm:$0xff] %vm2381, %v5229
      %5294 = vst.msk [vmem:[#allocation7 + $0x1b8] sm:$0xff] %vm2381, %v5230
      %5295 = vst.msk [vmem:[#allocation7 + $0x1c0] sm:$0xff] %vm2381, %v5231
      %5296 = vst.msk [vmem:[#allocation7 + $0x1c8] sm:$0xff] %vm2381, %v5232
      %5297 = vst.msk [vmem:[#allocation7 + $0x1d0] sm:$0xff] %vm2381, %v5233
      %5298 = vst.msk [vmem:[#allocation7 + $0x1d8] sm:$0xff] %vm2381, %v5234
      %5299 = vst.msk [vmem:[#allocation7 + $0x1e0] sm:$0xff] %vm2381, %v5235
      %5300 = vst.msk [vmem:[#allocation7 + $0x1e8] sm:$0xff] %vm2381, %v5236
      %5301 = vst.msk [vmem:[#allocation7 + $0x1f0] sm:$0xff] %vm2381, %v5237
      %5302 = vst.msk [vmem:[#allocation7 + $0x1f8] sm:$0xff] %vm2381, %v5238
      %5303 = vst.msk [vmem:[#allocation5] sm:$0xff] %vm4242, %v3154
      %5304 = vst.msk [vmem:[#allocation5 + $0x8] sm:$0xff] %vm4242, %v3155
      %5305 = vst.msk [vmem:[#allocation5 + $0x10] sm:$0xff] %vm4242, %v3156
      %5306 = vst.msk [vmem:[#allocation5 + $0x18] sm:$0xff] %vm4242, %v3157
      %5307 = vst.msk [vmem:[#allocation5 + $0x20] sm:$0xff] %vm4242, %v3158
      %5308 = vst.msk [vmem:[#allocation5 + $0x28] sm:$0xff] %vm4242, %v3159
      %5309 = vst.msk [vmem:[#allocation5 + $0x30] sm:$0xff] %vm4242, %v3160
      %5310 = vst.msk [vmem:[#allocation5 + $0x38] sm:$0xff] %vm4242, %v3161
      %5311 = vst.msk [vmem:[#allocation5 + $0x40] sm:$0xff] %vm4242, %v3162
      %5312 = vst.msk [vmem:[#allocation5 + $0x48] sm:$0xff] %vm4242, %v3163
      %5313 = vst.msk [vmem:[#allocation5 + $0x50] sm:$0xff] %vm4242, %v3164
      %5314 = vst.msk [vmem:[#allocation5 + $0x58] sm:$0xff] %vm4242, %v3165
      %5315 = vst.msk [vmem:[#allocation5 + $0x60] sm:$0xff] %vm4242, %v3166
      %5316 = vst.msk [vmem:[#allocation5 + $0x68] sm:$0xff] %vm4242, %v3167
      %5317 = vst.msk [vmem:[#allocation5 + $0x70] sm:$0xff] %vm4242, %v3168
      %5318 = vst.msk [vmem:[#allocation5 + $0x78] sm:$0xff] %vm4242, %v3169
      %5319 = vst.msk [vmem:[#allocation5 + $0x80] sm:$0xff] %vm4242, %v3170
      %5320 = vst.msk [vmem:[#allocation5 + $0x88] sm:$0xff] %vm4242, %v3171
      %5321 = vst.msk [vmem:[#allocation5 + $0x90] sm:$0xff] %vm4242, %v3172
      %5322 = vst.msk [vmem:[#allocation5 + $0x98] sm:$0xff] %vm4242, %v3173
      %5323 = vst.msk [vmem:[#allocation5 + $0xa0] sm:$0xff] %vm4242, %v3174
      %5324 = vst.msk [vmem:[#allocation5 + $0xa8] sm:$0xff] %vm4242, %v3175
      %5325 = vst.msk [vmem:[#allocation5 + $0xb0] sm:$0xff] %vm4242, %v3176
      %5326 = vst.msk [vmem:[#allocation5 + $0xb8] sm:$0xff] %vm4242, %v3177
      %5327 = vst.msk [vmem:[#allocation5 + $0xc0] sm:$0xff] %vm4242, %v3178
      %5328 = vst.msk [vmem:[#allocation5 + $0xc8] sm:$0xff] %vm4242, %v3179
      %5329 = vst.msk [vmem:[#allocation5 + $0xd0] sm:$0xff] %vm4242, %v3180
      %5330 = vst.msk [vmem:[#allocation5 + $0xd8] sm:$0xff] %vm4242, %v3181
      %5331 = vst.msk [vmem:[#allocation5 + $0xe0] sm:$0xff] %vm4242, %v3182
      %5332 = vst.msk [vmem:[#allocation5 + $0xe8] sm:$0xff] %vm4242, %v3183
      %5333 = vst.msk [vmem:[#allocation5 + $0xf0] sm:$0xff] %vm4242, %v3184
      %5334 = vst.msk [vmem:[#allocation5 + $0xf8] sm:$0xff] %vm4242, %v3185
      %5335 = vst.msk [vmem:[#allocation5 + $0x100] sm:$0xff] %vm4242, %v3186
      %5336 = vst.msk [vmem:[#allocation5 + $0x108] sm:$0xff] %vm4242, %v3187
      %5337 = vst.msk [vmem:[#allocation5 + $0x110] sm:$0xff] %vm4242, %v3188
      %5338 = vst.msk [vmem:[#allocation5 + $0x118] sm:$0xff] %vm4242, %v3189
      %5339 = vst.msk [vmem:[#allocation5 + $0x120] sm:$0xff] %vm4242, %v3190
      %5340 = vst.msk [vmem:[#allocation5 + $0x128] sm:$0xff] %vm4242, %v3191
      %5341 = vst.msk [vmem:[#allocation5 + $0x130] sm:$0xff] %vm4242, %v3192
      %5342 = vst.msk [vmem:[#allocation5 + $0x138] sm:$0xff] %vm4242, %v3193
      %5343 = vst.msk [vmem:[#allocation5 + $0x140] sm:$0xff] %vm4242, %v3194
      %5344 = vst.msk [vmem:[#allocation5 + $0x148] sm:$0xff] %vm4242, %v3195
      %5345 = vst.msk [vmem:[#allocation5 + $0x150] sm:$0xff] %vm4242, %v3196
      %5346 = vst.msk [vmem:[#allocation5 + $0x158] sm:$0xff] %vm4242, %v3197
      %5347 = vst.msk [vmem:[#allocation5 + $0x160] sm:$0xff] %vm4242, %v3198
      %5348 = vst.msk [vmem:[#allocation5 + $0x168] sm:$0xff] %vm4242, %v3199
      %5349 = vst.msk [vmem:[#allocation5 + $0x170] sm:$0xff] %vm4242, %v3200
      %5350 = vst.msk [vmem:[#allocation5 + $0x178] sm:$0xff] %vm4242, %v3201
      %5351 = vst.msk [vmem:[#allocation5 + $0x180] sm:$0xff] %vm4242, %v3202
      %5352 = vst.msk [vmem:[#allocation5 + $0x188] sm:$0xff] %vm4242, %v3203
      %5353 = vst.msk [vmem:[#allocation5 + $0x190] sm:$0xff] %vm4242, %v3204
      %5354 = vst.msk [vmem:[#allocation5 + $0x198] sm:$0xff] %vm4242, %v3205
      %5355 = vst.msk [vmem:[#allocation5 + $0x1a0] sm:$0xff] %vm4242, %v3206
      %5356 = vst.msk [vmem:[#allocation5 + $0x1a8] sm:$0xff] %vm4242, %v3207
      %5357 = vst.msk [vmem:[#allocation5 + $0x1b0] sm:$0xff] %vm4242, %v3208
      %5358 = vst.msk [vmem:[#allocation5 + $0x1b8] sm:$0xff] %vm4242, %v3209
      %5359 = vst.msk [vmem:[#allocation5 + $0x1c0] sm:$0xff] %vm4242, %v3210
      %5360 = vst.msk [vmem:[#allocation5 + $0x1c8] sm:$0xff] %vm4242, %v3211
      %5361 = vst.msk [vmem:[#allocation5 + $0x1d0] sm:$0xff] %vm4242, %v3212
      %5362 = vst.msk [vmem:[#allocation5 + $0x1d8] sm:$0xff] %vm4242, %v3213
      %5363 = vst.msk [vmem:[#allocation5 + $0x1e0] sm:$0xff] %vm4242, %v3214
      %5364 = vst.msk [vmem:[#allocation5 + $0x1e8] sm:$0xff] %vm4242, %v3215
      %5365 = vst.msk [vmem:[#allocation5 + $0x1f0] sm:$0xff] %vm4242, %v3216
      %5366 = vst.msk [vmem:[#allocation5 + $0x1f8] sm:$0xff] %vm4242, %v3217
      %p5367 = scmp.eq.s32.totalorder %s25, 1
      // Predicated region
      $region57: #{tpu_custom_call.1} parent=47 // pred_check
        %p5368 = pneg %p5367
      $region58: #{tpu_custom_call.1} parent=47 // pred_check_branch
        %5370 = sbr.rel (%p5368) target = $region60
      $region59: #{tpu_custom_call.1} parent=47 // pred_region
        %v5371 = vld [vmem:[#allocation6] sm:$0xff]
        %v5372 = vld [vmem:[#allocation6 + $0x8] sm:$0xff]
        %v5373 = vld [vmem:[#allocation6 + $0x10] sm:$0xff]
        %v5374 = vld [vmem:[#allocation6 + $0x18] sm:$0xff]
        %v5375 = vld [vmem:[#allocation6 + $0x20] sm:$0xff]
        %v5376 = vld [vmem:[#allocation6 + $0x28] sm:$0xff]
        %v5377 = vld [vmem:[#allocation6 + $0x30] sm:$0xff]
        %v5378 = vld [vmem:[#allocation6 + $0x38] sm:$0xff]
        %v5379 = vld [vmem:[#allocation6 + $0x40] sm:$0xff]
        %v5380 = vld [vmem:[#allocation6 + $0x48] sm:$0xff]
        %v5381 = vld [vmem:[#allocation6 + $0x50] sm:$0xff]
        %v5382 = vld [vmem:[#allocation6 + $0x58] sm:$0xff]
        %v5383 = vld [vmem:[#allocation6 + $0x60] sm:$0xff]
        %v5384 = vld [vmem:[#allocation6 + $0x68] sm:$0xff]
        %v5385 = vld [vmem:[#allocation6 + $0x70] sm:$0xff]
        %v5386 = vld [vmem:[#allocation6 + $0x78] sm:$0xff]
        %v5387 = vld [vmem:[#allocation6 + $0x80] sm:$0xff]
        %v5388 = vld [vmem:[#allocation6 + $0x88] sm:$0xff]
        %v5389 = vld [vmem:[#allocation6 + $0x90] sm:$0xff]
        %v5390 = vld [vmem:[#allocation6 + $0x98] sm:$0xff]
        %v5391 = vld [vmem:[#allocation6 + $0xa0] sm:$0xff]
        %v5392 = vld [vmem:[#allocation6 + $0xa8] sm:$0xff]
        %v5393 = vld [vmem:[#allocation6 + $0xb0] sm:$0xff]
        %v5394 = vld [vmem:[#allocation6 + $0xb8] sm:$0xff]
        %v5395 = vld [vmem:[#allocation6 + $0xc0] sm:$0xff]
        %v5396 = vld [vmem:[#allocation6 + $0xc8] sm:$0xff]
        %v5397 = vld [vmem:[#allocation6 + $0xd0] sm:$0xff]
        %v5398 = vld [vmem:[#allocation6 + $0xd8] sm:$0xff]
        %v5399 = vld [vmem:[#allocation6 + $0xe0] sm:$0xff]
        %v5400 = vld [vmem:[#allocation6 + $0xe8] sm:$0xff]
        %v5401 = vld [vmem:[#allocation6 + $0xf0] sm:$0xff]
        %v5402 = vld [vmem:[#allocation6 + $0xf8] sm:$0xff]
        %v5403 = vld [vmem:[#allocation6 + $0x100] sm:$0xff]
        %v5404 = vld [vmem:[#allocation6 + $0x108] sm:$0xff]
        %v5405 = vld [vmem:[#allocation6 + $0x110] sm:$0xff]
        %v5406 = vld [vmem:[#allocation6 + $0x118] sm:$0xff]
        %v5407 = vld [vmem:[#allocation6 + $0x120] sm:$0xff]
        %v5408 = vld [vmem:[#allocation6 + $0x128] sm:$0xff]
        %v5409 = vld [vmem:[#allocation6 + $0x130] sm:$0xff]
        %v5410 = vld [vmem:[#allocation6 + $0x138] sm:$0xff]
        %v5411 = vld [vmem:[#allocation6 + $0x140] sm:$0xff]
        %v5412 = vld [vmem:[#allocation6 + $0x148] sm:$0xff]
        %v5413 = vld [vmem:[#allocation6 + $0x150] sm:$0xff]
        %v5414 = vld [vmem:[#allocation6 + $0x158] sm:$0xff]
        %v5415 = vld [vmem:[#allocation6 + $0x160] sm:$0xff]
        %v5416 = vld [vmem:[#allocation6 + $0x168] sm:$0xff]
        %v5417 = vld [vmem:[#allocation6 + $0x170] sm:$0xff]
        %v5418 = vld [vmem:[#allocation6 + $0x178] sm:$0xff]
        %v5419 = vld [vmem:[#allocation6 + $0x180] sm:$0xff]
        %v5420 = vld [vmem:[#allocation6 + $0x188] sm:$0xff]
        %v5421 = vld [vmem:[#allocation6 + $0x190] sm:$0xff]
        %v5422 = vld [vmem:[#allocation6 + $0x198] sm:$0xff]
        %v5423 = vld [vmem:[#allocation6 + $0x1a0] sm:$0xff]
        %v5424 = vld [vmem:[#allocation6 + $0x1a8] sm:$0xff]
        %v5425 = vld [vmem:[#allocation6 + $0x1b0] sm:$0xff]
        %v5426 = vld [vmem:[#allocation6 + $0x1b8] sm:$0xff]
        %v5427 = vld [vmem:[#allocation6 + $0x1c0] sm:$0xff]
        %v5428 = vld [vmem:[#allocation6 + $0x1c8] sm:$0xff]
        %v5429 = vld [vmem:[#allocation6 + $0x1d0] sm:$0xff]
        %v5430 = vld [vmem:[#allocation6 + $0x1d8] sm:$0xff]
        %v5431 = vld [vmem:[#allocation6 + $0x1e0] sm:$0xff]
        %v5432 = vld [vmem:[#allocation6 + $0x1e8] sm:$0xff]
        %v5433 = vld [vmem:[#allocation6 + $0x1f0] sm:$0xff]
        %v5434 = vld [vmem:[#allocation6 + $0x1f8] sm:$0xff]
        %v5435 = vrcp.pop %v5371
        %v5436 = vrcp.pop %v5372
        %v5437 = vrcp.pop %v5373
        %v5438 = vrcp.pop %v5374
        %v5439 = vrcp.pop %v5375
        %v5440 = vrcp.pop %v5376
        %v5441 = vrcp.pop %v5377
        %v5442 = vrcp.pop %v5378
        %v5443 = vrcp.pop %v5379
        %v5444 = vrcp.pop %v5380
        %v5445 = vrcp.pop %v5381
        %v5446 = vrcp.pop %v5382
        %v5447 = vrcp.pop %v5383
        %v5448 = vrcp.pop %v5384
        %v5449 = vrcp.pop %v5385
        %v5450 = vrcp.pop %v5386
        %v5451 = vrcp.pop %v5387
        %v5452 = vrcp.pop %v5388
        %v5453 = vrcp.pop %v5389
        %v5454 = vrcp.pop %v5390
        %v5455 = vrcp.pop %v5391
        %v5456 = vrcp.pop %v5392
        %v5457 = vrcp.pop %v5393
        %v5458 = vrcp.pop %v5394
        %v5459 = vrcp.pop %v5395
        %v5460 = vrcp.pop %v5396
        %v5461 = vrcp.pop %v5397
        %v5462 = vrcp.pop %v5398
        %v5463 = vrcp.pop %v5399
        %v5464 = vrcp.pop %v5400
        %v5465 = vrcp.pop %v5401
        %v5466 = vrcp.pop %v5402
        %v5467 = vrcp.pop %v5403
        %v5468 = vrcp.pop %v5404
        %v5469 = vrcp.pop %v5405
        %v5470 = vrcp.pop %v5406
        %v5471 = vrcp.pop %v5407
        %v5472 = vrcp.pop %v5408
        %v5473 = vrcp.pop %v5409
        %v5474 = vrcp.pop %v5410
        %v5475 = vrcp.pop %v5411
        %v5476 = vrcp.pop %v5412
        %v5477 = vrcp.pop %v5413
        %v5478 = vrcp.pop %v5414
        %v5479 = vrcp.pop %v5415
        %v5480 = vrcp.pop %v5416
        %v5481 = vrcp.pop %v5417
        %v5482 = vrcp.pop %v5418
        %v5483 = vrcp.pop %v5419
        %v5484 = vrcp.pop %v5420
        %v5485 = vrcp.pop %v5421
        %v5486 = vrcp.pop %v5422
        %v5487 = vrcp.pop %v5423
        %v5488 = vrcp.pop %v5424
        %v5489 = vrcp.pop %v5425
        %v5490 = vrcp.pop %v5426
        %v5491 = vrcp.pop %v5427
        %v5492 = vrcp.pop %v5428
        %v5493 = vrcp.pop %v5429
        %v5494 = vrcp.pop %v5430
        %v5495 = vrcp.pop %v5431
        %v5496 = vrcp.pop %v5432
        %v5497 = vrcp.pop %v5433
        %v5498 = vrcp.pop %v5434
        %v5499 = vld [vmem:[#allocation7] sm:$0xff]
        %v5500 = vld [vmem:[#allocation7 + $0x8] sm:$0xff]
        %v5501 = vld [vmem:[#allocation7 + $0x10] sm:$0xff]
        %v5502 = vld [vmem:[#allocation7 + $0x18] sm:$0xff]
        %v5503 = vld [vmem:[#allocation7 + $0x20] sm:$0xff]
        %v5504 = vld [vmem:[#allocation7 + $0x28] sm:$0xff]
        %v5505 = vld [vmem:[#allocation7 + $0x30] sm:$0xff]
        %v5506 = vld [vmem:[#allocation7 + $0x38] sm:$0xff]
        %v5507 = vld [vmem:[#allocation7 + $0x40] sm:$0xff]
        %v5508 = vld [vmem:[#allocation7 + $0x48] sm:$0xff]
        %v5509 = vld [vmem:[#allocation7 + $0x50] sm:$0xff]
        %v5510 = vld [vmem:[#allocation7 + $0x58] sm:$0xff]
        %v5511 = vld [vmem:[#allocation7 + $0x60] sm:$0xff]
        %v5512 = vld [vmem:[#allocation7 + $0x68] sm:$0xff]
        %v5513 = vld [vmem:[#allocation7 + $0x70] sm:$0xff]
        %v5514 = vld [vmem:[#allocation7 + $0x78] sm:$0xff]
        %v5515 = vld [vmem:[#allocation7 + $0x80] sm:$0xff]
        %v5516 = vld [vmem:[#allocation7 + $0x88] sm:$0xff]
        %v5517 = vld [vmem:[#allocation7 + $0x90] sm:$0xff]
        %v5518 = vld [vmem:[#allocation7 + $0x98] sm:$0xff]
        %v5519 = vld [vmem:[#allocation7 + $0xa0] sm:$0xff]
        %v5520 = vld [vmem:[#allocation7 + $0xa8] sm:$0xff]
        %v5521 = vld [vmem:[#allocation7 + $0xb0] sm:$0xff]
        %v5522 = vld [vmem:[#allocation7 + $0xb8] sm:$0xff]
        %v5523 = vld [vmem:[#allocation7 + $0xc0] sm:$0xff]
        %v5524 = vld [vmem:[#allocation7 + $0xc8] sm:$0xff]
        %v5525 = vld [vmem:[#allocation7 + $0xd0] sm:$0xff]
        %v5526 = vld [vmem:[#allocation7 + $0xd8] sm:$0xff]
        %v5527 = vld [vmem:[#allocation7 + $0xe0] sm:$0xff]
        %v5528 = vld [vmem:[#allocation7 + $0xe8] sm:$0xff]
        %v5529 = vld [vmem:[#allocation7 + $0xf0] sm:$0xff]
        %v5530 = vld [vmem:[#allocation7 + $0xf8] sm:$0xff]
        %v5531 = vld [vmem:[#allocation7 + $0x100] sm:$0xff]
        %v5532 = vld [vmem:[#allocation7 + $0x108] sm:$0xff]
        %v5533 = vld [vmem:[#allocation7 + $0x110] sm:$0xff]
        %v5534 = vld [vmem:[#allocation7 + $0x118] sm:$0xff]
        %v5535 = vld [vmem:[#allocation7 + $0x120] sm:$0xff]
        %v5536 = vld [vmem:[#allocation7 + $0x128] sm:$0xff]
        %v5537 = vld [vmem:[#allocation7 + $0x130] sm:$0xff]
        %v5538 = vld [vmem:[#allocation7 + $0x138] sm:$0xff]
        %v5539 = vld [vmem:[#allocation7 + $0x140] sm:$0xff]
        %v5540 = vld [vmem:[#allocation7 + $0x148] sm:$0xff]
        %v5541 = vld [vmem:[#allocation7 + $0x150] sm:$0xff]
        %v5542 = vld [vmem:[#allocation7 + $0x158] sm:$0xff]
        %v5543 = vld [vmem:[#allocation7 + $0x160] sm:$0xff]
        %v5544 = vld [vmem:[#allocation7 + $0x168] sm:$0xff]
        %v5545 = vld [vmem:[#allocation7 + $0x170] sm:$0xff]
        %v5546 = vld [vmem:[#allocation7 + $0x178] sm:$0xff]
        %v5547 = vld [vmem:[#allocation7 + $0x180] sm:$0xff]
        %v5548 = vld [vmem:[#allocation7 + $0x188] sm:$0xff]
        %v5549 = vld [vmem:[#allocation7 + $0x190] sm:$0xff]
        %v5550 = vld [vmem:[#allocation7 + $0x198] sm:$0xff]
        %v5551 = vld [vmem:[#allocation7 + $0x1a0] sm:$0xff]
        %v5552 = vld [vmem:[#allocation7 + $0x1a8] sm:$0xff]
        %v5553 = vld [vmem:[#allocation7 + $0x1b0] sm:$0xff]
        %v5554 = vld [vmem:[#allocation7 + $0x1b8] sm:$0xff]
        %v5555 = vld [vmem:[#allocation7 + $0x1c0] sm:$0xff]
        %v5556 = vld [vmem:[#allocation7 + $0x1c8] sm:$0xff]
        %v5557 = vld [vmem:[#allocation7 + $0x1d0] sm:$0xff]
        %v5558 = vld [vmem:[#allocation7 + $0x1d8] sm:$0xff]
        %v5559 = vld [vmem:[#allocation7 + $0x1e0] sm:$0xff]
        %v5560 = vld [vmem:[#allocation7 + $0x1e8] sm:$0xff]
        %v5561 = vld [vmem:[#allocation7 + $0x1f0] sm:$0xff]
        %v5562 = vld [vmem:[#allocation7 + $0x1f8] sm:$0xff]
        %5564 = vset.pattern.permute.xlu0 0
        %5565 = vperm.xlu0 %5564, %v5435
        %v5566 = vpop.permute.xlu0 %5565
        %5569 = vset.pattern.permute.xlu0 0
        %5570 = vperm.xlu0 %5569, %v5436
        %v5571 = vpop.permute.xlu0 %5570
        %5574 = vset.pattern.permute.xlu0 0
        %5575 = vperm.xlu0 %5574, %v5437
        %v5576 = vpop.permute.xlu0 %5575
        %5579 = vset.pattern.permute.xlu0 0
        %5580 = vperm.xlu0 %5579, %v5438
        %v5581 = vpop.permute.xlu0 %5580
        %5584 = vset.pattern.permute.xlu0 0
        %5585 = vperm.xlu0 %5584, %v5439
        %v5586 = vpop.permute.xlu0 %5585
        %5589 = vset.pattern.permute.xlu0 0
        %5590 = vperm.xlu0 %5589, %v5440
        %v5591 = vpop.permute.xlu0 %5590
        %5594 = vset.pattern.permute.xlu0 0
        %5595 = vperm.xlu0 %5594, %v5441
        %v5596 = vpop.permute.xlu0 %5595
        %5599 = vset.pattern.permute.xlu0 0
        %5600 = vperm.xlu0 %5599, %v5442
        %v5601 = vpop.permute.xlu0 %5600
        %5604 = vset.pattern.permute.xlu0 0
        %5605 = vperm.xlu0 %5604, %v5443
        %v5606 = vpop.permute.xlu0 %5605
        %5609 = vset.pattern.permute.xlu0 0
        %5610 = vperm.xlu0 %5609, %v5444
        %v5611 = vpop.permute.xlu0 %5610
        %5614 = vset.pattern.permute.xlu0 0
        %5615 = vperm.xlu0 %5614, %v5445
        %v5616 = vpop.permute.xlu0 %5615
        %5619 = vset.pattern.permute.xlu0 0
        %5620 = vperm.xlu0 %5619, %v5446
        %v5621 = vpop.permute.xlu0 %5620
        %5624 = vset.pattern.permute.xlu0 0
        %5625 = vperm.xlu0 %5624, %v5447
        %v5626 = vpop.permute.xlu0 %5625
        %5629 = vset.pattern.permute.xlu0 0
        %5630 = vperm.xlu0 %5629, %v5448
        %v5631 = vpop.permute.xlu0 %5630
        %5634 = vset.pattern.permute.xlu0 0
        %5635 = vperm.xlu0 %5634, %v5449
        %v5636 = vpop.permute.xlu0 %5635
        %5639 = vset.pattern.permute.xlu0 0
        %5640 = vperm.xlu0 %5639, %v5450
        %v5641 = vpop.permute.xlu0 %5640
        %5644 = vset.pattern.permute.xlu0 0
        %5645 = vperm.xlu0 %5644, %v5451
        %v5646 = vpop.permute.xlu0 %5645
        %5649 = vset.pattern.permute.xlu0 0
        %5650 = vperm.xlu0 %5649, %v5452
        %v5651 = vpop.permute.xlu0 %5650
        %5654 = vset.pattern.permute.xlu0 0
        %5655 = vperm.xlu0 %5654, %v5453
        %v5656 = vpop.permute.xlu0 %5655
        %5659 = vset.pattern.permute.xlu0 0
        %5660 = vperm.xlu0 %5659, %v5454
        %v5661 = vpop.permute.xlu0 %5660
        %5664 = vset.pattern.permute.xlu0 0
        %5665 = vperm.xlu0 %5664, %v5455
        %v5666 = vpop.permute.xlu0 %5665
        %5669 = vset.pattern.permute.xlu0 0
        %5670 = vperm.xlu0 %5669, %v5456
        %v5671 = vpop.permute.xlu0 %5670
        %5674 = vset.pattern.permute.xlu0 0
        %5675 = vperm.xlu0 %5674, %v5457
        %v5676 = vpop.permute.xlu0 %5675
        %5679 = vset.pattern.permute.xlu0 0
        %5680 = vperm.xlu0 %5679, %v5458
        %v5681 = vpop.permute.xlu0 %5680
        %5684 = vset.pattern.permute.xlu0 0
        %5685 = vperm.xlu0 %5684, %v5459
        %v5686 = vpop.permute.xlu0 %5685
        %5689 = vset.pattern.permute.xlu0 0
        %5690 = vperm.xlu0 %5689, %v5460
        %v5691 = vpop.permute.xlu0 %5690
        %5694 = vset.pattern.permute.xlu0 0
        %5695 = vperm.xlu0 %5694, %v5461
        %v5696 = vpop.permute.xlu0 %5695
        %5699 = vset.pattern.permute.xlu0 0
        %5700 = vperm.xlu0 %5699, %v5462
        %v5701 = vpop.permute.xlu0 %5700
        %5704 = vset.pattern.permute.xlu0 0
        %5705 = vperm.xlu0 %5704, %v5463
        %v5706 = vpop.permute.xlu0 %5705
        %5709 = vset.pattern.permute.xlu0 0
        %5710 = vperm.xlu0 %5709, %v5464
        %v5711 = vpop.permute.xlu0 %5710
        %5714 = vset.pattern.permute.xlu0 0
        %5715 = vperm.xlu0 %5714, %v5465
        %v5716 = vpop.permute.xlu0 %5715
        %5719 = vset.pattern.permute.xlu0 0
        %5720 = vperm.xlu0 %5719, %v5466
        %v5721 = vpop.permute.xlu0 %5720
        %5724 = vset.pattern.permute.xlu0 0
        %5725 = vperm.xlu0 %5724, %v5467
        %v5726 = vpop.permute.xlu0 %5725
        %5729 = vset.pattern.permute.xlu0 0
        %5730 = vperm.xlu0 %5729, %v5468
        %v5731 = vpop.permute.xlu0 %5730
        %5734 = vset.pattern.permute.xlu0 0
        %5735 = vperm.xlu0 %5734, %v5469
        %v5736 = vpop.permute.xlu0 %5735
        %5739 = vset.pattern.permute.xlu0 0
        %5740 = vperm.xlu0 %5739, %v5470
        %v5741 = vpop.permute.xlu0 %5740
        %5744 = vset.pattern.permute.xlu0 0
        %5745 = vperm.xlu0 %5744, %v5471
        %v5746 = vpop.permute.xlu0 %5745
        %5749 = vset.pattern.permute.xlu0 0
        %5750 = vperm.xlu0 %5749, %v5472
        %v5751 = vpop.permute.xlu0 %5750
        %5754 = vset.pattern.permute.xlu0 0
        %5755 = vperm.xlu0 %5754, %v5473
        %v5756 = vpop.permute.xlu0 %5755
        %5759 = vset.pattern.permute.xlu0 0
        %5760 = vperm.xlu0 %5759, %v5474
        %v5761 = vpop.permute.xlu0 %5760
        %5764 = vset.pattern.permute.xlu0 0
        %5765 = vperm.xlu0 %5764, %v5475
        %v5766 = vpop.permute.xlu0 %5765
        %5769 = vset.pattern.permute.xlu0 0
        %5770 = vperm.xlu0 %5769, %v5476
        %v5771 = vpop.permute.xlu0 %5770
        %5774 = vset.pattern.permute.xlu0 0
        %5775 = vperm.xlu0 %5774, %v5477
        %v5776 = vpop.permute.xlu0 %5775
        %5779 = vset.pattern.permute.xlu0 0
        %5780 = vperm.xlu0 %5779, %v5478
        %v5781 = vpop.permute.xlu0 %5780
        %5784 = vset.pattern.permute.xlu0 0
        %5785 = vperm.xlu0 %5784, %v5479
        %v5786 = vpop.permute.xlu0 %5785
        %5789 = vset.pattern.permute.xlu0 0
        %5790 = vperm.xlu0 %5789, %v5480
        %v5791 = vpop.permute.xlu0 %5790
        %5794 = vset.pattern.permute.xlu0 0
        %5795 = vperm.xlu0 %5794, %v5481
        %v5796 = vpop.permute.xlu0 %5795
        %5799 = vset.pattern.permute.xlu0 0
        %5800 = vperm.xlu0 %5799, %v5482
        %v5801 = vpop.permute.xlu0 %5800
        %5804 = vset.pattern.permute.xlu0 0
        %5805 = vperm.xlu0 %5804, %v5483
        %v5806 = vpop.permute.xlu0 %5805
        %5809 = vset.pattern.permute.xlu0 0
        %5810 = vperm.xlu0 %5809, %v5484
        %v5811 = vpop.permute.xlu0 %5810
        %5814 = vset.pattern.permute.xlu0 0
        %5815 = vperm.xlu0 %5814, %v5485
        %v5816 = vpop.permute.xlu0 %5815
        %5819 = vset.pattern.permute.xlu0 0
        %5820 = vperm.xlu0 %5819, %v5486
        %v5821 = vpop.permute.xlu0 %5820
        %5824 = vset.pattern.permute.xlu0 0
        %5825 = vperm.xlu0 %5824, %v5487
        %v5826 = vpop.permute.xlu0 %5825
        %5829 = vset.pattern.permute.xlu0 0
        %5830 = vperm.xlu0 %5829, %v5488
        %v5831 = vpop.permute.xlu0 %5830
        %5834 = vset.pattern.permute.xlu0 0
        %5835 = vperm.xlu0 %5834, %v5489
        %v5836 = vpop.permute.xlu0 %5835
        %5839 = vset.pattern.permute.xlu0 0
        %5840 = vperm.xlu0 %5839, %v5490
        %v5841 = vpop.permute.xlu0 %5840
        %5844 = vset.pattern.permute.xlu0 0
        %5845 = vperm.xlu0 %5844, %v5491
        %v5846 = vpop.permute.xlu0 %5845
        %5849 = vset.pattern.permute.xlu0 0
        %5850 = vperm.xlu0 %5849, %v5492
        %v5851 = vpop.permute.xlu0 %5850
        %5854 = vset.pattern.permute.xlu0 0
        %5855 = vperm.xlu0 %5854, %v5493
        %v5856 = vpop.permute.xlu0 %5855
        %5859 = vset.pattern.permute.xlu0 0
        %5860 = vperm.xlu0 %5859, %v5494
        %v5861 = vpop.permute.xlu0 %5860
        %5864 = vset.pattern.permute.xlu0 0
        %5865 = vperm.xlu0 %5864, %v5495
        %v5866 = vpop.permute.xlu0 %5865
        %5869 = vset.pattern.permute.xlu0 0
        %5870 = vperm.xlu0 %5869, %v5496
        %v5871 = vpop.permute.xlu0 %5870
        %5874 = vset.pattern.permute.xlu0 0
        %5875 = vperm.xlu0 %5874, %v5497
        %v5876 = vpop.permute.xlu0 %5875
        %5879 = vset.pattern.permute.xlu0 0
        %5880 = vperm.xlu0 %5879, %v5498
        %v5881 = vpop.permute.xlu0 %5880
        %v5883 = vmul.f32 %v5499, %v5566
        %v5884 = vmul.f32 %v5500, %v5571
        %v5885 = vmul.f32 %v5501, %v5576
        %v5886 = vmul.f32 %v5502, %v5581
        %v5887 = vmul.f32 %v5503, %v5586
        %v5888 = vmul.f32 %v5504, %v5591
        %v5889 = vmul.f32 %v5505, %v5596
        %v5890 = vmul.f32 %v5506, %v5601
        %v5891 = vmul.f32 %v5507, %v5606
        %v5892 = vmul.f32 %v5508, %v5611
        %v5893 = vmul.f32 %v5509, %v5616
        %v5894 = vmul.f32 %v5510, %v5621
        %v5895 = vmul.f32 %v5511, %v5626
        %v5896 = vmul.f32 %v5512, %v5631
        %v5897 = vmul.f32 %v5513, %v5636
        %v5898 = vmul.f32 %v5514, %v5641
        %v5899 = vmul.f32 %v5515, %v5646
        %v5900 = vmul.f32 %v5516, %v5651
        %v5901 = vmul.f32 %v5517, %v5656
        %v5902 = vmul.f32 %v5518, %v5661
        %v5903 = vmul.f32 %v5519, %v5666
        %v5904 = vmul.f32 %v5520, %v5671
        %v5905 = vmul.f32 %v5521, %v5676
        %v5906 = vmul.f32 %v5522, %v5681
        %v5907 = vmul.f32 %v5523, %v5686
        %v5908 = vmul.f32 %v5524, %v5691
        %v5909 = vmul.f32 %v5525, %v5696
        %v5910 = vmul.f32 %v5526, %v5701
        %v5911 = vmul.f32 %v5527, %v5706
        %v5912 = vmul.f32 %v5528, %v5711
        %v5913 = vmul.f32 %v5529, %v5716
        %v5914 = vmul.f32 %v5530, %v5721
        %v5915 = vmul.f32 %v5531, %v5726
        %v5916 = vmul.f32 %v5532, %v5731
        %v5917 = vmul.f32 %v5533, %v5736
        %v5918 = vmul.f32 %v5534, %v5741
        %v5919 = vmul.f32 %v5535, %v5746
        %v5920 = vmul.f32 %v5536, %v5751
        %v5921 = vmul.f32 %v5537, %v5756
        %v5922 = vmul.f32 %v5538, %v5761
        %v5923 = vmul.f32 %v5539, %v5766
        %v5924 = vmul.f32 %v5540, %v5771
        %v5925 = vmul.f32 %v5541, %v5776
        %v5926 = vmul.f32 %v5542, %v5781
        %v5927 = vmul.f32 %v5543, %v5786
        %v5928 = vmul.f32 %v5544, %v5791
        %v5929 = vmul.f32 %v5545, %v5796
        %v5930 = vmul.f32 %v5546, %v5801
        %v5931 = vmul.f32 %v5547, %v5806
        %v5932 = vmul.f32 %v5548, %v5811
        %v5933 = vmul.f32 %v5549, %v5816
        %v5934 = vmul.f32 %v5550, %v5821
        %v5935 = vmul.f32 %v5551, %v5826
        %v5936 = vmul.f32 %v5552, %v5831
        %v5937 = vmul.f32 %v5553, %v5836
        %v5938 = vmul.f32 %v5554, %v5841
        %v5939 = vmul.f32 %v5555, %v5846
        %v5940 = vmul.f32 %v5556, %v5851
        %v5941 = vmul.f32 %v5557, %v5856
        %v5942 = vmul.f32 %v5558, %v5861
        %v5943 = vmul.f32 %v5559, %v5866
        %v5944 = vmul.f32 %v5560, %v5871
        %v5945 = vmul.f32 %v5561, %v5876
        %v5946 = vmul.f32 %v5562, %v5881
        %v5947 = vpack.c.bf16 %v5884, %v5883
        %v5948 = vpack.c.bf16 %v5886, %v5885
        %v5949 = vpack.c.bf16 %v5888, %v5887
        %v5950 = vpack.c.bf16 %v5890, %v5889
        %v5951 = vpack.c.bf16 %v5892, %v5891
        %v5952 = vpack.c.bf16 %v5894, %v5893
        %v5953 = vpack.c.bf16 %v5896, %v5895
        %v5954 = vpack.c.bf16 %v5898, %v5897
        %v5955 = vpack.c.bf16 %v5900, %v5899
        %v5956 = vpack.c.bf16 %v5902, %v5901
        %v5957 = vpack.c.bf16 %v5904, %v5903
        %v5958 = vpack.c.bf16 %v5906, %v5905
        %v5959 = vpack.c.bf16 %v5908, %v5907
        %v5960 = vpack.c.bf16 %v5910, %v5909
        %v5961 = vpack.c.bf16 %v5912, %v5911
        %v5962 = vpack.c.bf16 %v5914, %v5913
        %v5963 = vpack.c.bf16 %v5916, %v5915
        %v5964 = vpack.c.bf16 %v5918, %v5917
        %v5965 = vpack.c.bf16 %v5920, %v5919
        %v5966 = vpack.c.bf16 %v5922, %v5921
        %v5967 = vpack.c.bf16 %v5924, %v5923
        %v5968 = vpack.c.bf16 %v5926, %v5925
        %v5969 = vpack.c.bf16 %v5928, %v5927
        %v5970 = vpack.c.bf16 %v5930, %v5929
        %v5971 = vpack.c.bf16 %v5932, %v5931
        %v5972 = vpack.c.bf16 %v5934, %v5933
        %v5973 = vpack.c.bf16 %v5936, %v5935
        %v5974 = vpack.c.bf16 %v5938, %v5937
        %v5975 = vpack.c.bf16 %v5940, %v5939
        %v5976 = vpack.c.bf16 %v5942, %v5941
        %v5977 = vpack.c.bf16 %v5944, %v5943
        %v5978 = vpack.c.bf16 %v5946, %v5945
        %v5979 = vld [vmem:[%s5] sm:$0xf]
        %v5980 = vld [vmem:[%s5 + $0x4] sm:$0xf]
        %v5981 = vld [vmem:[%s5 + $0x8] sm:$0xf]
        %v5982 = vld [vmem:[%s5 + $0xc] sm:$0xf]
        %v5984 = vsel %vm2381, %v5947, 0
        %v5987 = vsel %vm2381, %v5948, 0
        %v5990 = vsel %vm2381, %v5949, 0
        %v5993 = vsel %vm2381, %v5950, 0
        %v5996 = vsel %vm2381, %v5951, 0
        %v5999 = vsel %vm2381, %v5952, 0
        %v6002 = vsel %vm2381, %v5953, 0
        %v6005 = vsel %vm2381, %v5954, 0
        %vm6007 = vcmask 1043456
        %v6009 = vsel %vm6007, %v5979, 0
        %6011 = vmatprep.subr.bf16.mxu0 0
        %6012 = vmatpush1.bf16.msra.mxu0 %v6009
        %6013 = vmatprep.subr.bf16.mxu0 0
        %6014 = vmatpush1.bf16.msra.mxu0 0
        %6015 = vmatprep.subr.bf16.mxu0 0
        %6016 = vmatpush1.bf16.msra.mxu0 0
        %6017 = vmatprep.subr.bf16.mxu0 0
        %6018 = vmatpush1.bf16.msra.mxu0 0
        %6019 = vmatprep.subr.bf16.mxu0 0
        %6020 = vmatpush1.bf16.msra.mxu0 0
        %6021 = vmatprep.subr.bf16.mxu0 0
        %6022 = vmatpush1.bf16.msra.mxu0 0
        %6023 = vmatprep.subr.bf16.mxu0 0
        %6024 = vmatpush1.bf16.msra.mxu0 0
        %6025 = vmatprep.subr.bf16.mxu0 0
        %6026 = vmatpush1.bf16.msra.mxu0 0
        %6027 = vmatprep.subr.bf16.mxu0 0
        %6028 = vmatpush1.bf16.msra.mxu0 0
        %6029 = vmatprep.subr.bf16.mxu0 0
        %6030 = vmatpush1.bf16.msra.mxu0 0
        %6031 = vmatprep.subr.bf16.mxu0 0
        %6032 = vmatpush1.bf16.msra.mxu0 0
        %6033 = vmatprep.subr.bf16.mxu0 0
        %6034 = vmatpush1.bf16.msra.mxu0 0
        %6035 = vmatprep.subr.bf16.mxu0 0
        %6036 = vmatpush1.bf16.msra.mxu0 0
        %6037 = vmatprep.subr.bf16.mxu0 0
        %6038 = vmatpush1.bf16.msra.mxu0 0
        %6039 = vmatprep.subr.bf16.mxu0 0
        %6040 = vmatpush1.bf16.msra.mxu0 0
        %6041 = vmatprep.subr.bf16.mxu0 0
        %6042 = vmatpush1.bf16.msra.mxu0 0
        %6043 = vmatprep.mubr.bf16.mxu0 0
        %6044 = vmatmul.mubr.bf16.gmra.mrb[0].mxu0 %v5984
        %v6045 = vpop.f32.mrb[0].mxu0
        %v6046 = vadd.f32 0.0, %v6045
        %v6047 = vpop.f32.mrb[0].mxu0
        %v6048 = vpop.f32.mrb[0].mxu0
        %v6049 = vadd.f32 0.0, %v6048
        %v6050 = vpop.f32.mrb[0].mxu0
        %6051 = vmatprep.mubr.bf16.mxu0 0
        %6052 = vmatmul.mubr.bf16.gmra.mrb[0].mxu0 %v5987
        %v6053 = vpop.f32.mrb[0].mxu0
        %v6054 = vadd.f32 0.0, %v6053
        %v6055 = vpop.f32.mrb[0].mxu0
        %v6056 = vpop.f32.mrb[0].mxu0
        %v6057 = vadd.f32 0.0, %v6056
        %v6058 = vpop.f32.mrb[0].mxu0
        %6059 = vmatprep.mubr.bf16.mxu0 0
        %6060 = vmatmul.mubr.bf16.gmra.mrb[0].mxu0 %v5990
        %v6061 = vpop.f32.mrb[0].mxu0
        %v6062 = vadd.f32 0.0, %v6061
        %v6063 = vpop.f32.mrb[0].mxu0
        %v6064 = vpop.f32.mrb[0].mxu0
        %v6065 = vadd.f32 0.0, %v6064
        %v6066 = vpop.f32.mrb[0].mxu0
        %6067 = vmatprep.mubr.bf16.mxu0 0
        %6068 = vmatmul.mubr.bf16.gmra.mrb[0].mxu0 %v5993
        %v6069 = vpop.f32.mrb[0].mxu0
        %v6070 = vadd.f32 0.0, %v6069
        %v6071 = vpop.f32.mrb[0].mxu0
        %v6072 = vpop.f32.mrb[0].mxu0
        %v6073 = vadd.f32 0.0, %v6072
        %v6074 = vpop.f32.mrb[0].mxu0
        %6075 = vmatprep.mubr.bf16.mxu0 0
        %6076 = vmatmul.mubr.bf16.gmra.mrb[0].mxu0 %v5996
        %v6077 = vpop.f32.mrb[0].mxu0
        %v6078 = vadd.f32 0.0, %v6077
        %v6079 = vpop.f32.mrb[0].mxu0
        %v6080 = vpop.f32.mrb[0].mxu0
        %v6081 = vadd.f32 0.0, %v6080
        %v6082 = vpop.f32.mrb[0].mxu0
        %6083 = vmatprep.mubr.bf16.mxu0 0
        %6084 = vmatmul.mubr.bf16.gmra.mrb[0].mxu0 %v5999
        %v6085 = vpop.f32.mrb[0].mxu0
        %v6086 = vadd.f32 0.0, %v6085
        %v6087 = vpop.f32.mrb[0].mxu0
        %v6088 = vpop.f32.mrb[0].mxu0
        %v6089 = vadd.f32 0.0, %v6088
        %v6090 = vpop.f32.mrb[0].mxu0
        %6091 = vmatprep.mubr.bf16.mxu0 0
        %6092 = vmatmul.mubr.bf16.gmra.mrb[0].mxu0 %v6002
        %v6093 = vpop.f32.mrb[0].mxu0
        %v6094 = vadd.f32 0.0, %v6093
        %v6095 = vpop.f32.mrb[0].mxu0
        %v6096 = vpop.f32.mrb[0].mxu0
        %v6097 = vadd.f32 0.0, %v6096
        %v6098 = vpop.f32.mrb[0].mxu0
        %6099 = vmatprep.mubr.bf16.mxu0 0
        %6100 = vmatmul.mubr.bf16.gmra.mrb[0].mxu0 %v6005
        %v6101 = vpop.f32.mrb[0].mxu0
        %v6102 = vadd.f32 0.0, %v6101
        %v6103 = vpop.f32.mrb[0].mxu0
        %v6104 = vpop.f32.mrb[0].mxu0
        %v6105 = vadd.f32 0.0, %v6104
        %v6106 = vpop.f32.mrb[0].mxu0
        %6107 = vdwg.mxu0
        %v6109 = vsel %vm2381, %v5955, 0
        %v6112 = vsel %vm2381, %v5956, 0
        %v6115 = vsel %vm2381, %v5957, 0
        %v6118 = vsel %vm2381, %v5958, 0
        %v6121 = vsel %vm2381, %v5959, 0
        %v6124 = vsel %vm2381, %v5960, 0
        %v6127 = vsel %vm2381, %v5961, 0
        %v6130 = vsel %vm2381, %v5962, 0
        %v6133 = vsel %vm6007, %v5980, 0
        %6135 = vmatprep.subr.bf16.mxu0 0
        %6136 = vmatpush1.bf16.msra.mxu0 %v6133
        %6137 = vmatprep.subr.bf16.mxu0 0
        %6138 = vmatpush1.bf16.msra.mxu0 0
        %6139 = vmatprep.subr.bf16.mxu0 0
        %6140 = vmatpush1.bf16.msra.mxu0 0
        %6141 = vmatprep.subr.bf16.mxu0 0
        %6142 = vmatpush1.bf16.msra.mxu0 0
        %6143 = vmatprep.subr.bf16.mxu0 0
        %6144 = vmatpush1.bf16.msra.mxu0 0
        %6145 = vmatprep.subr.bf16.mxu0 0
        %6146 = vmatpush1.bf16.msra.mxu0 0
        %6147 = vmatprep.subr.bf16.mxu0 0
        %6148 = vmatpush1.bf16.msra.mxu0 0
        %6149 = vmatprep.subr.bf16.mxu0 0
        %6150 = vmatpush1.bf16.msra.mxu0 0
        %6151 = vmatprep.subr.bf16.mxu0 0
        %6152 = vmatpush1.bf16.msra.mxu0 0
        %6153 = vmatprep.subr.bf16.mxu0 0
        %6154 = vmatpush1.bf16.msra.mxu0 0
        %6155 = vmatprep.subr.bf16.mxu0 0
        %6156 = vmatpush1.bf16.msra.mxu0 0
        %6157 = vmatprep.subr.bf16.mxu0 0
        %6158 = vmatpush1.bf16.msra.mxu0 0
        %6159 = vmatprep.subr.bf16.mxu0 0
        %6160 = vmatpush1.bf16.msra.mxu0 0
        %6161 = vmatprep.subr.bf16.mxu0 0
        %6162 = vmatpush1.bf16.msra.mxu0 0
        %6163 = vmatprep.subr.bf16.mxu0 0
        %6164 = vmatpush1.bf16.msra.mxu0 0
        %6165 = vmatprep.subr.bf16.mxu0 0
        %6166 = vmatpush1.bf16.msra.mxu0 0
        %6167 = vmatprep.mubr.bf16.mxu0 0
        %6168 = vmatmul.mubr.bf16.gmra.mrb[0].mxu0 %v6109
        %v6169 = vpop.f32.mrb[0].mxu0
        %v6170 = vadd.f32 0.0, %v6169
        %v6171 = vpop.f32.mrb[0].mxu0
        %v6172 = vpop.f32.mrb[0].mxu0
        %v6173 = vadd.f32 0.0, %v6172
        %v6174 = vpop.f32.mrb[0].mxu0
        %6175 = vmatprep.mubr.bf16.mxu0 0
        %6176 = vmatmul.mubr.bf16.gmra.mrb[0].mxu0 %v6112
        %v6177 = vpop.f32.mrb[0].mxu0
        %v6178 = vadd.f32 0.0, %v6177
        %v6179 = vpop.f32.mrb[0].mxu0
        %v6180 = vpop.f32.mrb[0].mxu0
        %v6181 = vadd.f32 0.0, %v6180
        %v6182 = vpop.f32.mrb[0].mxu0
        %6183 = vmatprep.mubr.bf16.mxu0 0
        %6184 = vmatmul.mubr.bf16.gmra.mrb[0].mxu0 %v6115
        %v6185 = vpop.f32.mrb[0].mxu0
        %v6186 = vadd.f32 0.0, %v6185
        %v6187 = vpop.f32.mrb[0].mxu0
        %v6188 = vpop.f32.mrb[0].mxu0
        %v6189 = vadd.f32 0.0, %v6188
        %v6190 = vpop.f32.mrb[0].mxu0
        %6191 = vmatprep.mubr.bf16.mxu0 0
        %6192 = vmatmul.mubr.bf16.gmra.mrb[0].mxu0 %v6118
        %v6193 = vpop.f32.mrb[0].mxu0
        %v6194 = vadd.f32 0.0, %v6193
        %v6195 = vpop.f32.mrb[0].mxu0
        %v6196 = vpop.f32.mrb[0].mxu0
        %v6197 = vadd.f32 0.0, %v6196
        %v6198 = vpop.f32.mrb[0].mxu0
        %6199 = vmatprep.mubr.bf16.mxu0 0
        %6200 = vmatmul.mubr.bf16.gmra.mrb[0].mxu0 %v6121
        %v6201 = vpop.f32.mrb[0].mxu0
        %v6202 = vadd.f32 0.0, %v6201
        %v6203 = vpop.f32.mrb[0].mxu0
        %v6204 = vpop.f32.mrb[0].mxu0
        %v6205 = vadd.f32 0.0, %v6204
        %v6206 = vpop.f32.mrb[0].mxu0
        %6207 = vmatprep.mubr.bf16.mxu0 0
        %6208 = vmatmul.mubr.bf16.gmra.mrb[0].mxu0 %v6124
        %v6209 = vpop.f32.mrb[0].mxu0
        %v6210 = vadd.f32 0.0, %v6209
        %v6211 = vpop.f32.mrb[0].mxu0
        %v6212 = vpop.f32.mrb[0].mxu0
        %v6213 = vadd.f32 0.0, %v6212
        %v6214 = vpop.f32.mrb[0].mxu0
        %6215 = vmatprep.mubr.bf16.mxu0 0
        %6216 = vmatmul.mubr.bf16.gmra.mrb[0].mxu0 %v6127
        %v6217 = vpop.f32.mrb[0].mxu0
        %v6218 = vadd.f32 0.0, %v6217
        %v6219 = vpop.f32.mrb[0].mxu0
        %v6220 = vpop.f32.mrb[0].mxu0
        %v6221 = vadd.f32 0.0, %v6220
        %v6222 = vpop.f32.mrb[0].mxu0
        %6223 = vmatprep.mubr.bf16.mxu0 0
        %6224 = vmatmul.mubr.bf16.gmra.mrb[0].mxu0 %v6130
        %v6225 = vpop.f32.mrb[0].mxu0
        %v6226 = vadd.f32 0.0, %v6225
        %v6227 = vpop.f32.mrb[0].mxu0
        %v6228 = vpop.f32.mrb[0].mxu0
        %v6229 = vadd.f32 0.0, %v6228
        %v6230 = vpop.f32.mrb[0].mxu0
        %6231 = vdwg.mxu0
        %v6233 = vsel %vm2381, %v5963, 0
        %v6236 = vsel %vm2381, %v5964, 0
        %v6239 = vsel %vm2381, %v5965, 0
        %v6242 = vsel %vm2381, %v5966, 0
        %v6245 = vsel %vm2381, %v5967, 0
        %v6248 = vsel %vm2381, %v5968, 0
        %v6251 = vsel %vm2381, %v5969, 0
        %v6254 = vsel %vm2381, %v5970, 0
        %v6257 = vsel %vm6007, %v5981, 0
        %6259 = vmatprep.subr.bf16.mxu0 0
        %6260 = vmatpush1.bf16.msra.mxu0 %v6257
        %6261 = vmatprep.subr.bf16.mxu0 0
        %6262 = vmatpush1.bf16.msra.mxu0 0
        %6263 = vmatprep.subr.bf16.mxu0 0
        %6264 = vmatpush1.bf16.msra.mxu0 0
        %6265 = vmatprep.subr.bf16.mxu0 0
        %6266 = vmatpush1.bf16.msra.mxu0 0
        %6267 = vmatprep.subr.bf16.mxu0 0
        %6268 = vmatpush1.bf16.msra.mxu0 0
        %6269 = vmatprep.subr.bf16.mxu0 0
        %6270 = vmatpush1.bf16.msra.mxu0 0
        %6271 = vmatprep.subr.bf16.mxu0 0
        %6272 = vmatpush1.bf16.msra.mxu0 0
        %6273 = vmatprep.subr.bf16.mxu0 0
        %6274 = vmatpush1.bf16.msra.mxu0 0
        %6275 = vmatprep.subr.bf16.mxu0 0
        %6276 = vmatpush1.bf16.msra.mxu0 0
        %6277 = vmatprep.subr.bf16.mxu0 0
        %6278 = vmatpush1.bf16.msra.mxu0 0
        %6279 = vmatprep.subr.bf16.mxu0 0
        %6280 = vmatpush1.bf16.msra.mxu0 0
        %6281 = vmatprep.subr.bf16.mxu0 0
        %6282 = vmatpush1.bf16.msra.mxu0 0
        %6283 = vmatprep.subr.bf16.mxu0 0
        %6284 = vmatpush1.bf16.msra.mxu0 0
        %6285 = vmatprep.subr.bf16.mxu0 0
        %6286 = vmatpush1.bf16.msra.mxu0 0
        %6287 = vmatprep.subr.bf16.mxu0 0
        %6288 = vmatpush1.bf16.msra.mxu0 0
        %6289 = vmatprep.subr.bf16.mxu0 0
        %6290 = vmatpush1.bf16.msra.mxu0 0
        %6291 = vmatprep.mubr.bf16.mxu0 0
        %6292 = vmatmul.mubr.bf16.gmra.mrb[0].mxu0 %v6233
        %v6293 = vpop.f32.mrb[0].mxu0
        %v6294 = vadd.f32 0.0, %v6293
        %v6295 = vpop.f32.mrb[0].mxu0
        %v6296 = vpop.f32.mrb[0].mxu0
        %v6297 = vadd.f32 0.0, %v6296
        %v6298 = vpop.f32.mrb[0].mxu0
        %6299 = vmatprep.mubr.bf16.mxu0 0
        %6300 = vmatmul.mubr.bf16.gmra.mrb[0].mxu0 %v6236
        %v6301 = vpop.f32.mrb[0].mxu0
        %v6302 = vadd.f32 0.0, %v6301
        %v6303 = vpop.f32.mrb[0].mxu0
        %v6304 = vpop.f32.mrb[0].mxu0
        %v6305 = vadd.f32 0.0, %v6304
        %v6306 = vpop.f32.mrb[0].mxu0
        %6307 = vmatprep.mubr.bf16.mxu0 0
        %6308 = vmatmul.mubr.bf16.gmra.mrb[0].mxu0 %v6239
        %v6309 = vpop.f32.mrb[0].mxu0
        %v6310 = vadd.f32 0.0, %v6309
        %v6311 = vpop.f32.mrb[0].mxu0
        %v6312 = vpop.f32.mrb[0].mxu0
        %v6313 = vadd.f32 0.0, %v6312
        %v6314 = vpop.f32.mrb[0].mxu0
        %6315 = vmatprep.mubr.bf16.mxu0 0
        %6316 = vmatmul.mubr.bf16.gmra.mrb[0].mxu0 %v6242
        %v6317 = vpop.f32.mrb[0].mxu0
        %v6318 = vadd.f32 0.0, %v6317
        %v6319 = vpop.f32.mrb[0].mxu0
        %v6320 = vpop.f32.mrb[0].mxu0
        %v6321 = vadd.f32 0.0, %v6320
        %v6322 = vpop.f32.mrb[0].mxu0
        %6323 = vmatprep.mubr.bf16.mxu0 0
        %6324 = vmatmul.mubr.bf16.gmra.mrb[0].mxu0 %v6245
        %v6325 = vpop.f32.mrb[0].mxu0
        %v6326 = vadd.f32 0.0, %v6325
        %v6327 = vpop.f32.mrb[0].mxu0
        %v6328 = vpop.f32.mrb[0].mxu0
        %v6329 = vadd.f32 0.0, %v6328
        %v6330 = vpop.f32.mrb[0].mxu0
        %6331 = vmatprep.mubr.bf16.mxu0 0
        %6332 = vmatmul.mubr.bf16.gmra.mrb[0].mxu0 %v6248
        %v6333 = vpop.f32.mrb[0].mxu0
        %v6334 = vadd.f32 0.0, %v6333
        %v6335 = vpop.f32.mrb[0].mxu0
        %v6336 = vpop.f32.mrb[0].mxu0
        %v6337 = vadd.f32 0.0, %v6336
        %v6338 = vpop.f32.mrb[0].mxu0
        %6339 = vmatprep.mubr.bf16.mxu0 0
        %6340 = vmatmul.mubr.bf16.gmra.mrb[0].mxu0 %v6251
        %v6341 = vpop.f32.mrb[0].mxu0
        %v6342 = vadd.f32 0.0, %v6341
        %v6343 = vpop.f32.mrb[0].mxu0
        %v6344 = vpop.f32.mrb[0].mxu0
        %v6345 = vadd.f32 0.0, %v6344
        %v6346 = vpop.f32.mrb[0].mxu0
        %6347 = vmatprep.mubr.bf16.mxu0 0
        %6348 = vmatmul.mubr.bf16.gmra.mrb[0].mxu0 %v6254
        %v6349 = vpop.f32.mrb[0].mxu0
        %v6350 = vadd.f32 0.0, %v6349
        %v6351 = vpop.f32.mrb[0].mxu0
        %v6352 = vpop.f32.mrb[0].mxu0
        %v6353 = vadd.f32 0.0, %v6352
        %v6354 = vpop.f32.mrb[0].mxu0
        %6355 = vdwg.mxu0
        %v6357 = vsel %vm2381, %v5971, 0
        %v6360 = vsel %vm2381, %v5972, 0
        %v6363 = vsel %vm2381, %v5973, 0
        %v6366 = vsel %vm2381, %v5974, 0
        %v6369 = vsel %vm2381, %v5975, 0
        %v6372 = vsel %vm2381, %v5976, 0
        %v6375 = vsel %vm2381, %v5977, 0
        %v6378 = vsel %vm2381, %v5978, 0
        %v6381 = vsel %vm6007, %v5982, 0
        %6383 = vmatprep.subr.bf16.mxu0 0
        %6384 = vmatpush1.bf16.msra.mxu0 %v6381
        %6385 = vmatprep.subr.bf16.mxu0 0
        %6386 = vmatpush1.bf16.msra.mxu0 0
        %6387 = vmatprep.subr.bf16.mxu0 0
        %6388 = vmatpush1.bf16.msra.mxu0 0
        %6389 = vmatprep.subr.bf16.mxu0 0
        %6390 = vmatpush1.bf16.msra.mxu0 0
        %6391 = vmatprep.subr.bf16.mxu0 0
        %6392 = vmatpush1.bf16.msra.mxu0 0
        %6393 = vmatprep.subr.bf16.mxu0 0
        %6394 = vmatpush1.bf16.msra.mxu0 0
        %6395 = vmatprep.subr.bf16.mxu0 0
        %6396 = vmatpush1.bf16.msra.mxu0 0
        %6397 = vmatprep.subr.bf16.mxu0 0
        %6398 = vmatpush1.bf16.msra.mxu0 0
        %6399 = vmatprep.subr.bf16.mxu0 0
        %6400 = vmatpush1.bf16.msra.mxu0 0
        %6401 = vmatprep.subr.bf16.mxu0 0
        %6402 = vmatpush1.bf16.msra.mxu0 0
        %6403 = vmatprep.subr.bf16.mxu0 0
        %6404 = vmatpush1.bf16.msra.mxu0 0
        %6405 = vmatprep.subr.bf16.mxu0 0
        %6406 = vmatpush1.bf16.msra.mxu0 0
        %6407 = vmatprep.subr.bf16.mxu0 0
        %6408 = vmatpush1.bf16.msra.mxu0 0
        %6409 = vmatprep.subr.bf16.mxu0 0
        %6410 = vmatpush1.bf16.msra.mxu0 0
        %6411 = vmatprep.subr.bf16.mxu0 0
        %6412 = vmatpush1.bf16.msra.mxu0 0
        %6413 = vmatprep.subr.bf16.mxu0 0
        %6414 = vmatpush1.bf16.msra.mxu0 0
        %6415 = vmatprep.mubr.bf16.mxu0 0
        %6416 = vmatmul.mubr.bf16.gmra.mrb[0].mxu0 %v6357
        %v6417 = vpop.f32.mrb[0].mxu0
        %v6418 = vadd.f32 0.0, %v6417
        %v6419 = vpop.f32.mrb[0].mxu0
        %v6420 = vpop.f32.mrb[0].mxu0
        %v6421 = vadd.f32 0.0, %v6420
        %v6422 = vpop.f32.mrb[0].mxu0
        %6423 = vmatprep.mubr.bf16.mxu0 0
        %6424 = vmatmul.mubr.bf16.gmra.mrb[0].mxu0 %v6360
        %v6425 = vpop.f32.mrb[0].mxu0
        %v6426 = vadd.f32 0.0, %v6425
        %v6427 = vpop.f32.mrb[0].mxu0
        %v6428 = vpop.f32.mrb[0].mxu0
        %v6429 = vadd.f32 0.0, %v6428
        %v6430 = vpop.f32.mrb[0].mxu0
        %6431 = vmatprep.mubr.bf16.mxu0 0
        %6432 = vmatmul.mubr.bf16.gmra.mrb[0].mxu0 %v6363
        %v6433 = vpop.f32.mrb[0].mxu0
        %v6434 = vadd.f32 0.0, %v6433
        %v6435 = vpop.f32.mrb[0].mxu0
        %v6436 = vpop.f32.mrb[0].mxu0
        %v6437 = vadd.f32 0.0, %v6436
        %v6438 = vpop.f32.mrb[0].mxu0
        %6439 = vmatprep.mubr.bf16.mxu0 0
        %6440 = vmatmul.mubr.bf16.gmra.mrb[0].mxu0 %v6366
        %v6441 = vpop.f32.mrb[0].mxu0
        %v6442 = vadd.f32 0.0, %v6441
        %v6443 = vpop.f32.mrb[0].mxu0
        %v6444 = vpop.f32.mrb[0].mxu0
        %v6445 = vadd.f32 0.0, %v6444
        %v6446 = vpop.f32.mrb[0].mxu0
        %6447 = vmatprep.mubr.bf16.mxu0 0
        %6448 = vmatmul.mubr.bf16.gmra.mrb[0].mxu0 %v6369
        %v6449 = vpop.f32.mrb[0].mxu0
        %v6450 = vadd.f32 0.0, %v6449
        %v6451 = vpop.f32.mrb[0].mxu0
        %v6452 = vpop.f32.mrb[0].mxu0
        %v6453 = vadd.f32 0.0, %v6452
        %v6454 = vpop.f32.mrb[0].mxu0
        %6455 = vmatprep.mubr.bf16.mxu0 0
        %6456 = vmatmul.mubr.bf16.gmra.mrb[0].mxu0 %v6372
        %v6457 = vpop.f32.mrb[0].mxu0
        %v6458 = vadd.f32 0.0, %v6457
        %v6459 = vpop.f32.mrb[0].mxu0
        %v6460 = vpop.f32.mrb[0].mxu0
        %v6461 = vadd.f32 0.0, %v6460
        %v6462 = vpop.f32.mrb[0].mxu0
        %6463 = vmatprep.mubr.bf16.mxu0 0
        %6464 = vmatmul.mubr.bf16.gmra.mrb[0].mxu0 %v6375
        %v6465 = vpop.f32.mrb[0].mxu0
        %v6466 = vadd.f32 0.0, %v6465
        %v6467 = vpop.f32.mrb[0].mxu0
        %v6468 = vpop.f32.mrb[0].mxu0
        %v6469 = vadd.f32 0.0, %v6468
        %v6470 = vpop.f32.mrb[0].mxu0
        %6471 = vmatprep.mubr.bf16.mxu0 0
        %6472 = vmatmul.mubr.bf16.gmra.mrb[0].mxu0 %v6378
        %v6473 = vpop.f32.mrb[0].mxu0
        %v6474 = vadd.f32 0.0, %v6473
        %v6475 = vpop.f32.mrb[0].mxu0
        %v6476 = vpop.f32.mrb[0].mxu0
        %v6477 = vadd.f32 0.0, %v6476
        %v6478 = vpop.f32.mrb[0].mxu0
        %6479 = vdwg.mxu0
        %vm6480 = vcmask 261120
        %v6481 = vsel %vm6480, %v6046, 0.0
        %v6482 = vsel %vm6480, %v6170, 0.0
        %v6483 = vadd.f32 %v6481, %v6482
        %v6484 = vsel %vm6480, %v6294, 0.0
        %v6485 = vadd.f32 %v6483, %v6484
        %v6486 = vsel %vm6480, %v6418, 0.0
        %v6487 = vadd.f32 %v6485, %v6486
        %v6488 = vsel %vm6480, %v6049, 0.0
        %v6489 = vsel %vm6480, %v6173, 0.0
        %v6490 = vadd.f32 %v6488, %v6489
        %v6491 = vsel %vm6480, %v6297, 0.0
        %v6492 = vadd.f32 %v6490, %v6491
        %v6493 = vsel %vm6480, %v6421, 0.0
        %v6494 = vadd.f32 %v6492, %v6493
        %v6495 = vsel %vm6480, %v6054, 0.0
        %v6496 = vsel %vm6480, %v6178, 0.0
        %v6497 = vadd.f32 %v6495, %v6496
        %v6498 = vsel %vm6480, %v6302, 0.0
        %v6499 = vadd.f32 %v6497, %v6498
        %v6500 = vsel %vm6480, %v6426, 0.0
        %v6501 = vadd.f32 %v6499, %v6500
        %v6502 = vsel %vm6480, %v6057, 0.0
        %v6503 = vsel %vm6480, %v6181, 0.0
        %v6504 = vadd.f32 %v6502, %v6503
        %v6505 = vsel %vm6480, %v6305, 0.0
        %v6506 = vadd.f32 %v6504, %v6505
        %v6507 = vsel %vm6480, %v6429, 0.0
        %v6508 = vadd.f32 %v6506, %v6507
        %v6509 = vsel %vm6480, %v6062, 0.0
        %v6510 = vsel %vm6480, %v6186, 0.0
        %v6511 = vadd.f32 %v6509, %v6510
        %v6512 = vsel %vm6480, %v6310, 0.0
        %v6513 = vadd.f32 %v6511, %v6512
        %v6514 = vsel %vm6480, %v6434, 0.0
        %v6515 = vadd.f32 %v6513, %v6514
        %v6516 = vsel %vm6480, %v6065, 0.0
        %v6517 = vsel %vm6480, %v6189, 0.0
        %v6518 = vadd.f32 %v6516, %v6517
        %v6519 = vsel %vm6480, %v6313, 0.0
        %v6520 = vadd.f32 %v6518, %v6519
        %v6521 = vsel %vm6480, %v6437, 0.0
        %v6522 = vadd.f32 %v6520, %v6521
        %v6523 = vsel %vm6480, %v6070, 0.0
        %v6524 = vsel %vm6480, %v6194, 0.0
        %v6525 = vadd.f32 %v6523, %v6524
        %v6526 = vsel %vm6480, %v6318, 0.0
        %v6527 = vadd.f32 %v6525, %v6526
        %v6528 = vsel %vm6480, %v6442, 0.0
        %v6529 = vadd.f32 %v6527, %v6528
        %v6530 = vsel %vm6480, %v6073, 0.0
        %v6531 = vsel %vm6480, %v6197, 0.0
        %v6532 = vadd.f32 %v6530, %v6531
        %v6533 = vsel %vm6480, %v6321, 0.0
        %v6534 = vadd.f32 %v6532, %v6533
        %v6535 = vsel %vm6480, %v6445, 0.0
        %v6536 = vadd.f32 %v6534, %v6535
        %v6537 = vsel %vm6480, %v6078, 0.0
        %v6538 = vsel %vm6480, %v6202, 0.0
        %v6539 = vadd.f32 %v6537, %v6538
        %v6540 = vsel %vm6480, %v6326, 0.0
        %v6541 = vadd.f32 %v6539, %v6540
        %v6542 = vsel %vm6480, %v6450, 0.0
        %v6543 = vadd.f32 %v6541, %v6542
        %v6544 = vsel %vm6480, %v6081, 0.0
        %v6545 = vsel %vm6480, %v6205, 0.0
        %v6546 = vadd.f32 %v6544, %v6545
        %v6547 = vsel %vm6480, %v6329, 0.0
        %v6548 = vadd.f32 %v6546, %v6547
        %v6549 = vsel %vm6480, %v6453, 0.0
        %v6550 = vadd.f32 %v6548, %v6549
        %v6551 = vsel %vm6480, %v6086, 0.0
        %v6552 = vsel %vm6480, %v6210, 0.0
        %v6553 = vadd.f32 %v6551, %v6552
        %v6554 = vsel %vm6480, %v6334, 0.0
        %v6555 = vadd.f32 %v6553, %v6554
        %v6556 = vsel %vm6480, %v6458, 0.0
        %v6557 = vadd.f32 %v6555, %v6556
        %v6558 = vsel %vm6480, %v6089, 0.0
        %v6559 = vsel %vm6480, %v6213, 0.0
        %v6560 = vadd.f32 %v6558, %v6559
        %v6561 = vsel %vm6480, %v6337, 0.0
        %v6562 = vadd.f32 %v6560, %v6561
        %v6563 = vsel %vm6480, %v6461, 0.0
        %v6564 = vadd.f32 %v6562, %v6563
        %v6565 = vsel %vm6480, %v6094, 0.0
        %v6566 = vsel %vm6480, %v6218, 0.0
        %v6567 = vadd.f32 %v6565, %v6566
        %v6568 = vsel %vm6480, %v6342, 0.0
        %v6569 = vadd.f32 %v6567, %v6568
        %v6570 = vsel %vm6480, %v6466, 0.0
        %v6571 = vadd.f32 %v6569, %v6570
        %v6572 = vsel %vm6480, %v6097, 0.0
        %v6573 = vsel %vm6480, %v6221, 0.0
        %v6574 = vadd.f32 %v6572, %v6573
        %v6575 = vsel %vm6480, %v6345, 0.0
        %v6576 = vadd.f32 %v6574, %v6575
        %v6577 = vsel %vm6480, %v6469, 0.0
        %v6578 = vadd.f32 %v6576, %v6577
        %v6579 = vsel %vm6480, %v6102, 0.0
        %v6580 = vsel %vm6480, %v6226, 0.0
        %v6581 = vadd.f32 %v6579, %v6580
        %v6582 = vsel %vm6480, %v6350, 0.0
        %v6583 = vadd.f32 %v6581, %v6582
        %v6584 = vsel %vm6480, %v6474, 0.0
        %v6585 = vadd.f32 %v6583, %v6584
        %v6586 = vsel %vm6480, %v6105, 0.0
        %v6587 = vsel %vm6480, %v6229, 0.0
        %v6588 = vadd.f32 %v6586, %v6587
        %v6589 = vsel %vm6480, %v6353, 0.0
        %v6590 = vadd.f32 %v6588, %v6589
        %v6591 = vsel %vm6480, %v6477, 0.0
        %v6592 = vadd.f32 %v6590, %v6591
        %v6593 = vld [vmem:[%s6] sm:$0x1]
        %v6595 = vlaneseq
        %v6596 = vshrl.u32 %v6595, 7
        %v6597 = vsub.s32 0, %v6596
        %v6598 = vrot.slane %v6593, %v6597
        %v6600 = vadd.f32 %v6487, %v6598
        %v6601 = vadd.f32 %v6494, %v6598
        %v6602 = vadd.f32 %v6501, %v6598
        %v6603 = vadd.f32 %v6508, %v6598
        %v6604 = vadd.f32 %v6515, %v6598
        %v6605 = vadd.f32 %v6522, %v6598
        %v6606 = vadd.f32 %v6529, %v6598
        %v6607 = vadd.f32 %v6536, %v6598
        %v6608 = vadd.f32 %v6543, %v6598
        %v6609 = vadd.f32 %v6550, %v6598
        %v6610 = vadd.f32 %v6557, %v6598
        %v6611 = vadd.f32 %v6564, %v6598
        %v6612 = vadd.f32 %v6571, %v6598
        %v6613 = vadd.f32 %v6578, %v6598
        %v6614 = vadd.f32 %v6585, %v6598
        %v6615 = vadd.f32 %v6592, %v6598
        %6616 = vst.msk [vmem:[%s359] sm:$0xff] %vm6480, %v6600
        %6617 = vst.msk [vmem:[%s359 + $0x8] sm:$0xff] %vm6480, %v6601
        %6618 = vst.msk [vmem:[%s359 + $0x10] sm:$0xff] %vm6480, %v6602
        %6619 = vst.msk [vmem:[%s359 + $0x18] sm:$0xff] %vm6480, %v6603
        %6620 = vst.msk [vmem:[%s359 + $0x20] sm:$0xff] %vm6480, %v6604
        %6621 = vst.msk [vmem:[%s359 + $0x28] sm:$0xff] %vm6480, %v6605
        %6622 = vst.msk [vmem:[%s359 + $0x30] sm:$0xff] %vm6480, %v6606
        %6623 = vst.msk [vmem:[%s359 + $0x38] sm:$0xff] %vm6480, %v6607
        %6624 = vst.msk [vmem:[%s359 + $0x40] sm:$0xff] %vm6480, %v6608
        %6625 = vst.msk [vmem:[%s359 + $0x48] sm:$0xff] %vm6480, %v6609
        %6626 = vst.msk [vmem:[%s359 + $0x50] sm:$0xff] %vm6480, %v6610
        %6627 = vst.msk [vmem:[%s359 + $0x58] sm:$0xff] %vm6480, %v6611
        %6628 = vst.msk [vmem:[%s359 + $0x60] sm:$0xff] %vm6480, %v6612
        %6629 = vst.msk [vmem:[%s359 + $0x68] sm:$0xff] %vm6480, %v6613
        %6630 = vst.msk [vmem:[%s359 + $0x70] sm:$0xff] %vm6480, %v6614
        %6631 = vst.msk [vmem:[%s359 + $0x78] sm:$0xff] %vm6480, %v6615
      $region60: #{tpu_custom_call.1} parent=47 // pred_fallthru
        _
      %s6632 = smul.u32 16, %s24
      %p6633 = scmp.lt.s32.totalorder %s23, 1
      %s6634 = scalar_select %p6633, %s23, 1
      %p6635 = scmp.lt.s32.totalorder %s6632, 31
      %s6636 = scalar_select %p6635, %s6632, 31
      %s6637 = smul.addr %s6634, 32
      %s6638 = sadd.s32 %s6636, %s6637
      %s6639 = smul.addr %s6638, 8
      %s6640 = scalar_lea.vmem %s7, %s6639
      // Predicated region
      $region61: #{tpu_custom_call.1} parent=47 // pred_check
        %p6641 = pneg %p218
      $region62: #{tpu_custom_call.1} parent=47 // pred_check_branch
        %6643 = sbr.rel (%p6641) target = $region64
      $region63: #{tpu_custom_call.1} parent=47 // pred_region
        %s6644 = smul.u32 16, %s24
      $region64: #{tpu_custom_call.1} parent=47 // pred_fallthru
        _
    $region48: #{tpu_custom_call.1} parent=5 // pred_fallthru
      _
    %p6645 = scmp.le.s32.totalorder 2, %s13
    // Predicated region
    $region65: #{tpu_custom_call.1} parent=5 // pred_check
      %p6646 = pneg %p6645
    $region66: #{tpu_custom_call.1} parent=5 // pred_check_branch
      %6648 = sbr.rel (%p6646) target = $region68
    $region67: #{tpu_custom_call.1} parent=5 // pred_region
      %s6649 = ssub.s32 %s13, 2
      // Predicated region
      $region69: #{tpu_custom_call.1} parent=67 // pred_check
        %p6650 = pneg %p224
      $region70: #{tpu_custom_call.1} parent=67 // pred_check_branch
        %6652 = sbr.rel (%p6650) target = $region72
      $region71: #{tpu_custom_call.1} parent=67 // pred_region
        %s6653 = smul.u32 16, %s27
        %p6654 = scmp.lt.s32.totalorder %s26, 1
        %s6655 = scalar_select %p6654, %s26, 1
        %p6656 = scmp.lt.s32.totalorder %s6653, 31
        %s6657 = scalar_select %p6656, %s6653, 31
        %s6658 = smul.addr %s6655, 32
        %s6659 = sadd.s32 %s6657, %s6658
        %s6660 = smul.addr %s6659, 8
        %s6661 = scalar_lea.vmem %s7, %s6660
      $region72: #{tpu_custom_call.1} parent=67 // pred_fallthru
        _
    $region68: #{tpu_custom_call.1} parent=5 // pred_fallthru
      _
  $region6: #{tpu_custom_call.1} parent=0 // loop_footer
    %s17 = sadd.s32 1, %s13
  $region7: #{tpu_custom_call.1} parent=0 // loop_footer_branch
    %12 = sbr.rel target = $region3
  $region8: #{tpu_custom_call.1} parent=0 // loop_exit
    _

</llo_original>
